<compile_context>
chip_gen: v7x
topology: tpu7x:2x2x1
jax: 0.10.0
libtpu: 0.0.40
codegen_flags: <defaults>
</compile_context>

<pallas_src>
import math

import numpy as np
import jax
import jax.numpy as jnp
from jax import lax
from jax.experimental import pallas as pl
from jax.experimental.pallas import tpu as pltpu


def kernel_size(in_channel):
    k = int((math.log2(in_channel) + 1) // 2)
    return k + 1 if k % 2 == 0 else k


# --------------------------------------------------------------------------
# fused BFM kernel: multi-scale conv + channel/spatial attention + fusion
# --------------------------------------------------------------------------
def _bfm_kernel(x_ref, b_ref, bias_ref, sv1_ref, sv2_ref, e_ref,
                cw1_ref, cb1_ref, cw2_ref, cb2_ref, sb1_ref, sb2_ref,
                out_ref, xpad_ref, spp_ref):
    _, _, H, WC = x_ref.shape
    W = e_ref.shape[0]
    C = WC // W
    Wp = W + 6                       # padded width (in pixels)
    WpC = Wp * C                     # padded row width (in lanes)
    W4 = 4 * Wp                      # packed 4-plane width for the spatial conv
    f32 = jnp.float32

    # ---- pad input into VMEM: zero only the halo strips (interior is overwritten) ----
    xpad_ref[:, 0:3, :] = jnp.zeros((2, 3, WpC), f32)
    xpad_ref[:, 3 + H:H + 6, :] = jnp.zeros((2, 3, WpC), f32)
    xpad_ref[:, 3:3 + H, 0:3 * C] = jnp.zeros((2, H, 3 * C), f32)
    xpad_ref[:, 3:3 + H, 3 * C + WC:WpC] = jnp.zeros((2, H, 3 * C), f32)
    xpad_ref[:, 3:3 + H, 3 * C:3 * C + WC] = x_ref[0]

    # ---- multi-scale conv: 7 banded, lane-dense MXU matmuls (both streams stacked) ----
    acc = jnp.dot(xpad_ref[:, 0:H, :].reshape(2 * H, WpC), b_ref[0],
                  preferred_element_type=f32)
    for i in range(1, 7):
        acc = acc + jnp.dot(xpad_ref[:, i:i + H, :].reshape(2 * H, WpC), b_ref[i],
                            preferred_element_type=f32)
    acc = acc + bias_ref[...]                                          # (2H, 3*W*C)
    msum = (jnp.maximum(acc[:, 0:WC], 0.0)
            + jnp.maximum(acc[:, WC:2 * WC], 0.0)
            + jnp.maximum(acc[:, 2 * WC:3 * WC], 0.0))                 # (2H, W*C)
    m1 = msum[0:H]                                                     # t1 stream
    m2 = msum[H:2 * H]                                                 # t2 stream

    # ---- pools (all ops stay on lane-dense slabs / tiny slices, no lane reshapes) ----
    def channel_pools(m):                                              # -> (1, C), (1, C)
        rsum = jnp.sum(m, axis=0, keepdims=True)
        rmax = jnp.max(m, axis=0, keepdims=True)
        s = rsum[:, 0:C]
        x = rmax[:, 0:C]
        for w in range(1, W):
            s = s + rsum[:, w * C:(w + 1) * C]
            x = jnp.maximum(x, rmax[:, w * C:(w + 1) * C])
        return s / float(H * W), x

    def spatial_pools(m):                                              # -> (H, W), (H, W)
        avg_cols = []
        max_cols = []
        for w in range(W):
            grp = m[:, w * C:(w + 1) * C]
            avg_cols.append(jnp.mean(grp, axis=1, keepdims=True))
            max_cols.append(jnp.max(grp, axis=1, keepdims=True))
        return (jnp.concatenate(avg_cols, axis=1),
                jnp.concatenate(max_cols, axis=1))

    chavg1, chmax1 = channel_pools(m1)
    chavg2, chmax2 = channel_pools(m2)
    spavg1, spmax1 = spatial_pools(m1)
    spavg2, spmax2 = spatial_pools(m2)

    # ---- channel attention: two Conv1d(4 -> 1, k, same) sharing pooled-input slices ----
    k = cw1_ref.shape[1]
    pc = k // 2
    pool = jnp.concatenate([chavg1, chmax1, chavg2, chmax2], axis=0)   # (4, C)
    pz = jnp.zeros((4, pc), f32)
    poolp = jnp.concatenate([pz, pool, pz], axis=1)                    # (4, C + 2*pc)
    ca1 = jnp.full((1, C), cb1_ref[0], f32)
    ca2 = jnp.full((1, C), cb2_ref[0], f32)
    for p_ in range(4):
        for j in range(k):
            sl = poolp[p_:p_ + 1, j:j + C]
            ca1 = ca1 + cw1_ref[p_, j] * sl
            ca2 = ca2 + cw2_ref[p_, j] * sl
    cmx = jnp.maximum(ca1, ca2)
    ce1 = jnp.exp(ca1 - cmx)
    ce2 = jnp.exp(ca2 - cmx)
    cinv = pl.reciprocal(ce1 + ce2, approx=True)
    ca1 = ce1 * cinv
    ca2 = ce2 * cinv                                                   # (1, C)

    # ---- spatial attention: 7x7 conv over 4 planes packed along lanes (98 wide FMAs) ----
    spp_ref[...] = jnp.zeros_like(spp_ref)                             # tiny (H+6, 4*(W+6)+6)
    spp_ref[3:3 + H, 0 * Wp + 3:0 * Wp + 3 + W] = spavg1
    spp_ref[3:3 + H, 1 * Wp + 3:1 * Wp + 3 + W] = spmax1
    spp_ref[3:3 + H, 2 * Wp + 3:2 * Wp + 3 + W] = spavg2
    spp_ref[3:3 + H, 3 * Wp + 3:3 * Wp + 3 + W] = spmax2

    acc1 = jnp.zeros((H, W4), f32)
    acc2 = jnp.zeros((H, W4), f32)
    # TODO(synk): could wrap in lax.fori_loop(unroll=...) with pl.ds offsets to bound live ranges.
    for i in range(7):
        for j in range(7):
            sl = spp_ref[i:i + H, j:j + W4]
            t_ = i * 7 + j
            acc1 = acc1 + sv1_ref[t_:t_ + 1, :] * sl
            acc2 = acc2 + sv2_ref[t_:t_ + 1, :] * sl
    sa1 = jnp.full((H, W), sb1_ref[0], f32)
    sa2 = jnp.full((H, W), sb2_ref[0], f32)
    for p_ in range(4):
        sa1 = sa1 + acc1[:, p_ * Wp:p_ * Wp + W]
        sa2 = sa2 + acc2[:, p_ * Wp:p_ * Wp + W]
    smx = jnp.maximum(sa1, sa2)
    se1 = jnp.exp(sa1 - smx)
    se2 = jnp.exp(sa2 - smx)
    sinv = pl.reciprocal(se1 + se2, approx=True)
    sa1 = se1 * sinv
    sa2 = se2 * sinv                                                   # (H, W)

    # ---- fuse in the lane-dense (H, W*C) layout; single unmasked 128-lane store ----
    ca1w = jnp.concatenate([ca1] * W, axis=1)                          # (1, W*C)
    ca2w = jnp.concatenate([ca2] * W, axis=1)
    sa1w = jnp.dot(sa1, e_ref[...], preferred_element_type=f32)        # (H, W*C)
    sa2w = jnp.dot(sa2, e_ref[...], preferred_element_type=f32)
    w1 = ca1w + sa1w + 1.0
    w2 = ca2w + sa2w + 1.0
    out_ref[0] = (w1 * m1 + w2 * m2).astype(out_ref.dtype)


# --------------------------------------------------------------------------
# wrapper-side constant preparation
# --------------------------------------------------------------------------
def _prepare_constants(p, W):
    C = p['w3'].shape[2]
    # embed 3x3 / 5x5 weights into a 7x7 footprint, stack scales: (3, 7, 7, Cin, Cout)
    w3f = jnp.zeros((7, 7, C, C), jnp.float32).at[2:5, 2:5].set(p['w3'])
    w5f = jnp.zeros((7, 7, C, C), jnp.float32).at[1:6, 1:6].set(p['w5'])
    wf = jnp.stack([w3f, w5f, p['w7'].astype(jnp.float32)], axis=0)

    # banded per-row-tap matrices: B[i, (w+j)*C + cin, s*W*C + w*C + cout] = wf[s, i, j, cin, cout]
    a_i = jnp.arange(W + 6)
    w_i = jnp.arange(W)
    j_i = jnp.arange(7)
    P = (a_i[None, :, None] - w_i[None, None, :] == j_i[:, None, None]).astype(jnp.float32)
    B = jnp.einsum('jaw,sijcd->iacswd', P, wf).reshape(7, (W + 6) * C, 3 * W * C)

    bias_full = jnp.concatenate([jnp.tile(p['b3'], W), jnp.tile(p['b5'], W),
                                 jnp.tile(p['b7'], W)]).reshape(1, 3 * W * C)

    # packed spatial-conv tap weights: sv[i*7+j, plane*(W+6) + u] = sw[i, j, plane] for u < W
    lane_mask = (jnp.arange(W + 6) < W).astype(jnp.float32)
    sv1 = (p['sw1'][..., None] * lane_mask).reshape(49, 4 * (W + 6))
    sv2 = (p['sw2'][..., None] * lane_mask).reshape(49, 4 * (W + 6))

    # lane-expansion matrix: E[w, w*C + c] = 1  (broadcast an (H, W) map to (H, W*C) via MXU)
    E = (jnp.arange(W * C)[None, :] // C == jnp.arange(W)[:, None]).astype(jnp.float32)
    return B, bias_full, sv1, sv2, E


def bfm_forward(t1_nchw, t2_nchw, p):
    """BFM forward; t1, t2 are NCHW float32, output is NCHW."""
    N, C, H, W = t1_nchw.shape
    t1n = jnp.transpose(t1_nchw, (0, 2, 3, 1)).astype(jnp.float32).reshape(N, H, W * C)
    t2n = jnp.transpose(t2_nchw, (0, 2, 3, 1)).astype(jnp.float32).reshape(N, H, W * C)
    x_all = jnp.stack([t1n, t2n], axis=1)                              # (N, 2, H, W*C)

    B, bias_full, sv1, sv2, E = _prepare_constants(p, W)

    WpC = (W + 6) * C
    W4 = 4 * (W + 6)
    smem = pl.BlockSpec(memory_space=pltpu.MemorySpace.SMEM)

    out = pl.pallas_call(
        _bfm_kernel,
        out_shape=jax.ShapeDtypeStruct((N, H, W * C), jnp.float32),
        grid=(N,),
        in_specs=[
            pl.BlockSpec((1, 2, H, W * C), lambda n: (n, 0, 0, 0)),
            pl.BlockSpec((7, WpC, 3 * W * C), lambda n: (0, 0, 0)),
            pl.BlockSpec((1, 3 * W * C), lambda n: (0, 0)),
            pl.BlockSpec((49, W4), lambda n: (0, 0)),
            pl.BlockSpec((49, W4), lambda n: (0, 0)),
            pl.BlockSpec((W, W * C), lambda n: (0, 0)),
            smem, smem, smem, smem, smem, smem,
        ],
        out_specs=pl.BlockSpec((1, H, W * C), lambda n: (n, 0, 0)),
        scratch_shapes=[
            pltpu.VMEM((2, H + 6, WpC), jnp.float32),      # padded input, both streams
            pltpu.VMEM((H + 6, W4 + 6), jnp.float32),      # packed padded spatial pools
        ],
        compiler_params=pltpu.CompilerParams(
            dimension_semantics=("parallel",),
            vmem_limit_bytes=32 * 1024 * 1024),
    )(x_all, B, bias_full, sv1, sv2, E,
      p['cw1'], p['cb1'], p['cw2'], p['cb2'], p['sb1'], p['sb2'])

    return jnp.transpose(out.reshape(N, H, W, C), (0, 3, 1, 2))


# --------------------------------------------------------------------------
# deterministic parameter init (synthetic; shapes follow the PyTorch __init__)
# --------------------------------------------------------------------------
def init_params(key, C):
    k = kernel_size(C)
    keys = jax.random.split(key, 14)

    def conv_w(kk, ksz, cin, cout):
        scale = 1.0 / math.sqrt(cin * ksz * ksz)
        return scale * jax.random.normal(kk, (ksz, ksz, cin, cout), jnp.float32)

    p = {
        'k': k,
        # MultiScaleFeatureExtractor (weights stored HWIO)
        'w3': conv_w(keys[0], 3, C, C), 'b3': 0.01 * jax.random.normal(keys[1], (C,), jnp.float32),
        'w5': conv_w(keys[2], 5, C, C), 'b5': 0.01 * jax.random.normal(keys[3], (C,), jnp.float32),
        'w7': conv_w(keys[4], 7, C, C), 'b7': 0.01 * jax.random.normal(keys[5], (C,), jnp.float32),
        # ChannelAttention Conv1d(4,1,k)  -> weight (4, k), bias (1,)
        'cw1': (1.0 / math.sqrt(4 * k)) * jax.random.normal(keys[6], (4, k), jnp.float32),
        'cb1': 0.01 * jax.random.normal(keys[7], (1,), jnp.float32),
        'cw2': (1.0 / math.sqrt(4 * k)) * jax.random.normal(keys[8], (4, k), jnp.float32),
        'cb2': 0.01 * jax.random.normal(keys[9], (1,), jnp.float32),
        # SpatialAttention Conv2d(4,1,7) -> weight (7, 7, 4) [i, j, plane], bias (1,)
        'sw1': (1.0 / math.sqrt(4 * 49)) * jax.random.normal(keys[10], (7, 7, 4), jnp.float32),
        'sb1': 0.01 * jax.random.normal(keys[11], (1,), jnp.float32),
        'sw2': (1.0 / math.sqrt(4 * 49)) * jax.random.normal(keys[12], (7, 7, 4), jnp.float32),
        'sb2': 0.01 * jax.random.normal(keys[13], (1,), jnp.float32),
    }
    return p


# --------------------------------------------------------------------------
# pure-JAX reference (sanity check)
# --------------------------------------------------------------------------
def ref_bfm(t1_nchw, t2_nchw, p):
    prec = lax.Precision.HIGHEST

    def conv2d(x, w, b, pad):
        y = lax.conv_general_dilated(x, w, (1, 1), [(pad, pad), (pad, pad)],
                                     dimension_numbers=('NHWC', 'HWIO', 'NHWC'),
                                     precision=prec)
        return y + b

    def msfe_ref(x):
        o1 = jax.nn.relu(conv2d(x, p['w3'], p['b3'], 1))
        o2 = jax.nn.relu(conv2d(x, p['w5'], p['b5'], 2))
        o3 = jax.nn.relu(conv2d(x, p['w7'], p['b7'], 3))
        return o1 + o2 + o3

    t1 = jnp.transpose(t1_nchw, (0, 2, 3, 1)).astype(jnp.float32)
    t2 = jnp.transpose(t2_nchw, (0, 2, 3, 1)).astype(jnp.float32)
    t1m = msfe_ref(t1)
    t2m = msfe_ref(t2)
    N, H, W, C = t1m.shape
    k = p['k']
    pc = k // 2

    # channel attention
    chpool = jnp.stack([t1m.mean((1, 2)), t1m.max((1, 2)),
                        t2m.mean((1, 2)), t2m.max((1, 2))], axis=1)       # (N,4,C)
    chp = jnp.pad(chpool, ((0, 0), (0, 0), (pc, pc)))

    def chconv(w, b):
        out = jnp.zeros((N, C), jnp.float32) + b[0]
        for i in range(4):
            for j in range(k):
                out = out + w[i, j] * chp[:, i, j:j + C]
        return out

    ca = jax.nn.softmax(jnp.stack([chconv(p['cw1'], p['cb1']),
                                   chconv(p['cw2'], p['cb2'])], axis=0), axis=0)  # (2,N,C)

    # spatial attention
    sppool = jnp.stack([t1m.mean(-1), t1m.max(-1), t2m.mean(-1), t2m.max(-1)], axis=-1)  # (N,H,W,4)

    def spconv(w, b):
        y = lax.conv_general_dilated(sppool, w.reshape(7, 7, 4, 1), (1, 1),
                                     [(3, 3), (3, 3)],
                                     dimension_numbers=('NHWC', 'HWIO', 'NHWC'),
                                     precision=prec)
        return y[..., 0] + b[0]

    sa = jax.nn.softmax(jnp.stack([spconv(p['sw1'], p['sb1']),
                                   spconv(p['sw2'], p['sb2'])], axis=0), axis=0)  # (2,N,H,W)

    w1 = ca[0][:, None, None, :] + sa[0][..., None] + 1.0
    w2 = ca[1][:, None, None, :] + sa[1][..., None] + 1.0
    out = w1 * t1m + w2 * t2m
    return jnp.transpose(out, (0, 3, 1, 2))


if __name__ == "__main__":
    key = jax.random.PRNGKey(0)
    kp, k1, k2 = jax.random.split(key, 3)

    N, C, H, W = 2, 8, 16, 16
    params = init_params(kp, C)

    t1 = jax.random.normal(k1, (N, C, H, W), jnp.float32)
    t2 = jax.random.normal(k2, (N, C, H, W), jnp.float32)

    out = jax.jit(bfm_forward)(t1, t2, params)
    out = jax.block_until_ready(out)
    assert out.shape == (N, C, H, W)

    ref = jax.block_until_ready(ref_bfm(t1, t2, params))
    np.testing.assert_allclose(np.asarray(out), np.asarray(ref), rtol=5e-3, atol=5e-3)

    print("KERNEL_OK")
</pallas_src>

<mosaic_0001>
module attributes {stable_mosaic.version = 11 : i64} {
  func.func @_bfm_kernel(%arg0: i32, %arg1: memref<1x2x16x128xf32, #tpu.memory_space<vmem>>, %arg2: memref<7x176x384xf32, #tpu.memory_space<vmem>>, %arg3: memref<1x384xf32, #tpu.memory_space<vmem>>, %arg4: memref<49x88xf32, #tpu.memory_space<vmem>>, %arg5: memref<49x88xf32, #tpu.memory_space<vmem>>, %arg6: memref<16x128xf32, #tpu.memory_space<vmem>>, %arg7: memref<4x3xf32, #tpu.memory_space<smem>>, %arg8: memref<1xf32, #tpu.memory_space<smem>>, %arg9: memref<4x3xf32, #tpu.memory_space<smem>>, %arg10: memref<1xf32, #tpu.memory_space<smem>>, %arg11: memref<1xf32, #tpu.memory_space<smem>>, %arg12: memref<1xf32, #tpu.memory_space<smem>>, %arg13: memref<1x16x128xf32, #tpu.memory_space<vmem>>, %arg14: memref<2x22x176xf32, #tpu.memory_space<vmem>>, %arg15: memref<22x94xf32, #tpu.memory_space<vmem>>) attributes {dimension_semantics = [#tpu.dimension_semantics<parallel>], iteration_bounds = array<i64: 2>, scalar_prefetch = 0 : i64, scratch_operands = 2 : i64, tpu.core_type = #tpu.core_type<tc>, window_params = [{transform_indices = @transform_0, window_bounds = array<i64: 1, 2, 16, 128>}, {pipeline_mode = #tpu.pipeline_mode<synchronous>, transform_indices = @transform_1, window_bounds = array<i64: 7, 176, 384>}, {pipeline_mode = #tpu.pipeline_mode<synchronous>, transform_indices = @transform_2, window_bounds = array<i64: 1, 384>}, {pipeline_mode = #tpu.pipeline_mode<synchronous>, transform_indices = @transform_3, window_bounds = array<i64: 49, 88>}, {pipeline_mode = #tpu.pipeline_mode<synchronous>, transform_indices = @transform_4, window_bounds = array<i64: 49, 88>}, {pipeline_mode = #tpu.pipeline_mode<synchronous>, transform_indices = @transform_5, window_bounds = array<i64: 16, 128>}, {transform_indices = @transform_6, window_bounds = array<i64: 4, 3>}, {transform_indices = @transform_7, window_bounds = array<i64: 1>}, {transform_indices = @transform_8, window_bounds = array<i64: 4, 3>}, {transform_indices = @transform_9, window_bounds = array<i64: 1>}, {transform_indices = @transform_10, window_bounds = array<i64: 1>}, {transform_indices = @transform_11, window_bounds = array<i64: 1>}, {transform_indices = @transform_12, window_bounds = array<i64: 1, 16, 128>}]} {
    %cst = arith.constant 0.000000e+00 : f32
    %0 = vector.broadcast %cst : f32 to vector<2x3x176xf32>
    %c0 = arith.constant 0 : index
    %c0_0 = arith.constant 0 : index
    %c0_1 = arith.constant 0 : index
    %1 = vector.load %arg14[%c0, %c0_0, %c0_1] : memref<2x22x176xf32, #tpu.memory_space<vmem>>, vector<2x3x176xf32>
    tpu.vector_store %arg14[%c0, %c0_0, %c0_1], %0 {strides = array<i32>} : memref<2x22x176xf32, #tpu.memory_space<vmem>>, vector<2x3x176xf32>,
    %cst_2 = arith.constant 0.000000e+00 : f32
    %2 = vector.broadcast %cst_2 : f32 to vector<2x3x176xf32>
    %c0_3 = arith.constant 0 : index
    %c19 = arith.constant 19 : index
    %c0_4 = arith.constant 0 : index
    %3 = vector.load %arg14[%c0_3, %c19, %c0_4] : memref<2x22x176xf32, #tpu.memory_space<vmem>>, vector<2x3x176xf32>
    tpu.vector_store %arg14[%c0_3, %c19, %c0_4], %2 {strides = array<i32>} : memref<2x22x176xf32, #tpu.memory_space<vmem>>, vector<2x3x176xf32>,
    %cst_5 = arith.constant 0.000000e+00 : f32
    %4 = vector.broadcast %cst_5 : f32 to vector<2x16x24xf32>
    %c0_6 = arith.constant 0 : index
    %c3 = arith.constant 3 : index
    %c0_7 = arith.constant 0 : index
    %5 = vector.load %arg14[%c0_6, %c3, %c0_7] : memref<2x22x176xf32, #tpu.memory_space<vmem>>, vector<2x16x24xf32>
    tpu.vector_store %arg14[%c0_6, %c3, %c0_7], %4 {strides = array<i32>} : memref<2x22x176xf32, #tpu.memory_space<vmem>>, vector<2x16x24xf32>,
    %cst_8 = arith.constant 0.000000e+00 : f32
    %6 = vector.broadcast %cst_8 : f32 to vector<2x16x24xf32>
    %c0_9 = arith.constant 0 : index
    %c3_10 = arith.constant 3 : index
    %c152 = arith.constant 152 : index
    %7 = vector.load %arg14[%c0_9, %c3_10, %c152] : memref<2x22x176xf32, #tpu.memory_space<vmem>>, vector<2x16x24xf32>
    tpu.vector_store %arg14[%c0_9, %c3_10, %c152], %6 {strides = array<i32>} : memref<2x22x176xf32, #tpu.memory_space<vmem>>, vector<2x16x24xf32>,
    %c0_11 = arith.constant 0 : index
    %c0_12 = arith.constant 0 : index
    %c0_13 = arith.constant 0 : index
    %c0_14 = arith.constant 0 : index
    %8 = vector.load %arg1[%c0_11, %c0_12, %c0_13, %c0_14] : memref<1x2x16x128xf32, #tpu.memory_space<vmem>>, vector<1x2x16x128xf32>
    %9 = vector.shape_cast %8 : vector<1x2x16x128xf32> to vector<2x16x128xf32>
    %c0_15 = arith.constant 0 : index
    %c3_16 = arith.constant 3 : index
    %c24 = arith.constant 24 : index
    %10 = vector.load %arg14[%c0_15, %c3_16, %c24] : memref<2x22x176xf32, #tpu.memory_space<vmem>>, vector<2x16x128xf32>
    tpu.vector_store %arg14[%c0_15, %c3_16, %c24], %9 {strides = array<i32>} : memref<2x22x176xf32, #tpu.memory_space<vmem>>, vector<2x16x128xf32>,
    %c0_17 = arith.constant 0 : index
    %c0_18 = arith.constant 0 : index
    %c0_19 = arith.constant 0 : index
    %11 = vector.load %arg14[%c0_17, %c0_18, %c0_19] : memref<2x22x176xf32, #tpu.memory_space<vmem>>, vector<2x16x176xf32>
    %12 = vector.shape_cast %11 : vector<2x16x176xf32> to vector<32x176xf32>
    %c0_20 = arith.constant 0 : index
    %c0_21 = arith.constant 0 : index
    %c0_22 = arith.constant 0 : index
    %13 = vector.load %arg2[%c0_20, %c0_21, %c0_22] : memref<7x176x384xf32, #tpu.memory_space<vmem>>, vector<1x176x384xf32>
    %14 = vector.shape_cast %13 : vector<1x176x384xf32> to vector<176x384xf32>
    %cst_23 = arith.constant dense<0.000000e+00> : vector<32x384xf32>
    %15 = tpu.matmul %12, %14, %cst_23 {dimension_numbers = #tpu.dot_dimension_numbers<[1], [0], [0], [1], [0, 0, 1, 1], [], []>} : vector<32x176xf32>, vector<176x384xf32>, vector<32x384xf32> -> vector<32x384xf32>
    %c0_24 = arith.constant 0 : index
    %c1 = arith.constant 1 : index
    %c0_25 = arith.constant 0 : index
    %16 = vector.load %arg14[%c0_24, %c1, %c0_25] : memref<2x22x176xf32, #tpu.memory_space<vmem>>, vector<2x16x176xf32>
    %17 = vector.shape_cast %16 : vector<2x16x176xf32> to vector<32x176xf32>
    %c1_26 = arith.constant 1 : index
    %c0_27 = arith.constant 0 : index
    %c0_28 = arith.constant 0 : index
    %18 = vector.load %arg2[%c1_26, %c0_27, %c0_28] : memref<7x176x384xf32, #tpu.memory_space<vmem>>, vector<1x176x384xf32>
    %19 = vector.shape_cast %18 : vector<1x176x384xf32> to vector<176x384xf32>
    %cst_29 = arith.constant dense<0.000000e+00> : vector<32x384xf32>
    %20 = tpu.matmul %17, %19, %cst_29 {dimension_numbers = #tpu.dot_dimension_numbers<[1], [0], [0], [1], [0, 0, 1, 1], [], []>} : vector<32x176xf32>, vector<176x384xf32>, vector<32x384xf32> -> vector<32x384xf32>
    %21 = arith.addf %15, %20 : vector<32x384xf32>
    %c0_30 = arith.constant 0 : index
    %c2 = arith.constant 2 : index
    %c0_31 = arith.constant 0 : index
    %22 = vector.load %arg14[%c0_30, %c2, %c0_31] : memref<2x22x176xf32, #tpu.memory_space<vmem>>, vector<2x16x176xf32>
    %23 = vector.shape_cast %22 : vector<2x16x176xf32> to vector<32x176xf32>
    %c2_32 = arith.constant 2 : index
    %c0_33 = arith.constant 0 : index
    %c0_34 = arith.constant 0 : index
    %24 = vector.load %arg2[%c2_32, %c0_33, %c0_34] : memref<7x176x384xf32, #tpu.memory_space<vmem>>, vector<1x176x384xf32>
    %25 = vector.shape_cast %24 : vector<1x176x384xf32> to vector<176x384xf32>
    %cst_35 = arith.constant dense<0.000000e+00> : vector<32x384xf32>
    %26 = tpu.matmul %23, %25, %cst_35 {dimension_numbers = #tpu.dot_dimension_numbers<[1], [0], [0], [1], [0, 0, 1, 1], [], []>} : vector<32x176xf32>, vector<176x384xf32>, vector<32x384xf32> -> vector<32x384xf32>
    %27 = arith.addf %21, %26 : vector<32x384xf32>
    %c0_36 = arith.constant 0 : index
    %c3_37 = arith.constant 3 : index
    %c0_38 = arith.constant 0 : index
    %28 = vector.load %arg14[%c0_36, %c3_37, %c0_38] : memref<2x22x176xf32, #tpu.memory_space<vmem>>, vector<2x16x176xf32>
    %29 = vector.shape_cast %28 : vector<2x16x176xf32> to vector<32x176xf32>
    %c3_39 = arith.constant 3 : index
    %c0_40 = arith.constant 0 : index
    %c0_41 = arith.constant 0 : index
    %30 = vector.load %arg2[%c3_39, %c0_40, %c0_41] : memref<7x176x384xf32, #tpu.memory_space<vmem>>, vector<1x176x384xf32>
    %31 = vector.shape_cast %30 : vector<1x176x384xf32> to vector<176x384xf32>
    %cst_42 = arith.constant dense<0.000000e+00> : vector<32x384xf32>
    %32 = tpu.matmul %29, %31, %cst_42 {dimension_numbers = #tpu.dot_dimension_numbers<[1], [0], [0], [1], [0, 0, 1, 1], [], []>} : vector<32x176xf32>, vector<176x384xf32>, vector<32x384xf32> -> vector<32x384xf32>
    %33 = arith.addf %27, %32 : vector<32x384xf32>
    %c0_43 = arith.constant 0 : index
    %c4 = arith.constant 4 : index
    %c0_44 = arith.constant 0 : index
    %34 = vector.load %arg14[%c0_43, %c4, %c0_44] : memref<2x22x176xf32, #tpu.memory_space<vmem>>, vector<2x16x176xf32>
    %35 = vector.shape_cast %34 : vector<2x16x176xf32> to vector<32x176xf32>
    %c4_45 = arith.constant 4 : index
    %c0_46 = arith.constant 0 : index
    %c0_47 = arith.constant 0 : index
    %36 = vector.load %arg2[%c4_45, %c0_46, %c0_47] : memref<7x176x384xf32, #tpu.memory_space<vmem>>, vector<1x176x384xf32>
    %37 = vector.shape_cast %36 : vector<1x176x384xf32> to vector<176x384xf32>
    %cst_48 = arith.constant dense<0.000000e+00> : vector<32x384xf32>
    %38 = tpu.matmul %35, %37, %cst_48 {dimension_numbers = #tpu.dot_dimension_numbers<[1], [0], [0], [1], [0, 0, 1, 1], [], []>} : vector<32x176xf32>, vector<176x384xf32>, vector<32x384xf32> -> vector<32x384xf32>
    %39 = arith.addf %33, %38 : vector<32x384xf32>
    %c0_49 = arith.constant 0 : index
    %c5 = arith.constant 5 : index
    %c0_50 = arith.constant 0 : index
    %40 = vector.load %arg14[%c0_49, %c5, %c0_50] : memref<2x22x176xf32, #tpu.memory_space<vmem>>, vector<2x16x176xf32>
    %41 = vector.shape_cast %40 : vector<2x16x176xf32> to vector<32x176xf32>
    %c5_51 = arith.constant 5 : index
    %c0_52 = arith.constant 0 : index
    %c0_53 = arith.constant 0 : index
    %42 = vector.load %arg2[%c5_51, %c0_52, %c0_53] : memref<7x176x384xf32, #tpu.memory_space<vmem>>, vector<1x176x384xf32>
    %43 = vector.shape_cast %42 : vector<1x176x384xf32> to vector<176x384xf32>
    %cst_54 = arith.constant dense<0.000000e+00> : vector<32x384xf32>
    %44 = tpu.matmul %41, %43, %cst_54 {dimension_numbers = #tpu.dot_dimension_numbers<[1], [0], [0], [1], [0, 0, 1, 1], [], []>} : vector<32x176xf32>, vector<176x384xf32>, vector<32x384xf32> -> vector<32x384xf32>
    %45 = arith.addf %39, %44 : vector<32x384xf32>
    %c0_55 = arith.constant 0 : index
    %c6 = arith.constant 6 : index
    %c0_56 = arith.constant 0 : index
    %46 = vector.load %arg14[%c0_55, %c6, %c0_56] : memref<2x22x176xf32, #tpu.memory_space<vmem>>, vector<2x16x176xf32>
    %47 = vector.shape_cast %46 : vector<2x16x176xf32> to vector<32x176xf32>
    %c6_57 = arith.constant 6 : index
    %c0_58 = arith.constant 0 : index
    %c0_59 = arith.constant 0 : index
    %48 = vector.load %arg2[%c6_57, %c0_58, %c0_59] : memref<7x176x384xf32, #tpu.memory_space<vmem>>, vector<1x176x384xf32>
    %49 = vector.shape_cast %48 : vector<1x176x384xf32> to vector<176x384xf32>
    %cst_60 = arith.constant dense<0.000000e+00> : vector<32x384xf32>
    %50 = tpu.matmul %47, %49, %cst_60 {dimension_numbers = #tpu.dot_dimension_numbers<[1], [0], [0], [1], [0, 0, 1, 1], [], []>} : vector<32x176xf32>, vector<176x384xf32>, vector<32x384xf32> -> vector<32x384xf32>
    %51 = arith.addf %45, %50 : vector<32x384xf32>
    %c0_61 = arith.constant 0 : index
    %c0_62 = arith.constant 0 : index
    %52 = vector.load %arg3[%c0_61, %c0_62] : memref<1x384xf32, #tpu.memory_space<vmem>>, vector<1x384xf32>
    %53 = vector.broadcast %52 : vector<1x384xf32> to vector<32x384xf32>
    %54 = arith.addf %51, %53 : vector<32x384xf32>
    %55 = vector.extract_strided_slice %54 {offsets = [0, 0], sizes = [32, 128], strides = [1, 1]} : vector<32x384xf32> to vector<32x128xf32>
    %cst_63 = arith.constant 0.000000e+00 : f32
    %56 = vector.broadcast %cst_63 : f32 to vector<32x128xf32>
    %57 = arith.maximumf %55, %56 : vector<32x128xf32>
    %58 = vector.extract_strided_slice %54 {offsets = [0, 128], sizes = [32, 128], strides = [1, 1]} : vector<32x384xf32> to vector<32x128xf32>
    %cst_64 = arith.constant 0.000000e+00 : f32
    %59 = vector.broadcast %cst_64 : f32 to vector<32x128xf32>
    %60 = arith.maximumf %58, %59 : vector<32x128xf32>
    %61 = arith.addf %57, %60 : vector<32x128xf32>
    %62 = vector.extract_strided_slice %54 {offsets = [0, 256], sizes = [32, 128], strides = [1, 1]} : vector<32x384xf32> to vector<32x128xf32>
    %cst_65 = arith.constant 0.000000e+00 : f32
    %63 = vector.broadcast %cst_65 : f32 to vector<32x128xf32>
    %64 = arith.maximumf %62, %63 : vector<32x128xf32>
    %65 = arith.addf %61, %64 : vector<32x128xf32>
    %66 = vector.extract_strided_slice %65 {offsets = [0, 0], sizes = [16, 128], strides = [1, 1]} : vector<32x128xf32> to vector<16x128xf32>
    %67 = vector.extract_strided_slice %65 {offsets = [16, 0], sizes = [16, 128], strides = [1, 1]} : vector<32x128xf32> to vector<16x128xf32>
    %cst_66 = arith.constant dense<0.000000e+00> : vector<128xf32>
    %68 = vector.multi_reduction <add>, %66, %cst_66 [0] : vector<16x128xf32> to vector<128xf32>
    %69 = vector.shape_cast %68 : vector<128xf32> to vector<1x128xf32>
    %cst_67 = arith.constant dense<0xFF800000> : vector<128xf32>
    %70 = vector.multi_reduction <maximumf>, %66, %cst_67 [0] : vector<16x128xf32> to vector<128xf32>
    %71 = vector.shape_cast %70 : vector<128xf32> to vector<1x128xf32>
    %72 = vector.extract_strided_slice %69 {offsets = [0, 0], sizes = [1, 8], strides = [1, 1]} : vector<1x128xf32> to vector<1x8xf32>
    %73 = vector.extract_strided_slice %71 {offsets = [0, 0], sizes = [1, 8], strides = [1, 1]} : vector<1x128xf32> to vector<1x8xf32>
    %74 = vector.extract_strided_slice %69 {offsets = [0, 8], sizes = [1, 8], strides = [1, 1]} : vector<1x128xf32> to vector<1x8xf32>
    %75 = arith.addf %72, %74 : vector<1x8xf32>
    %76 = vector.extract_strided_slice %71 {offsets = [0, 8], sizes = [1, 8], strides = [1, 1]} : vector<1x128xf32> to vector<1x8xf32>
    %77 = arith.maximumf %73, %76 : vector<1x8xf32>
    %78 = vector.extract_strided_slice %69 {offsets = [0, 16], sizes = [1, 8], strides = [1, 1]} : vector<1x128xf32> to vector<1x8xf32>
    %79 = arith.addf %75, %78 : vector<1x8xf32>
    %80 = vector.extract_strided_slice %71 {offsets = [0, 16], sizes = [1, 8], strides = [1, 1]} : vector<1x128xf32> to vector<1x8xf32>
    %81 = arith.maximumf %77, %80 : vector<1x8xf32>
    %82 = vector.extract_strided_slice %69 {offsets = [0, 24], sizes = [1, 8], strides = [1, 1]} : vector<1x128xf32> to vector<1x8xf32>
    %83 = arith.addf %79, %82 : vector<1x8xf32>
    %84 = vector.extract_strided_slice %71 {offsets = [0, 24], sizes = [1, 8], strides = [1, 1]} : vector<1x128xf32> to vector<1x8xf32>
    %85 = arith.maximumf %81, %84 : vector<1x8xf32>
    %86 = vector.extract_strided_slice %69 {offsets = [0, 32], sizes = [1, 8], strides = [1, 1]} : vector<1x128xf32> to vector<1x8xf32>
    %87 = arith.addf %83, %86 : vector<1x8xf32>
    %88 = vector.extract_strided_slice %71 {offsets = [0, 32], sizes = [1, 8], strides = [1, 1]} : vector<1x128xf32> to vector<1x8xf32>
    %89 = arith.maximumf %85, %88 : vector<1x8xf32>
    %90 = vector.extract_strided_slice %69 {offsets = [0, 40], sizes = [1, 8], strides = [1, 1]} : vector<1x128xf32> to vector<1x8xf32>
    %91 = arith.addf %87, %90 : vector<1x8xf32>
    %92 = vector.extract_strided_slice %71 {offsets = [0, 40], sizes = [1, 8], strides = [1, 1]} : vector<1x128xf32> to vector<1x8xf32>
    %93 = arith.maximumf %89, %92 : vector<1x8xf32>
    %94 = vector.extract_strided_slice %69 {offsets = [0, 48], sizes = [1, 8], strides = [1, 1]} : vector<1x128xf32> to vector<1x8xf32>
    %95 = arith.addf %91, %94 : vector<1x8xf32>
    %96 = vector.extract_strided_slice %71 {offsets = [0, 48], sizes = [1, 8], strides = [1, 1]} : vector<1x128xf32> to vector<1x8xf32>
    %97 = arith.maximumf %93, %96 : vector<1x8xf32>
    %98 = vector.extract_strided_slice %69 {offsets = [0, 56], sizes = [1, 8], strides = [1, 1]} : vector<1x128xf32> to vector<1x8xf32>
    %99 = arith.addf %95, %98 : vector<1x8xf32>
    %100 = vector.extract_strided_slice %71 {offsets = [0, 56], sizes = [1, 8], strides = [1, 1]} : vector<1x128xf32> to vector<1x8xf32>
    %101 = arith.maximumf %97, %100 : vector<1x8xf32>
    %102 = vector.extract_strided_slice %69 {offsets = [0, 64], sizes = [1, 8], strides = [1, 1]} : vector<1x128xf32> to vector<1x8xf32>
    %103 = arith.addf %99, %102 : vector<1x8xf32>
    %104 = vector.extract_strided_slice %71 {offsets = [0, 64], sizes = [1, 8], strides = [1, 1]} : vector<1x128xf32> to vector<1x8xf32>
    %105 = arith.maximumf %101, %104 : vector<1x8xf32>
    %106 = vector.extract_strided_slice %69 {offsets = [0, 72], sizes = [1, 8], strides = [1, 1]} : vector<1x128xf32> to vector<1x8xf32>
    %107 = arith.addf %103, %106 : vector<1x8xf32>
    %108 = vector.extract_strided_slice %71 {offsets = [0, 72], sizes = [1, 8], strides = [1, 1]} : vector<1x128xf32> to vector<1x8xf32>
    %109 = arith.maximumf %105, %108 : vector<1x8xf32>
    %110 = vector.extract_strided_slice %69 {offsets = [0, 80], sizes = [1, 8], strides = [1, 1]} : vector<1x128xf32> to vector<1x8xf32>
    %111 = arith.addf %107, %110 : vector<1x8xf32>
    %112 = vector.extract_strided_slice %71 {offsets = [0, 80], sizes = [1, 8], strides = [1, 1]} : vector<1x128xf32> to vector<1x8xf32>
    %113 = arith.maximumf %109, %112 : vector<1x8xf32>
    %114 = vector.extract_strided_slice %69 {offsets = [0, 88], sizes = [1, 8], strides = [1, 1]} : vector<1x128xf32> to vector<1x8xf32>
    %115 = arith.addf %111, %114 : vector<1x8xf32>
    %116 = vector.extract_strided_slice %71 {offsets = [0, 88], sizes = [1, 8], strides = [1, 1]} : vector<1x128xf32> to vector<1x8xf32>
    %117 = arith.maximumf %113, %116 : vector<1x8xf32>
    %118 = vector.extract_strided_slice %69 {offsets = [0, 96], sizes = [1, 8], strides = [1, 1]} : vector<1x128xf32> to vector<1x8xf32>
    %119 = arith.addf %115, %118 : vector<1x8xf32>
    %120 = vector.extract_strided_slice %71 {offsets = [0, 96], sizes = [1, 8], strides = [1, 1]} : vector<1x128xf32> to vector<1x8xf32>
    %121 = arith.maximumf %117, %120 : vector<1x8xf32>
    %122 = vector.extract_strided_slice %69 {offsets = [0, 104], sizes = [1, 8], strides = [1, 1]} : vector<1x128xf32> to vector<1x8xf32>
    %123 = arith.addf %119, %122 : vector<1x8xf32>
    %124 = vector.extract_strided_slice %71 {offsets = [0, 104], sizes = [1, 8], strides = [1, 1]} : vector<1x128xf32> to vector<1x8xf32>
    %125 = arith.maximumf %121, %124 : vector<1x8xf32>
    %126 = vector.extract_strided_slice %69 {offsets = [0, 112], sizes = [1, 8], strides = [1, 1]} : vector<1x128xf32> to vector<1x8xf32>
    %127 = arith.addf %123, %126 : vector<1x8xf32>
    %128 = vector.extract_strided_slice %71 {offsets = [0, 112], sizes = [1, 8], strides = [1, 1]} : vector<1x128xf32> to vector<1x8xf32>
    %129 = arith.maximumf %125, %128 : vector<1x8xf32>
    %130 = vector.extract_strided_slice %69 {offsets = [0, 120], sizes = [1, 8], strides = [1, 1]} : vector<1x128xf32> to vector<1x8xf32>
    %131 = arith.addf %127, %130 : vector<1x8xf32>
    %132 = vector.extract_strided_slice %71 {offsets = [0, 120], sizes = [1, 8], strides = [1, 1]} : vector<1x128xf32> to vector<1x8xf32>
    %133 = arith.maximumf %129, %132 : vector<1x8xf32>
    %cst_68 = arith.constant 2.560000e+02 : f32
    %134 = vector.broadcast %cst_68 : f32 to vector<1x8xf32>
    %135 = arith.divf %131, %134 : vector<1x8xf32>
    %cst_69 = arith.constant dense<0.000000e+00> : vector<128xf32>
    %136 = vector.multi_reduction <add>, %67, %cst_69 [0] : vector<16x128xf32> to vector<128xf32>
    %137 = vector.shape_cast %136 : vector<128xf32> to vector<1x128xf32>
    %cst_70 = arith.constant dense<0xFF800000> : vector<128xf32>
    %138 = vector.multi_reduction <maximumf>, %67, %cst_70 [0] : vector<16x128xf32> to vector<128xf32>
    %139 = vector.shape_cast %138 : vector<128xf32> to vector<1x128xf32>
    %140 = vector.extract_strided_slice %137 {offsets = [0, 0], sizes = [1, 8], strides = [1, 1]} : vector<1x128xf32> to vector<1x8xf32>
    %141 = vector.extract_strided_slice %139 {offsets = [0, 0], sizes = [1, 8], strides = [1, 1]} : vector<1x128xf32> to vector<1x8xf32>
    %142 = vector.extract_strided_slice %137 {offsets = [0, 8], sizes = [1, 8], strides = [1, 1]} : vector<1x128xf32> to vector<1x8xf32>
    %143 = arith.addf %140, %142 : vector<1x8xf32>
    %144 = vector.extract_strided_slice %139 {offsets = [0, 8], sizes = [1, 8], strides = [1, 1]} : vector<1x128xf32> to vector<1x8xf32>
    %145 = arith.maximumf %141, %144 : vector<1x8xf32>
    %146 = vector.extract_strided_slice %137 {offsets = [0, 16], sizes = [1, 8], strides = [1, 1]} : vector<1x128xf32> to vector<1x8xf32>
    %147 = arith.addf %143, %146 : vector<1x8xf32>
    %148 = vector.extract_strided_slice %139 {offsets = [0, 16], sizes = [1, 8], strides = [1, 1]} : vector<1x128xf32> to vector<1x8xf32>
    %149 = arith.maximumf %145, %148 : vector<1x8xf32>
    %150 = vector.extract_strided_slice %137 {offsets = [0, 24], sizes = [1, 8], strides = [1, 1]} : vector<1x128xf32> to vector<1x8xf32>
    %151 = arith.addf %147, %150 : vector<1x8xf32>
    %152 = vector.extract_strided_slice %139 {offsets = [0, 24], sizes = [1, 8], strides = [1, 1]} : vector<1x128xf32> to vector<1x8xf32>
    %153 = arith.maximumf %149, %152 : vector<1x8xf32>
    %154 = vector.extract_strided_slice %137 {offsets = [0, 32], sizes = [1, 8], strides = [1, 1]} : vector<1x128xf32> to vector<1x8xf32>
    %155 = arith.addf %151, %154 : vector<1x8xf32>
    %156 = vector.extract_strided_slice %139 {offsets = [0, 32], sizes = [1, 8], strides = [1, 1]} : vector<1x128xf32> to vector<1x8xf32>
    %157 = arith.maximumf %153, %156 : vector<1x8xf32>
    %158 = vector.extract_strided_slice %137 {offsets = [0, 40], sizes = [1, 8], strides = [1, 1]} : vector<1x128xf32> to vector<1x8xf32>
    %159 = arith.addf %155, %158 : vector<1x8xf32>
    %160 = vector.extract_strided_slice %139 {offsets = [0, 40], sizes = [1, 8], strides = [1, 1]} : vector<1x128xf32> to vector<1x8xf32>
    %161 = arith.maximumf %157, %160 : vector<1x8xf32>
    %162 = vector.extract_strided_slice %137 {offsets = [0, 48], sizes = [1, 8], strides = [1, 1]} : vector<1x128xf32> to vector<1x8xf32>
    %163 = arith.addf %159, %162 : vector<1x8xf32>
    %164 = vector.extract_strided_slice %139 {offsets = [0, 48], sizes = [1, 8], strides = [1, 1]} : vector<1x128xf32> to vector<1x8xf32>
    %165 = arith.maximumf %161, %164 : vector<1x8xf32>
    %166 = vector.extract_strided_slice %137 {offsets = [0, 56], sizes = [1, 8], strides = [1, 1]} : vector<1x128xf32> to vector<1x8xf32>
    %167 = arith.addf %163, %166 : vector<1x8xf32>
    %168 = vector.extract_strided_slice %139 {offsets = [0, 56], sizes = [1, 8], strides = [1, 1]} : vector<1x128xf32> to vector<1x8xf32>
    %169 = arith.maximumf %165, %168 : vector<1x8xf32>
    %170 = vector.extract_strided_slice %137 {offsets = [0, 64], sizes = [1, 8], strides = [1, 1]} : vector<1x128xf32> to vector<1x8xf32>
    %171 = arith.addf %167, %170 : vector<1x8xf32>
    %172 = vector.extract_strided_slice %139 {offsets = [0, 64], sizes = [1, 8], strides = [1, 1]} : vector<1x128xf32> to vector<1x8xf32>
    %173 = arith.maximumf %169, %172 : vector<1x8xf32>
    %174 = vector.extract_strided_slice %137 {offsets = [0, 72], sizes = [1, 8], strides = [1, 1]} : vector<1x128xf32> to vector<1x8xf32>
    %175 = arith.addf %171, %174 : vector<1x8xf32>
    %176 = vector.extract_strided_slice %139 {offsets = [0, 72], sizes = [1, 8], strides = [1, 1]} : vector<1x128xf32> to vector<1x8xf32>
    %177 = arith.maximumf %173, %176 : vector<1x8xf32>
    %178 = vector.extract_strided_slice %137 {offsets = [0, 80], sizes = [1, 8], strides = [1, 1]} : vector<1x128xf32> to vector<1x8xf32>
    %179 = arith.addf %175, %178 : vector<1x8xf32>
    %180 = vector.extract_strided_slice %139 {offsets = [0, 80], sizes = [1, 8], strides = [1, 1]} : vector<1x128xf32> to vector<1x8xf32>
    %181 = arith.maximumf %177, %180 : vector<1x8xf32>
    %182 = vector.extract_strided_slice %137 {offsets = [0, 88], sizes = [1, 8], strides = [1, 1]} : vector<1x128xf32> to vector<1x8xf32>
    %183 = arith.addf %179, %182 : vector<1x8xf32>
    %184 = vector.extract_strided_slice %139 {offsets = [0, 88], sizes = [1, 8], strides = [1, 1]} : vector<1x128xf32> to vector<1x8xf32>
    %185 = arith.maximumf %181, %184 : vector<1x8xf32>
    %186 = vector.extract_strided_slice %137 {offsets = [0, 96], sizes = [1, 8], strides = [1, 1]} : vector<1x128xf32> to vector<1x8xf32>
    %187 = arith.addf %183, %186 : vector<1x8xf32>
    %188 = vector.extract_strided_slice %139 {offsets = [0, 96], sizes = [1, 8], strides = [1, 1]} : vector<1x128xf32> to vector<1x8xf32>
    %189 = arith.maximumf %185, %188 : vector<1x8xf32>
    %190 = vector.extract_strided_slice %137 {offsets = [0, 104], sizes = [1, 8], strides = [1, 1]} : vector<1x128xf32> to vector<1x8xf32>
    %191 = arith.addf %187, %190 : vector<1x8xf32>
    %192 = vector.extract_strided_slice %139 {offsets = [0, 104], sizes = [1, 8], strides = [1, 1]} : vector<1x128xf32> to vector<1x8xf32>
    %193 = arith.maximumf %189, %192 : vector<1x8xf32>
    %194 = vector.extract_strided_slice %137 {offsets = [0, 112], sizes = [1, 8], strides = [1, 1]} : vector<1x128xf32> to vector<1x8xf32>
    %195 = arith.addf %191, %194 : vector<1x8xf32>
    %196 = vector.extract_strided_slice %139 {offsets = [0, 112], sizes = [1, 8], strides = [1, 1]} : vector<1x128xf32> to vector<1x8xf32>
    %197 = arith.maximumf %193, %196 : vector<1x8xf32>
    %198 = vector.extract_strided_slice %137 {offsets = [0, 120], sizes = [1, 8], strides = [1, 1]} : vector<1x128xf32> to vector<1x8xf32>
    %199 = arith.addf %195, %198 : vector<1x8xf32>
    %200 = vector.extract_strided_slice %139 {offsets = [0, 120], sizes = [1, 8], strides = [1, 1]} : vector<1x128xf32> to vector<1x8xf32>
    %201 = arith.maximumf %197, %200 : vector<1x8xf32>
    %cst_71 = arith.constant 2.560000e+02 : f32
    %202 = vector.broadcast %cst_71 : f32 to vector<1x8xf32>
    %203 = arith.divf %199, %202 : vector<1x8xf32>
    %204 = vector.extract_strided_slice %66 {offsets = [0, 0], sizes = [16, 8], strides = [1, 1]} : vector<16x128xf32> to vector<16x8xf32>
    %cst_72 = arith.constant dense<0.000000e+00> : vector<16xf32>
    %205 = vector.multi_reduction <add>, %204, %cst_72 [1] : vector<16x8xf32> to vector<16xf32>
    %206 = vector.shape_cast %205 : vector<16xf32> to vector<16x1xf32>
    %cst_73 = arith.constant 8.000000e+00 : f32
    %207 = vector.broadcast %cst_73 : f32 to vector<16x1xf32>
    %208 = arith.divf %206, %207 : vector<16x1xf32>
    %cst_74 = arith.constant dense<0xFF800000> : vector<16xf32>
    %209 = vector.multi_reduction <maximumf>, %204, %cst_74 [1] : vector<16x8xf32> to vector<16xf32>
    %210 = vector.shape_cast %209 : vector<16xf32> to vector<16x1xf32>
    %211 = vector.extract_strided_slice %66 {offsets = [0, 8], sizes = [16, 8], strides = [1, 1]} : vector<16x128xf32> to vector<16x8xf32>
    %cst_75 = arith.constant dense<0.000000e+00> : vector<16xf32>
    %212 = vector.multi_reduction <add>, %211, %cst_75 [1] : vector<16x8xf32> to vector<16xf32>
    %213 = vector.shape_cast %212 : vector<16xf32> to vector<16x1xf32>
    %cst_76 = arith.constant 8.000000e+00 : f32
    %214 = vector.broadcast %cst_76 : f32 to vector<16x1xf32>
    %215 = arith.divf %213, %214 : vector<16x1xf32>
    %cst_77 = arith.constant dense<0xFF800000> : vector<16xf32>
    %216 = vector.multi_reduction <maximumf>, %211, %cst_77 [1] : vector<16x8xf32> to vector<16xf32>
    %217 = vector.shape_cast %216 : vector<16xf32> to vector<16x1xf32>
    %218 = vector.extract_strided_slice %66 {offsets = [0, 16], sizes = [16, 8], strides = [1, 1]} : vector<16x128xf32> to vector<16x8xf32>
    %cst_78 = arith.constant dense<0.000000e+00> : vector<16xf32>
    %219 = vector.multi_reduction <add>, %218, %cst_78 [1] : vector<16x8xf32> to vector<16xf32>
    %220 = vector.shape_cast %219 : vector<16xf32> to vector<16x1xf32>
    %cst_79 = arith.constant 8.000000e+00 : f32
    %221 = vector.broadcast %cst_79 : f32 to vector<16x1xf32>
    %222 = arith.divf %220, %221 : vector<16x1xf32>
    %cst_80 = arith.constant dense<0xFF800000> : vector<16xf32>
    %223 = vector.multi_reduction <maximumf>, %218, %cst_80 [1] : vector<16x8xf32> to vector<16xf32>
    %224 = vector.shape_cast %223 : vector<16xf32> to vector<16x1xf32>
    %225 = vector.extract_strided_slice %66 {offsets = [0, 24], sizes = [16, 8], strides = [1, 1]} : vector<16x128xf32> to vector<16x8xf32>
    %cst_81 = arith.constant dense<0.000000e+00> : vector<16xf32>
    %226 = vector.multi_reduction <add>, %225, %cst_81 [1] : vector<16x8xf32> to vector<16xf32>
    %227 = vector.shape_cast %226 : vector<16xf32> to vector<16x1xf32>
    %cst_82 = arith.constant 8.000000e+00 : f32
    %228 = vector.broadcast %cst_82 : f32 to vector<16x1xf32>
    %229 = arith.divf %227, %228 : vector<16x1xf32>
    %cst_83 = arith.constant dense<0xFF800000> : vector<16xf32>
    %230 = vector.multi_reduction <maximumf>, %225, %cst_83 [1] : vector<16x8xf32> to vector<16xf32>
    %231 = vector.shape_cast %230 : vector<16xf32> to vector<16x1xf32>
    %232 = vector.extract_strided_slice %66 {offsets = [0, 32], sizes = [16, 8], strides = [1, 1]} : vector<16x128xf32> to vector<16x8xf32>
    %cst_84 = arith.constant dense<0.000000e+00> : vector<16xf32>
    %233 = vector.multi_reduction <add>, %232, %cst_84 [1] : vector<16x8xf32> to vector<16xf32>
    %234 = vector.shape_cast %233 : vector<16xf32> to vector<16x1xf32>
    %cst_85 = arith.constant 8.000000e+00 : f32
    %235 = vector.broadcast %cst_85 : f32 to vector<16x1xf32>
    %236 = arith.divf %234, %235 : vector<16x1xf32>
    %cst_86 = arith.constant dense<0xFF800000> : vector<16xf32>
    %237 = vector.multi_reduction <maximumf>, %232, %cst_86 [1] : vector<16x8xf32> to vector<16xf32>
    %238 = vector.shape_cast %237 : vector<16xf32> to vector<16x1xf32>
    %239 = vector.extract_strided_slice %66 {offsets = [0, 40], sizes = [16, 8], strides = [1, 1]} : vector<16x128xf32> to vector<16x8xf32>
    %cst_87 = arith.constant dense<0.000000e+00> : vector<16xf32>
    %240 = vector.multi_reduction <add>, %239, %cst_87 [1] : vector<16x8xf32> to vector<16xf32>
    %241 = vector.shape_cast %240 : vector<16xf32> to vector<16x1xf32>
    %cst_88 = arith.constant 8.000000e+00 : f32
    %242 = vector.broadcast %cst_88 : f32 to vector<16x1xf32>
    %243 = arith.divf %241, %242 : vector<16x1xf32>
    %cst_89 = arith.constant dense<0xFF800000> : vector<16xf32>
    %244 = vector.multi_reduction <maximumf>, %239, %cst_89 [1] : vector<16x8xf32> to vector<16xf32>
    %245 = vector.shape_cast %244 : vector<16xf32> to vector<16x1xf32>
    %246 = vector.extract_strided_slice %66 {offsets = [0, 48], sizes = [16, 8], strides = [1, 1]} : vector<16x128xf32> to vector<16x8xf32>
    %cst_90 = arith.constant dense<0.000000e+00> : vector<16xf32>
    %247 = vector.multi_reduction <add>, %246, %cst_90 [1] : vector<16x8xf32> to vector<16xf32>
    %248 = vector.shape_cast %247 : vector<16xf32> to vector<16x1xf32>
    %cst_91 = arith.constant 8.000000e+00 : f32
    %249 = vector.broadcast %cst_91 : f32 to vector<16x1xf32>
    %250 = arith.divf %248, %249 : vector<16x1xf32>
    %cst_92 = arith.constant dense<0xFF800000> : vector<16xf32>
    %251 = vector.multi_reduction <maximumf>, %246, %cst_92 [1] : vector<16x8xf32> to vector<16xf32>
    %252 = vector.shape_cast %251 : vector<16xf32> to vector<16x1xf32>
    %253 = vector.extract_strided_slice %66 {offsets = [0, 56], sizes = [16, 8], strides = [1, 1]} : vector<16x128xf32> to vector<16x8xf32>
    %cst_93 = arith.constant dense<0.000000e+00> : vector<16xf32>
    %254 = vector.multi_reduction <add>, %253, %cst_93 [1] : vector<16x8xf32> to vector<16xf32>
    %255 = vector.shape_cast %254 : vector<16xf32> to vector<16x1xf32>
    %cst_94 = arith.constant 8.000000e+00 : f32
    %256 = vector.broadcast %cst_94 : f32 to vector<16x1xf32>
    %257 = arith.divf %255, %256 : vector<16x1xf32>
    %cst_95 = arith.constant dense<0xFF800000> : vector<16xf32>
    %258 = vector.multi_reduction <maximumf>, %253, %cst_95 [1] : vector<16x8xf32> to vector<16xf32>
    %259 = vector.shape_cast %258 : vector<16xf32> to vector<16x1xf32>
    %260 = vector.extract_strided_slice %66 {offsets = [0, 64], sizes = [16, 8], strides = [1, 1]} : vector<16x128xf32> to vector<16x8xf32>
    %cst_96 = arith.constant dense<0.000000e+00> : vector<16xf32>
    %261 = vector.multi_reduction <add>, %260, %cst_96 [1] : vector<16x8xf32> to vector<16xf32>
    %262 = vector.shape_cast %261 : vector<16xf32> to vector<16x1xf32>
    %cst_97 = arith.constant 8.000000e+00 : f32
    %263 = vector.broadcast %cst_97 : f32 to vector<16x1xf32>
    %264 = arith.divf %262, %263 : vector<16x1xf32>
    %cst_98 = arith.constant dense<0xFF800000> : vector<16xf32>
    %265 = vector.multi_reduction <maximumf>, %260, %cst_98 [1] : vector<16x8xf32> to vector<16xf32>
    %266 = vector.shape_cast %265 : vector<16xf32> to vector<16x1xf32>
    %267 = vector.extract_strided_slice %66 {offsets = [0, 72], sizes = [16, 8], strides = [1, 1]} : vector<16x128xf32> to vector<16x8xf32>
    %cst_99 = arith.constant dense<0.000000e+00> : vector<16xf32>
    %268 = vector.multi_reduction <add>, %267, %cst_99 [1] : vector<16x8xf32> to vector<16xf32>
    %269 = vector.shape_cast %268 : vector<16xf32> to vector<16x1xf32>
    %cst_100 = arith.constant 8.000000e+00 : f32
    %270 = vector.broadcast %cst_100 : f32 to vector<16x1xf32>
    %271 = arith.divf %269, %270 : vector<16x1xf32>
    %cst_101 = arith.constant dense<0xFF800000> : vector<16xf32>
    %272 = vector.multi_reduction <maximumf>, %267, %cst_101 [1] : vector<16x8xf32> to vector<16xf32>
    %273 = vector.shape_cast %272 : vector<16xf32> to vector<16x1xf32>
    %274 = vector.extract_strided_slice %66 {offsets = [0, 80], sizes = [16, 8], strides = [1, 1]} : vector<16x128xf32> to vector<16x8xf32>
    %cst_102 = arith.constant dense<0.000000e+00> : vector<16xf32>
    %275 = vector.multi_reduction <add>, %274, %cst_102 [1] : vector<16x8xf32> to vector<16xf32>
    %276 = vector.shape_cast %275 : vector<16xf32> to vector<16x1xf32>
    %cst_103 = arith.constant 8.000000e+00 : f32
    %277 = vector.broadcast %cst_103 : f32 to vector<16x1xf32>
    %278 = arith.divf %276, %277 : vector<16x1xf32>
    %cst_104 = arith.constant dense<0xFF800000> : vector<16xf32>
    %279 = vector.multi_reduction <maximumf>, %274, %cst_104 [1] : vector<16x8xf32> to vector<16xf32>
    %280 = vector.shape_cast %279 : vector<16xf32> to vector<16x1xf32>
    %281 = vector.extract_strided_slice %66 {offsets = [0, 88], sizes = [16, 8], strides = [1, 1]} : vector<16x128xf32> to vector<16x8xf32>
    %cst_105 = arith.constant dense<0.000000e+00> : vector<16xf32>
    %282 = vector.multi_reduction <add>, %281, %cst_105 [1] : vector<16x8xf32> to vector<16xf32>
    %283 = vector.shape_cast %282 : vector<16xf32> to vector<16x1xf32>
    %cst_106 = arith.constant 8.000000e+00 : f32
    %284 = vector.broadcast %cst_106 : f32 to vector<16x1xf32>
    %285 = arith.divf %283, %284 : vector<16x1xf32>
    %cst_107 = arith.constant dense<0xFF800000> : vector<16xf32>
    %286 = vector.multi_reduction <maximumf>, %281, %cst_107 [1] : vector<16x8xf32> to vector<16xf32>
    %287 = vector.shape_cast %286 : vector<16xf32> to vector<16x1xf32>
    %288 = vector.extract_strided_slice %66 {offsets = [0, 96], sizes = [16, 8], strides = [1, 1]} : vector<16x128xf32> to vector<16x8xf32>
    %cst_108 = arith.constant dense<0.000000e+00> : vector<16xf32>
    %289 = vector.multi_reduction <add>, %288, %cst_108 [1] : vector<16x8xf32> to vector<16xf32>
    %290 = vector.shape_cast %289 : vector<16xf32> to vector<16x1xf32>
    %cst_109 = arith.constant 8.000000e+00 : f32
    %291 = vector.broadcast %cst_109 : f32 to vector<16x1xf32>
    %292 = arith.divf %290, %291 : vector<16x1xf32>
    %cst_110 = arith.constant dense<0xFF800000> : vector<16xf32>
    %293 = vector.multi_reduction <maximumf>, %288, %cst_110 [1] : vector<16x8xf32> to vector<16xf32>
    %294 = vector.shape_cast %293 : vector<16xf32> to vector<16x1xf32>
    %295 = vector.extract_strided_slice %66 {offsets = [0, 104], sizes = [16, 8], strides = [1, 1]} : vector<16x128xf32> to vector<16x8xf32>
    %cst_111 = arith.constant dense<0.000000e+00> : vector<16xf32>
    %296 = vector.multi_reduction <add>, %295, %cst_111 [1] : vector<16x8xf32> to vector<16xf32>
    %297 = vector.shape_cast %296 : vector<16xf32> to vector<16x1xf32>
    %cst_112 = arith.constant 8.000000e+00 : f32
    %298 = vector.broadcast %cst_112 : f32 to vector<16x1xf32>
    %299 = arith.divf %297, %298 : vector<16x1xf32>
    %cst_113 = arith.constant dense<0xFF800000> : vector<16xf32>
    %300 = vector.multi_reduction <maximumf>, %295, %cst_113 [1] : vector<16x8xf32> to vector<16xf32>
    %301 = vector.shape_cast %300 : vector<16xf32> to vector<16x1xf32>
    %302 = vector.extract_strided_slice %66 {offsets = [0, 112], sizes = [16, 8], strides = [1, 1]} : vector<16x128xf32> to vector<16x8xf32>
    %cst_114 = arith.constant dense<0.000000e+00> : vector<16xf32>
    %303 = vector.multi_reduction <add>, %302, %cst_114 [1] : vector<16x8xf32> to vector<16xf32>
    %304 = vector.shape_cast %303 : vector<16xf32> to vector<16x1xf32>
    %cst_115 = arith.constant 8.000000e+00 : f32
    %305 = vector.broadcast %cst_115 : f32 to vector<16x1xf32>
    %306 = arith.divf %304, %305 : vector<16x1xf32>
    %cst_116 = arith.constant dense<0xFF800000> : vector<16xf32>
    %307 = vector.multi_reduction <maximumf>, %302, %cst_116 [1] : vector<16x8xf32> to vector<16xf32>
    %308 = vector.shape_cast %307 : vector<16xf32> to vector<16x1xf32>
    %309 = vector.extract_strided_slice %66 {offsets = [0, 120], sizes = [16, 8], strides = [1, 1]} : vector<16x128xf32> to vector<16x8xf32>
    %cst_117 = arith.constant dense<0.000000e+00> : vector<16xf32>
    %310 = vector.multi_reduction <add>, %309, %cst_117 [1] : vector<16x8xf32> to vector<16xf32>
    %311 = vector.shape_cast %310 : vector<16xf32> to vector<16x1xf32>
    %cst_118 = arith.constant 8.000000e+00 : f32
    %312 = vector.broadcast %cst_118 : f32 to vector<16x1xf32>
    %313 = arith.divf %311, %312 : vector<16x1xf32>
    %cst_119 = arith.constant dense<0xFF800000> : vector<16xf32>
    %314 = vector.multi_reduction <maximumf>, %309, %cst_119 [1] : vector<16x8xf32> to vector<16xf32>
    %315 = vector.shape_cast %314 : vector<16xf32> to vector<16x1xf32>
    %316 = tpu.concatenate %208, %215, %222, %229, %236, %243, %250, %257, %264, %271, %278, %285, %292, %299, %306, %313 in 1 : vector<16x1xf32>, vector<16x1xf32>, vector<16x1xf32>, vector<16x1xf32>, vector<16x1xf32>, vector<16x1xf32>, vector<16x1xf32>, vector<16x1xf32>, vector<16x1xf32>, vector<16x1xf32>, vector<16x1xf32>, vector<16x1xf32>, vector<16x1xf32>, vector<16x1xf32>, vector<16x1xf32>, vector<16x1xf32> -> vector<16x16xf32>
    %317 = tpu.concatenate %210, %217, %224, %231, %238, %245, %252, %259, %266, %273, %280, %287, %294, %301, %308, %315 in 1 : vector<16x1xf32>, vector<16x1xf32>, vector<16x1xf32>, vector<16x1xf32>, vector<16x1xf32>, vector<16x1xf32>, vector<16x1xf32>, vector<16x1xf32>, vector<16x1xf32>, vector<16x1xf32>, vector<16x1xf32>, vector<16x1xf32>, vector<16x1xf32>, vector<16x1xf32>, vector<16x1xf32>, vector<16x1xf32> -> vector<16x16xf32>
    %318 = vector.extract_strided_slice %67 {offsets = [0, 0], sizes = [16, 8], strides = [1, 1]} : vector<16x128xf32> to vector<16x8xf32>
    %cst_120 = arith.constant dense<0.000000e+00> : vector<16xf32>
    %319 = vector.multi_reduction <add>, %318, %cst_120 [1] : vector<16x8xf32> to vector<16xf32>
    %320 = vector.shape_cast %319 : vector<16xf32> to vector<16x1xf32>
    %cst_121 = arith.constant 8.000000e+00 : f32
    %321 = vector.broadcast %cst_121 : f32 to vector<16x1xf32>
    %322 = arith.divf %320, %321 : vector<16x1xf32>
    %cst_122 = arith.constant dense<0xFF800000> : vector<16xf32>
    %323 = vector.multi_reduction <maximumf>, %318, %cst_122 [1] : vector<16x8xf32> to vector<16xf32>
    %324 = vector.shape_cast %323 : vector<16xf32> to vector<16x1xf32>
    %325 = vector.extract_strided_slice %67 {offsets = [0, 8], sizes = [16, 8], strides = [1, 1]} : vector<16x128xf32> to vector<16x8xf32>
    %cst_123 = arith.constant dense<0.000000e+00> : vector<16xf32>
    %326 = vector.multi_reduction <add>, %325, %cst_123 [1] : vector<16x8xf32> to vector<16xf32>
    %327 = vector.shape_cast %326 : vector<16xf32> to vector<16x1xf32>
    %cst_124 = arith.constant 8.000000e+00 : f32
    %328 = vector.broadcast %cst_124 : f32 to vector<16x1xf32>
    %329 = arith.divf %327, %328 : vector<16x1xf32>
    %cst_125 = arith.constant dense<0xFF800000> : vector<16xf32>
    %330 = vector.multi_reduction <maximumf>, %325, %cst_125 [1] : vector<16x8xf32> to vector<16xf32>
    %331 = vector.shape_cast %330 : vector<16xf32> to vector<16x1xf32>
    %332 = vector.extract_strided_slice %67 {offsets = [0, 16], sizes = [16, 8], strides = [1, 1]} : vector<16x128xf32> to vector<16x8xf32>
    %cst_126 = arith.constant dense<0.000000e+00> : vector<16xf32>
    %333 = vector.multi_reduction <add>, %332, %cst_126 [1] : vector<16x8xf32> to vector<16xf32>
    %334 = vector.shape_cast %333 : vector<16xf32> to vector<16x1xf32>
    %cst_127 = arith.constant 8.000000e+00 : f32
    %335 = vector.broadcast %cst_127 : f32 to vector<16x1xf32>
    %336 = arith.divf %334, %335 : vector<16x1xf32>
    %cst_128 = arith.constant dense<0xFF800000> : vector<16xf32>
    %337 = vector.multi_reduction <maximumf>, %332, %cst_128 [1] : vector<16x8xf32> to vector<16xf32>
    %338 = vector.shape_cast %337 : vector<16xf32> to vector<16x1xf32>
    %339 = vector.extract_strided_slice %67 {offsets = [0, 24], sizes = [16, 8], strides = [1, 1]} : vector<16x128xf32> to vector<16x8xf32>
    %cst_129 = arith.constant dense<0.000000e+00> : vector<16xf32>
    %340 = vector.multi_reduction <add>, %339, %cst_129 [1] : vector<16x8xf32> to vector<16xf32>
    %341 = vector.shape_cast %340 : vector<16xf32> to vector<16x1xf32>
    %cst_130 = arith.constant 8.000000e+00 : f32
    %342 = vector.broadcast %cst_130 : f32 to vector<16x1xf32>
    %343 = arith.divf %341, %342 : vector<16x1xf32>
    %cst_131 = arith.constant dense<0xFF800000> : vector<16xf32>
    %344 = vector.multi_reduction <maximumf>, %339, %cst_131 [1] : vector<16x8xf32> to vector<16xf32>
    %345 = vector.shape_cast %344 : vector<16xf32> to vector<16x1xf32>
    %346 = vector.extract_strided_slice %67 {offsets = [0, 32], sizes = [16, 8], strides = [1, 1]} : vector<16x128xf32> to vector<16x8xf32>
    %cst_132 = arith.constant dense<0.000000e+00> : vector<16xf32>
    %347 = vector.multi_reduction <add>, %346, %cst_132 [1] : vector<16x8xf32> to vector<16xf32>
    %348 = vector.shape_cast %347 : vector<16xf32> to vector<16x1xf32>
    %cst_133 = arith.constant 8.000000e+00 : f32
    %349 = vector.broadcast %cst_133 : f32 to vector<16x1xf32>
    %350 = arith.divf %348, %349 : vector<16x1xf32>
    %cst_134 = arith.constant dense<0xFF800000> : vector<16xf32>
    %351 = vector.multi_reduction <maximumf>, %346, %cst_134 [1] : vector<16x8xf32> to vector<16xf32>
    %352 = vector.shape_cast %351 : vector<16xf32> to vector<16x1xf32>
    %353 = vector.extract_strided_slice %67 {offsets = [0, 40], sizes = [16, 8], strides = [1, 1]} : vector<16x128xf32> to vector<16x8xf32>
    %cst_135 = arith.constant dense<0.000000e+00> : vector<16xf32>
    %354 = vector.multi_reduction <add>, %353, %cst_135 [1] : vector<16x8xf32> to vector<16xf32>
    %355 = vector.shape_cast %354 : vector<16xf32> to vector<16x1xf32>
    %cst_136 = arith.constant 8.000000e+00 : f32
    %356 = vector.broadcast %cst_136 : f32 to vector<16x1xf32>
    %357 = arith.divf %355, %356 : vector<16x1xf32>
    %cst_137 = arith.constant dense<0xFF800000> : vector<16xf32>
    %358 = vector.multi_reduction <maximumf>, %353, %cst_137 [1] : vector<16x8xf32> to vector<16xf32>
    %359 = vector.shape_cast %358 : vector<16xf32> to vector<16x1xf32>
    %360 = vector.extract_strided_slice %67 {offsets = [0, 48], sizes = [16, 8], strides = [1, 1]} : vector<16x128xf32> to vector<16x8xf32>
    %cst_138 = arith.constant dense<0.000000e+00> : vector<16xf32>
    %361 = vector.multi_reduction <add>, %360, %cst_138 [1] : vector<16x8xf32> to vector<16xf32>
    %362 = vector.shape_cast %361 : vector<16xf32> to vector<16x1xf32>
    %cst_139 = arith.constant 8.000000e+00 : f32
    %363 = vector.broadcast %cst_139 : f32 to vector<16x1xf32>
    %364 = arith.divf %362, %363 : vector<16x1xf32>
    %cst_140 = arith.constant dense<0xFF800000> : vector<16xf32>
    %365 = vector.multi_reduction <maximumf>, %360, %cst_140 [1] : vector<16x8xf32> to vector<16xf32>
    %366 = vector.shape_cast %365 : vector<16xf32> to vector<16x1xf32>
    %367 = vector.extract_strided_slice %67 {offsets = [0, 56], sizes = [16, 8], strides = [1, 1]} : vector<16x128xf32> to vector<16x8xf32>
    %cst_141 = arith.constant dense<0.000000e+00> : vector<16xf32>
    %368 = vector.multi_reduction <add>, %367, %cst_141 [1] : vector<16x8xf32> to vector<16xf32>
    %369 = vector.shape_cast %368 : vector<16xf32> to vector<16x1xf32>
    %cst_142 = arith.constant 8.000000e+00 : f32
    %370 = vector.broadcast %cst_142 : f32 to vector<16x1xf32>
    %371 = arith.divf %369, %370 : vector<16x1xf32>
    %cst_143 = arith.constant dense<0xFF800000> : vector<16xf32>
    %372 = vector.multi_reduction <maximumf>, %367, %cst_143 [1] : vector<16x8xf32> to vector<16xf32>
    %373 = vector.shape_cast %372 : vector<16xf32> to vector<16x1xf32>
    %374 = vector.extract_strided_slice %67 {offsets = [0, 64], sizes = [16, 8], strides = [1, 1]} : vector<16x128xf32> to vector<16x8xf32>
    %cst_144 = arith.constant dense<0.000000e+00> : vector<16xf32>
    %375 = vector.multi_reduction <add>, %374, %cst_144 [1] : vector<16x8xf32> to vector<16xf32>
    %376 = vector.shape_cast %375 : vector<16xf32> to vector<16x1xf32>
    %cst_145 = arith.constant 8.000000e+00 : f32
    %377 = vector.broadcast %cst_145 : f32 to vector<16x1xf32>
    %378 = arith.divf %376, %377 : vector<16x1xf32>
    %cst_146 = arith.constant dense<0xFF800000> : vector<16xf32>
    %379 = vector.multi_reduction <maximumf>, %374, %cst_146 [1] : vector<16x8xf32> to vector<16xf32>
    %380 = vector.shape_cast %379 : vector<16xf32> to vector<16x1xf32>
    %381 = vector.extract_strided_slice %67 {offsets = [0, 72], sizes = [16, 8], strides = [1, 1]} : vector<16x128xf32> to vector<16x8xf32>
    %cst_147 = arith.constant dense<0.000000e+00> : vector<16xf32>
    %382 = vector.multi_reduction <add>, %381, %cst_147 [1] : vector<16x8xf32> to vector<16xf32>
    %383 = vector.shape_cast %382 : vector<16xf32> to vector<16x1xf32>
    %cst_148 = arith.constant 8.000000e+00 : f32
    %384 = vector.broadcast %cst_148 : f32 to vector<16x1xf32>
    %385 = arith.divf %383, %384 : vector<16x1xf32>
    %cst_149 = arith.constant dense<0xFF800000> : vector<16xf32>
    %386 = vector.multi_reduction <maximumf>, %381, %cst_149 [1] : vector<16x8xf32> to vector<16xf32>
    %387 = vector.shape_cast %386 : vector<16xf32> to vector<16x1xf32>
    %388 = vector.extract_strided_slice %67 {offsets = [0, 80], sizes = [16, 8], strides = [1, 1]} : vector<16x128xf32> to vector<16x8xf32>
    %cst_150 = arith.constant dense<0.000000e+00> : vector<16xf32>
    %389 = vector.multi_reduction <add>, %388, %cst_150 [1] : vector<16x8xf32> to vector<16xf32>
    %390 = vector.shape_cast %389 : vector<16xf32> to vector<16x1xf32>
    %cst_151 = arith.constant 8.000000e+00 : f32
    %391 = vector.broadcast %cst_151 : f32 to vector<16x1xf32>
    %392 = arith.divf %390, %391 : vector<16x1xf32>
    %cst_152 = arith.constant dense<0xFF800000> : vector<16xf32>
    %393 = vector.multi_reduction <maximumf>, %388, %cst_152 [1] : vector<16x8xf32> to vector<16xf32>
    %394 = vector.shape_cast %393 : vector<16xf32> to vector<16x1xf32>
    %395 = vector.extract_strided_slice %67 {offsets = [0, 88], sizes = [16, 8], strides = [1, 1]} : vector<16x128xf32> to vector<16x8xf32>
    %cst_153 = arith.constant dense<0.000000e+00> : vector<16xf32>
    %396 = vector.multi_reduction <add>, %395, %cst_153 [1] : vector<16x8xf32> to vector<16xf32>
    %397 = vector.shape_cast %396 : vector<16xf32> to vector<16x1xf32>
    %cst_154 = arith.constant 8.000000e+00 : f32
    %398 = vector.broadcast %cst_154 : f32 to vector<16x1xf32>
    %399 = arith.divf %397, %398 : vector<16x1xf32>
    %cst_155 = arith.constant dense<0xFF800000> : vector<16xf32>
    %400 = vector.multi_reduction <maximumf>, %395, %cst_155 [1] : vector<16x8xf32> to vector<16xf32>
    %401 = vector.shape_cast %400 : vector<16xf32> to vector<16x1xf32>
    %402 = vector.extract_strided_slice %67 {offsets = [0, 96], sizes = [16, 8], strides = [1, 1]} : vector<16x128xf32> to vector<16x8xf32>
    %cst_156 = arith.constant dense<0.000000e+00> : vector<16xf32>
    %403 = vector.multi_reduction <add>, %402, %cst_156 [1] : vector<16x8xf32> to vector<16xf32>
    %404 = vector.shape_cast %403 : vector<16xf32> to vector<16x1xf32>
    %cst_157 = arith.constant 8.000000e+00 : f32
    %405 = vector.broadcast %cst_157 : f32 to vector<16x1xf32>
    %406 = arith.divf %404, %405 : vector<16x1xf32>
    %cst_158 = arith.constant dense<0xFF800000> : vector<16xf32>
    %407 = vector.multi_reduction <maximumf>, %402, %cst_158 [1] : vector<16x8xf32> to vector<16xf32>
    %408 = vector.shape_cast %407 : vector<16xf32> to vector<16x1xf32>
    %409 = vector.extract_strided_slice %67 {offsets = [0, 104], sizes = [16, 8], strides = [1, 1]} : vector<16x128xf32> to vector<16x8xf32>
    %cst_159 = arith.constant dense<0.000000e+00> : vector<16xf32>
    %410 = vector.multi_reduction <add>, %409, %cst_159 [1] : vector<16x8xf32> to vector<16xf32>
    %411 = vector.shape_cast %410 : vector<16xf32> to vector<16x1xf32>
    %cst_160 = arith.constant 8.000000e+00 : f32
    %412 = vector.broadcast %cst_160 : f32 to vector<16x1xf32>
    %413 = arith.divf %411, %412 : vector<16x1xf32>
    %cst_161 = arith.constant dense<0xFF800000> : vector<16xf32>
    %414 = vector.multi_reduction <maximumf>, %409, %cst_161 [1] : vector<16x8xf32> to vector<16xf32>
    %415 = vector.shape_cast %414 : vector<16xf32> to vector<16x1xf32>
    %416 = vector.extract_strided_slice %67 {offsets = [0, 112], sizes = [16, 8], strides = [1, 1]} : vector<16x128xf32> to vector<16x8xf32>
    %cst_162 = arith.constant dense<0.000000e+00> : vector<16xf32>
    %417 = vector.multi_reduction <add>, %416, %cst_162 [1] : vector<16x8xf32> to vector<16xf32>
    %418 = vector.shape_cast %417 : vector<16xf32> to vector<16x1xf32>
    %cst_163 = arith.constant 8.000000e+00 : f32
    %419 = vector.broadcast %cst_163 : f32 to vector<16x1xf32>
    %420 = arith.divf %418, %419 : vector<16x1xf32>
    %cst_164 = arith.constant dense<0xFF800000> : vector<16xf32>
    %421 = vector.multi_reduction <maximumf>, %416, %cst_164 [1] : vector<16x8xf32> to vector<16xf32>
    %422 = vector.shape_cast %421 : vector<16xf32> to vector<16x1xf32>
    %423 = vector.extract_strided_slice %67 {offsets = [0, 120], sizes = [16, 8], strides = [1, 1]} : vector<16x128xf32> to vector<16x8xf32>
    %cst_165 = arith.constant dense<0.000000e+00> : vector<16xf32>
    %424 = vector.multi_reduction <add>, %423, %cst_165 [1] : vector<16x8xf32> to vector<16xf32>
    %425 = vector.shape_cast %424 : vector<16xf32> to vector<16x1xf32>
    %cst_166 = arith.constant 8.000000e+00 : f32
    %426 = vector.broadcast %cst_166 : f32 to vector<16x1xf32>
    %427 = arith.divf %425, %426 : vector<16x1xf32>
    %cst_167 = arith.constant dense<0xFF800000> : vector<16xf32>
    %428 = vector.multi_reduction <maximumf>, %423, %cst_167 [1] : vector<16x8xf32> to vector<16xf32>
    %429 = vector.shape_cast %428 : vector<16xf32> to vector<16x1xf32>
    %430 = tpu.concatenate %322, %329, %336, %343, %350, %357, %364, %371, %378, %385, %392, %399, %406, %413, %420, %427 in 1 : vector<16x1xf32>, vector<16x1xf32>, vector<16x1xf32>, vector<16x1xf32>, vector<16x1xf32>, vector<16x1xf32>, vector<16x1xf32>, vector<16x1xf32>, vector<16x1xf32>, vector<16x1xf32>, vector<16x1xf32>, vector<16x1xf32>, vector<16x1xf32>, vector<16x1xf32>, vector<16x1xf32>, vector<16x1xf32> -> vector<16x16xf32>
    %431 = tpu.concatenate %324, %331, %338, %345, %352, %359, %366, %373, %380, %387, %394, %401, %408, %415, %422, %429 in 1 : vector<16x1xf32>, vector<16x1xf32>, vector<16x1xf32>, vector<16x1xf32>, vector<16x1xf32>, vector<16x1xf32>, vector<16x1xf32>, vector<16x1xf32>, vector<16x1xf32>, vector<16x1xf32>, vector<16x1xf32>, vector<16x1xf32>, vector<16x1xf32>, vector<16x1xf32>, vector<16x1xf32>, vector<16x1xf32> -> vector<16x16xf32>
    %432 = tpu.concatenate %135, %133, %203, %201 in 0 : vector<1x8xf32>, vector<1x8xf32>, vector<1x8xf32>, vector<1x8xf32> -> vector<4x8xf32>
    %cst_168 = arith.constant 0.000000e+00 : f32
    %433 = vector.broadcast %cst_168 : f32 to vector<4x1xf32>
    %434 = tpu.concatenate %433, %432, %433 in 1 : vector<4x1xf32>, vector<4x8xf32>, vector<4x1xf32> -> vector<4x10xf32>
    %c0_169 = arith.constant 0 : index
    %435 = memref.load %arg8[%c0_169] : memref<1xf32, #tpu.memory_space<smem>>
    %436 = vector.broadcast %435 : f32 to vector<1x8xf32>
    %c0_170 = arith.constant 0 : index
    %437 = memref.load %arg10[%c0_170] : memref<1xf32, #tpu.memory_space<smem>>
    %438 = vector.broadcast %437 : f32 to vector<1x8xf32>
    %439 = vector.extract_strided_slice %434 {offsets = [0, 0], sizes = [1, 8], strides = [1, 1]} : vector<4x10xf32> to vector<1x8xf32>
    %c0_171 = arith.constant 0 : index
    %c0_172 = arith.constant 0 : index
    %440 = memref.load %arg7[%c0_171, %c0_172] : memref<4x3xf32, #tpu.memory_space<smem>>
    %441 = vector.broadcast %440 : f32 to vector<1x8xf32>
    %442 = arith.mulf %441, %439 : vector<1x8xf32>
    %443 = arith.addf %436, %442 : vector<1x8xf32>
    %c0_173 = arith.constant 0 : index
    %c0_174 = arith.constant 0 : index
    %444 = memref.load %arg9[%c0_173, %c0_174] : memref<4x3xf32, #tpu.memory_space<smem>>
    %445 = vector.broadcast %444 : f32 to vector<1x8xf32>
    %446 = arith.mulf %445, %439 : vector<1x8xf32>
    %447 = arith.addf %438, %446 : vector<1x8xf32>
    %448 = vector.extract_strided_slice %434 {offsets = [0, 1], sizes = [1, 8], strides = [1, 1]} : vector<4x10xf32> to vector<1x8xf32>
    %c0_175 = arith.constant 0 : index
    %c1_176 = arith.constant 1 : index
    %449 = memref.load %arg7[%c0_175, %c1_176] : memref<4x3xf32, #tpu.memory_space<smem>>
    %450 = vector.broadcast %449 : f32 to vector<1x8xf32>
    %451 = arith.mulf %450, %448 : vector<1x8xf32>
    %452 = arith.addf %443, %451 : vector<1x8xf32>
    %c0_177 = arith.constant 0 : index
    %c1_178 = arith.constant 1 : index
    %453 = memref.load %arg9[%c0_177, %c1_178] : memref<4x3xf32, #tpu.memory_space<smem>>
    %454 = vector.broadcast %453 : f32 to vector<1x8xf32>
    %455 = arith.mulf %454, %448 : vector<1x8xf32>
    %456 = arith.addf %447, %455 : vector<1x8xf32>
    %457 = vector.extract_strided_slice %434 {offsets = [0, 2], sizes = [1, 8], strides = [1, 1]} : vector<4x10xf32> to vector<1x8xf32>
    %c0_179 = arith.constant 0 : index
    %c2_180 = arith.constant 2 : index
    %458 = memref.load %arg7[%c0_179, %c2_180] : memref<4x3xf32, #tpu.memory_space<smem>>
    %459 = vector.broadcast %458 : f32 to vector<1x8xf32>
    %460 = arith.mulf %459, %457 : vector<1x8xf32>
    %461 = arith.addf %452, %460 : vector<1x8xf32>
    %c0_181 = arith.constant 0 : index
    %c2_182 = arith.constant 2 : index
    %462 = memref.load %arg9[%c0_181, %c2_182] : memref<4x3xf32, #tpu.memory_space<smem>>
    %463 = vector.broadcast %462 : f32 to vector<1x8xf32>
    %464 = arith.mulf %463, %457 : vector<1x8xf32>
    %465 = arith.addf %456, %464 : vector<1x8xf32>
    %466 = vector.extract_strided_slice %434 {offsets = [1, 0], sizes = [1, 8], strides = [1, 1]} : vector<4x10xf32> to vector<1x8xf32>
    %c1_183 = arith.constant 1 : index
    %c0_184 = arith.constant 0 : index
    %467 = memref.load %arg7[%c1_183, %c0_184] : memref<4x3xf32, #tpu.memory_space<smem>>
    %468 = vector.broadcast %467 : f32 to vector<1x8xf32>
    %469 = arith.mulf %468, %466 : vector<1x8xf32>
    %470 = arith.addf %461, %469 : vector<1x8xf32>
    %c1_185 = arith.constant 1 : index
    %c0_186 = arith.constant 0 : index
    %471 = memref.load %arg9[%c1_185, %c0_186] : memref<4x3xf32, #tpu.memory_space<smem>>
    %472 = vector.broadcast %471 : f32 to vector<1x8xf32>
    %473 = arith.mulf %472, %466 : vector<1x8xf32>
    %474 = arith.addf %465, %473 : vector<1x8xf32>
    %475 = vector.extract_strided_slice %434 {offsets = [1, 1], sizes = [1, 8], strides = [1, 1]} : vector<4x10xf32> to vector<1x8xf32>
    %c1_187 = arith.constant 1 : index
    %c1_188 = arith.constant 1 : index
    %476 = memref.load %arg7[%c1_187, %c1_188] : memref<4x3xf32, #tpu.memory_space<smem>>
    %477 = vector.broadcast %476 : f32 to vector<1x8xf32>
    %478 = arith.mulf %477, %475 : vector<1x8xf32>
    %479 = arith.addf %470, %478 : vector<1x8xf32>
    %c1_189 = arith.constant 1 : index
    %c1_190 = arith.constant 1 : index
    %480 = memref.load %arg9[%c1_189, %c1_190] : memref<4x3xf32, #tpu.memory_space<smem>>
    %481 = vector.broadcast %480 : f32 to vector<1x8xf32>
    %482 = arith.mulf %481, %475 : vector<1x8xf32>
    %483 = arith.addf %474, %482 : vector<1x8xf32>
    %484 = vector.extract_strided_slice %434 {offsets = [1, 2], sizes = [1, 8], strides = [1, 1]} : vector<4x10xf32> to vector<1x8xf32>
    %c1_191 = arith.constant 1 : index
    %c2_192 = arith.constant 2 : index
    %485 = memref.load %arg7[%c1_191, %c2_192] : memref<4x3xf32, #tpu.memory_space<smem>>
    %486 = vector.broadcast %485 : f32 to vector<1x8xf32>
    %487 = arith.mulf %486, %484 : vector<1x8xf32>
    %488 = arith.addf %479, %487 : vector<1x8xf32>
    %c1_193 = arith.constant 1 : index
    %c2_194 = arith.constant 2 : index
    %489 = memref.load %arg9[%c1_193, %c2_194] : memref<4x3xf32, #tpu.memory_space<smem>>
    %490 = vector.broadcast %489 : f32 to vector<1x8xf32>
    %491 = arith.mulf %490, %484 : vector<1x8xf32>
    %492 = arith.addf %483, %491 : vector<1x8xf32>
    %493 = vector.extract_strided_slice %434 {offsets = [2, 0], sizes = [1, 8], strides = [1, 1]} : vector<4x10xf32> to vector<1x8xf32>
    %c2_195 = arith.constant 2 : index
    %c0_196 = arith.constant 0 : index
    %494 = memref.load %arg7[%c2_195, %c0_196] : memref<4x3xf32, #tpu.memory_space<smem>>
    %495 = vector.broadcast %494 : f32 to vector<1x8xf32>
    %496 = arith.mulf %495, %493 : vector<1x8xf32>
    %497 = arith.addf %488, %496 : vector<1x8xf32>
    %c2_197 = arith.constant 2 : index
    %c0_198 = arith.constant 0 : index
    %498 = memref.load %arg9[%c2_197, %c0_198] : memref<4x3xf32, #tpu.memory_space<smem>>
    %499 = vector.broadcast %498 : f32 to vector<1x8xf32>
    %500 = arith.mulf %499, %493 : vector<1x8xf32>
    %501 = arith.addf %492, %500 : vector<1x8xf32>
    %502 = vector.extract_strided_slice %434 {offsets = [2, 1], sizes = [1, 8], strides = [1, 1]} : vector<4x10xf32> to vector<1x8xf32>
    %c2_199 = arith.constant 2 : index
    %c1_200 = arith.constant 1 : index
    %503 = memref.load %arg7[%c2_199, %c1_200] : memref<4x3xf32, #tpu.memory_space<smem>>
    %504 = vector.broadcast %503 : f32 to vector<1x8xf32>
    %505 = arith.mulf %504, %502 : vector<1x8xf32>
    %506 = arith.addf %497, %505 : vector<1x8xf32>
    %c2_201 = arith.constant 2 : index
    %c1_202 = arith.constant 1 : index
    %507 = memref.load %arg9[%c2_201, %c1_202] : memref<4x3xf32, #tpu.memory_space<smem>>
    %508 = vector.broadcast %507 : f32 to vector<1x8xf32>
    %509 = arith.mulf %508, %502 : vector<1x8xf32>
    %510 = arith.addf %501, %509 : vector<1x8xf32>
    %511 = vector.extract_strided_slice %434 {offsets = [2, 2], sizes = [1, 8], strides = [1, 1]} : vector<4x10xf32> to vector<1x8xf32>
    %c2_203 = arith.constant 2 : index
    %c2_204 = arith.constant 2 : index
    %512 = memref.load %arg7[%c2_203, %c2_204] : memref<4x3xf32, #tpu.memory_space<smem>>
    %513 = vector.broadcast %512 : f32 to vector<1x8xf32>
    %514 = arith.mulf %513, %511 : vector<1x8xf32>
    %515 = arith.addf %506, %514 : vector<1x8xf32>
    %c2_205 = arith.constant 2 : index
    %c2_206 = arith.constant 2 : index
    %516 = memref.load %arg9[%c2_205, %c2_206] : memref<4x3xf32, #tpu.memory_space<smem>>
    %517 = vector.broadcast %516 : f32 to vector<1x8xf32>
    %518 = arith.mulf %517, %511 : vector<1x8xf32>
    %519 = arith.addf %510, %518 : vector<1x8xf32>
    %520 = vector.extract_strided_slice %434 {offsets = [3, 0], sizes = [1, 8], strides = [1, 1]} : vector<4x10xf32> to vector<1x8xf32>
    %c3_207 = arith.constant 3 : index
    %c0_208 = arith.constant 0 : index
    %521 = memref.load %arg7[%c3_207, %c0_208] : memref<4x3xf32, #tpu.memory_space<smem>>
    %522 = vector.broadcast %521 : f32 to vector<1x8xf32>
    %523 = arith.mulf %522, %520 : vector<1x8xf32>
    %524 = arith.addf %515, %523 : vector<1x8xf32>
    %c3_209 = arith.constant 3 : index
    %c0_210 = arith.constant 0 : index
    %525 = memref.load %arg9[%c3_209, %c0_210] : memref<4x3xf32, #tpu.memory_space<smem>>
    %526 = vector.broadcast %525 : f32 to vector<1x8xf32>
    %527 = arith.mulf %526, %520 : vector<1x8xf32>
    %528 = arith.addf %519, %527 : vector<1x8xf32>
    %529 = vector.extract_strided_slice %434 {offsets = [3, 1], sizes = [1, 8], strides = [1, 1]} : vector<4x10xf32> to vector<1x8xf32>
    %c3_211 = arith.constant 3 : index
    %c1_212 = arith.constant 1 : index
    %530 = memref.load %arg7[%c3_211, %c1_212] : memref<4x3xf32, #tpu.memory_space<smem>>
    %531 = vector.broadcast %530 : f32 to vector<1x8xf32>
    %532 = arith.mulf %531, %529 : vector<1x8xf32>
    %533 = arith.addf %524, %532 : vector<1x8xf32>
    %c3_213 = arith.constant 3 : index
    %c1_214 = arith.constant 1 : index
    %534 = memref.load %arg9[%c3_213, %c1_214] : memref<4x3xf32, #tpu.memory_space<smem>>
    %535 = vector.broadcast %534 : f32 to vector<1x8xf32>
    %536 = arith.mulf %535, %529 : vector<1x8xf32>
    %537 = arith.addf %528, %536 : vector<1x8xf32>
    %538 = vector.extract_strided_slice %434 {offsets = [3, 2], sizes = [1, 8], strides = [1, 1]} : vector<4x10xf32> to vector<1x8xf32>
    %c3_215 = arith.constant 3 : index
    %c2_216 = arith.constant 2 : index
    %539 = memref.load %arg7[%c3_215, %c2_216] : memref<4x3xf32, #tpu.memory_space<smem>>
    %540 = vector.broadcast %539 : f32 to vector<1x8xf32>
    %541 = arith.mulf %540, %538 : vector<1x8xf32>
    %542 = arith.addf %533, %541 : vector<1x8xf32>
    %c3_217 = arith.constant 3 : index
    %c2_218 = arith.constant 2 : index
    %543 = memref.load %arg9[%c3_217, %c2_218] : memref<4x3xf32, #tpu.memory_space<smem>>
    %544 = vector.broadcast %543 : f32 to vector<1x8xf32>
    %545 = arith.mulf %544, %538 : vector<1x8xf32>
    %546 = arith.addf %537, %545 : vector<1x8xf32>
    %547 = arith.maximumf %542, %546 : vector<1x8xf32>
    %548 = arith.subf %542, %547 : vector<1x8xf32>
    %549 = math.exp %548 : vector<1x8xf32>
    %550 = arith.subf %546, %547 : vector<1x8xf32>
    %551 = math.exp %550 : vector<1x8xf32>
    %552 = arith.addf %549, %551 : vector<1x8xf32>
    %553 = tpu.reciprocal %552 {approx = true} : vector<1x8xf32> -> vector<1x8xf32>
    %554 = arith.mulf %549, %553 : vector<1x8xf32>
    %555 = arith.mulf %551, %553 : vector<1x8xf32>
    %cst_219 = arith.constant 0.000000e+00 : f32
    %556 = vector.broadcast %cst_219 : f32 to vector<22x94xf32>
    %c0_220 = arith.constant 0 : index
    %c0_221 = arith.constant 0 : index
    %557 = vector.load %arg15[%c0_220, %c0_221] : memref<22x94xf32, #tpu.memory_space<vmem>>, vector<22x94xf32>
    tpu.vector_store %arg15[%c0_220, %c0_221], %556 {strides = array<i32>} : memref<22x94xf32, #tpu.memory_space<vmem>>, vector<22x94xf32>,
    %c3_222 = arith.constant 3 : index
    %c3_223 = arith.constant 3 : index
    %558 = vector.load %arg15[%c3_222, %c3_223] : memref<22x94xf32, #tpu.memory_space<vmem>>, vector<16x16xf32>
    tpu.vector_store %arg15[%c3_222, %c3_223], %316 {strides = array<i32>} : memref<22x94xf32, #tpu.memory_space<vmem>>, vector<16x16xf32>,
    %c3_224 = arith.constant 3 : index
    %c25 = arith.constant 25 : index
    %559 = vector.load %arg15[%c3_224, %c25] : memref<22x94xf32, #tpu.memory_space<vmem>>, vector<16x16xf32>
    tpu.vector_store %arg15[%c3_224, %c25], %317 {strides = array<i32>} : memref<22x94xf32, #tpu.memory_space<vmem>>, vector<16x16xf32>,
    %c3_225 = arith.constant 3 : index
    %c47 = arith.constant 47 : index
    %560 = vector.load %arg15[%c3_225, %c47] : memref<22x94xf32, #tpu.memory_space<vmem>>, vector<16x16xf32>
    tpu.vector_store %arg15[%c3_225, %c47], %430 {strides = array<i32>} : memref<22x94xf32, #tpu.memory_space<vmem>>, vector<16x16xf32>,
    %c3_226 = arith.constant 3 : index
    %c69 = arith.constant 69 : index
    %561 = vector.load %arg15[%c3_226, %c69] : memref<22x94xf32, #tpu.memory_space<vmem>>, vector<16x16xf32>
    tpu.vector_store %arg15[%c3_226, %c69], %431 {strides = array<i32>} : memref<22x94xf32, #tpu.memory_space<vmem>>, vector<16x16xf32>,
    %cst_227 = arith.constant 0.000000e+00 : f32
    %562 = vector.broadcast %cst_227 : f32 to vector<16x88xf32>
    %cst_228 = arith.constant 0.000000e+00 : f32
    %563 = vector.broadcast %cst_228 : f32 to vector<16x88xf32>
    %c0_229 = arith.constant 0 : index
    %c0_230 = arith.constant 0 : index
    %564 = vector.load %arg15[%c0_229, %c0_230] : memref<22x94xf32, #tpu.memory_space<vmem>>, vector<16x88xf32>
    %c0_231 = arith.constant 0 : index
    %c0_232 = arith.constant 0 : index
    %565 = vector.load %arg4[%c0_231, %c0_232] : memref<49x88xf32, #tpu.memory_space<vmem>>, vector<1x88xf32>
    %566 = vector.broadcast %565 : vector<1x88xf32> to vector<16x88xf32>
    %567 = arith.mulf %566, %564 : vector<16x88xf32>
    %568 = arith.addf %562, %567 : vector<16x88xf32>
    %c0_233 = arith.constant 0 : index
    %c0_234 = arith.constant 0 : index
    %569 = vector.load %arg5[%c0_233, %c0_234] : memref<49x88xf32, #tpu.memory_space<vmem>>, vector<1x88xf32>
    %570 = vector.broadcast %569 : vector<1x88xf32> to vector<16x88xf32>
    %571 = arith.mulf %570, %564 : vector<16x88xf32>
    %572 = arith.addf %563, %571 : vector<16x88xf32>
    %c0_235 = arith.constant 0 : index
    %c1_236 = arith.constant 1 : index
    %573 = vector.load %arg15[%c0_235, %c1_236] : memref<22x94xf32, #tpu.memory_space<vmem>>, vector<16x88xf32>
    %c1_237 = arith.constant 1 : index
    %c0_238 = arith.constant 0 : index
    %574 = vector.load %arg4[%c1_237, %c0_238] : memref<49x88xf32, #tpu.memory_space<vmem>>, vector<1x88xf32>
    %575 = vector.broadcast %574 : vector<1x88xf32> to vector<16x88xf32>
    %576 = arith.mulf %575, %573 : vector<16x88xf32>
    %577 = arith.addf %568, %576 : vector<16x88xf32>
    %c1_239 = arith.constant 1 : index
    %c0_240 = arith.constant 0 : index
    %578 = vector.load %arg5[%c1_239, %c0_240] : memref<49x88xf32, #tpu.memory_space<vmem>>, vector<1x88xf32>
    %579 = vector.broadcast %578 : vector<1x88xf32> to vector<16x88xf32>
    %580 = arith.mulf %579, %573 : vector<16x88xf32>
    %581 = arith.addf %572, %580 : vector<16x88xf32>
    %c0_241 = arith.constant 0 : index
    %c2_242 = arith.constant 2 : index
    %582 = vector.load %arg15[%c0_241, %c2_242] : memref<22x94xf32, #tpu.memory_space<vmem>>, vector<16x88xf32>
    %c2_243 = arith.constant 2 : index
    %c0_244 = arith.constant 0 : index
    %583 = vector.load %arg4[%c2_243, %c0_244] : memref<49x88xf32, #tpu.memory_space<vmem>>, vector<1x88xf32>
    %584 = vector.broadcast %583 : vector<1x88xf32> to vector<16x88xf32>
    %585 = arith.mulf %584, %582 : vector<16x88xf32>
    %586 = arith.addf %577, %585 : vector<16x88xf32>
    %c2_245 = arith.constant 2 : index
    %c0_246 = arith.constant 0 : index
    %587 = vector.load %arg5[%c2_245, %c0_246] : memref<49x88xf32, #tpu.memory_space<vmem>>, vector<1x88xf32>
    %588 = vector.broadcast %587 : vector<1x88xf32> to vector<16x88xf32>
    %589 = arith.mulf %588, %582 : vector<16x88xf32>
    %590 = arith.addf %581, %589 : vector<16x88xf32>
    %c0_247 = arith.constant 0 : index
    %c3_248 = arith.constant 3 : index
    %591 = vector.load %arg15[%c0_247, %c3_248] : memref<22x94xf32, #tpu.memory_space<vmem>>, vector<16x88xf32>
    %c3_249 = arith.constant 3 : index
    %c0_250 = arith.constant 0 : index
    %592 = vector.load %arg4[%c3_249, %c0_250] : memref<49x88xf32, #tpu.memory_space<vmem>>, vector<1x88xf32>
    %593 = vector.broadcast %592 : vector<1x88xf32> to vector<16x88xf32>
    %594 = arith.mulf %593, %591 : vector<16x88xf32>
    %595 = arith.addf %586, %594 : vector<16x88xf32>
    %c3_251 = arith.constant 3 : index
    %c0_252 = arith.constant 0 : index
    %596 = vector.load %arg5[%c3_251, %c0_252] : memref<49x88xf32, #tpu.memory_space<vmem>>, vector<1x88xf32>
    %597 = vector.broadcast %596 : vector<1x88xf32> to vector<16x88xf32>
    %598 = arith.mulf %597, %591 : vector<16x88xf32>
    %599 = arith.addf %590, %598 : vector<16x88xf32>
    %c0_253 = arith.constant 0 : index
    %c4_254 = arith.constant 4 : index
    %600 = vector.load %arg15[%c0_253, %c4_254] : memref<22x94xf32, #tpu.memory_space<vmem>>, vector<16x88xf32>
    %c4_255 = arith.constant 4 : index
    %c0_256 = arith.constant 0 : index
    %601 = vector.load %arg4[%c4_255, %c0_256] : memref<49x88xf32, #tpu.memory_space<vmem>>, vector<1x88xf32>
    %602 = vector.broadcast %601 : vector<1x88xf32> to vector<16x88xf32>
    %603 = arith.mulf %602, %600 : vector<16x88xf32>
    %604 = arith.addf %595, %603 : vector<16x88xf32>
    %c4_257 = arith.constant 4 : index
    %c0_258 = arith.constant 0 : index
    %605 = vector.load %arg5[%c4_257, %c0_258] : memref<49x88xf32, #tpu.memory_space<vmem>>, vector<1x88xf32>
    %606 = vector.broadcast %605 : vector<1x88xf32> to vector<16x88xf32>
    %607 = arith.mulf %606, %600 : vector<16x88xf32>
    %608 = arith.addf %599, %607 : vector<16x88xf32>
    %c0_259 = arith.constant 0 : index
    %c5_260 = arith.constant 5 : index
    %609 = vector.load %arg15[%c0_259, %c5_260] : memref<22x94xf32, #tpu.memory_space<vmem>>, vector<16x88xf32>
    %c5_261 = arith.constant 5 : index
    %c0_262 = arith.constant 0 : index
    %610 = vector.load %arg4[%c5_261, %c0_262] : memref<49x88xf32, #tpu.memory_space<vmem>>, vector<1x88xf32>
    %611 = vector.broadcast %610 : vector<1x88xf32> to vector<16x88xf32>
    %612 = arith.mulf %611, %609 : vector<16x88xf32>
    %613 = arith.addf %604, %612 : vector<16x88xf32>
    %c5_263 = arith.constant 5 : index
    %c0_264 = arith.constant 0 : index
    %614 = vector.load %arg5[%c5_263, %c0_264] : memref<49x88xf32, #tpu.memory_space<vmem>>, vector<1x88xf32>
    %615 = vector.broadcast %614 : vector<1x88xf32> to vector<16x88xf32>
    %616 = arith.mulf %615, %609 : vector<16x88xf32>
    %617 = arith.addf %608, %616 : vector<16x88xf32>
    %c0_265 = arith.constant 0 : index
    %c6_266 = arith.constant 6 : index
    %618 = vector.load %arg15[%c0_265, %c6_266] : memref<22x94xf32, #tpu.memory_space<vmem>>, vector<16x88xf32>
    %c6_267 = arith.constant 6 : index
    %c0_268 = arith.constant 0 : index
    %619 = vector.load %arg4[%c6_267, %c0_268] : memref<49x88xf32, #tpu.memory_space<vmem>>, vector<1x88xf32>
    %620 = vector.broadcast %619 : vector<1x88xf32> to vector<16x88xf32>
    %621 = arith.mulf %620, %618 : vector<16x88xf32>
    %622 = arith.addf %613, %621 : vector<16x88xf32>
    %c6_269 = arith.constant 6 : index
    %c0_270 = arith.constant 0 : index
    %623 = vector.load %arg5[%c6_269, %c0_270] : memref<49x88xf32, #tpu.memory_space<vmem>>, vector<1x88xf32>
    %624 = vector.broadcast %623 : vector<1x88xf32> to vector<16x88xf32>
    %625 = arith.mulf %624, %618 : vector<16x88xf32>
    %626 = arith.addf %617, %625 : vector<16x88xf32>
    %c1_271 = arith.constant 1 : index
    %c0_272 = arith.constant 0 : index
    %627 = vector.load %arg15[%c1_271, %c0_272] : memref<22x94xf32, #tpu.memory_space<vmem>>, vector<16x88xf32>
    %c7 = arith.constant 7 : index
    %c0_273 = arith.constant 0 : index
    %628 = vector.load %arg4[%c7, %c0_273] : memref<49x88xf32, #tpu.memory_space<vmem>>, vector<1x88xf32>
    %629 = vector.broadcast %628 : vector<1x88xf32> to vector<16x88xf32>
    %630 = arith.mulf %629, %627 : vector<16x88xf32>
    %631 = arith.addf %622, %630 : vector<16x88xf32>
    %c7_274 = arith.constant 7 : index
    %c0_275 = arith.constant 0 : index
    %632 = vector.load %arg5[%c7_274, %c0_275] : memref<49x88xf32, #tpu.memory_space<vmem>>, vector<1x88xf32>
    %633 = vector.broadcast %632 : vector<1x88xf32> to vector<16x88xf32>
    %634 = arith.mulf %633, %627 : vector<16x88xf32>
    %635 = arith.addf %626, %634 : vector<16x88xf32>
    %c1_276 = arith.constant 1 : index
    %c1_277 = arith.constant 1 : index
    %636 = vector.load %arg15[%c1_276, %c1_277] : memref<22x94xf32, #tpu.memory_space<vmem>>, vector<16x88xf32>
    %c8 = arith.constant 8 : index
    %c0_278 = arith.constant 0 : index
    %637 = vector.load %arg4[%c8, %c0_278] : memref<49x88xf32, #tpu.memory_space<vmem>>, vector<1x88xf32>
    %638 = vector.broadcast %637 : vector<1x88xf32> to vector<16x88xf32>
    %639 = arith.mulf %638, %636 : vector<16x88xf32>
    %640 = arith.addf %631, %639 : vector<16x88xf32>
    %c8_279 = arith.constant 8 : index
    %c0_280 = arith.constant 0 : index
    %641 = vector.load %arg5[%c8_279, %c0_280] : memref<49x88xf32, #tpu.memory_space<vmem>>, vector<1x88xf32>
    %642 = vector.broadcast %641 : vector<1x88xf32> to vector<16x88xf32>
    %643 = arith.mulf %642, %636 : vector<16x88xf32>
    %644 = arith.addf %635, %643 : vector<16x88xf32>
    %c1_281 = arith.constant 1 : index
    %c2_282 = arith.constant 2 : index
    %645 = vector.load %arg15[%c1_281, %c2_282] : memref<22x94xf32, #tpu.memory_space<vmem>>, vector<16x88xf32>
    %c9 = arith.constant 9 : index
    %c0_283 = arith.constant 0 : index
    %646 = vector.load %arg4[%c9, %c0_283] : memref<49x88xf32, #tpu.memory_space<vmem>>, vector<1x88xf32>
    %647 = vector.broadcast %646 : vector<1x88xf32> to vector<16x88xf32>
    %648 = arith.mulf %647, %645 : vector<16x88xf32>
    %649 = arith.addf %640, %648 : vector<16x88xf32>
    %c9_284 = arith.constant 9 : index
    %c0_285 = arith.constant 0 : index
    %650 = vector.load %arg5[%c9_284, %c0_285] : memref<49x88xf32, #tpu.memory_space<vmem>>, vector<1x88xf32>
    %651 = vector.broadcast %650 : vector<1x88xf32> to vector<16x88xf32>
    %652 = arith.mulf %651, %645 : vector<16x88xf32>
    %653 = arith.addf %644, %652 : vector<16x88xf32>
    %c1_286 = arith.constant 1 : index
    %c3_287 = arith.constant 3 : index
    %654 = vector.load %arg15[%c1_286, %c3_287] : memref<22x94xf32, #tpu.memory_space<vmem>>, vector<16x88xf32>
    %c10 = arith.constant 10 : index
    %c0_288 = arith.constant 0 : index
    %655 = vector.load %arg4[%c10, %c0_288] : memref<49x88xf32, #tpu.memory_space<vmem>>, vector<1x88xf32>
    %656 = vector.broadcast %655 : vector<1x88xf32> to vector<16x88xf32>
    %657 = arith.mulf %656, %654 : vector<16x88xf32>
    %658 = arith.addf %649, %657 : vector<16x88xf32>
    %c10_289 = arith.constant 10 : index
    %c0_290 = arith.constant 0 : index
    %659 = vector.load %arg5[%c10_289, %c0_290] : memref<49x88xf32, #tpu.memory_space<vmem>>, vector<1x88xf32>
    %660 = vector.broadcast %659 : vector<1x88xf32> to vector<16x88xf32>
    %661 = arith.mulf %660, %654 : vector<16x88xf32>
    %662 = arith.addf %653, %661 : vector<16x88xf32>
    %c1_291 = arith.constant 1 : index
    %c4_292 = arith.constant 4 : index
    %663 = vector.load %arg15[%c1_291, %c4_292] : memref<22x94xf32, #tpu.memory_space<vmem>>, vector<16x88xf32>
    %c11 = arith.constant 11 : index
    %c0_293 = arith.constant 0 : index
    %664 = vector.load %arg4[%c11, %c0_293] : memref<49x88xf32, #tpu.memory_space<vmem>>, vector<1x88xf32>
    %665 = vector.broadcast %664 : vector<1x88xf32> to vector<16x88xf32>
    %666 = arith.mulf %665, %663 : vector<16x88xf32>
    %667 = arith.addf %658, %666 : vector<16x88xf32>
    %c11_294 = arith.constant 11 : index
    %c0_295 = arith.constant 0 : index
    %668 = vector.load %arg5[%c11_294, %c0_295] : memref<49x88xf32, #tpu.memory_space<vmem>>, vector<1x88xf32>
    %669 = vector.broadcast %668 : vector<1x88xf32> to vector<16x88xf32>
    %670 = arith.mulf %669, %663 : vector<16x88xf32>
    %671 = arith.addf %662, %670 : vector<16x88xf32>
    %c1_296 = arith.constant 1 : index
    %c5_297 = arith.constant 5 : index
    %672 = vector.load %arg15[%c1_296, %c5_297] : memref<22x94xf32, #tpu.memory_space<vmem>>, vector<16x88xf32>
    %c12 = arith.constant 12 : index
    %c0_298 = arith.constant 0 : index
    %673 = vector.load %arg4[%c12, %c0_298] : memref<49x88xf32, #tpu.memory_space<vmem>>, vector<1x88xf32>
    %674 = vector.broadcast %673 : vector<1x88xf32> to vector<16x88xf32>
    %675 = arith.mulf %674, %672 : vector<16x88xf32>
    %676 = arith.addf %667, %675 : vector<16x88xf32>
    %c12_299 = arith.constant 12 : index
    %c0_300 = arith.constant 0 : index
    %677 = vector.load %arg5[%c12_299, %c0_300] : memref<49x88xf32, #tpu.memory_space<vmem>>, vector<1x88xf32>
    %678 = vector.broadcast %677 : vector<1x88xf32> to vector<16x88xf32>
    %679 = arith.mulf %678, %672 : vector<16x88xf32>
    %680 = arith.addf %671, %679 : vector<16x88xf32>
    %c1_301 = arith.constant 1 : index
    %c6_302 = arith.constant 6 : index
    %681 = vector.load %arg15[%c1_301, %c6_302] : memref<22x94xf32, #tpu.memory_space<vmem>>, vector<16x88xf32>
    %c13 = arith.constant 13 : index
    %c0_303 = arith.constant 0 : index
    %682 = vector.load %arg4[%c13, %c0_303] : memref<49x88xf32, #tpu.memory_space<vmem>>, vector<1x88xf32>
    %683 = vector.broadcast %682 : vector<1x88xf32> to vector<16x88xf32>
    %684 = arith.mulf %683, %681 : vector<16x88xf32>
    %685 = arith.addf %676, %684 : vector<16x88xf32>
    %c13_304 = arith.constant 13 : index
    %c0_305 = arith.constant 0 : index
    %686 = vector.load %arg5[%c13_304, %c0_305] : memref<49x88xf32, #tpu.memory_space<vmem>>, vector<1x88xf32>
    %687 = vector.broadcast %686 : vector<1x88xf32> to vector<16x88xf32>
    %688 = arith.mulf %687, %681 : vector<16x88xf32>
    %689 = arith.addf %680, %688 : vector<16x88xf32>
    %c2_306 = arith.constant 2 : index
    %c0_307 = arith.constant 0 : index
    %690 = vector.load %arg15[%c2_306, %c0_307] : memref<22x94xf32, #tpu.memory_space<vmem>>, vector<16x88xf32>
    %c14 = arith.constant 14 : index
    %c0_308 = arith.constant 0 : index
    %691 = vector.load %arg4[%c14, %c0_308] : memref<49x88xf32, #tpu.memory_space<vmem>>, vector<1x88xf32>
    %692 = vector.broadcast %691 : vector<1x88xf32> to vector<16x88xf32>
    %693 = arith.mulf %692, %690 : vector<16x88xf32>
    %694 = arith.addf %685, %693 : vector<16x88xf32>
    %c14_309 = arith.constant 14 : index
    %c0_310 = arith.constant 0 : index
    %695 = vector.load %arg5[%c14_309, %c0_310] : memref<49x88xf32, #tpu.memory_space<vmem>>, vector<1x88xf32>
    %696 = vector.broadcast %695 : vector<1x88xf32> to vector<16x88xf32>
    %697 = arith.mulf %696, %690 : vector<16x88xf32>
    %698 = arith.addf %689, %697 : vector<16x88xf32>
    %c2_311 = arith.constant 2 : index
    %c1_312 = arith.constant 1 : index
    %699 = vector.load %arg15[%c2_311, %c1_312] : memref<22x94xf32, #tpu.memory_space<vmem>>, vector<16x88xf32>
    %c15 = arith.constant 15 : index
    %c0_313 = arith.constant 0 : index
    %700 = vector.load %arg4[%c15, %c0_313] : memref<49x88xf32, #tpu.memory_space<vmem>>, vector<1x88xf32>
    %701 = vector.broadcast %700 : vector<1x88xf32> to vector<16x88xf32>
    %702 = arith.mulf %701, %699 : vector<16x88xf32>
    %703 = arith.addf %694, %702 : vector<16x88xf32>
    %c15_314 = arith.constant 15 : index
    %c0_315 = arith.constant 0 : index
    %704 = vector.load %arg5[%c15_314, %c0_315] : memref<49x88xf32, #tpu.memory_space<vmem>>, vector<1x88xf32>
    %705 = vector.broadcast %704 : vector<1x88xf32> to vector<16x88xf32>
    %706 = arith.mulf %705, %699 : vector<16x88xf32>
    %707 = arith.addf %698, %706 : vector<16x88xf32>
    %c2_316 = arith.constant 2 : index
    %c2_317 = arith.constant 2 : index
    %708 = vector.load %arg15[%c2_316, %c2_317] : memref<22x94xf32, #tpu.memory_space<vmem>>, vector<16x88xf32>
    %c16 = arith.constant 16 : index
    %c0_318 = arith.constant 0 : index
    %709 = vector.load %arg4[%c16, %c0_318] : memref<49x88xf32, #tpu.memory_space<vmem>>, vector<1x88xf32>
    %710 = vector.broadcast %709 : vector<1x88xf32> to vector<16x88xf32>
    %711 = arith.mulf %710, %708 : vector<16x88xf32>
    %712 = arith.addf %703, %711 : vector<16x88xf32>
    %c16_319 = arith.constant 16 : index
    %c0_320 = arith.constant 0 : index
    %713 = vector.load %arg5[%c16_319, %c0_320] : memref<49x88xf32, #tpu.memory_space<vmem>>, vector<1x88xf32>
    %714 = vector.broadcast %713 : vector<1x88xf32> to vector<16x88xf32>
    %715 = arith.mulf %714, %708 : vector<16x88xf32>
    %716 = arith.addf %707, %715 : vector<16x88xf32>
    %c2_321 = arith.constant 2 : index
    %c3_322 = arith.constant 3 : index
    %717 = vector.load %arg15[%c2_321, %c3_322] : memref<22x94xf32, #tpu.memory_space<vmem>>, vector<16x88xf32>
    %c17 = arith.constant 17 : index
    %c0_323 = arith.constant 0 : index
    %718 = vector.load %arg4[%c17, %c0_323] : memref<49x88xf32, #tpu.memory_space<vmem>>, vector<1x88xf32>
    %719 = vector.broadcast %718 : vector<1x88xf32> to vector<16x88xf32>
    %720 = arith.mulf %719, %717 : vector<16x88xf32>
    %721 = arith.addf %712, %720 : vector<16x88xf32>
    %c17_324 = arith.constant 17 : index
    %c0_325 = arith.constant 0 : index
    %722 = vector.load %arg5[%c17_324, %c0_325] : memref<49x88xf32, #tpu.memory_space<vmem>>, vector<1x88xf32>
    %723 = vector.broadcast %722 : vector<1x88xf32> to vector<16x88xf32>
    %724 = arith.mulf %723, %717 : vector<16x88xf32>
    %725 = arith.addf %716, %724 : vector<16x88xf32>
    %c2_326 = arith.constant 2 : index
    %c4_327 = arith.constant 4 : index
    %726 = vector.load %arg15[%c2_326, %c4_327] : memref<22x94xf32, #tpu.memory_space<vmem>>, vector<16x88xf32>
    %c18 = arith.constant 18 : index
    %c0_328 = arith.constant 0 : index
    %727 = vector.load %arg4[%c18, %c0_328] : memref<49x88xf32, #tpu.memory_space<vmem>>, vector<1x88xf32>
    %728 = vector.broadcast %727 : vector<1x88xf32> to vector<16x88xf32>
    %729 = arith.mulf %728, %726 : vector<16x88xf32>
    %730 = arith.addf %721, %729 : vector<16x88xf32>
    %c18_329 = arith.constant 18 : index
    %c0_330 = arith.constant 0 : index
    %731 = vector.load %arg5[%c18_329, %c0_330] : memref<49x88xf32, #tpu.memory_space<vmem>>, vector<1x88xf32>
    %732 = vector.broadcast %731 : vector<1x88xf32> to vector<16x88xf32>
    %733 = arith.mulf %732, %726 : vector<16x88xf32>
    %734 = arith.addf %725, %733 : vector<16x88xf32>
    %c2_331 = arith.constant 2 : index
    %c5_332 = arith.constant 5 : index
    %735 = vector.load %arg15[%c2_331, %c5_332] : memref<22x94xf32, #tpu.memory_space<vmem>>, vector<16x88xf32>
    %c19_333 = arith.constant 19 : index
    %c0_334 = arith.constant 0 : index
    %736 = vector.load %arg4[%c19_333, %c0_334] : memref<49x88xf32, #tpu.memory_space<vmem>>, vector<1x88xf32>
    %737 = vector.broadcast %736 : vector<1x88xf32> to vector<16x88xf32>
    %738 = arith.mulf %737, %735 : vector<16x88xf32>
    %739 = arith.addf %730, %738 : vector<16x88xf32>
    %c19_335 = arith.constant 19 : index
    %c0_336 = arith.constant 0 : index
    %740 = vector.load %arg5[%c19_335, %c0_336] : memref<49x88xf32, #tpu.memory_space<vmem>>, vector<1x88xf32>
    %741 = vector.broadcast %740 : vector<1x88xf32> to vector<16x88xf32>
    %742 = arith.mulf %741, %735 : vector<16x88xf32>
    %743 = arith.addf %734, %742 : vector<16x88xf32>
    %c2_337 = arith.constant 2 : index
    %c6_338 = arith.constant 6 : index
    %744 = vector.load %arg15[%c2_337, %c6_338] : memref<22x94xf32, #tpu.memory_space<vmem>>, vector<16x88xf32>
    %c20 = arith.constant 20 : index
    %c0_339 = arith.constant 0 : index
    %745 = vector.load %arg4[%c20, %c0_339] : memref<49x88xf32, #tpu.memory_space<vmem>>, vector<1x88xf32>
    %746 = vector.broadcast %745 : vector<1x88xf32> to vector<16x88xf32>
    %747 = arith.mulf %746, %744 : vector<16x88xf32>
    %748 = arith.addf %739, %747 : vector<16x88xf32>
    %c20_340 = arith.constant 20 : index
    %c0_341 = arith.constant 0 : index
    %749 = vector.load %arg5[%c20_340, %c0_341] : memref<49x88xf32, #tpu.memory_space<vmem>>, vector<1x88xf32>
    %750 = vector.broadcast %749 : vector<1x88xf32> to vector<16x88xf32>
    %751 = arith.mulf %750, %744 : vector<16x88xf32>
    %752 = arith.addf %743, %751 : vector<16x88xf32>
    %c3_342 = arith.constant 3 : index
    %c0_343 = arith.constant 0 : index
    %753 = vector.load %arg15[%c3_342, %c0_343] : memref<22x94xf32, #tpu.memory_space<vmem>>, vector<16x88xf32>
    %c21 = arith.constant 21 : index
    %c0_344 = arith.constant 0 : index
    %754 = vector.load %arg4[%c21, %c0_344] : memref<49x88xf32, #tpu.memory_space<vmem>>, vector<1x88xf32>
    %755 = vector.broadcast %754 : vector<1x88xf32> to vector<16x88xf32>
    %756 = arith.mulf %755, %753 : vector<16x88xf32>
    %757 = arith.addf %748, %756 : vector<16x88xf32>
    %c21_345 = arith.constant 21 : index
    %c0_346 = arith.constant 0 : index
    %758 = vector.load %arg5[%c21_345, %c0_346] : memref<49x88xf32, #tpu.memory_space<vmem>>, vector<1x88xf32>
    %759 = vector.broadcast %758 : vector<1x88xf32> to vector<16x88xf32>
    %760 = arith.mulf %759, %753 : vector<16x88xf32>
    %761 = arith.addf %752, %760 : vector<16x88xf32>
    %c3_347 = arith.constant 3 : index
    %c1_348 = arith.constant 1 : index
    %762 = vector.load %arg15[%c3_347, %c1_348] : memref<22x94xf32, #tpu.memory_space<vmem>>, vector<16x88xf32>
    %c22 = arith.constant 22 : index
    %c0_349 = arith.constant 0 : index
    %763 = vector.load %arg4[%c22, %c0_349] : memref<49x88xf32, #tpu.memory_space<vmem>>, vector<1x88xf32>
    %764 = vector.broadcast %763 : vector<1x88xf32> to vector<16x88xf32>
    %765 = arith.mulf %764, %762 : vector<16x88xf32>
    %766 = arith.addf %757, %765 : vector<16x88xf32>
    %c22_350 = arith.constant 22 : index
    %c0_351 = arith.constant 0 : index
    %767 = vector.load %arg5[%c22_350, %c0_351] : memref<49x88xf32, #tpu.memory_space<vmem>>, vector<1x88xf32>
    %768 = vector.broadcast %767 : vector<1x88xf32> to vector<16x88xf32>
    %769 = arith.mulf %768, %762 : vector<16x88xf32>
    %770 = arith.addf %761, %769 : vector<16x88xf32>
    %c3_352 = arith.constant 3 : index
    %c2_353 = arith.constant 2 : index
    %771 = vector.load %arg15[%c3_352, %c2_353] : memref<22x94xf32, #tpu.memory_space<vmem>>, vector<16x88xf32>
    %c23 = arith.constant 23 : index
    %c0_354 = arith.constant 0 : index
    %772 = vector.load %arg4[%c23, %c0_354] : memref<49x88xf32, #tpu.memory_space<vmem>>, vector<1x88xf32>
    %773 = vector.broadcast %772 : vector<1x88xf32> to vector<16x88xf32>
    %774 = arith.mulf %773, %771 : vector<16x88xf32>
    %775 = arith.addf %766, %774 : vector<16x88xf32>
    %c23_355 = arith.constant 23 : index
    %c0_356 = arith.constant 0 : index
    %776 = vector.load %arg5[%c23_355, %c0_356] : memref<49x88xf32, #tpu.memory_space<vmem>>, vector<1x88xf32>
    %777 = vector.broadcast %776 : vector<1x88xf32> to vector<16x88xf32>
    %778 = arith.mulf %777, %771 : vector<16x88xf32>
    %779 = arith.addf %770, %778 : vector<16x88xf32>
    %c3_357 = arith.constant 3 : index
    %c3_358 = arith.constant 3 : index
    %780 = vector.load %arg15[%c3_357, %c3_358] : memref<22x94xf32, #tpu.memory_space<vmem>>, vector<16x88xf32>
    %c24_359 = arith.constant 24 : index
    %c0_360 = arith.constant 0 : index
    %781 = vector.load %arg4[%c24_359, %c0_360] : memref<49x88xf32, #tpu.memory_space<vmem>>, vector<1x88xf32>
    %782 = vector.broadcast %781 : vector<1x88xf32> to vector<16x88xf32>
    %783 = arith.mulf %782, %780 : vector<16x88xf32>
    %784 = arith.addf %775, %783 : vector<16x88xf32>
    %c24_361 = arith.constant 24 : index
    %c0_362 = arith.constant 0 : index
    %785 = vector.load %arg5[%c24_361, %c0_362] : memref<49x88xf32, #tpu.memory_space<vmem>>, vector<1x88xf32>
    %786 = vector.broadcast %785 : vector<1x88xf32> to vector<16x88xf32>
    %787 = arith.mulf %786, %780 : vector<16x88xf32>
    %788 = arith.addf %779, %787 : vector<16x88xf32>
    %c3_363 = arith.constant 3 : index
    %c4_364 = arith.constant 4 : index
    %789 = vector.load %arg15[%c3_363, %c4_364] : memref<22x94xf32, #tpu.memory_space<vmem>>, vector<16x88xf32>
    %c25_365 = arith.constant 25 : index
    %c0_366 = arith.constant 0 : index
    %790 = vector.load %arg4[%c25_365, %c0_366] : memref<49x88xf32, #tpu.memory_space<vmem>>, vector<1x88xf32>
    %791 = vector.broadcast %790 : vector<1x88xf32> to vector<16x88xf32>
    %792 = arith.mulf %791, %789 : vector<16x88xf32>
    %793 = arith.addf %784, %792 : vector<16x88xf32>
    %c25_367 = arith.constant 25 : index
    %c0_368 = arith.constant 0 : index
    %794 = vector.load %arg5[%c25_367, %c0_368] : memref<49x88xf32, #tpu.memory_space<vmem>>, vector<1x88xf32>
    %795 = vector.broadcast %794 : vector<1x88xf32> to vector<16x88xf32>
    %796 = arith.mulf %795, %789 : vector<16x88xf32>
    %797 = arith.addf %788, %796 : vector<16x88xf32>
    %c3_369 = arith.constant 3 : index
    %c5_370 = arith.constant 5 : index
    %798 = vector.load %arg15[%c3_369, %c5_370] : memref<22x94xf32, #tpu.memory_space<vmem>>, vector<16x88xf32>
    %c26 = arith.constant 26 : index
    %c0_371 = arith.constant 0 : index
    %799 = vector.load %arg4[%c26, %c0_371] : memref<49x88xf32, #tpu.memory_space<vmem>>, vector<1x88xf32>
    %800 = vector.broadcast %799 : vector<1x88xf32> to vector<16x88xf32>
    %801 = arith.mulf %800, %798 : vector<16x88xf32>
    %802 = arith.addf %793, %801 : vector<16x88xf32>
    %c26_372 = arith.constant 26 : index
    %c0_373 = arith.constant 0 : index
    %803 = vector.load %arg5[%c26_372, %c0_373] : memref<49x88xf32, #tpu.memory_space<vmem>>, vector<1x88xf32>
    %804 = vector.broadcast %803 : vector<1x88xf32> to vector<16x88xf32>
    %805 = arith.mulf %804, %798 : vector<16x88xf32>
    %806 = arith.addf %797, %805 : vector<16x88xf32>
    %c3_374 = arith.constant 3 : index
    %c6_375 = arith.constant 6 : index
    %807 = vector.load %arg15[%c3_374, %c6_375] : memref<22x94xf32, #tpu.memory_space<vmem>>, vector<16x88xf32>
    %c27 = arith.constant 27 : index
    %c0_376 = arith.constant 0 : index
    %808 = vector.load %arg4[%c27, %c0_376] : memref<49x88xf32, #tpu.memory_space<vmem>>, vector<1x88xf32>
    %809 = vector.broadcast %808 : vector<1x88xf32> to vector<16x88xf32>
    %810 = arith.mulf %809, %807 : vector<16x88xf32>
    %811 = arith.addf %802, %810 : vector<16x88xf32>
    %c27_377 = arith.constant 27 : index
    %c0_378 = arith.constant 0 : index
    %812 = vector.load %arg5[%c27_377, %c0_378] : memref<49x88xf32, #tpu.memory_space<vmem>>, vector<1x88xf32>
    %813 = vector.broadcast %812 : vector<1x88xf32> to vector<16x88xf32>
    %814 = arith.mulf %813, %807 : vector<16x88xf32>
    %815 = arith.addf %806, %814 : vector<16x88xf32>
    %c4_379 = arith.constant 4 : index
    %c0_380 = arith.constant 0 : index
    %816 = vector.load %arg15[%c4_379, %c0_380] : memref<22x94xf32, #tpu.memory_space<vmem>>, vector<16x88xf32>
    %c28 = arith.constant 28 : index
    %c0_381 = arith.constant 0 : index
    %817 = vector.load %arg4[%c28, %c0_381] : memref<49x88xf32, #tpu.memory_space<vmem>>, vector<1x88xf32>
    %818 = vector.broadcast %817 : vector<1x88xf32> to vector<16x88xf32>
    %819 = arith.mulf %818, %816 : vector<16x88xf32>
    %820 = arith.addf %811, %819 : vector<16x88xf32>
    %c28_382 = arith.constant 28 : index
    %c0_383 = arith.constant 0 : index
    %821 = vector.load %arg5[%c28_382, %c0_383] : memref<49x88xf32, #tpu.memory_space<vmem>>, vector<1x88xf32>
    %822 = vector.broadcast %821 : vector<1x88xf32> to vector<16x88xf32>
    %823 = arith.mulf %822, %816 : vector<16x88xf32>
    %824 = arith.addf %815, %823 : vector<16x88xf32>
    %c4_384 = arith.constant 4 : index
    %c1_385 = arith.constant 1 : index
    %825 = vector.load %arg15[%c4_384, %c1_385] : memref<22x94xf32, #tpu.memory_space<vmem>>, vector<16x88xf32>
    %c29 = arith.constant 29 : index
    %c0_386 = arith.constant 0 : index
    %826 = vector.load %arg4[%c29, %c0_386] : memref<49x88xf32, #tpu.memory_space<vmem>>, vector<1x88xf32>
    %827 = vector.broadcast %826 : vector<1x88xf32> to vector<16x88xf32>
    %828 = arith.mulf %827, %825 : vector<16x88xf32>
    %829 = arith.addf %820, %828 : vector<16x88xf32>
    %c29_387 = arith.constant 29 : index
    %c0_388 = arith.constant 0 : index
    %830 = vector.load %arg5[%c29_387, %c0_388] : memref<49x88xf32, #tpu.memory_space<vmem>>, vector<1x88xf32>
    %831 = vector.broadcast %830 : vector<1x88xf32> to vector<16x88xf32>
    %832 = arith.mulf %831, %825 : vector<16x88xf32>
    %833 = arith.addf %824, %832 : vector<16x88xf32>
    %c4_389 = arith.constant 4 : index
    %c2_390 = arith.constant 2 : index
    %834 = vector.load %arg15[%c4_389, %c2_390] : memref<22x94xf32, #tpu.memory_space<vmem>>, vector<16x88xf32>
    %c30 = arith.constant 30 : index
    %c0_391 = arith.constant 0 : index
    %835 = vector.load %arg4[%c30, %c0_391] : memref<49x88xf32, #tpu.memory_space<vmem>>, vector<1x88xf32>
    %836 = vector.broadcast %835 : vector<1x88xf32> to vector<16x88xf32>
    %837 = arith.mulf %836, %834 : vector<16x88xf32>
    %838 = arith.addf %829, %837 : vector<16x88xf32>
    %c30_392 = arith.constant 30 : index
    %c0_393 = arith.constant 0 : index
    %839 = vector.load %arg5[%c30_392, %c0_393] : memref<49x88xf32, #tpu.memory_space<vmem>>, vector<1x88xf32>
    %840 = vector.broadcast %839 : vector<1x88xf32> to vector<16x88xf32>
    %841 = arith.mulf %840, %834 : vector<16x88xf32>
    %842 = arith.addf %833, %841 : vector<16x88xf32>
    %c4_394 = arith.constant 4 : index
    %c3_395 = arith.constant 3 : index
    %843 = vector.load %arg15[%c4_394, %c3_395] : memref<22x94xf32, #tpu.memory_space<vmem>>, vector<16x88xf32>
    %c31 = arith.constant 31 : index
    %c0_396 = arith.constant 0 : index
    %844 = vector.load %arg4[%c31, %c0_396] : memref<49x88xf32, #tpu.memory_space<vmem>>, vector<1x88xf32>
    %845 = vector.broadcast %844 : vector<1x88xf32> to vector<16x88xf32>
    %846 = arith.mulf %845, %843 : vector<16x88xf32>
    %847 = arith.addf %838, %846 : vector<16x88xf32>
    %c31_397 = arith.constant 31 : index
    %c0_398 = arith.constant 0 : index
    %848 = vector.load %arg5[%c31_397, %c0_398] : memref<49x88xf32, #tpu.memory_space<vmem>>, vector<1x88xf32>
    %849 = vector.broadcast %848 : vector<1x88xf32> to vector<16x88xf32>
    %850 = arith.mulf %849, %843 : vector<16x88xf32>
    %851 = arith.addf %842, %850 : vector<16x88xf32>
    %c4_399 = arith.constant 4 : index
    %c4_400 = arith.constant 4 : index
    %852 = vector.load %arg15[%c4_399, %c4_400] : memref<22x94xf32, #tpu.memory_space<vmem>>, vector<16x88xf32>
    %c32 = arith.constant 32 : index
    %c0_401 = arith.constant 0 : index
    %853 = vector.load %arg4[%c32, %c0_401] : memref<49x88xf32, #tpu.memory_space<vmem>>, vector<1x88xf32>
    %854 = vector.broadcast %853 : vector<1x88xf32> to vector<16x88xf32>
    %855 = arith.mulf %854, %852 : vector<16x88xf32>
    %856 = arith.addf %847, %855 : vector<16x88xf32>
    %c32_402 = arith.constant 32 : index
    %c0_403 = arith.constant 0 : index
    %857 = vector.load %arg5[%c32_402, %c0_403] : memref<49x88xf32, #tpu.memory_space<vmem>>, vector<1x88xf32>
    %858 = vector.broadcast %857 : vector<1x88xf32> to vector<16x88xf32>
    %859 = arith.mulf %858, %852 : vector<16x88xf32>
    %860 = arith.addf %851, %859 : vector<16x88xf32>
    %c4_404 = arith.constant 4 : index
    %c5_405 = arith.constant 5 : index
    %861 = vector.load %arg15[%c4_404, %c5_405] : memref<22x94xf32, #tpu.memory_space<vmem>>, vector<16x88xf32>
    %c33 = arith.constant 33 : index
    %c0_406 = arith.constant 0 : index
    %862 = vector.load %arg4[%c33, %c0_406] : memref<49x88xf32, #tpu.memory_space<vmem>>, vector<1x88xf32>
    %863 = vector.broadcast %862 : vector<1x88xf32> to vector<16x88xf32>
    %864 = arith.mulf %863, %861 : vector<16x88xf32>
    %865 = arith.addf %856, %864 : vector<16x88xf32>
    %c33_407 = arith.constant 33 : index
    %c0_408 = arith.constant 0 : index
    %866 = vector.load %arg5[%c33_407, %c0_408] : memref<49x88xf32, #tpu.memory_space<vmem>>, vector<1x88xf32>
    %867 = vector.broadcast %866 : vector<1x88xf32> to vector<16x88xf32>
    %868 = arith.mulf %867, %861 : vector<16x88xf32>
    %869 = arith.addf %860, %868 : vector<16x88xf32>
    %c4_409 = arith.constant 4 : index
    %c6_410 = arith.constant 6 : index
    %870 = vector.load %arg15[%c4_409, %c6_410] : memref<22x94xf32, #tpu.memory_space<vmem>>, vector<16x88xf32>
    %c34 = arith.constant 34 : index
    %c0_411 = arith.constant 0 : index
    %871 = vector.load %arg4[%c34, %c0_411] : memref<49x88xf32, #tpu.memory_space<vmem>>, vector<1x88xf32>
    %872 = vector.broadcast %871 : vector<1x88xf32> to vector<16x88xf32>
    %873 = arith.mulf %872, %870 : vector<16x88xf32>
    %874 = arith.addf %865, %873 : vector<16x88xf32>
    %c34_412 = arith.constant 34 : index
    %c0_413 = arith.constant 0 : index
    %875 = vector.load %arg5[%c34_412, %c0_413] : memref<49x88xf32, #tpu.memory_space<vmem>>, vector<1x88xf32>
    %876 = vector.broadcast %875 : vector<1x88xf32> to vector<16x88xf32>
    %877 = arith.mulf %876, %870 : vector<16x88xf32>
    %878 = arith.addf %869, %877 : vector<16x88xf32>
    %c5_414 = arith.constant 5 : index
    %c0_415 = arith.constant 0 : index
    %879 = vector.load %arg15[%c5_414, %c0_415] : memref<22x94xf32, #tpu.memory_space<vmem>>, vector<16x88xf32>
    %c35 = arith.constant 35 : index
    %c0_416 = arith.constant 0 : index
    %880 = vector.load %arg4[%c35, %c0_416] : memref<49x88xf32, #tpu.memory_space<vmem>>, vector<1x88xf32>
    %881 = vector.broadcast %880 : vector<1x88xf32> to vector<16x88xf32>
    %882 = arith.mulf %881, %879 : vector<16x88xf32>
    %883 = arith.addf %874, %882 : vector<16x88xf32>
    %c35_417 = arith.constant 35 : index
    %c0_418 = arith.constant 0 : index
    %884 = vector.load %arg5[%c35_417, %c0_418] : memref<49x88xf32, #tpu.memory_space<vmem>>, vector<1x88xf32>
    %885 = vector.broadcast %884 : vector<1x88xf32> to vector<16x88xf32>
    %886 = arith.mulf %885, %879 : vector<16x88xf32>
    %887 = arith.addf %878, %886 : vector<16x88xf32>
    %c5_419 = arith.constant 5 : index
    %c1_420 = arith.constant 1 : index
    %888 = vector.load %arg15[%c5_419, %c1_420] : memref<22x94xf32, #tpu.memory_space<vmem>>, vector<16x88xf32>
    %c36 = arith.constant 36 : index
    %c0_421 = arith.constant 0 : index
    %889 = vector.load %arg4[%c36, %c0_421] : memref<49x88xf32, #tpu.memory_space<vmem>>, vector<1x88xf32>
    %890 = vector.broadcast %889 : vector<1x88xf32> to vector<16x88xf32>
    %891 = arith.mulf %890, %888 : vector<16x88xf32>
    %892 = arith.addf %883, %891 : vector<16x88xf32>
    %c36_422 = arith.constant 36 : index
    %c0_423 = arith.constant 0 : index
    %893 = vector.load %arg5[%c36_422, %c0_423] : memref<49x88xf32, #tpu.memory_space<vmem>>, vector<1x88xf32>
    %894 = vector.broadcast %893 : vector<1x88xf32> to vector<16x88xf32>
    %895 = arith.mulf %894, %888 : vector<16x88xf32>
    %896 = arith.addf %887, %895 : vector<16x88xf32>
    %c5_424 = arith.constant 5 : index
    %c2_425 = arith.constant 2 : index
    %897 = vector.load %arg15[%c5_424, %c2_425] : memref<22x94xf32, #tpu.memory_space<vmem>>, vector<16x88xf32>
    %c37 = arith.constant 37 : index
    %c0_426 = arith.constant 0 : index
    %898 = vector.load %arg4[%c37, %c0_426] : memref<49x88xf32, #tpu.memory_space<vmem>>, vector<1x88xf32>
    %899 = vector.broadcast %898 : vector<1x88xf32> to vector<16x88xf32>
    %900 = arith.mulf %899, %897 : vector<16x88xf32>
    %901 = arith.addf %892, %900 : vector<16x88xf32>
    %c37_427 = arith.constant 37 : index
    %c0_428 = arith.constant 0 : index
    %902 = vector.load %arg5[%c37_427, %c0_428] : memref<49x88xf32, #tpu.memory_space<vmem>>, vector<1x88xf32>
    %903 = vector.broadcast %902 : vector<1x88xf32> to vector<16x88xf32>
    %904 = arith.mulf %903, %897 : vector<16x88xf32>
    %905 = arith.addf %896, %904 : vector<16x88xf32>
    %c5_429 = arith.constant 5 : index
    %c3_430 = arith.constant 3 : index
    %906 = vector.load %arg15[%c5_429, %c3_430] : memref<22x94xf32, #tpu.memory_space<vmem>>, vector<16x88xf32>
    %c38 = arith.constant 38 : index
    %c0_431 = arith.constant 0 : index
    %907 = vector.load %arg4[%c38, %c0_431] : memref<49x88xf32, #tpu.memory_space<vmem>>, vector<1x88xf32>
    %908 = vector.broadcast %907 : vector<1x88xf32> to vector<16x88xf32>
    %909 = arith.mulf %908, %906 : vector<16x88xf32>
    %910 = arith.addf %901, %909 : vector<16x88xf32>
    %c38_432 = arith.constant 38 : index
    %c0_433 = arith.constant 0 : index
    %911 = vector.load %arg5[%c38_432, %c0_433] : memref<49x88xf32, #tpu.memory_space<vmem>>, vector<1x88xf32>
    %912 = vector.broadcast %911 : vector<1x88xf32> to vector<16x88xf32>
    %913 = arith.mulf %912, %906 : vector<16x88xf32>
    %914 = arith.addf %905, %913 : vector<16x88xf32>
    %c5_434 = arith.constant 5 : index
    %c4_435 = arith.constant 4 : index
    %915 = vector.load %arg15[%c5_434, %c4_435] : memref<22x94xf32, #tpu.memory_space<vmem>>, vector<16x88xf32>
    %c39 = arith.constant 39 : index
    %c0_436 = arith.constant 0 : index
    %916 = vector.load %arg4[%c39, %c0_436] : memref<49x88xf32, #tpu.memory_space<vmem>>, vector<1x88xf32>
    %917 = vector.broadcast %916 : vector<1x88xf32> to vector<16x88xf32>
    %918 = arith.mulf %917, %915 : vector<16x88xf32>
    %919 = arith.addf %910, %918 : vector<16x88xf32>
    %c39_437 = arith.constant 39 : index
    %c0_438 = arith.constant 0 : index
    %920 = vector.load %arg5[%c39_437, %c0_438] : memref<49x88xf32, #tpu.memory_space<vmem>>, vector<1x88xf32>
    %921 = vector.broadcast %920 : vector<1x88xf32> to vector<16x88xf32>
    %922 = arith.mulf %921, %915 : vector<16x88xf32>
    %923 = arith.addf %914, %922 : vector<16x88xf32>
    %c5_439 = arith.constant 5 : index
    %c5_440 = arith.constant 5 : index
    %924 = vector.load %arg15[%c5_439, %c5_440] : memref<22x94xf32, #tpu.memory_space<vmem>>, vector<16x88xf32>
    %c40 = arith.constant 40 : index
    %c0_441 = arith.constant 0 : index
    %925 = vector.load %arg4[%c40, %c0_441] : memref<49x88xf32, #tpu.memory_space<vmem>>, vector<1x88xf32>
    %926 = vector.broadcast %925 : vector<1x88xf32> to vector<16x88xf32>
    %927 = arith.mulf %926, %924 : vector<16x88xf32>
    %928 = arith.addf %919, %927 : vector<16x88xf32>
    %c40_442 = arith.constant 40 : index
    %c0_443 = arith.constant 0 : index
    %929 = vector.load %arg5[%c40_442, %c0_443] : memref<49x88xf32, #tpu.memory_space<vmem>>, vector<1x88xf32>
    %930 = vector.broadcast %929 : vector<1x88xf32> to vector<16x88xf32>
    %931 = arith.mulf %930, %924 : vector<16x88xf32>
    %932 = arith.addf %923, %931 : vector<16x88xf32>
    %c5_444 = arith.constant 5 : index
    %c6_445 = arith.constant 6 : index
    %933 = vector.load %arg15[%c5_444, %c6_445] : memref<22x94xf32, #tpu.memory_space<vmem>>, vector<16x88xf32>
    %c41 = arith.constant 41 : index
    %c0_446 = arith.constant 0 : index
    %934 = vector.load %arg4[%c41, %c0_446] : memref<49x88xf32, #tpu.memory_space<vmem>>, vector<1x88xf32>
    %935 = vector.broadcast %934 : vector<1x88xf32> to vector<16x88xf32>
    %936 = arith.mulf %935, %933 : vector<16x88xf32>
    %937 = arith.addf %928, %936 : vector<16x88xf32>
    %c41_447 = arith.constant 41 : index
    %c0_448 = arith.constant 0 : index
    %938 = vector.load %arg5[%c41_447, %c0_448] : memref<49x88xf32, #tpu.memory_space<vmem>>, vector<1x88xf32>
    %939 = vector.broadcast %938 : vector<1x88xf32> to vector<16x88xf32>
    %940 = arith.mulf %939, %933 : vector<16x88xf32>
    %941 = arith.addf %932, %940 : vector<16x88xf32>
    %c6_449 = arith.constant 6 : index
    %c0_450 = arith.constant 0 : index
    %942 = vector.load %arg15[%c6_449, %c0_450] : memref<22x94xf32, #tpu.memory_space<vmem>>, vector<16x88xf32>
    %c42 = arith.constant 42 : index
    %c0_451 = arith.constant 0 : index
    %943 = vector.load %arg4[%c42, %c0_451] : memref<49x88xf32, #tpu.memory_space<vmem>>, vector<1x88xf32>
    %944 = vector.broadcast %943 : vector<1x88xf32> to vector<16x88xf32>
    %945 = arith.mulf %944, %942 : vector<16x88xf32>
    %946 = arith.addf %937, %945 : vector<16x88xf32>
    %c42_452 = arith.constant 42 : index
    %c0_453 = arith.constant 0 : index
    %947 = vector.load %arg5[%c42_452, %c0_453] : memref<49x88xf32, #tpu.memory_space<vmem>>, vector<1x88xf32>
    %948 = vector.broadcast %947 : vector<1x88xf32> to vector<16x88xf32>
    %949 = arith.mulf %948, %942 : vector<16x88xf32>
    %950 = arith.addf %941, %949 : vector<16x88xf32>
    %c6_454 = arith.constant 6 : index
    %c1_455 = arith.constant 1 : index
    %951 = vector.load %arg15[%c6_454, %c1_455] : memref<22x94xf32, #tpu.memory_space<vmem>>, vector<16x88xf32>
    %c43 = arith.constant 43 : index
    %c0_456 = arith.constant 0 : index
    %952 = vector.load %arg4[%c43, %c0_456] : memref<49x88xf32, #tpu.memory_space<vmem>>, vector<1x88xf32>
    %953 = vector.broadcast %952 : vector<1x88xf32> to vector<16x88xf32>
    %954 = arith.mulf %953, %951 : vector<16x88xf32>
    %955 = arith.addf %946, %954 : vector<16x88xf32>
    %c43_457 = arith.constant 43 : index
    %c0_458 = arith.constant 0 : index
    %956 = vector.load %arg5[%c43_457, %c0_458] : memref<49x88xf32, #tpu.memory_space<vmem>>, vector<1x88xf32>
    %957 = vector.broadcast %956 : vector<1x88xf32> to vector<16x88xf32>
    %958 = arith.mulf %957, %951 : vector<16x88xf32>
    %959 = arith.addf %950, %958 : vector<16x88xf32>
    %c6_459 = arith.constant 6 : index
    %c2_460 = arith.constant 2 : index
    %960 = vector.load %arg15[%c6_459, %c2_460] : memref<22x94xf32, #tpu.memory_space<vmem>>, vector<16x88xf32>
    %c44 = arith.constant 44 : index
    %c0_461 = arith.constant 0 : index
    %961 = vector.load %arg4[%c44, %c0_461] : memref<49x88xf32, #tpu.memory_space<vmem>>, vector<1x88xf32>
    %962 = vector.broadcast %961 : vector<1x88xf32> to vector<16x88xf32>
    %963 = arith.mulf %962, %960 : vector<16x88xf32>
    %964 = arith.addf %955, %963 : vector<16x88xf32>
    %c44_462 = arith.constant 44 : index
    %c0_463 = arith.constant 0 : index
    %965 = vector.load %arg5[%c44_462, %c0_463] : memref<49x88xf32, #tpu.memory_space<vmem>>, vector<1x88xf32>
    %966 = vector.broadcast %965 : vector<1x88xf32> to vector<16x88xf32>
    %967 = arith.mulf %966, %960 : vector<16x88xf32>
    %968 = arith.addf %959, %967 : vector<16x88xf32>
    %c6_464 = arith.constant 6 : index
    %c3_465 = arith.constant 3 : index
    %969 = vector.load %arg15[%c6_464, %c3_465] : memref<22x94xf32, #tpu.memory_space<vmem>>, vector<16x88xf32>
    %c45 = arith.constant 45 : index
    %c0_466 = arith.constant 0 : index
    %970 = vector.load %arg4[%c45, %c0_466] : memref<49x88xf32, #tpu.memory_space<vmem>>, vector<1x88xf32>
    %971 = vector.broadcast %970 : vector<1x88xf32> to vector<16x88xf32>
    %972 = arith.mulf %971, %969 : vector<16x88xf32>
    %973 = arith.addf %964, %972 : vector<16x88xf32>
    %c45_467 = arith.constant 45 : index
    %c0_468 = arith.constant 0 : index
    %974 = vector.load %arg5[%c45_467, %c0_468] : memref<49x88xf32, #tpu.memory_space<vmem>>, vector<1x88xf32>
    %975 = vector.broadcast %974 : vector<1x88xf32> to vector<16x88xf32>
    %976 = arith.mulf %975, %969 : vector<16x88xf32>
    %977 = arith.addf %968, %976 : vector<16x88xf32>
    %c6_469 = arith.constant 6 : index
    %c4_470 = arith.constant 4 : index
    %978 = vector.load %arg15[%c6_469, %c4_470] : memref<22x94xf32, #tpu.memory_space<vmem>>, vector<16x88xf32>
    %c46 = arith.constant 46 : index
    %c0_471 = arith.constant 0 : index
    %979 = vector.load %arg4[%c46, %c0_471] : memref<49x88xf32, #tpu.memory_space<vmem>>, vector<1x88xf32>
    %980 = vector.broadcast %979 : vector<1x88xf32> to vector<16x88xf32>
    %981 = arith.mulf %980, %978 : vector<16x88xf32>
    %982 = arith.addf %973, %981 : vector<16x88xf32>
    %c46_472 = arith.constant 46 : index
    %c0_473 = arith.constant 0 : index
    %983 = vector.load %arg5[%c46_472, %c0_473] : memref<49x88xf32, #tpu.memory_space<vmem>>, vector<1x88xf32>
    %984 = vector.broadcast %983 : vector<1x88xf32> to vector<16x88xf32>
    %985 = arith.mulf %984, %978 : vector<16x88xf32>
    %986 = arith.addf %977, %985 : vector<16x88xf32>
    %c6_474 = arith.constant 6 : index
    %c5_475 = arith.constant 5 : index
    %987 = vector.load %arg15[%c6_474, %c5_475] : memref<22x94xf32, #tpu.memory_space<vmem>>, vector<16x88xf32>
    %c47_476 = arith.constant 47 : index
    %c0_477 = arith.constant 0 : index
    %988 = vector.load %arg4[%c47_476, %c0_477] : memref<49x88xf32, #tpu.memory_space<vmem>>, vector<1x88xf32>
    %989 = vector.broadcast %988 : vector<1x88xf32> to vector<16x88xf32>
    %990 = arith.mulf %989, %987 : vector<16x88xf32>
    %991 = arith.addf %982, %990 : vector<16x88xf32>
    %c47_478 = arith.constant 47 : index
    %c0_479 = arith.constant 0 : index
    %992 = vector.load %arg5[%c47_478, %c0_479] : memref<49x88xf32, #tpu.memory_space<vmem>>, vector<1x88xf32>
    %993 = vector.broadcast %992 : vector<1x88xf32> to vector<16x88xf32>
    %994 = arith.mulf %993, %987 : vector<16x88xf32>
    %995 = arith.addf %986, %994 : vector<16x88xf32>
    %c6_480 = arith.constant 6 : index
    %c6_481 = arith.constant 6 : index
    %996 = vector.load %arg15[%c6_480, %c6_481] : memref<22x94xf32, #tpu.memory_space<vmem>>, vector<16x88xf32>
    %c48 = arith.constant 48 : index
    %c0_482 = arith.constant 0 : index
    %997 = vector.load %arg4[%c48, %c0_482] : memref<49x88xf32, #tpu.memory_space<vmem>>, vector<1x88xf32>
    %998 = vector.broadcast %997 : vector<1x88xf32> to vector<16x88xf32>
    %999 = arith.mulf %998, %996 : vector<16x88xf32>
    %1000 = arith.addf %991, %999 : vector<16x88xf32>
    %c48_483 = arith.constant 48 : index
    %c0_484 = arith.constant 0 : index
    %1001 = vector.load %arg5[%c48_483, %c0_484] : memref<49x88xf32, #tpu.memory_space<vmem>>, vector<1x88xf32>
    %1002 = vector.broadcast %1001 : vector<1x88xf32> to vector<16x88xf32>
    %1003 = arith.mulf %1002, %996 : vector<16x88xf32>
    %1004 = arith.addf %995, %1003 : vector<16x88xf32>
    %c0_485 = arith.constant 0 : index
    %1005 = memref.load %arg11[%c0_485] : memref<1xf32, #tpu.memory_space<smem>>
    %1006 = vector.broadcast %1005 : f32 to vector<16x16xf32>
    %c0_486 = arith.constant 0 : index
    %1007 = memref.load %arg12[%c0_486] : memref<1xf32, #tpu.memory_space<smem>>
    %1008 = vector.broadcast %1007 : f32 to vector<16x16xf32>
    %1009 = vector.extract_strided_slice %1000 {offsets = [0, 0], sizes = [16, 16], strides = [1, 1]} : vector<16x88xf32> to vector<16x16xf32>
    %1010 = arith.addf %1006, %1009 : vector<16x16xf32>
    %1011 = vector.extract_strided_slice %1004 {offsets = [0, 0], sizes = [16, 16], strides = [1, 1]} : vector<16x88xf32> to vector<16x16xf32>
    %1012 = arith.addf %1008, %1011 : vector<16x16xf32>
    %1013 = vector.extract_strided_slice %1000 {offsets = [0, 22], sizes = [16, 16], strides = [1, 1]} : vector<16x88xf32> to vector<16x16xf32>
    %1014 = arith.addf %1010, %1013 : vector<16x16xf32>
    %1015 = vector.extract_strided_slice %1004 {offsets = [0, 22], sizes = [16, 16], strides = [1, 1]} : vector<16x88xf32> to vector<16x16xf32>
    %1016 = arith.addf %1012, %1015 : vector<16x16xf32>
    %1017 = vector.extract_strided_slice %1000 {offsets = [0, 44], sizes = [16, 16], strides = [1, 1]} : vector<16x88xf32> to vector<16x16xf32>
    %1018 = arith.addf %1014, %1017 : vector<16x16xf32>
    %1019 = vector.extract_strided_slice %1004 {offsets = [0, 44], sizes = [16, 16], strides = [1, 1]} : vector<16x88xf32> to vector<16x16xf32>
    %1020 = arith.addf %1016, %1019 : vector<16x16xf32>
    %1021 = vector.extract_strided_slice %1000 {offsets = [0, 66], sizes = [16, 16], strides = [1, 1]} : vector<16x88xf32> to vector<16x16xf32>
    %1022 = arith.addf %1018, %1021 : vector<16x16xf32>
    %1023 = vector.extract_strided_slice %1004 {offsets = [0, 66], sizes = [16, 16], strides = [1, 1]} : vector<16x88xf32> to vector<16x16xf32>
    %1024 = arith.addf %1020, %1023 : vector<16x16xf32>
    %1025 = arith.maximumf %1022, %1024 : vector<16x16xf32>
    %1026 = arith.subf %1022, %1025 : vector<16x16xf32>
    %1027 = math.exp %1026 : vector<16x16xf32>
    %1028 = arith.subf %1024, %1025 : vector<16x16xf32>
    %1029 = math.exp %1028 : vector<16x16xf32>
    %1030 = arith.addf %1027, %1029 : vector<16x16xf32>
    %1031 = tpu.reciprocal %1030 {approx = true} : vector<16x16xf32> -> vector<16x16xf32>
    %1032 = arith.mulf %1027, %1031 : vector<16x16xf32>
    %1033 = arith.mulf %1029, %1031 : vector<16x16xf32>
    %1034 = tpu.concatenate %554, %554, %554, %554, %554, %554, %554, %554, %554, %554, %554, %554, %554, %554, %554, %554 in 1 : vector<1x8xf32>, vector<1x8xf32>, vector<1x8xf32>, vector<1x8xf32>, vector<1x8xf32>, vector<1x8xf32>, vector<1x8xf32>, vector<1x8xf32>, vector<1x8xf32>, vector<1x8xf32>, vector<1x8xf32>, vector<1x8xf32>, vector<1x8xf32>, vector<1x8xf32>, vector<1x8xf32>, vector<1x8xf32> -> vector<1x128xf32>
    %1035 = tpu.concatenate %555, %555, %555, %555, %555, %555, %555, %555, %555, %555, %555, %555, %555, %555, %555, %555 in 1 : vector<1x8xf32>, vector<1x8xf32>, vector<1x8xf32>, vector<1x8xf32>, vector<1x8xf32>, vector<1x8xf32>, vector<1x8xf32>, vector<1x8xf32>, vector<1x8xf32>, vector<1x8xf32>, vector<1x8xf32>, vector<1x8xf32>, vector<1x8xf32>, vector<1x8xf32>, vector<1x8xf32>, vector<1x8xf32> -> vector<1x128xf32>
    %c0_487 = arith.constant 0 : index
    %c0_488 = arith.constant 0 : index
    %1036 = vector.load %arg6[%c0_487, %c0_488] : memref<16x128xf32, #tpu.memory_space<vmem>>, vector<16x128xf32>
    %cst_489 = arith.constant dense<0.000000e+00> : vector<16x128xf32>
    %1037 = tpu.matmul %1032, %1036, %cst_489 {dimension_numbers = #tpu.dot_dimension_numbers<[1], [0], [0], [1], [0, 0, 1, 1], [], []>} : vector<16x16xf32>, vector<16x128xf32>, vector<16x128xf32> -> vector<16x128xf32>
    %c0_490 = arith.constant 0 : index
    %c0_491 = arith.constant 0 : index
    %1038 = vector.load %arg6[%c0_490, %c0_491] : memref<16x128xf32, #tpu.memory_space<vmem>>, vector<16x128xf32>
    %cst_492 = arith.constant dense<0.000000e+00> : vector<16x128xf32>
    %1039 = tpu.matmul %1033, %1038, %cst_492 {dimension_numbers = #tpu.dot_dimension_numbers<[1], [0], [0], [1], [0, 0, 1, 1], [], []>} : vector<16x16xf32>, vector<16x128xf32>, vector<16x128xf32> -> vector<16x128xf32>
    %1040 = vector.broadcast %1034 : vector<1x128xf32> to vector<16x128xf32>
    %1041 = arith.addf %1040, %1037 : vector<16x128xf32>
    %cst_493 = arith.constant 1.000000e+00 : f32
    %1042 = vector.broadcast %cst_493 : f32 to vector<16x128xf32>
    %1043 = arith.addf %1041, %1042 : vector<16x128xf32>
    %1044 = vector.broadcast %1035 : vector<1x128xf32> to vector<16x128xf32>
    %1045 = arith.addf %1044, %1039 : vector<16x128xf32>
    %cst_494 = arith.constant 1.000000e+00 : f32
    %1046 = vector.broadcast %cst_494 : f32 to vector<16x128xf32>
    %1047 = arith.addf %1045, %1046 : vector<16x128xf32>
    %1048 = arith.mulf %1043, %66 : vector<16x128xf32>
    %1049 = arith.mulf %1047, %67 : vector<16x128xf32>
    %1050 = arith.addf %1048, %1049 : vector<16x128xf32>
    %c0_495 = arith.constant 0 : index
    %c0_496 = arith.constant 0 : index
    %c0_497 = arith.constant 0 : index
    %1051 = vector.load %arg13[%c0_495, %c0_496, %c0_497] : memref<1x16x128xf32, #tpu.memory_space<vmem>>, vector<1x16x128xf32>
    %1052 = vector.shape_cast %1051 : vector<1x16x128xf32> to vector<16x128xf32>
    %1053 = vector.shape_cast %1050 : vector<16x128xf32> to vector<1x16x128xf32>
    tpu.vector_store %arg13[%c0_495, %c0_496, %c0_497], %1053 {strides = array<i32>} : memref<1x16x128xf32, #tpu.memory_space<vmem>>, vector<1x16x128xf32>,
    return
  }
  func.func @transform_0(%arg0: i32) -> (i32, i32, i32, i32) {
    %c0_i32 = arith.constant 0 : i32
    %c0_i32_0 = arith.constant 0 : i32
    %c0_i32_1 = arith.constant 0 : i32
    %c0_i32_2 = arith.constant 0 : i32
    return %arg0, %c0_i32, %c0_i32_0, %c0_i32_1 : i32, i32, i32, i32
  }
  func.func @transform_1(%arg0: i32) -> (i32, i32, i32) {
    %c0_i32 = arith.constant 0 : i32
    %c0_i32_0 = arith.constant 0 : i32
    %c0_i32_1 = arith.constant 0 : i32
    %c0_i32_2 = arith.constant 0 : i32
    return %c0_i32, %c0_i32_0, %c0_i32_1 : i32, i32, i32
  }
  func.func @transform_2(%arg0: i32) -> (i32, i32) {
    %c0_i32 = arith.constant 0 : i32
    %c0_i32_0 = arith.constant 0 : i32
    %c0_i32_1 = arith.constant 0 : i32
    return %c0_i32, %c0_i32_0 : i32, i32
  }
  func.func @transform_3(%arg0: i32) -> (i32, i32) {
    %c0_i32 = arith.constant 0 : i32
    %c0_i32_0 = arith.constant 0 : i32
    %c0_i32_1 = arith.constant 0 : i32
    return %c0_i32, %c0_i32_0 : i32, i32
  }
  func.func @transform_4(%arg0: i32) -> (i32, i32) {
    %c0_i32 = arith.constant 0 : i32
    %c0_i32_0 = arith.constant 0 : i32
    %c0_i32_1 = arith.constant 0 : i32
    return %c0_i32, %c0_i32_0 : i32, i32
  }
  func.func @transform_5(%arg0: i32) -> (i32, i32) {
    %c0_i32 = arith.constant 0 : i32
    %c0_i32_0 = arith.constant 0 : i32
    %c0_i32_1 = arith.constant 0 : i32
    return %c0_i32, %c0_i32_0 : i32, i32
  }
  func.func @transform_6(%arg0: i32) -> (i32, i32) {
    %c0_i32 = arith.constant 0 : i32
    %c0_i32_0 = arith.constant 0 : i32
    %c0_i32_1 = arith.constant 0 : i32
    return %c0_i32, %c0_i32_0 : i32, i32
  }
  func.func @transform_7(%arg0: i32) -> i32 {
    %c0_i32 = arith.constant 0 : i32
    %c0_i32_0 = arith.constant 0 : i32
    return %c0_i32 : i32
  }
  func.func @transform_8(%arg0: i32) -> (i32, i32) {
    %c0_i32 = arith.constant 0 : i32
    %c0_i32_0 = arith.constant 0 : i32
    %c0_i32_1 = arith.constant 0 : i32
    return %c0_i32, %c0_i32_0 : i32, i32
  }
  func.func @transform_9(%arg0: i32) -> i32 {
    %c0_i32 = arith.constant 0 : i32
    %c0_i32_0 = arith.constant 0 : i32
    return %c0_i32 : i32
  }
  func.func @transform_10(%arg0: i32) -> i32 {
    %c0_i32 = arith.constant 0 : i32
    %c0_i32_0 = arith.constant 0 : i32
    return %c0_i32 : i32
  }
  func.func @transform_11(%arg0: i32) -> i32 {
    %c0_i32 = arith.constant 0 : i32
    %c0_i32_0 = arith.constant 0 : i32
    return %c0_i32 : i32
  }
  func.func @transform_12(%arg0: i32) -> (i32, i32, i32) {
    %c0_i32 = arith.constant 0 : i32
    %c0_i32_0 = arith.constant 0 : i32
    %c0_i32_1 = arith.constant 0 : i32
    return %arg0, %c0_i32, %c0_i32_0 : i32, i32, i32
  }
}

</mosaic_0001>

<llo_original>
// kernel: tile.28
$region0: #{tile.28}
  #allocation0 [shape = 's32[1]{0}', space=sflag, size = 0x4, scoped, tag = 'scoped memory for tile.28']
  %s0 = inlined_call_operand.vmem [shape: f32[8], index: 0, kind: input, shape index: {}]
  %s1 = inlined_call_operand.vmem [shape: f32[16,8], index: 1, kind: output, shape index: {}]
  // Predicated region
  $region2: #{tile.28} parent=0 // pred_check
    _
  $region3: #{tile.28} parent=0 // pred_check_branch
    %3 = sbr.rel (0) target = $region5
  $region4: #{tile.28} parent=0 // pred_region
    _
  $region5: #{tile.28} parent=0 // pred_fallthru
    _
  %v4 = vld [vmem:[%s0] ss:$0 sm:$0xff]
  %5 = vst [vmem:[%s1] sm:$0xff] %v4
  %s6 = scalar_lea.vmem %s1, 8
  %7 = vst [vmem:[%s6] sm:$0xff] %v4

// kernel: tile.29
$region0: #{tile.29}
  %s0 = inlined_call_operand.vmem [shape: f32[16,8], index: 0, kind: input, shape index: {}]
  %s1 = inlined_call_operand.vmem [shape: f32[128], index: 1, kind: output, shape index: {}]
  $region1: #{tile.29} parent=0
    #allocation0 [shape = 'u8[4096]{0}', space=vmem, size = 0x1000, scoped, tag = 'scoped mem for output reshape']
    %v2 = vld [vmem:[%s0] sm:$0x1]
    %vm3 = vcmask 64512
    %4 = vst.msk [vmem:[#allocation0] sm:$0x1] %vm3, %v2
    %s5 = scalar_lea.vmem %s0, 15
    %v6 = vld [vmem:[%s5] sm:$0x1]
    %7 = vrot.lane.b32.xlu0 %v6, 120
    %v8 = vpop.permute.xlu0 %7
    %vm9 = vcmask 1048512
    %10 = vst.msk [vmem:[#allocation0] sm:$0x1] %vm9, %v8
    %s11 = scalar_lea.vmem %s0, 14
    %v12 = vld [vmem:[%s11] sm:$0x1]
    %13 = vrot.lane.b32.xlu0 %v12, 112
    %v14 = vpop.permute.xlu0 %13
    %vm15 = vcmask 982912
    %16 = vst.msk [vmem:[#allocation0] sm:$0x1] %vm15, %v14
    %s17 = scalar_lea.vmem %s0, 13
    %v18 = vld [vmem:[%s17] sm:$0x1]
    %19 = vrot.lane.b32.xlu0 %v18, 104
    %v20 = vpop.permute.xlu0 %19
    %vm21 = vcmask 917312
    %22 = vst.msk [vmem:[#allocation0] sm:$0x1] %vm21, %v20
    %s23 = scalar_lea.vmem %s0, 12
    %v24 = vld [vmem:[%s23] sm:$0x1]
    %25 = vrot.lane.b32.xlu0 %v24, 96
    %v26 = vpop.permute.xlu0 %25
    %vm27 = vcmask 851712
    %28 = vst.msk [vmem:[#allocation0] sm:$0x1] %vm27, %v26
    %s29 = scalar_lea.vmem %s0, 11
    %v30 = vld [vmem:[%s29] sm:$0x1]
    %31 = vrot.lane.b32.xlu0 %v30, 88
    %v32 = vpop.permute.xlu0 %31
    %vm33 = vcmask 786112
    %34 = vst.msk [vmem:[#allocation0] sm:$0x1] %vm33, %v32
    %s35 = scalar_lea.vmem %s0, 10
    %v36 = vld [vmem:[%s35] sm:$0x1]
    %37 = vrot.lane.b32.xlu0 %v36, 80
    %v38 = vpop.permute.xlu0 %37
    %vm39 = vcmask 720512
    %40 = vst.msk [vmem:[#allocation0] sm:$0x1] %vm39, %v38
    %s41 = scalar_lea.vmem %s0, 9
    %v42 = vld [vmem:[%s41] sm:$0x1]
    %43 = vrot.lane.b32.xlu0 %v42, 72
    %v44 = vpop.permute.xlu0 %43
    %vm45 = vcmask 654912
    %46 = vst.msk [vmem:[#allocation0] sm:$0x1] %vm45, %v44
    %s47 = scalar_lea.vmem %s0, 8
    %v48 = vld [vmem:[%s47] sm:$0x1]
    %49 = vrot.lane.b32.xlu0 %v48, 64
    %v50 = vpop.permute.xlu0 %49
    %vm51 = vcmask 589312
    %52 = vst.msk [vmem:[#allocation0] sm:$0x1] %vm51, %v50
    %s53 = scalar_lea.vmem %s0, 7
    %v54 = vld [vmem:[%s53] sm:$0x1]
    %55 = vrot.lane.b32.xlu0 %v54, 56
    %v56 = vpop.permute.xlu0 %55
    %vm57 = vcmask 523712
    %58 = vst.msk [vmem:[#allocation0] sm:$0x1] %vm57, %v56
    %s59 = scalar_lea.vmem %s0, 6
    %v60 = vld [vmem:[%s59] sm:$0x1]
    %61 = vrot.lane.b32.xlu0 %v60, 48
    %v62 = vpop.permute.xlu0 %61
    %vm63 = vcmask 458112
    %64 = vst.msk [vmem:[#allocation0] sm:$0x1] %vm63, %v62
    %s65 = scalar_lea.vmem %s0, 5
    %v66 = vld [vmem:[%s65] sm:$0x1]
    %67 = vrot.lane.b32.xlu0 %v66, 40
    %v68 = vpop.permute.xlu0 %67
    %vm69 = vcmask 392512
    %70 = vst.msk [vmem:[#allocation0] sm:$0x1] %vm69, %v68
    %s71 = scalar_lea.vmem %s0, 4
    %v72 = vld [vmem:[%s71] sm:$0x1]
    %73 = vrot.lane.b32.xlu0 %v72, 32
    %v74 = vpop.permute.xlu0 %73
    %vm75 = vcmask 326912
    %76 = vst.msk [vmem:[#allocation0] sm:$0x1] %vm75, %v74
    %s77 = scalar_lea.vmem %s0, 3
    %v78 = vld [vmem:[%s77] sm:$0x1]
    %79 = vrot.lane.b32.xlu0 %v78, 24
    %v80 = vpop.permute.xlu0 %79
    %vm81 = vcmask 261312
    %82 = vst.msk [vmem:[#allocation0] sm:$0x1] %vm81, %v80
    %s83 = scalar_lea.vmem %s0, 2
    %v84 = vld [vmem:[%s83] sm:$0x1]
    %85 = vrot.lane.b32.xlu0 %v84, 16
    %v86 = vpop.permute.xlu0 %85
    %vm87 = vcmask 195712
    %88 = vst.msk [vmem:[#allocation0] sm:$0x1] %vm87, %v86
    %s89 = scalar_lea.vmem %s0, 1
    %v90 = vld [vmem:[%s89] sm:$0x1]
    %91 = vrot.lane.b32.xlu0 %v90, 8
    %v92 = vpop.permute.xlu0 %91
    %vm93 = vcmask 130112
    %94 = vst.msk [vmem:[#allocation0] sm:$0x1] %vm93, %v92
    %s96 = sshllo.u32 0, 1
    %v98 = vld [vmem:[#allocation0] sm:%s96]
    %s99 = sshllo.u32 0, 1
    %100 = vst [vmem:[%s1] sm:%s99] %v98

// kernel: bfm_forward.1
$region0: #{bfm_forward.1}
  #allocation0 [shape = 'u32[]', space=smem, size = 0x4, offset = 0x4, fixed_abs, tag = 'smem constant byte address 0x4 - core index']
  #allocation1 [shape = 'u32[144,128]{1,0:T(1,128)}', space=vmem, size = 0x12000, scoped, tag = 'internal scratch']
  #allocation2 [shape = 'f32[2,22,176]{2,1,0:T(8,128)}', space=vmem, size = 0xc000, scoped, tag = 'scratch operand']
  #allocation3 [shape = 'f32[22,94]{1,0:T(8,128)}', space=vmem, size = 0x3000, scoped, tag = 'scratch operand']
  #allocation4 [shape = 'f32[1]{0:T(128)S(6)}', space=smem, size = 0x200, scoped, tag = 'scoped memory for bfm_forward.1']
  #allocation5 [shape = 'f32[1]{0:T(128)S(6)}', space=smem, size = 0x200, scoped, tag = 'scoped memory for bfm_forward.1']
  #allocation6 [shape = 'f32[1]{0:T(128)S(6)}', space=smem, size = 0x200, scoped, tag = 'scoped memory for bfm_forward.1']
  #allocation7 [shape = 'f32[1]{0:T(128)S(6)}', space=smem, size = 0x200, scoped, tag = 'scoped memory for bfm_forward.1']
  %s0 = inlined_call_operand.vmem [shape: f32[2,2,16,128], index: 0, kind: input, shape index: {}]
  %s1 = inlined_call_operand.vmem [shape: f32[7,176,384], index: 1, kind: input, shape index: {}]
  %s2 = inlined_call_operand.vmem [shape: f32[1,384], index: 2, kind: input, shape index: {}]
  %s3 = inlined_call_operand.vmem [shape: f32[49,88], index: 3, kind: input, shape index: {}]
  %s4 = inlined_call_operand.vmem [shape: f32[49,88], index: 4, kind: input, shape index: {}]
  %s5 = inlined_call_operand.vmem [shape: f32[16,128], index: 5, kind: input, shape index: {}]
  %s6 = inlined_call_operand.vmem [shape: f32[4,3], index: 6, kind: input, shape index: {}]
  %s7 = inlined_call_operand.<no memory space> [shape: f32[1], index: 7, kind: input, shape index: {}]
  %s8 = inlined_call_operand.vmem [shape: f32[4,3], index: 8, kind: input, shape index: {}]
  %s9 = inlined_call_operand.<no memory space> [shape: f32[1], index: 9, kind: input, shape index: {}]
  %s10 = inlined_call_operand.<no memory space> [shape: f32[1], index: 10, kind: input, shape index: {}]
  %s11 = inlined_call_operand.<no memory space> [shape: f32[1], index: 11, kind: input, shape index: {}]
  %s12 = inlined_call_operand.vmem [shape: f32[2,16,128], index: 12, kind: output, shape index: {}]
  %s13 = sld [smem:[#allocation0]]
  $region89: #{bfm_forward.1} parent=0
    _
  %s15 = ssub.s32 1, %s13
  %s16 = scalar_select 0, %s15, %s13
  %17 = sst [smem:[#allocation4]] %s7
  %18 = sst [smem:[#allocation5]] %s9
  %19 = sst [smem:[#allocation6]] %s10
  %20 = sst [smem:[#allocation7]] %s11
  $region1: #{bfm_forward.1} parent=0
    #allocation8 [shape = 'u8[2048]{0}', space=smem, size = 0x800, scoped, tag = 'input window, operand 6, single buffered']
    #allocation9 [shape = 's32[2]{0}', space=sflag, size = 0x8, scoped, tag = 'scoped memory for bfm_forward.1']
    #allocation10 [shape = 'u8[2048]{0}', space=smem, size = 0x800, scoped, tag = 'input window, operand 8, single buffered']
    #allocation11 [shape = 's32[1]{0}', space=sflag, size = 0x4, scoped, tag = 'scoped memory for bfm_forward.1']
    %21 = vsyncpa [#allocation9], 0
    %22 = vsyncpa [#allocation11], 0
    loop: start=0, step=1, limit=4
    $region2: #{bfm_forward.1} parent=1 // loop_pre_header
      _
    $region3: #{bfm_forward.1} parent=1 // loop_header
      %s24 = sphi 0, %s28
      %p25 = scmp.ge.s32.totalorder %s24, 4
      %s34 = sphi 0, %s36
      %s37 = sphi 0, %s34
      %s38 = sphi 0, %s37
      %s54 = sphi 0, %s38
      %s58 = sphi 0, %s58
      %s60 = sphi 0, %s58
      %s61 = sphi 0, %s60
      %s75 = sphi 0, %s61
      %s79 = sphi 0, %s79
      %s81 = sphi 0, %s79
      %s82 = sphi 0, %s81
      %s96 = sphi 0, %s82
      %s100 = sphi 0, %s100
      %s102 = sphi 0, %s100
      %s103 = sphi 0, %s102
      %s117 = sphi 0, %s103
      %s121 = sphi 0, %s121
      %s123 = sphi 0, %s121
      %s124 = sphi 0, %s123
      %s138 = sphi 0, %s124
      %s142 = sphi 0, %s142
      %s144 = sphi 0, %s142
      %s145 = sphi 0, %s144
      %s159 = sphi 0, %s145
      %s163 = sphi 0, %s163
      %s165 = sphi 0, %s163
      %s166 = sphi 0, %s165
      %s180 = sphi 0, %s166
      %s184 = sphi 0, %s184
      %s186 = sphi 0, %s184
      %s187 = sphi 0, %s186
      %s201 = sphi 0, %s187
      %s205 = sphi 0, %s205
      %s207 = sphi 0, %s205
      %s208 = sphi 0, %s207
      %s222 = sphi 0, %s208
      %s226 = sphi 0, %s226
      %s228 = sphi 0, %s226
      %s229 = sphi 0, %s228
      %s243 = sphi 0, %s229
      %s247 = sphi 0, %s247
      %s249 = sphi 0, %s247
      %s250 = sphi 0, %s249
      %s264 = sphi 0, %s250
      %s268 = sphi 0, %s268
      %s270 = sphi 0, %s268
      %s271 = sphi 0, %s270
      %s285 = sphi 0, %s271
      %s291 = sphi 0, %s293
      %s294 = sphi 0, %s291
      %s295 = sphi 0, %s294
      %s311 = sphi 0, %s295
    $region4: #{bfm_forward.1} parent=1 // loop_header_branch
      %27 = sbr.rel (%p25) target = $region8
    $region5: #{bfm_forward.1} parent=1 // loop_body
      %s29 = ssub.s32 %s24, 1
      %s30 = ssub.s32 %s24, 2
      %s31 = sadd.s32 %s24, 1
      %s32 = ssub.s32 %s24, %s31
      %p33 = scmp.eq.s32.totalorder %s32, 0
      %s35 = sadd.s32 %s34, 1
      %s36 = scalar_select %p33, %s34, %s35
      %p39 = pneg %p33
      %p40 = scmp.eq.s32.totalorder %s24, 1
      %p41 = por %p39, %p40
      %p42 = scmp.ne.s32.totalorder %s34, %s37
      %p43 = scmp.eq.s32.totalorder %s24, 0
      %p44 = por %p42, %p43
      %p45 = scmp.ne.s32.totalorder %s34, %s37
      %p46 = scmp.eq.s32.totalorder %s29, 1
      %p47 = por %p45, %p46
      %p48 = scmp.ne.s32.totalorder %s37, %s38
      %p49 = scmp.eq.s32.totalorder %s29, 0
      %p50 = por %p48, %p49
      %p51 = scmp.ne.s32.totalorder %s37, %s38
      %p52 = scmp.eq.s32.totalorder %s30, 1
      %p53 = por %p51, %p52
      %p55 = scmp.ne.s32.totalorder %s38, %s54
      %p56 = scmp.eq.s32.totalorder %s30, 0
      %p57 = por %p55, %p56
      %s59 = sadd.s32 %s58, 1
      %p62 = scmp.eq.s32.totalorder %s24, 1
      %p63 = scmp.ne.s32.totalorder %s58, %s60
      %p64 = scmp.eq.s32.totalorder %s24, 0
      %p65 = por %p63, %p64
      %p66 = scmp.ne.s32.totalorder %s58, %s60
      %p67 = scmp.eq.s32.totalorder %s29, 1
      %p68 = por %p66, %p67
      %p69 = scmp.ne.s32.totalorder %s60, %s61
      %p70 = scmp.eq.s32.totalorder %s29, 0
      %p71 = por %p69, %p70
      %p72 = scmp.ne.s32.totalorder %s60, %s61
      %p73 = scmp.eq.s32.totalorder %s30, 1
      %p74 = por %p72, %p73
      %p76 = scmp.ne.s32.totalorder %s61, %s75
      %p77 = scmp.eq.s32.totalorder %s30, 0
      %p78 = por %p76, %p77
      %s80 = sadd.s32 %s79, 1
      %p83 = scmp.eq.s32.totalorder %s24, 1
      %p84 = scmp.ne.s32.totalorder %s79, %s81
      %p85 = scmp.eq.s32.totalorder %s24, 0
      %p86 = por %p84, %p85
      %p87 = scmp.ne.s32.totalorder %s79, %s81
      %p88 = scmp.eq.s32.totalorder %s29, 1
      %p89 = por %p87, %p88
      %p90 = scmp.ne.s32.totalorder %s81, %s82
      %p91 = scmp.eq.s32.totalorder %s29, 0
      %p92 = por %p90, %p91
      %p93 = scmp.ne.s32.totalorder %s81, %s82
      %p94 = scmp.eq.s32.totalorder %s30, 1
      %p95 = por %p93, %p94
      %p97 = scmp.ne.s32.totalorder %s82, %s96
      %p98 = scmp.eq.s32.totalorder %s30, 0
      %p99 = por %p97, %p98
      %s101 = sadd.s32 %s100, 1
      %p104 = scmp.eq.s32.totalorder %s24, 1
      %p105 = scmp.ne.s32.totalorder %s100, %s102
      %p106 = scmp.eq.s32.totalorder %s24, 0
      %p107 = por %p105, %p106
      %p108 = scmp.ne.s32.totalorder %s100, %s102
      %p109 = scmp.eq.s32.totalorder %s29, 1
      %p110 = por %p108, %p109
      %p111 = scmp.ne.s32.totalorder %s102, %s103
      %p112 = scmp.eq.s32.totalorder %s29, 0
      %p113 = por %p111, %p112
      %p114 = scmp.ne.s32.totalorder %s102, %s103
      %p115 = scmp.eq.s32.totalorder %s30, 1
      %p116 = por %p114, %p115
      %p118 = scmp.ne.s32.totalorder %s103, %s117
      %p119 = scmp.eq.s32.totalorder %s30, 0
      %p120 = por %p118, %p119
      %s122 = sadd.s32 %s121, 1
      %p125 = scmp.eq.s32.totalorder %s24, 1
      %p126 = scmp.ne.s32.totalorder %s121, %s123
      %p127 = scmp.eq.s32.totalorder %s24, 0
      %p128 = por %p126, %p127
      %p129 = scmp.ne.s32.totalorder %s121, %s123
      %p130 = scmp.eq.s32.totalorder %s29, 1
      %p131 = por %p129, %p130
      %p132 = scmp.ne.s32.totalorder %s123, %s124
      %p133 = scmp.eq.s32.totalorder %s29, 0
      %p134 = por %p132, %p133
      %p135 = scmp.ne.s32.totalorder %s123, %s124
      %p136 = scmp.eq.s32.totalorder %s30, 1
      %p137 = por %p135, %p136
      %p139 = scmp.ne.s32.totalorder %s124, %s138
      %p140 = scmp.eq.s32.totalorder %s30, 0
      %p141 = por %p139, %p140
      %s143 = sadd.s32 %s142, 1
      %p146 = scmp.eq.s32.totalorder %s24, 1
      %p147 = scmp.ne.s32.totalorder %s142, %s144
      %p148 = scmp.eq.s32.totalorder %s24, 0
      %p149 = por %p147, %p148
      %p150 = scmp.ne.s32.totalorder %s142, %s144
      %p151 = scmp.eq.s32.totalorder %s29, 1
      %p152 = por %p150, %p151
      %p153 = scmp.ne.s32.totalorder %s144, %s145
      %p154 = scmp.eq.s32.totalorder %s29, 0
      %p155 = por %p153, %p154
      %p156 = scmp.ne.s32.totalorder %s144, %s145
      %p157 = scmp.eq.s32.totalorder %s30, 1
      %p158 = por %p156, %p157
      %p160 = scmp.ne.s32.totalorder %s145, %s159
      %p161 = scmp.eq.s32.totalorder %s30, 0
      %p162 = por %p160, %p161
      %s164 = sadd.s32 %s163, 1
      %p167 = scmp.eq.s32.totalorder %s24, 1
      %p168 = scmp.ne.s32.totalorder %s163, %s165
      %p169 = scmp.eq.s32.totalorder %s24, 0
      %p170 = por %p168, %p169
      %p171 = scmp.ne.s32.totalorder %s163, %s165
      %p172 = scmp.eq.s32.totalorder %s29, 1
      %p173 = por %p171, %p172
      %p174 = scmp.ne.s32.totalorder %s165, %s166
      %p175 = scmp.eq.s32.totalorder %s29, 0
      %p176 = por %p174, %p175
      %p177 = scmp.ne.s32.totalorder %s165, %s166
      %p178 = scmp.eq.s32.totalorder %s30, 1
      %p179 = por %p177, %p178
      %p181 = scmp.ne.s32.totalorder %s166, %s180
      %p182 = scmp.eq.s32.totalorder %s30, 0
      %p183 = por %p181, %p182
      %s185 = sadd.s32 %s184, 1
      %p188 = scmp.eq.s32.totalorder %s24, 1
      %p189 = scmp.ne.s32.totalorder %s184, %s186
      %p190 = scmp.eq.s32.totalorder %s24, 0
      %p191 = por %p189, %p190
      %p192 = scmp.ne.s32.totalorder %s184, %s186
      %p193 = scmp.eq.s32.totalorder %s29, 1
      %p194 = por %p192, %p193
      %p195 = scmp.ne.s32.totalorder %s186, %s187
      %p196 = scmp.eq.s32.totalorder %s29, 0
      %p197 = por %p195, %p196
      %p198 = scmp.ne.s32.totalorder %s186, %s187
      %p199 = scmp.eq.s32.totalorder %s30, 1
      %p200 = por %p198, %p199
      %p202 = scmp.ne.s32.totalorder %s187, %s201
      %p203 = scmp.eq.s32.totalorder %s30, 0
      %p204 = por %p202, %p203
      %s206 = sadd.s32 %s205, 1
      %p209 = scmp.eq.s32.totalorder %s24, 1
      %p210 = scmp.ne.s32.totalorder %s205, %s207
      %p211 = scmp.eq.s32.totalorder %s24, 0
      %p212 = por %p210, %p211
      %p213 = scmp.ne.s32.totalorder %s205, %s207
      %p214 = scmp.eq.s32.totalorder %s29, 1
      %p215 = por %p213, %p214
      %p216 = scmp.ne.s32.totalorder %s207, %s208
      %p217 = scmp.eq.s32.totalorder %s29, 0
      %p218 = por %p216, %p217
      %p219 = scmp.ne.s32.totalorder %s207, %s208
      %p220 = scmp.eq.s32.totalorder %s30, 1
      %p221 = por %p219, %p220
      %p223 = scmp.ne.s32.totalorder %s208, %s222
      %p224 = scmp.eq.s32.totalorder %s30, 0
      %p225 = por %p223, %p224
      %s227 = sadd.s32 %s226, 1
      %p230 = scmp.eq.s32.totalorder %s24, 1
      %p231 = scmp.ne.s32.totalorder %s226, %s228
      %p232 = scmp.eq.s32.totalorder %s24, 0
      %p233 = por %p231, %p232
      %p234 = scmp.ne.s32.totalorder %s226, %s228
      %p235 = scmp.eq.s32.totalorder %s29, 1
      %p236 = por %p234, %p235
      %p237 = scmp.ne.s32.totalorder %s228, %s229
      %p238 = scmp.eq.s32.totalorder %s29, 0
      %p239 = por %p237, %p238
      %p240 = scmp.ne.s32.totalorder %s228, %s229
      %p241 = scmp.eq.s32.totalorder %s30, 1
      %p242 = por %p240, %p241
      %p244 = scmp.ne.s32.totalorder %s229, %s243
      %p245 = scmp.eq.s32.totalorder %s30, 0
      %p246 = por %p244, %p245
      %s248 = sadd.s32 %s247, 1
      %p251 = scmp.eq.s32.totalorder %s24, 1
      %p252 = scmp.ne.s32.totalorder %s247, %s249
      %p253 = scmp.eq.s32.totalorder %s24, 0
      %p254 = por %p252, %p253
      %p255 = scmp.ne.s32.totalorder %s247, %s249
      %p256 = scmp.eq.s32.totalorder %s29, 1
      %p257 = por %p255, %p256
      %p258 = scmp.ne.s32.totalorder %s249, %s250
      %p259 = scmp.eq.s32.totalorder %s29, 0
      %p260 = por %p258, %p259
      %p261 = scmp.ne.s32.totalorder %s249, %s250
      %p262 = scmp.eq.s32.totalorder %s30, 1
      %p263 = por %p261, %p262
      %p265 = scmp.ne.s32.totalorder %s250, %s264
      %p266 = scmp.eq.s32.totalorder %s30, 0
      %p267 = por %p265, %p266
      %s269 = sadd.s32 %s268, 1
      %p272 = scmp.eq.s32.totalorder %s24, 1
      %p273 = scmp.ne.s32.totalorder %s268, %s270
      %p274 = scmp.eq.s32.totalorder %s24, 0
      %p275 = por %p273, %p274
      %p276 = scmp.ne.s32.totalorder %s268, %s270
      %p277 = scmp.eq.s32.totalorder %s29, 1
      %p278 = por %p276, %p277
      %p279 = scmp.ne.s32.totalorder %s270, %s271
      %p280 = scmp.eq.s32.totalorder %s29, 0
      %p281 = por %p279, %p280
      %p282 = scmp.ne.s32.totalorder %s270, %s271
      %p283 = scmp.eq.s32.totalorder %s30, 1
      %p284 = por %p282, %p283
      %p286 = scmp.ne.s32.totalorder %s271, %s285
      %p287 = scmp.eq.s32.totalorder %s30, 0
      %p288 = por %p286, %p287
      %s289 = ssub.s32 %s24, %s31
      %p290 = scmp.eq.s32.totalorder %s289, 0
      %s292 = sadd.s32 %s291, 1
      %s293 = scalar_select %p290, %s291, %s292
      %p296 = pneg %p290
      %p297 = scmp.eq.s32.totalorder %s24, 1
      %p298 = por %p296, %p297
      %p299 = scmp.ne.s32.totalorder %s291, %s294
      %p300 = scmp.eq.s32.totalorder %s24, 0
      %p301 = por %p299, %p300
      %p302 = scmp.ne.s32.totalorder %s291, %s294
      %p303 = scmp.eq.s32.totalorder %s29, 1
      %p304 = por %p302, %p303
      %p305 = scmp.ne.s32.totalorder %s294, %s295
      %p306 = scmp.eq.s32.totalorder %s29, 0
      %p307 = por %p305, %p306
      %p308 = scmp.ne.s32.totalorder %s294, %s295
      %p309 = scmp.eq.s32.totalorder %s30, 1
      %p310 = por %p308, %p309
      %p312 = scmp.ne.s32.totalorder %s295, %s311
      %p313 = scmp.eq.s32.totalorder %s30, 0
      %p314 = por %p312, %p313
      %p315 = scmp.le.s32.totalorder 1, %s24
      %p316 = scmp.lt.s32.totalorder %s24, 3
      %p317 = pnand %p315, %p316
      %p318 = pneg %p317
      // Predicated region
      $region9: #{bfm_forward.1} parent=5 // pred_check
        _
      $region10: #{bfm_forward.1} parent=5 // pred_check_branch
        %320 = sbr.rel (%p317) target = $region12
      $region11: #{bfm_forward.1} parent=5 // pred_region
        %s321 = ssub.s32 %s24, 1
        // Predicated region
        $region13: #{bfm_forward.1} parent=11 // pred_check
          %p322 = pneg %p71
        $region14: #{bfm_forward.1} parent=11 // pred_check_branch
          %324 = sbr.rel (%p322) target = $region16
        $region15: #{bfm_forward.1} parent=11 // pred_region
          _
        $region16: #{bfm_forward.1} parent=11 // pred_fallthru
          _
        // Predicated region
        $region17: #{bfm_forward.1} parent=11 // pred_check
          %p325 = pneg %p92
        $region18: #{bfm_forward.1} parent=11 // pred_check_branch
          %327 = sbr.rel (%p325) target = $region20
        $region19: #{bfm_forward.1} parent=11 // pred_region
          _
        $region20: #{bfm_forward.1} parent=11 // pred_fallthru
          _
        // Predicated region
        $region21: #{bfm_forward.1} parent=11 // pred_check
          %p328 = pneg %p113
        $region22: #{bfm_forward.1} parent=11 // pred_check_branch
          %330 = sbr.rel (%p328) target = $region24
        $region23: #{bfm_forward.1} parent=11 // pred_region
          _
        $region24: #{bfm_forward.1} parent=11 // pred_fallthru
          _
        // Predicated region
        $region25: #{bfm_forward.1} parent=11 // pred_check
          %p331 = pneg %p134
        $region26: #{bfm_forward.1} parent=11 // pred_check_branch
          %333 = sbr.rel (%p331) target = $region28
        $region27: #{bfm_forward.1} parent=11 // pred_region
          _
        $region28: #{bfm_forward.1} parent=11 // pred_fallthru
          _
        // Predicated region
        $region29: #{bfm_forward.1} parent=11 // pred_check
          %p334 = pneg %p155
        $region30: #{bfm_forward.1} parent=11 // pred_check_branch
          %336 = sbr.rel (%p334) target = $region32
        $region31: #{bfm_forward.1} parent=11 // pred_region
          _
        $region32: #{bfm_forward.1} parent=11 // pred_fallthru
          _
        // Predicated region
        $region33: #{bfm_forward.1} parent=11 // pred_check
          %p337 = pneg %p176
        $region34: #{bfm_forward.1} parent=11 // pred_check_branch
          %339 = sbr.rel (%p337) target = $region36
        $region35: #{bfm_forward.1} parent=11 // pred_region
          %s341 = ssub.s32 64, 64
          %342 = vsyncadd [#allocation9], %s341
          %s344 = sshll.u32 %s6, 4
          %s345 = int_to_ptr.vmem [resolvable:$true] %s344
          %347 = dma.vmem_to_smem %s345, 64, [#allocation8], [#allocation9]
        $region36: #{bfm_forward.1} parent=11 // pred_fallthru
          _
        // Predicated region
        $region37: #{bfm_forward.1} parent=11 // pred_check
          %p348 = pneg %p197
        $region38: #{bfm_forward.1} parent=11 // pred_check_branch
          %350 = sbr.rel (%p348) target = $region40
        $region39: #{bfm_forward.1} parent=11 // pred_region
          _
        $region40: #{bfm_forward.1} parent=11 // pred_fallthru
          _
        // Predicated region
        $region41: #{bfm_forward.1} parent=11 // pred_check
          %p351 = pneg %p218
        $region42: #{bfm_forward.1} parent=11 // pred_check_branch
          %353 = sbr.rel (%p351) target = $region44
        $region43: #{bfm_forward.1} parent=11 // pred_region
          %s355 = ssub.s32 64, 64
          %356 = vsyncadd [#allocation11], %s355
          %s358 = sshll.u32 %s8, 4
          %s359 = int_to_ptr.vmem [resolvable:$true] %s358
          %361 = dma.vmem_to_smem %s359, 64, [#allocation10], [#allocation11]
        $region44: #{bfm_forward.1} parent=11 // pred_fallthru
          _
        // Predicated region
        $region45: #{bfm_forward.1} parent=11 // pred_check
          %p362 = pneg %p239
        $region46: #{bfm_forward.1} parent=11 // pred_check_branch
          %364 = sbr.rel (%p362) target = $region48
        $region47: #{bfm_forward.1} parent=11 // pred_region
          _
        $region48: #{bfm_forward.1} parent=11 // pred_fallthru
          _
        // Predicated region
        $region49: #{bfm_forward.1} parent=11 // pred_check
          %p365 = pneg %p260
        $region50: #{bfm_forward.1} parent=11 // pred_check_branch
          %367 = sbr.rel (%p365) target = $region52
        $region51: #{bfm_forward.1} parent=11 // pred_region
          _
        $region52: #{bfm_forward.1} parent=11 // pred_fallthru
          _
        // Predicated region
        $region53: #{bfm_forward.1} parent=11 // pred_check
          %p368 = pneg %p281
        $region54: #{bfm_forward.1} parent=11 // pred_check_branch
          %370 = sbr.rel (%p368) target = $region56
        $region55: #{bfm_forward.1} parent=11 // pred_region
          _
        $region56: #{bfm_forward.1} parent=11 // pred_fallthru
          _
      $region12: #{bfm_forward.1} parent=5 // pred_fallthru
        _
      %p371 = scmp.lt.s32.totalorder %s24, 2
      // Predicated region
      $region57: #{bfm_forward.1} parent=5 // pred_check
        %p372 = pneg %p371
      $region58: #{bfm_forward.1} parent=5 // pred_check_branch
        %374 = sbr.rel (%p372) target = $region60
      $region59: #{bfm_forward.1} parent=5 // pred_region
        // Predicated region
        $region61: #{bfm_forward.1} parent=59 // pred_check
          %p375 = pneg %p44
        $region62: #{bfm_forward.1} parent=59 // pred_check_branch
          %377 = sbr.rel (%p375) target = $region64
        $region63: #{bfm_forward.1} parent=59 // pred_region
          %p378 = scmp.lt.s32.totalorder %s24, 1
          %s379 = scalar_select %p378, %s24, 1
          %s380 = smul.addr %s379, 4
          %s381 = smul.addr %s380, 8
          %s382 = scalar_lea.vmem %s0, %s381
        $region64: #{bfm_forward.1} parent=59 // pred_fallthru
          _
      $region60: #{bfm_forward.1} parent=5 // pred_fallthru
        _
      %p383 = scmp.le.s32.totalorder 1, %s24
      %p384 = scmp.lt.s32.totalorder %s24, 3
      %p385 = pnand %p383, %p384
      %p386 = pneg %p385
      // Predicated region
      $region65: #{bfm_forward.1} parent=5 // pred_check
        _
      $region66: #{bfm_forward.1} parent=5 // pred_check_branch
        %388 = sbr.rel (%p385) target = $region68
      $region67: #{bfm_forward.1} parent=5 // pred_region
        %s389 = ssub.s32 %s24, 1
        // Predicated region
        $region69: #{bfm_forward.1} parent=67 // pred_check
          %p390 = pneg %p176
        $region70: #{bfm_forward.1} parent=67 // pred_check_branch
          %392 = sbr.rel (%p390) target = $region72
        $region71: #{bfm_forward.1} parent=67 // pred_region
          %393 = dma.done [#allocation9], 64
        $region72: #{bfm_forward.1} parent=67 // pred_fallthru
          _
        // Predicated region
        $region73: #{bfm_forward.1} parent=67 // pred_check
          %p394 = pneg %p218
        $region74: #{bfm_forward.1} parent=67 // pred_check_branch
          %396 = sbr.rel (%p394) target = $region76
        $region75: #{bfm_forward.1} parent=67 // pred_region
          %397 = dma.done [#allocation11], 64
        $region76: #{bfm_forward.1} parent=67 // pred_fallthru
          _
        %398 = sfence
        %p399 = scmp.lt.s32.totalorder %s29, 1
        %s400 = scalar_select %p399, %s29, 1
        %s401 = smul.addr %s400, 4
        %s402 = smul.addr %s401, 8
        %s403 = scalar_lea.vmem %s0, %s402
        %p404 = pneg %p50
        %p405 = pneg %p47
        %p406 = pneg %p71
        %p407 = pneg %p68
        %p408 = pneg %p92
        %p409 = pneg %p89
        %p410 = pneg %p113
        %p411 = pneg %p110
        %p412 = pneg %p134
        %p413 = pneg %p131
        %p414 = pneg %p155
        %p415 = pneg %p152
        %p416 = pneg %p176
        %p417 = pneg %p173
        %p418 = pneg %p197
        %p419 = pneg %p194
        %p420 = pneg %p218
        %p421 = pneg %p215
        %p422 = pneg %p239
        %p423 = pneg %p236
        %p424 = pneg %p260
        %p425 = pneg %p257
        %p426 = pneg %p281
        %p427 = pneg %p278
        %p428 = pneg %p307
        %p429 = pneg %p304
        %p430 = scmp.lt.s32.totalorder %s29, 1
        %s431 = scalar_select %p430, %s29, 1
        %s432 = smul.addr %s431, 2
        %s433 = smul.addr %s432, 8
        %s434 = scalar_lea.vmem %s12, %s433
        %p435 = scmp.lt.s32.totalorder %s29, 1
        %s436 = scalar_select %p435, %s29, 1
        %s437 = smul.addr %s436, 4
        %s438 = smul.addr %s437, 8
        %s439 = scalar_lea.vmem %s0, %s438
        %p440 = scmp.lt.s32.totalorder %s29, 1
        %s441 = scalar_select %p440, %s29, 1
        %s442 = smul.addr %s441, 2
        %s443 = smul.addr %s442, 8
        %s444 = scalar_lea.vmem %s12, %s443
        %445 = vst [vmem:[#allocation2] sm:$0x7] 0.0
        %vm446 = vcmask 387072
        %447 = vst.msk [vmem:[#allocation2 + $0x8] sm:$0x7] %vm446, 0.0
        %448 = vst [vmem:[#allocation2 + $0x30] sm:$0x7] 0.0
        %449 = vst.msk [vmem:[#allocation2 + $0x38] sm:$0x7] %vm446, 0.0
        %450 = vst [vmem:[#allocation2 + $0x20] sm:$0x38] 0.0
        %vm451 = vcmask 390147
        %452 = vst.msk [vmem:[#allocation2 + $0x28] sm:$0x38] %vm451, 0.0
        %453 = vst [vmem:[#allocation2 + $0x50] sm:$0x38] 0.0
        %454 = vst.msk [vmem:[#allocation2 + $0x58] sm:$0x38] %vm451, 0.0
        %vm455 = vcmask 195587
        %456 = vst.msk [vmem:[#allocation2] sm:$0xf8] %vm455, 0.0
        %vm457 = vcmask 195584
        %458 = vst.msk [vmem:[#allocation2 + $0x10] sm:$0xff] %vm457, 0.0
        %vm459 = vcmask 190464
        %460 = vst.msk [vmem:[#allocation2 + $0x20] sm:$0x7] %vm459, 0.0
        %461 = vst.msk [vmem:[#allocation2 + $0x30] sm:$0xf8] %vm455, 0.0
        %462 = vst.msk [vmem:[#allocation2 + $0x40] sm:$0xff] %vm457, 0.0
        %463 = vst.msk [vmem:[#allocation2 + $0x50] sm:$0x7] %vm459, 0.0
        %vm464 = vcmask 392387
        %465 = vst.msk [vmem:[#allocation2 + $0x8] sm:$0xf8] %vm464, 0.0
        %vm466 = vcmask 392384
        %467 = vst.msk [vmem:[#allocation2 + $0x18] sm:$0xff] %vm466, 0.0
        %vm468 = vcmask 387264
        %469 = vst.msk [vmem:[#allocation2 + $0x28] sm:$0x7] %vm468, 0.0
        %470 = vst.msk [vmem:[#allocation2 + $0x38] sm:$0xf8] %vm464, 0.0
        %471 = vst.msk [vmem:[#allocation2 + $0x48] sm:$0xff] %vm466, 0.0
        %472 = vst.msk [vmem:[#allocation2 + $0x58] sm:$0x7] %vm468, 0.0
        %v473 = vld [vmem:[%s439] sm:$0xff]
        %v474 = vld [vmem:[%s439 + $0x8] sm:$0xff]
        %v475 = vld [vmem:[%s439 + $0x10] sm:$0xff]
        %v476 = vld [vmem:[%s439 + $0x18] sm:$0xff]
        %vm481 = vcmask 1042432
        %v482 = vrot.slane %v473, 5
        %v483 = vrot.slane %v474, 5
        %v484 = vsel %vm481, %v482, %v483
        %v485 = vrot.slane %v475, 5
        %v486 = vrot.slane %v476, 5
        %v487 = vsel %vm481, %v485, %v486
        %488 = vrot.lane.b32.xlu0 %v482, 24
        %v489 = vpop.permute.xlu0 %488
        %490 = vrot.lane.b32.xlu0 %v484, 24
        %v491 = vpop.permute.xlu0 %490
        %492 = vrot.lane.b32.xlu0 %v483, 24
        %v493 = vpop.permute.xlu0 %492
        %494 = vrot.lane.b32.xlu0 %v485, 24
        %v495 = vpop.permute.xlu0 %494
        %496 = vrot.lane.b32.xlu0 %v487, 24
        %v497 = vpop.permute.xlu0 %496
        %498 = vrot.lane.b32.xlu0 %v486, 24
        %v499 = vpop.permute.xlu0 %498
        %vm506 = vcmask 1047747
        %507 = vst.msk [vmem:[#allocation2] sm:$0xf8] %vm506, %v489
        %508 = vst.msk [vmem:[#allocation2 + $0x8] sm:$0xf8] %vm455, %v489
        %vm509 = vcmask 1047744
        %510 = vst.msk [vmem:[#allocation2 + $0x10] sm:$0xff] %vm509, %v491
        %511 = vst.msk [vmem:[#allocation2 + $0x18] sm:$0xff] %vm457, %v491
        %vm512 = vcmask 1042624
        %513 = vst.msk [vmem:[#allocation2 + $0x20] sm:$0x7] %vm512, %v493
        %514 = vst.msk [vmem:[#allocation2 + $0x28] sm:$0x7] %vm459, %v493
        %515 = vst.msk [vmem:[#allocation2 + $0x30] sm:$0xf8] %vm506, %v495
        %516 = vst.msk [vmem:[#allocation2 + $0x38] sm:$0xf8] %vm455, %v495
        %517 = vst.msk [vmem:[#allocation2 + $0x40] sm:$0xff] %vm509, %v497
        %518 = vst.msk [vmem:[#allocation2 + $0x48] sm:$0xff] %vm457, %v497
        %519 = vst.msk [vmem:[#allocation2 + $0x50] sm:$0x7] %vm512, %v499
        %520 = vst.msk [vmem:[#allocation2 + $0x58] sm:$0x7] %vm459, %v499
        %v521 = vld [vmem:[#allocation2] sm:$0xff]
        %v522 = vld [vmem:[#allocation2 + $0x8] sm:$0xff]
        %v523 = vld [vmem:[#allocation2 + $0x10] sm:$0xff]
        %v524 = vld [vmem:[#allocation2 + $0x18] sm:$0xff]
        %v525 = vld [vmem:[#allocation2 + $0x30] sm:$0xff]
        %v526 = vld [vmem:[#allocation2 + $0x38] sm:$0xff]
        %v527 = vld [vmem:[#allocation2 + $0x40] sm:$0xff]
        %v528 = vld [vmem:[#allocation2 + $0x48] sm:$0xff]
        %v529 = vld [vmem:[%s1] sm:$0xff]
        %v530 = vld [vmem:[%s1 + $0x8] sm:$0xff]
        %v531 = vld [vmem:[%s1 + $0x10] sm:$0xff]
        %v532 = vld [vmem:[%s1 + $0x18] sm:$0xff]
        %v533 = vld [vmem:[%s1 + $0x20] sm:$0xff]
        %v534 = vld [vmem:[%s1 + $0x28] sm:$0xff]
        %v535 = vld [vmem:[%s1 + $0x30] sm:$0xff]
        %v536 = vld [vmem:[%s1 + $0x38] sm:$0xff]
        %v537 = vld [vmem:[%s1 + $0x40] sm:$0xff]
        %v538 = vld [vmem:[%s1 + $0x48] sm:$0xff]
        %v539 = vld [vmem:[%s1 + $0x50] sm:$0xff]
        %v540 = vld [vmem:[%s1 + $0x58] sm:$0xff]
        %v541 = vld [vmem:[%s1 + $0x60] sm:$0xff]
        %v542 = vld [vmem:[%s1 + $0x68] sm:$0xff]
        %v543 = vld [vmem:[%s1 + $0x70] sm:$0xff]
        %v544 = vld [vmem:[%s1 + $0x78] sm:$0xff]
        %v545 = vld [vmem:[%s1 + $0x80] sm:$0xff]
        %v546 = vld [vmem:[%s1 + $0x88] sm:$0xff]
        %v547 = vld [vmem:[%s1 + $0x90] sm:$0xff]
        %v548 = vld [vmem:[%s1 + $0x98] sm:$0xff]
        %v549 = vld [vmem:[%s1 + $0xa0] sm:$0xff]
        %v550 = vld [vmem:[%s1 + $0xa8] sm:$0xff]
        %v551 = vld [vmem:[%s1 + $0xb0] sm:$0xff]
        %v552 = vld [vmem:[%s1 + $0xb8] sm:$0xff]
        %v553 = vld [vmem:[%s1 + $0xc0] sm:$0xff]
        %v554 = vld [vmem:[%s1 + $0xc8] sm:$0xff]
        %v555 = vld [vmem:[%s1 + $0xd0] sm:$0xff]
        %v556 = vld [vmem:[%s1 + $0xd8] sm:$0xff]
        %v557 = vld [vmem:[%s1 + $0xe0] sm:$0xff]
        %v558 = vld [vmem:[%s1 + $0xe8] sm:$0xff]
        %v559 = vld [vmem:[%s1 + $0xf0] sm:$0xff]
        %v560 = vld [vmem:[%s1 + $0xf8] sm:$0xff]
        %v561 = vld [vmem:[%s1 + $0x100] sm:$0xff]
        %v562 = vld [vmem:[%s1 + $0x108] sm:$0xff]
        %v563 = vld [vmem:[%s1 + $0x110] sm:$0xff]
        %v564 = vld [vmem:[%s1 + $0x118] sm:$0xff]
        %v565 = vld [vmem:[%s1 + $0x120] sm:$0xff]
        %v566 = vld [vmem:[%s1 + $0x128] sm:$0xff]
        %v567 = vld [vmem:[%s1 + $0x130] sm:$0xff]
        %v568 = vld [vmem:[%s1 + $0x138] sm:$0xff]
        %v569 = vld [vmem:[%s1 + $0x140] sm:$0xff]
        %v570 = vld [vmem:[%s1 + $0x148] sm:$0xff]
        %v571 = vld [vmem:[%s1 + $0x150] sm:$0xff]
        %v572 = vld [vmem:[%s1 + $0x158] sm:$0xff]
        %v573 = vld [vmem:[%s1 + $0x160] sm:$0xff]
        %v574 = vld [vmem:[%s1 + $0x168] sm:$0xff]
        %v575 = vld [vmem:[%s1 + $0x170] sm:$0xff]
        %v576 = vld [vmem:[%s1 + $0x178] sm:$0xff]
        %v577 = vld [vmem:[%s1 + $0x180] sm:$0xff]
        %v578 = vld [vmem:[%s1 + $0x188] sm:$0xff]
        %v579 = vld [vmem:[%s1 + $0x190] sm:$0xff]
        %v580 = vld [vmem:[%s1 + $0x198] sm:$0xff]
        %v581 = vld [vmem:[%s1 + $0x1a0] sm:$0xff]
        %v582 = vld [vmem:[%s1 + $0x1a8] sm:$0xff]
        %v583 = vld [vmem:[%s1 + $0x1b0] sm:$0xff]
        %v584 = vld [vmem:[%s1 + $0x1b8] sm:$0xff]
        %v585 = vld [vmem:[%s1 + $0x1c0] sm:$0xff]
        %v586 = vld [vmem:[%s1 + $0x1c8] sm:$0xff]
        %v587 = vld [vmem:[%s1 + $0x1d0] sm:$0xff]
        %v588 = vld [vmem:[%s1 + $0x1d8] sm:$0xff]
        %v589 = vld [vmem:[%s1 + $0x1e0] sm:$0xff]
        %v590 = vld [vmem:[%s1 + $0x1e8] sm:$0xff]
        %v591 = vld [vmem:[%s1 + $0x1f0] sm:$0xff]
        %v592 = vld [vmem:[%s1 + $0x1f8] sm:$0xff]
        %v593 = vld [vmem:[%s1 + $0x200] sm:$0xff]
        %v594 = vld [vmem:[%s1 + $0x208] sm:$0xff]
        %v595 = vld [vmem:[#allocation2] sm:$0xfe]
        %v596 = vld [vmem:[#allocation2 + $0x8] sm:$0xfe]
        %v597 = vld [vmem:[#allocation2 + $0x20] sm:$0x1]
        %v598 = vld [vmem:[#allocation2 + $0x28] sm:$0x1]
        %v599 = vld [vmem:[#allocation2 + $0x30] sm:$0xfe]
        %v600 = vld [vmem:[#allocation2 + $0x38] sm:$0xfe]
        %v601 = vld [vmem:[#allocation2 + $0x50] sm:$0x1]
        %v602 = vld [vmem:[#allocation2 + $0x58] sm:$0x1]
        %vm615 = vcmask 1046528
        %v616 = vrot.slane %v595, 1
        %v617 = vrot.slane %v523, 1
        %v618 = vsel %vm615, %v616, %v617
        %v619 = vrot.slane %v596, 1
        %v620 = vrot.slane %v524, 1
        %v621 = vsel %vm615, %v619, %v620
        %v622 = vrot.slane %v597, 1
        %v623 = vsel %vm615, %v617, %v622
        %v624 = vrot.slane %v598, 1
        %v625 = vsel %vm615, %v620, %v624
        %v626 = vrot.slane %v599, 1
        %v627 = vrot.slane %v527, 1
        %v628 = vsel %vm615, %v626, %v627
        %v629 = vrot.slane %v600, 1
        %v630 = vrot.slane %v528, 1
        %v631 = vsel %vm615, %v629, %v630
        %v632 = vrot.slane %v601, 1
        %v633 = vsel %vm615, %v627, %v632
        %v634 = vrot.slane %v602, 1
        %v635 = vsel %vm615, %v630, %v634
        %s640 = scalar_lea.vmem %s1, 528
        %v641 = vld [vmem:[%s640] sm:$0xff]
        %v642 = vld [vmem:[%s640 + $0x8] sm:$0xff]
        %v643 = vld [vmem:[%s640 + $0x10] sm:$0xff]
        %v644 = vld [vmem:[%s640 + $0x18] sm:$0xff]
        %v645 = vld [vmem:[%s640 + $0x20] sm:$0xff]
        %v646 = vld [vmem:[%s640 + $0x28] sm:$0xff]
        %v647 = vld [vmem:[%s640 + $0x30] sm:$0xff]
        %v648 = vld [vmem:[%s640 + $0x38] sm:$0xff]
        %v649 = vld [vmem:[%s640 + $0x40] sm:$0xff]
        %v650 = vld [vmem:[%s640 + $0x48] sm:$0xff]
        %v651 = vld [vmem:[%s640 + $0x50] sm:$0xff]
        %v652 = vld [vmem:[%s640 + $0x58] sm:$0xff]
        %v653 = vld [vmem:[%s640 + $0x60] sm:$0xff]
        %v654 = vld [vmem:[%s640 + $0x68] sm:$0xff]
        %v655 = vld [vmem:[%s640 + $0x70] sm:$0xff]
        %v656 = vld [vmem:[%s640 + $0x78] sm:$0xff]
        %v657 = vld [vmem:[%s640 + $0x80] sm:$0xff]
        %v658 = vld [vmem:[%s640 + $0x88] sm:$0xff]
        %v659 = vld [vmem:[%s640 + $0x90] sm:$0xff]
        %v660 = vld [vmem:[%s640 + $0x98] sm:$0xff]
        %v661 = vld [vmem:[%s640 + $0xa0] sm:$0xff]
        %v662 = vld [vmem:[%s640 + $0xa8] sm:$0xff]
        %v663 = vld [vmem:[%s640 + $0xb0] sm:$0xff]
        %v664 = vld [vmem:[%s640 + $0xb8] sm:$0xff]
        %v665 = vld [vmem:[%s640 + $0xc0] sm:$0xff]
        %v666 = vld [vmem:[%s640 + $0xc8] sm:$0xff]
        %v667 = vld [vmem:[%s640 + $0xd0] sm:$0xff]
        %v668 = vld [vmem:[%s640 + $0xd8] sm:$0xff]
        %v669 = vld [vmem:[%s640 + $0xe0] sm:$0xff]
        %v670 = vld [vmem:[%s640 + $0xe8] sm:$0xff]
        %v671 = vld [vmem:[%s640 + $0xf0] sm:$0xff]
        %v672 = vld [vmem:[%s640 + $0xf8] sm:$0xff]
        %v673 = vld [vmem:[%s640 + $0x100] sm:$0xff]
        %v674 = vld [vmem:[%s640 + $0x108] sm:$0xff]
        %v675 = vld [vmem:[%s640 + $0x110] sm:$0xff]
        %v676 = vld [vmem:[%s640 + $0x118] sm:$0xff]
        %v677 = vld [vmem:[%s640 + $0x120] sm:$0xff]
        %v678 = vld [vmem:[%s640 + $0x128] sm:$0xff]
        %v679 = vld [vmem:[%s640 + $0x130] sm:$0xff]
        %v680 = vld [vmem:[%s640 + $0x138] sm:$0xff]
        %v681 = vld [vmem:[%s640 + $0x140] sm:$0xff]
        %v682 = vld [vmem:[%s640 + $0x148] sm:$0xff]
        %v683 = vld [vmem:[%s640 + $0x150] sm:$0xff]
        %v684 = vld [vmem:[%s640 + $0x158] sm:$0xff]
        %v685 = vld [vmem:[%s640 + $0x160] sm:$0xff]
        %v686 = vld [vmem:[%s640 + $0x168] sm:$0xff]
        %v687 = vld [vmem:[%s640 + $0x170] sm:$0xff]
        %v688 = vld [vmem:[%s640 + $0x178] sm:$0xff]
        %v689 = vld [vmem:[%s640 + $0x180] sm:$0xff]
        %v690 = vld [vmem:[%s640 + $0x188] sm:$0xff]
        %v691 = vld [vmem:[%s640 + $0x190] sm:$0xff]
        %v692 = vld [vmem:[%s640 + $0x198] sm:$0xff]
        %v693 = vld [vmem:[%s640 + $0x1a0] sm:$0xff]
        %v694 = vld [vmem:[%s640 + $0x1a8] sm:$0xff]
        %v695 = vld [vmem:[%s640 + $0x1b0] sm:$0xff]
        %v696 = vld [vmem:[%s640 + $0x1b8] sm:$0xff]
        %v697 = vld [vmem:[%s640 + $0x1c0] sm:$0xff]
        %v698 = vld [vmem:[%s640 + $0x1c8] sm:$0xff]
        %v699 = vld [vmem:[%s640 + $0x1d0] sm:$0xff]
        %v700 = vld [vmem:[%s640 + $0x1d8] sm:$0xff]
        %v701 = vld [vmem:[%s640 + $0x1e0] sm:$0xff]
        %v702 = vld [vmem:[%s640 + $0x1e8] sm:$0xff]
        %v703 = vld [vmem:[%s640 + $0x1f0] sm:$0xff]
        %v704 = vld [vmem:[%s640 + $0x1f8] sm:$0xff]
        %v705 = vld [vmem:[%s640 + $0x200] sm:$0xff]
        %v706 = vld [vmem:[%s640 + $0x208] sm:$0xff]
        %vm707 = vcmask 392192
        %v708 = vsel %vm707, %v621, 0
        %v710 = vsel %vm707, %v625, 0
        %v712 = vsel %vm707, %v631, 0
        %v714 = vsel %vm707, %v635, 0
        %716 = vmatprep.subr.mxu0 %v642
        %717 = vmatpush1.msra.mxu0 %v641
        %718 = vmatprep.subr.mxu0 %v645
        %719 = vmatpush1.msra.mxu0 %v644
        %720 = vmatprep.subr.mxu0 %v648
        %721 = vmatpush1.msra.mxu0 %v647
        %722 = vmatprep.subr.mxu0 %v651
        %723 = vmatpush1.msra.mxu0 %v650
        %724 = vmatprep.subr.mxu0 %v654
        %725 = vmatpush1.msra.mxu0 %v653
        %726 = vmatprep.subr.mxu0 %v657
        %727 = vmatpush1.msra.mxu0 %v656
        %728 = vmatprep.subr.mxu0 %v660
        %729 = vmatpush1.msra.mxu0 %v659
        %730 = vmatprep.subr.mxu0 %v663
        %731 = vmatpush1.msra.mxu0 %v662
        %732 = vmatprep.subr.mxu0 %v666
        %733 = vmatpush1.msra.mxu0 %v665
        %734 = vmatprep.subr.mxu0 %v669
        %735 = vmatpush1.msra.mxu0 %v668
        %736 = vmatprep.subr.mxu0 %v672
        %737 = vmatpush1.msra.mxu0 %v671
        %738 = vmatprep.subr.mxu0 %v675
        %739 = vmatpush1.msra.mxu0 %v674
        %740 = vmatprep.subr.mxu0 %v678
        %741 = vmatpush1.msra.mxu0 %v677
        %742 = vmatprep.subr.mxu0 %v681
        %743 = vmatpush1.msra.mxu0 %v680
        %744 = vmatprep.subr.mxu0 %v684
        %745 = vmatpush1.msra.mxu0 %v683
        %746 = vmatprep.subr.mxu0 %v687
        %747 = vmatpush1.msra.mxu0 %v686
        %748 = vmatprep.subr.mxu0 %v690
        %749 = vmatpush1.msra.mxu0 %v689
        %750 = vmatprep.subr.mxu0 %v693
        %751 = vmatpush1.msra.mxu0 %v692
        %752 = vmatprep.subr.mxu0 %v696
        %753 = vmatpush1.msra.mxu0 %v695
        %754 = vmatprep.subr.mxu0 %v699
        %755 = vmatpush1.msra.mxu0 %v698
        %756 = vmatprep.subr.mxu0 %v702
        %757 = vmatpush1.msra.mxu0 %v701
        %758 = vmatprep.subr.mxu0 %v705
        %759 = vmatpush1.msra.mxu0 %v704
        %760 = vmatprep.subr.mxu0 0.0
        %761 = vmatpush1.msra.mxu0 0.0
        %762 = vmatprep.subr.mxu0 0.0
        %763 = vmatpush1.msra.mxu0 0.0
        %764 = vmatprep.subr.mxu0 0.0
        %765 = vmatpush1.msra.mxu0 0.0
        %766 = vmatprep.subr.mxu0 0.0
        %767 = vmatpush1.msra.mxu0 0.0
        %768 = vmatprep.subr.mxu0 0.0
        %769 = vmatpush1.msra.mxu0 0.0
        %770 = vmatprep.subr.mxu0 0.0
        %771 = vmatpush1.msra.mxu0 0.0
        %772 = vmatprep.subr.mxu0 0.0
        %773 = vmatpush1.msra.mxu0 0.0
        %774 = vmatprep.subr.mxu0 0.0
        %775 = vmatpush1.msra.mxu0 0.0
        %776 = vmatprep.subr.mxu0 0.0
        %777 = vmatpush1.msra.mxu0 0.0
        %778 = vmatprep.subr.mxu0 0.0
        %779 = vmatpush1.msra.mxu0 0.0
        %780 = vmatprep.mubr.f32.mxu0 %v708
        %781 = vmatmul.mubr.f32.gmra.mrb[0].mxu0 %v618
        %v782 = vpop.f32.mrb[0].mxu0
        %v783 = vadd.f32 0.0, %v782
        %v784 = vpop.f32.mrb[0].mxu0
        %v785 = vadd.f32 0.0, %v784
        %786 = vmatprep.mubr.f32.mxu0 %v710
        %787 = vmatmul.mubr.f32.gmra.mrb[0].mxu0 %v623
        %v788 = vpop.f32.mrb[0].mxu0
        %v789 = vadd.f32 0.0, %v788
        %v790 = vpop.f32.mrb[0].mxu0
        %v791 = vadd.f32 0.0, %v790
        %792 = vmatprep.mubr.f32.mxu0 %v712
        %793 = vmatmul.mubr.f32.gmra.mrb[0].mxu0 %v628
        %v794 = vpop.f32.mrb[0].mxu0
        %v795 = vadd.f32 0.0, %v794
        %v796 = vpop.f32.mrb[0].mxu0
        %v797 = vadd.f32 0.0, %v796
        %798 = vmatprep.mubr.f32.mxu0 %v714
        %799 = vmatmul.mubr.f32.gmra.mrb[0].mxu0 %v633
        %v800 = vpop.f32.mrb[0].mxu0
        %v801 = vadd.f32 0.0, %v800
        %v802 = vpop.f32.mrb[0].mxu0
        %v803 = vadd.f32 0.0, %v802
        %804 = vdwg.mxu0
        %805 = vmatprep.subr.mxu0 0.0
        %806 = vmatpush1.msra.mxu0 %v643
        %807 = vmatprep.subr.mxu0 0.0
        %808 = vmatpush1.msra.mxu0 %v646
        %809 = vmatprep.subr.mxu0 0.0
        %810 = vmatpush1.msra.mxu0 %v649
        %811 = vmatprep.subr.mxu0 0.0
        %812 = vmatpush1.msra.mxu0 %v652
        %813 = vmatprep.subr.mxu0 0.0
        %814 = vmatpush1.msra.mxu0 %v655
        %815 = vmatprep.subr.mxu0 0.0
        %816 = vmatpush1.msra.mxu0 %v658
        %817 = vmatprep.subr.mxu0 0.0
        %818 = vmatpush1.msra.mxu0 %v661
        %819 = vmatprep.subr.mxu0 0.0
        %820 = vmatpush1.msra.mxu0 %v664
        %821 = vmatprep.subr.mxu0 0.0
        %822 = vmatpush1.msra.mxu0 %v667
        %823 = vmatprep.subr.mxu0 0.0
        %824 = vmatpush1.msra.mxu0 %v670
        %825 = vmatprep.subr.mxu0 0.0
        %826 = vmatpush1.msra.mxu0 %v673
        %827 = vmatprep.subr.mxu0 0.0
        %828 = vmatpush1.msra.mxu0 %v676
        %829 = vmatprep.subr.mxu0 0.0
        %830 = vmatpush1.msra.mxu0 %v679
        %831 = vmatprep.subr.mxu0 0.0
        %832 = vmatpush1.msra.mxu0 %v682
        %833 = vmatprep.subr.mxu0 0.0
        %834 = vmatpush1.msra.mxu0 %v685
        %835 = vmatprep.subr.mxu0 0.0
        %836 = vmatpush1.msra.mxu0 %v688
        %837 = vmatprep.subr.mxu0 0.0
        %838 = vmatpush1.msra.mxu0 %v691
        %839 = vmatprep.subr.mxu0 0.0
        %840 = vmatpush1.msra.mxu0 %v694
        %841 = vmatprep.subr.mxu0 0.0
        %842 = vmatpush1.msra.mxu0 %v697
        %843 = vmatprep.subr.mxu0 0.0
        %844 = vmatpush1.msra.mxu0 %v700
        %845 = vmatprep.subr.mxu0 0.0
        %846 = vmatpush1.msra.mxu0 %v703
        %847 = vmatprep.subr.mxu0 0.0
        %848 = vmatpush1.msra.mxu0 %v706
        %849 = vmatprep.subr.mxu0 0.0
        %850 = vmatpush1.msra.mxu0 0.0
        %851 = vmatprep.subr.mxu0 0.0
        %852 = vmatpush1.msra.mxu0 0.0
        %853 = vmatprep.subr.mxu0 0.0
        %854 = vmatpush1.msra.mxu0 0.0
        %855 = vmatprep.subr.mxu0 0.0
        %856 = vmatpush1.msra.mxu0 0.0
        %857 = vmatprep.subr.mxu0 0.0
        %858 = vmatpush1.msra.mxu0 0.0
        %859 = vmatprep.subr.mxu0 0.0
        %860 = vmatpush1.msra.mxu0 0.0
        %861 = vmatprep.subr.mxu0 0.0
        %862 = vmatpush1.msra.mxu0 0.0
        %863 = vmatprep.subr.mxu0 0.0
        %864 = vmatpush1.msra.mxu0 0.0
        %865 = vmatprep.subr.mxu0 0.0
        %866 = vmatpush1.msra.mxu0 0.0
        %867 = vmatprep.subr.mxu0 0.0
        %868 = vmatpush1.msra.mxu0 0.0
        %869 = vmatprep.mubr.f32.mxu0 %v708
        %870 = vmatmul.mubr.f32.gmra.mrb[0].mxu0 %v618
        %v871 = vpop.f32.mrb[0].mxu0
        %v872 = vadd.f32 0.0, %v871
        %v873 = vpop.f32.mrb[0].mxu0
        %874 = vmatprep.mubr.f32.mxu0 %v710
        %875 = vmatmul.mubr.f32.gmra.mrb[0].mxu0 %v623
        %v876 = vpop.f32.mrb[0].mxu0
        %v877 = vadd.f32 0.0, %v876
        %v878 = vpop.f32.mrb[0].mxu0
        %879 = vmatprep.mubr.f32.mxu0 %v712
        %880 = vmatmul.mubr.f32.gmra.mrb[0].mxu0 %v628
        %v881 = vpop.f32.mrb[0].mxu0
        %v882 = vadd.f32 0.0, %v881
        %v883 = vpop.f32.mrb[0].mxu0
        %884 = vmatprep.mubr.f32.mxu0 %v714
        %885 = vmatmul.mubr.f32.gmra.mrb[0].mxu0 %v633
        %v886 = vpop.f32.mrb[0].mxu0
        %v887 = vadd.f32 0.0, %v886
        %v888 = vpop.f32.mrb[0].mxu0
        %889 = vdwg.mxu0
        %v891 = vsel %vm707, %v522, 0
        %v893 = vsel %vm707, %v524, 0
        %v896 = vsel %vm707, %v526, 0
        %v898 = vsel %vm707, %v528, 0
        %900 = vmatprep.subr.mxu0 %v530
        %901 = vmatpush1.msra.mxu0 %v529
        %902 = vmatprep.subr.mxu0 %v533
        %903 = vmatpush1.msra.mxu0 %v532
        %904 = vmatprep.subr.mxu0 %v536
        %905 = vmatpush1.msra.mxu0 %v535
        %906 = vmatprep.subr.mxu0 %v539
        %907 = vmatpush1.msra.mxu0 %v538
        %908 = vmatprep.subr.mxu0 %v542
        %909 = vmatpush1.msra.mxu0 %v541
        %910 = vmatprep.subr.mxu0 %v545
        %911 = vmatpush1.msra.mxu0 %v544
        %912 = vmatprep.subr.mxu0 %v548
        %913 = vmatpush1.msra.mxu0 %v547
        %914 = vmatprep.subr.mxu0 %v551
        %915 = vmatpush1.msra.mxu0 %v550
        %916 = vmatprep.subr.mxu0 %v554
        %917 = vmatpush1.msra.mxu0 %v553
        %918 = vmatprep.subr.mxu0 %v557
        %919 = vmatpush1.msra.mxu0 %v556
        %920 = vmatprep.subr.mxu0 %v560
        %921 = vmatpush1.msra.mxu0 %v559
        %922 = vmatprep.subr.mxu0 %v563
        %923 = vmatpush1.msra.mxu0 %v562
        %924 = vmatprep.subr.mxu0 %v566
        %925 = vmatpush1.msra.mxu0 %v565
        %926 = vmatprep.subr.mxu0 %v569
        %927 = vmatpush1.msra.mxu0 %v568
        %928 = vmatprep.subr.mxu0 %v572
        %929 = vmatpush1.msra.mxu0 %v571
        %930 = vmatprep.subr.mxu0 %v575
        %931 = vmatpush1.msra.mxu0 %v574
        %932 = vmatprep.subr.mxu0 %v578
        %933 = vmatpush1.msra.mxu0 %v577
        %934 = vmatprep.subr.mxu0 %v581
        %935 = vmatpush1.msra.mxu0 %v580
        %936 = vmatprep.subr.mxu0 %v584
        %937 = vmatpush1.msra.mxu0 %v583
        %938 = vmatprep.subr.mxu0 %v587
        %939 = vmatpush1.msra.mxu0 %v586
        %940 = vmatprep.subr.mxu0 %v590
        %941 = vmatpush1.msra.mxu0 %v589
        %942 = vmatprep.subr.mxu0 %v593
        %943 = vmatpush1.msra.mxu0 %v592
        %944 = vmatprep.subr.mxu0 0.0
        %945 = vmatpush1.msra.mxu0 0.0
        %946 = vmatprep.subr.mxu0 0.0
        %947 = vmatpush1.msra.mxu0 0.0
        %948 = vmatprep.subr.mxu0 0.0
        %949 = vmatpush1.msra.mxu0 0.0
        %950 = vmatprep.subr.mxu0 0.0
        %951 = vmatpush1.msra.mxu0 0.0
        %952 = vmatprep.subr.mxu0 0.0
        %953 = vmatpush1.msra.mxu0 0.0
        %954 = vmatprep.subr.mxu0 0.0
        %955 = vmatpush1.msra.mxu0 0.0
        %956 = vmatprep.subr.mxu0 0.0
        %957 = vmatpush1.msra.mxu0 0.0
        %958 = vmatprep.subr.mxu0 0.0
        %959 = vmatpush1.msra.mxu0 0.0
        %960 = vmatprep.subr.mxu0 0.0
        %961 = vmatpush1.msra.mxu0 0.0
        %962 = vmatprep.subr.mxu0 0.0
        %963 = vmatpush1.msra.mxu0 0.0
        %964 = vmatprep.mubr.f32.mxu0 %v891
        %965 = vmatmul.mubr.f32.gmra.mrb[0].mxu0 %v521
        %v966 = vpop.f32.mrb[0].mxu0
        %v967 = vadd.f32 %v783, %v966
        %v968 = vpop.f32.mrb[0].mxu0
        %v969 = vadd.f32 %v785, %v968
        %970 = vmatprep.mubr.f32.mxu0 %v893
        %971 = vmatmul.mubr.f32.gmra.mrb[0].mxu0 %v523
        %v972 = vpop.f32.mrb[0].mxu0
        %v973 = vadd.f32 %v789, %v972
        %v974 = vpop.f32.mrb[0].mxu0
        %v975 = vadd.f32 %v791, %v974
        %976 = vmatprep.mubr.f32.mxu0 %v896
        %977 = vmatmul.mubr.f32.gmra.mrb[0].mxu0 %v525
        %v978 = vpop.f32.mrb[0].mxu0
        %v979 = vadd.f32 %v795, %v978
        %v980 = vpop.f32.mrb[0].mxu0
        %v981 = vadd.f32 %v797, %v980
        %982 = vmatprep.mubr.f32.mxu0 %v898
        %983 = vmatmul.mubr.f32.gmra.mrb[0].mxu0 %v527
        %v984 = vpop.f32.mrb[0].mxu0
        %v985 = vadd.f32 %v801, %v984
        %v986 = vpop.f32.mrb[0].mxu0
        %v987 = vadd.f32 %v803, %v986
        %988 = vdwg.mxu0
        %989 = vmatprep.subr.mxu0 0.0
        %990 = vmatpush1.msra.mxu0 %v531
        %991 = vmatprep.subr.mxu0 0.0
        %992 = vmatpush1.msra.mxu0 %v534
        %993 = vmatprep.subr.mxu0 0.0
        %994 = vmatpush1.msra.mxu0 %v537
        %995 = vmatprep.subr.mxu0 0.0
        %996 = vmatpush1.msra.mxu0 %v540
        %997 = vmatprep.subr.mxu0 0.0
        %998 = vmatpush1.msra.mxu0 %v543
        %999 = vmatprep.subr.mxu0 0.0
        %1000 = vmatpush1.msra.mxu0 %v546
        %1001 = vmatprep.subr.mxu0 0.0
        %1002 = vmatpush1.msra.mxu0 %v549
        %1003 = vmatprep.subr.mxu0 0.0
        %1004 = vmatpush1.msra.mxu0 %v552
        %1005 = vmatprep.subr.mxu0 0.0
        %1006 = vmatpush1.msra.mxu0 %v555
        %1007 = vmatprep.subr.mxu0 0.0
        %1008 = vmatpush1.msra.mxu0 %v558
        %1009 = vmatprep.subr.mxu0 0.0
        %1010 = vmatpush1.msra.mxu0 %v561
        %1011 = vmatprep.subr.mxu0 0.0
        %1012 = vmatpush1.msra.mxu0 %v564
        %1013 = vmatprep.subr.mxu0 0.0
        %1014 = vmatpush1.msra.mxu0 %v567
        %1015 = vmatprep.subr.mxu0 0.0
        %1016 = vmatpush1.msra.mxu0 %v570
        %1017 = vmatprep.subr.mxu0 0.0
        %1018 = vmatpush1.msra.mxu0 %v573
        %1019 = vmatprep.subr.mxu0 0.0
        %1020 = vmatpush1.msra.mxu0 %v576
        %1021 = vmatprep.subr.mxu0 0.0
        %1022 = vmatpush1.msra.mxu0 %v579
        %1023 = vmatprep.subr.mxu0 0.0
        %1024 = vmatpush1.msra.mxu0 %v582
        %1025 = vmatprep.subr.mxu0 0.0
        %1026 = vmatpush1.msra.mxu0 %v585
        %1027 = vmatprep.subr.mxu0 0.0
        %1028 = vmatpush1.msra.mxu0 %v588
        %1029 = vmatprep.subr.mxu0 0.0
        %1030 = vmatpush1.msra.mxu0 %v591
        %1031 = vmatprep.subr.mxu0 0.0
        %1032 = vmatpush1.msra.mxu0 %v594
        %1033 = vmatprep.subr.mxu0 0.0
        %1034 = vmatpush1.msra.mxu0 0.0
        %1035 = vmatprep.subr.mxu0 0.0
        %1036 = vmatpush1.msra.mxu0 0.0
        %1037 = vmatprep.subr.mxu0 0.0
        %1038 = vmatpush1.msra.mxu0 0.0
        %1039 = vmatprep.subr.mxu0 0.0
        %1040 = vmatpush1.msra.mxu0 0.0
        %1041 = vmatprep.subr.mxu0 0.0
        %1042 = vmatpush1.msra.mxu0 0.0
        %1043 = vmatprep.subr.mxu0 0.0
        %1044 = vmatpush1.msra.mxu0 0.0
        %1045 = vmatprep.subr.mxu0 0.0
        %1046 = vmatpush1.msra.mxu0 0.0
        %1047 = vmatprep.subr.mxu0 0.0
        %1048 = vmatpush1.msra.mxu0 0.0
        %1049 = vmatprep.subr.mxu0 0.0
        %1050 = vmatpush1.msra.mxu0 0.0
        %1051 = vmatprep.subr.mxu0 0.0
        %1052 = vmatpush1.msra.mxu0 0.0
        %1053 = vmatprep.mubr.f32.mxu0 %v891
        %1054 = vmatmul.mubr.f32.gmra.mrb[0].mxu0 %v521
        %v1055 = vpop.f32.mrb[0].mxu0
        %v1056 = vadd.f32 %v872, %v1055
        %v1057 = vpop.f32.mrb[0].mxu0
        %1058 = vmatprep.mubr.f32.mxu0 %v893
        %1059 = vmatmul.mubr.f32.gmra.mrb[0].mxu0 %v523
        %v1060 = vpop.f32.mrb[0].mxu0
        %v1061 = vadd.f32 %v877, %v1060
        %v1062 = vpop.f32.mrb[0].mxu0
        %1063 = vmatprep.mubr.f32.mxu0 %v896
        %1064 = vmatmul.mubr.f32.gmra.mrb[0].mxu0 %v525
        %v1065 = vpop.f32.mrb[0].mxu0
        %v1066 = vadd.f32 %v882, %v1065
        %v1067 = vpop.f32.mrb[0].mxu0
        %1068 = vmatprep.mubr.f32.mxu0 %v898
        %1069 = vmatmul.mubr.f32.gmra.mrb[0].mxu0 %v527
        %v1070 = vpop.f32.mrb[0].mxu0
        %v1071 = vadd.f32 %v887, %v1070
        %v1072 = vpop.f32.mrb[0].mxu0
        %1073 = vdwg.mxu0
        %v1074 = vld [vmem:[#allocation2] sm:$0xfc]
        %v1075 = vld [vmem:[#allocation2 + $0x8] sm:$0xfc]
        %v1076 = vld [vmem:[#allocation2 + $0x20] sm:$0x3]
        %v1077 = vld [vmem:[#allocation2 + $0x28] sm:$0x3]
        %v1078 = vld [vmem:[#allocation2 + $0x30] sm:$0xfc]
        %v1079 = vld [vmem:[#allocation2 + $0x38] sm:$0xfc]
        %v1080 = vld [vmem:[#allocation2 + $0x50] sm:$0x3]
        %v1081 = vld [vmem:[#allocation2 + $0x58] sm:$0x3]
        %vm1090 = vcmask 1045504
        %v1091 = vrot.slane %v1074, 2
        %v1092 = vrot.slane %v523, 2
        %v1093 = vsel %vm1090, %v1091, %v1092
        %v1094 = vrot.slane %v1075, 2
        %v1095 = vrot.slane %v524, 2
        %v1096 = vsel %vm1090, %v1094, %v1095
        %v1097 = vrot.slane %v1076, 2
        %v1098 = vsel %vm1090, %v1092, %v1097
        %v1099 = vrot.slane %v1077, 2
        %v1100 = vsel %vm1090, %v1095, %v1099
        %v1101 = vrot.slane %v1078, 2
        %v1102 = vrot.slane %v527, 2
        %v1103 = vsel %vm1090, %v1101, %v1102
        %v1104 = vrot.slane %v1079, 2
        %v1105 = vrot.slane %v528, 2
        %v1106 = vsel %vm1090, %v1104, %v1105
        %v1107 = vrot.slane %v1080, 2
        %v1108 = vsel %vm1090, %v1102, %v1107
        %v1109 = vrot.slane %v1081, 2
        %v1110 = vsel %vm1090, %v1105, %v1109
        %s1115 = scalar_lea.vmem %s1, 1056
        %v1116 = vld [vmem:[%s1115] sm:$0xff]
        %v1117 = vld [vmem:[%s1115 + $0x8] sm:$0xff]
        %v1118 = vld [vmem:[%s1115 + $0x10] sm:$0xff]
        %v1119 = vld [vmem:[%s1115 + $0x18] sm:$0xff]
        %v1120 = vld [vmem:[%s1115 + $0x20] sm:$0xff]
        %v1121 = vld [vmem:[%s1115 + $0x28] sm:$0xff]
        %v1122 = vld [vmem:[%s1115 + $0x30] sm:$0xff]
        %v1123 = vld [vmem:[%s1115 + $0x38] sm:$0xff]
        %v1124 = vld [vmem:[%s1115 + $0x40] sm:$0xff]
        %v1125 = vld [vmem:[%s1115 + $0x48] sm:$0xff]
        %v1126 = vld [vmem:[%s1115 + $0x50] sm:$0xff]
        %v1127 = vld [vmem:[%s1115 + $0x58] sm:$0xff]
        %v1128 = vld [vmem:[%s1115 + $0x60] sm:$0xff]
        %v1129 = vld [vmem:[%s1115 + $0x68] sm:$0xff]
        %v1130 = vld [vmem:[%s1115 + $0x70] sm:$0xff]
        %v1131 = vld [vmem:[%s1115 + $0x78] sm:$0xff]
        %v1132 = vld [vmem:[%s1115 + $0x80] sm:$0xff]
        %v1133 = vld [vmem:[%s1115 + $0x88] sm:$0xff]
        %v1134 = vld [vmem:[%s1115 + $0x90] sm:$0xff]
        %v1135 = vld [vmem:[%s1115 + $0x98] sm:$0xff]
        %v1136 = vld [vmem:[%s1115 + $0xa0] sm:$0xff]
        %v1137 = vld [vmem:[%s1115 + $0xa8] sm:$0xff]
        %v1138 = vld [vmem:[%s1115 + $0xb0] sm:$0xff]
        %v1139 = vld [vmem:[%s1115 + $0xb8] sm:$0xff]
        %v1140 = vld [vmem:[%s1115 + $0xc0] sm:$0xff]
        %v1141 = vld [vmem:[%s1115 + $0xc8] sm:$0xff]
        %v1142 = vld [vmem:[%s1115 + $0xd0] sm:$0xff]
        %v1143 = vld [vmem:[%s1115 + $0xd8] sm:$0xff]
        %v1144 = vld [vmem:[%s1115 + $0xe0] sm:$0xff]
        %v1145 = vld [vmem:[%s1115 + $0xe8] sm:$0xff]
        %v1146 = vld [vmem:[%s1115 + $0xf0] sm:$0xff]
        %v1147 = vld [vmem:[%s1115 + $0xf8] sm:$0xff]
        %v1148 = vld [vmem:[%s1115 + $0x100] sm:$0xff]
        %v1149 = vld [vmem:[%s1115 + $0x108] sm:$0xff]
        %v1150 = vld [vmem:[%s1115 + $0x110] sm:$0xff]
        %v1151 = vld [vmem:[%s1115 + $0x118] sm:$0xff]
        %v1152 = vld [vmem:[%s1115 + $0x120] sm:$0xff]
        %v1153 = vld [vmem:[%s1115 + $0x128] sm:$0xff]
        %v1154 = vld [vmem:[%s1115 + $0x130] sm:$0xff]
        %v1155 = vld [vmem:[%s1115 + $0x138] sm:$0xff]
        %v1156 = vld [vmem:[%s1115 + $0x140] sm:$0xff]
        %v1157 = vld [vmem:[%s1115 + $0x148] sm:$0xff]
        %v1158 = vld [vmem:[%s1115 + $0x150] sm:$0xff]
        %v1159 = vld [vmem:[%s1115 + $0x158] sm:$0xff]
        %v1160 = vld [vmem:[%s1115 + $0x160] sm:$0xff]
        %v1161 = vld [vmem:[%s1115 + $0x168] sm:$0xff]
        %v1162 = vld [vmem:[%s1115 + $0x170] sm:$0xff]
        %v1163 = vld [vmem:[%s1115 + $0x178] sm:$0xff]
        %v1164 = vld [vmem:[%s1115 + $0x180] sm:$0xff]
        %v1165 = vld [vmem:[%s1115 + $0x188] sm:$0xff]
        %v1166 = vld [vmem:[%s1115 + $0x190] sm:$0xff]
        %v1167 = vld [vmem:[%s1115 + $0x198] sm:$0xff]
        %v1168 = vld [vmem:[%s1115 + $0x1a0] sm:$0xff]
        %v1169 = vld [vmem:[%s1115 + $0x1a8] sm:$0xff]
        %v1170 = vld [vmem:[%s1115 + $0x1b0] sm:$0xff]
        %v1171 = vld [vmem:[%s1115 + $0x1b8] sm:$0xff]
        %v1172 = vld [vmem:[%s1115 + $0x1c0] sm:$0xff]
        %v1173 = vld [vmem:[%s1115 + $0x1c8] sm:$0xff]
        %v1174 = vld [vmem:[%s1115 + $0x1d0] sm:$0xff]
        %v1175 = vld [vmem:[%s1115 + $0x1d8] sm:$0xff]
        %v1176 = vld [vmem:[%s1115 + $0x1e0] sm:$0xff]
        %v1177 = vld [vmem:[%s1115 + $0x1e8] sm:$0xff]
        %v1178 = vld [vmem:[%s1115 + $0x1f0] sm:$0xff]
        %v1179 = vld [vmem:[%s1115 + $0x1f8] sm:$0xff]
        %v1180 = vld [vmem:[%s1115 + $0x200] sm:$0xff]
        %v1181 = vld [vmem:[%s1115 + $0x208] sm:$0xff]
        %v1182 = vsel %vm707, %v1096, 0
        %v1184 = vsel %vm707, %v1100, 0
        %v1186 = vsel %vm707, %v1106, 0
        %v1188 = vsel %vm707, %v1110, 0
        %1190 = vmatprep.subr.mxu0 %v1117
        %1191 = vmatpush1.msra.mxu0 %v1116
        %1192 = vmatprep.subr.mxu0 %v1120
        %1193 = vmatpush1.msra.mxu0 %v1119
        %1194 = vmatprep.subr.mxu0 %v1123
        %1195 = vmatpush1.msra.mxu0 %v1122
        %1196 = vmatprep.subr.mxu0 %v1126
        %1197 = vmatpush1.msra.mxu0 %v1125
        %1198 = vmatprep.subr.mxu0 %v1129
        %1199 = vmatpush1.msra.mxu0 %v1128
        %1200 = vmatprep.subr.mxu0 %v1132
        %1201 = vmatpush1.msra.mxu0 %v1131
        %1202 = vmatprep.subr.mxu0 %v1135
        %1203 = vmatpush1.msra.mxu0 %v1134
        %1204 = vmatprep.subr.mxu0 %v1138
        %1205 = vmatpush1.msra.mxu0 %v1137
        %1206 = vmatprep.subr.mxu0 %v1141
        %1207 = vmatpush1.msra.mxu0 %v1140
        %1208 = vmatprep.subr.mxu0 %v1144
        %1209 = vmatpush1.msra.mxu0 %v1143
        %1210 = vmatprep.subr.mxu0 %v1147
        %1211 = vmatpush1.msra.mxu0 %v1146
        %1212 = vmatprep.subr.mxu0 %v1150
        %1213 = vmatpush1.msra.mxu0 %v1149
        %1214 = vmatprep.subr.mxu0 %v1153
        %1215 = vmatpush1.msra.mxu0 %v1152
        %1216 = vmatprep.subr.mxu0 %v1156
        %1217 = vmatpush1.msra.mxu0 %v1155
        %1218 = vmatprep.subr.mxu0 %v1159
        %1219 = vmatpush1.msra.mxu0 %v1158
        %1220 = vmatprep.subr.mxu0 %v1162
        %1221 = vmatpush1.msra.mxu0 %v1161
        %1222 = vmatprep.subr.mxu0 %v1165
        %1223 = vmatpush1.msra.mxu0 %v1164
        %1224 = vmatprep.subr.mxu0 %v1168
        %1225 = vmatpush1.msra.mxu0 %v1167
        %1226 = vmatprep.subr.mxu0 %v1171
        %1227 = vmatpush1.msra.mxu0 %v1170
        %1228 = vmatprep.subr.mxu0 %v1174
        %1229 = vmatpush1.msra.mxu0 %v1173
        %1230 = vmatprep.subr.mxu0 %v1177
        %1231 = vmatpush1.msra.mxu0 %v1176
        %1232 = vmatprep.subr.mxu0 %v1180
        %1233 = vmatpush1.msra.mxu0 %v1179
        %1234 = vmatprep.subr.mxu0 0.0
        %1235 = vmatpush1.msra.mxu0 0.0
        %1236 = vmatprep.subr.mxu0 0.0
        %1237 = vmatpush1.msra.mxu0 0.0
        %1238 = vmatprep.subr.mxu0 0.0
        %1239 = vmatpush1.msra.mxu0 0.0
        %1240 = vmatprep.subr.mxu0 0.0
        %1241 = vmatpush1.msra.mxu0 0.0
        %1242 = vmatprep.subr.mxu0 0.0
        %1243 = vmatpush1.msra.mxu0 0.0
        %1244 = vmatprep.subr.mxu0 0.0
        %1245 = vmatpush1.msra.mxu0 0.0
        %1246 = vmatprep.subr.mxu0 0.0
        %1247 = vmatpush1.msra.mxu0 0.0
        %1248 = vmatprep.subr.mxu0 0.0
        %1249 = vmatpush1.msra.mxu0 0.0
        %1250 = vmatprep.subr.mxu0 0.0
        %1251 = vmatpush1.msra.mxu0 0.0
        %1252 = vmatprep.subr.mxu0 0.0
        %1253 = vmatpush1.msra.mxu0 0.0
        %1254 = vmatprep.mubr.f32.mxu0 %v1182
        %1255 = vmatmul.mubr.f32.gmra.mrb[0].mxu0 %v1093
        %v1256 = vpop.f32.mrb[0].mxu0
        %v1257 = vadd.f32 0.0, %v1256
        %v1258 = vpop.f32.mrb[0].mxu0
        %v1259 = vadd.f32 0.0, %v1258
        %1260 = vmatprep.mubr.f32.mxu0 %v1184
        %1261 = vmatmul.mubr.f32.gmra.mrb[0].mxu0 %v1098
        %v1262 = vpop.f32.mrb[0].mxu0
        %v1263 = vadd.f32 0.0, %v1262
        %v1264 = vpop.f32.mrb[0].mxu0
        %v1265 = vadd.f32 0.0, %v1264
        %1266 = vmatprep.mubr.f32.mxu0 %v1186
        %1267 = vmatmul.mubr.f32.gmra.mrb[0].mxu0 %v1103
        %v1268 = vpop.f32.mrb[0].mxu0
        %v1269 = vadd.f32 0.0, %v1268
        %v1270 = vpop.f32.mrb[0].mxu0
        %v1271 = vadd.f32 0.0, %v1270
        %1272 = vmatprep.mubr.f32.mxu0 %v1188
        %1273 = vmatmul.mubr.f32.gmra.mrb[0].mxu0 %v1108
        %v1274 = vpop.f32.mrb[0].mxu0
        %v1275 = vadd.f32 0.0, %v1274
        %v1276 = vpop.f32.mrb[0].mxu0
        %v1277 = vadd.f32 0.0, %v1276
        %1278 = vdwg.mxu0
        %1279 = vmatprep.subr.mxu0 0.0
        %1280 = vmatpush1.msra.mxu0 %v1118
        %1281 = vmatprep.subr.mxu0 0.0
        %1282 = vmatpush1.msra.mxu0 %v1121
        %1283 = vmatprep.subr.mxu0 0.0
        %1284 = vmatpush1.msra.mxu0 %v1124
        %1285 = vmatprep.subr.mxu0 0.0
        %1286 = vmatpush1.msra.mxu0 %v1127
        %1287 = vmatprep.subr.mxu0 0.0
        %1288 = vmatpush1.msra.mxu0 %v1130
        %1289 = vmatprep.subr.mxu0 0.0
        %1290 = vmatpush1.msra.mxu0 %v1133
        %1291 = vmatprep.subr.mxu0 0.0
        %1292 = vmatpush1.msra.mxu0 %v1136
        %1293 = vmatprep.subr.mxu0 0.0
        %1294 = vmatpush1.msra.mxu0 %v1139
        %1295 = vmatprep.subr.mxu0 0.0
        %1296 = vmatpush1.msra.mxu0 %v1142
        %1297 = vmatprep.subr.mxu0 0.0
        %1298 = vmatpush1.msra.mxu0 %v1145
        %1299 = vmatprep.subr.mxu0 0.0
        %1300 = vmatpush1.msra.mxu0 %v1148
        %1301 = vmatprep.subr.mxu0 0.0
        %1302 = vmatpush1.msra.mxu0 %v1151
        %1303 = vmatprep.subr.mxu0 0.0
        %1304 = vmatpush1.msra.mxu0 %v1154
        %1305 = vmatprep.subr.mxu0 0.0
        %1306 = vmatpush1.msra.mxu0 %v1157
        %1307 = vmatprep.subr.mxu0 0.0
        %1308 = vmatpush1.msra.mxu0 %v1160
        %1309 = vmatprep.subr.mxu0 0.0
        %1310 = vmatpush1.msra.mxu0 %v1163
        %1311 = vmatprep.subr.mxu0 0.0
        %1312 = vmatpush1.msra.mxu0 %v1166
        %1313 = vmatprep.subr.mxu0 0.0
        %1314 = vmatpush1.msra.mxu0 %v1169
        %1315 = vmatprep.subr.mxu0 0.0
        %1316 = vmatpush1.msra.mxu0 %v1172
        %1317 = vmatprep.subr.mxu0 0.0
        %1318 = vmatpush1.msra.mxu0 %v1175
        %1319 = vmatprep.subr.mxu0 0.0
        %1320 = vmatpush1.msra.mxu0 %v1178
        %1321 = vmatprep.subr.mxu0 0.0
        %1322 = vmatpush1.msra.mxu0 %v1181
        %1323 = vmatprep.subr.mxu0 0.0
        %1324 = vmatpush1.msra.mxu0 0.0
        %1325 = vmatprep.subr.mxu0 0.0
        %1326 = vmatpush1.msra.mxu0 0.0
        %1327 = vmatprep.subr.mxu0 0.0
        %1328 = vmatpush1.msra.mxu0 0.0
        %1329 = vmatprep.subr.mxu0 0.0
        %1330 = vmatpush1.msra.mxu0 0.0
        %1331 = vmatprep.subr.mxu0 0.0
        %1332 = vmatpush1.msra.mxu0 0.0
        %1333 = vmatprep.subr.mxu0 0.0
        %1334 = vmatpush1.msra.mxu0 0.0
        %1335 = vmatprep.subr.mxu0 0.0
        %1336 = vmatpush1.msra.mxu0 0.0
        %1337 = vmatprep.subr.mxu0 0.0
        %1338 = vmatpush1.msra.mxu0 0.0
        %1339 = vmatprep.subr.mxu0 0.0
        %1340 = vmatpush1.msra.mxu0 0.0
        %1341 = vmatprep.subr.mxu0 0.0
        %1342 = vmatpush1.msra.mxu0 0.0
        %1343 = vmatprep.mubr.f32.mxu0 %v1182
        %1344 = vmatmul.mubr.f32.gmra.mrb[0].mxu0 %v1093
        %v1345 = vpop.f32.mrb[0].mxu0
        %v1346 = vadd.f32 0.0, %v1345
        %v1347 = vpop.f32.mrb[0].mxu0
        %1348 = vmatprep.mubr.f32.mxu0 %v1184
        %1349 = vmatmul.mubr.f32.gmra.mrb[0].mxu0 %v1098
        %v1350 = vpop.f32.mrb[0].mxu0
        %v1351 = vadd.f32 0.0, %v1350
        %v1352 = vpop.f32.mrb[0].mxu0
        %1353 = vmatprep.mubr.f32.mxu0 %v1186
        %1354 = vmatmul.mubr.f32.gmra.mrb[0].mxu0 %v1103
        %v1355 = vpop.f32.mrb[0].mxu0
        %v1356 = vadd.f32 0.0, %v1355
        %v1357 = vpop.f32.mrb[0].mxu0
        %1358 = vmatprep.mubr.f32.mxu0 %v1188
        %1359 = vmatmul.mubr.f32.gmra.mrb[0].mxu0 %v1108
        %v1360 = vpop.f32.mrb[0].mxu0
        %v1361 = vadd.f32 0.0, %v1360
        %v1362 = vpop.f32.mrb[0].mxu0
        %1363 = vdwg.mxu0
        %v1364 = vadd.f32 %v967, %v1257
        %v1365 = vadd.f32 %v969, %v1259
        %v1366 = vadd.f32 %v1056, %v1346
        %v1367 = vadd.f32 %v973, %v1263
        %v1368 = vadd.f32 %v975, %v1265
        %v1369 = vadd.f32 %v1061, %v1351
        %v1370 = vadd.f32 %v979, %v1269
        %v1371 = vadd.f32 %v981, %v1271
        %v1372 = vadd.f32 %v1066, %v1356
        %v1373 = vadd.f32 %v985, %v1275
        %v1374 = vadd.f32 %v987, %v1277
        %v1375 = vadd.f32 %v1071, %v1361
        %v1376 = vld [vmem:[#allocation2] sm:$0xf8]
        %v1377 = vld [vmem:[#allocation2 + $0x8] sm:$0xf8]
        %v1378 = vld [vmem:[#allocation2 + $0x20] sm:$0x7]
        %v1379 = vld [vmem:[#allocation2 + $0x28] sm:$0x7]
        %v1380 = vld [vmem:[#allocation2 + $0x30] sm:$0xf8]
        %v1381 = vld [vmem:[#allocation2 + $0x38] sm:$0xf8]
        %v1382 = vld [vmem:[#allocation2 + $0x50] sm:$0x7]
        %v1383 = vld [vmem:[#allocation2 + $0x58] sm:$0x7]
        %vm1392 = vcmask 1044480
        %v1393 = vrot.slane %v1376, 3
        %v1394 = vrot.slane %v523, 3
        %v1395 = vsel %vm1392, %v1393, %v1394
        %v1396 = vrot.slane %v1377, 3
        %v1397 = vrot.slane %v524, 3
        %v1398 = vsel %vm1392, %v1396, %v1397
        %v1399 = vrot.slane %v1378, 3
        %v1400 = vsel %vm1392, %v1394, %v1399
        %v1401 = vrot.slane %v1379, 3
        %v1402 = vsel %vm1392, %v1397, %v1401
        %v1403 = vrot.slane %v1380, 3
        %v1404 = vrot.slane %v527, 3
        %v1405 = vsel %vm1392, %v1403, %v1404
        %v1406 = vrot.slane %v1381, 3
        %v1407 = vrot.slane %v528, 3
        %v1408 = vsel %vm1392, %v1406, %v1407
        %v1409 = vrot.slane %v1382, 3
        %v1410 = vsel %vm1392, %v1404, %v1409
        %v1411 = vrot.slane %v1383, 3
        %v1412 = vsel %vm1392, %v1407, %v1411
        %s1417 = scalar_lea.vmem %s1, 1584
        %v1418 = vld [vmem:[%s1417] sm:$0xff]
        %v1419 = vld [vmem:[%s1417 + $0x8] sm:$0xff]
        %v1420 = vld [vmem:[%s1417 + $0x10] sm:$0xff]
        %v1421 = vld [vmem:[%s1417 + $0x18] sm:$0xff]
        %v1422 = vld [vmem:[%s1417 + $0x20] sm:$0xff]
        %v1423 = vld [vmem:[%s1417 + $0x28] sm:$0xff]
        %v1424 = vld [vmem:[%s1417 + $0x30] sm:$0xff]
        %v1425 = vld [vmem:[%s1417 + $0x38] sm:$0xff]
        %v1426 = vld [vmem:[%s1417 + $0x40] sm:$0xff]
        %v1427 = vld [vmem:[%s1417 + $0x48] sm:$0xff]
        %v1428 = vld [vmem:[%s1417 + $0x50] sm:$0xff]
        %v1429 = vld [vmem:[%s1417 + $0x58] sm:$0xff]
        %v1430 = vld [vmem:[%s1417 + $0x60] sm:$0xff]
        %v1431 = vld [vmem:[%s1417 + $0x68] sm:$0xff]
        %v1432 = vld [vmem:[%s1417 + $0x70] sm:$0xff]
        %v1433 = vld [vmem:[%s1417 + $0x78] sm:$0xff]
        %v1434 = vld [vmem:[%s1417 + $0x80] sm:$0xff]
        %v1435 = vld [vmem:[%s1417 + $0x88] sm:$0xff]
        %v1436 = vld [vmem:[%s1417 + $0x90] sm:$0xff]
        %v1437 = vld [vmem:[%s1417 + $0x98] sm:$0xff]
        %v1438 = vld [vmem:[%s1417 + $0xa0] sm:$0xff]
        %v1439 = vld [vmem:[%s1417 + $0xa8] sm:$0xff]
        %v1440 = vld [vmem:[%s1417 + $0xb0] sm:$0xff]
        %v1441 = vld [vmem:[%s1417 + $0xb8] sm:$0xff]
        %v1442 = vld [vmem:[%s1417 + $0xc0] sm:$0xff]
        %v1443 = vld [vmem:[%s1417 + $0xc8] sm:$0xff]
        %v1444 = vld [vmem:[%s1417 + $0xd0] sm:$0xff]
        %v1445 = vld [vmem:[%s1417 + $0xd8] sm:$0xff]
        %v1446 = vld [vmem:[%s1417 + $0xe0] sm:$0xff]
        %v1447 = vld [vmem:[%s1417 + $0xe8] sm:$0xff]
        %v1448 = vld [vmem:[%s1417 + $0xf0] sm:$0xff]
        %v1449 = vld [vmem:[%s1417 + $0xf8] sm:$0xff]
        %v1450 = vld [vmem:[%s1417 + $0x100] sm:$0xff]
        %v1451 = vld [vmem:[%s1417 + $0x108] sm:$0xff]
        %v1452 = vld [vmem:[%s1417 + $0x110] sm:$0xff]
        %v1453 = vld [vmem:[%s1417 + $0x118] sm:$0xff]
        %v1454 = vld [vmem:[%s1417 + $0x120] sm:$0xff]
        %v1455 = vld [vmem:[%s1417 + $0x128] sm:$0xff]
        %v1456 = vld [vmem:[%s1417 + $0x130] sm:$0xff]
        %v1457 = vld [vmem:[%s1417 + $0x138] sm:$0xff]
        %v1458 = vld [vmem:[%s1417 + $0x140] sm:$0xff]
        %v1459 = vld [vmem:[%s1417 + $0x148] sm:$0xff]
        %v1460 = vld [vmem:[%s1417 + $0x150] sm:$0xff]
        %v1461 = vld [vmem:[%s1417 + $0x158] sm:$0xff]
        %v1462 = vld [vmem:[%s1417 + $0x160] sm:$0xff]
        %v1463 = vld [vmem:[%s1417 + $0x168] sm:$0xff]
        %v1464 = vld [vmem:[%s1417 + $0x170] sm:$0xff]
        %v1465 = vld [vmem:[%s1417 + $0x178] sm:$0xff]
        %v1466 = vld [vmem:[%s1417 + $0x180] sm:$0xff]
        %v1467 = vld [vmem:[%s1417 + $0x188] sm:$0xff]
        %v1468 = vld [vmem:[%s1417 + $0x190] sm:$0xff]
        %v1469 = vld [vmem:[%s1417 + $0x198] sm:$0xff]
        %v1470 = vld [vmem:[%s1417 + $0x1a0] sm:$0xff]
        %v1471 = vld [vmem:[%s1417 + $0x1a8] sm:$0xff]
        %v1472 = vld [vmem:[%s1417 + $0x1b0] sm:$0xff]
        %v1473 = vld [vmem:[%s1417 + $0x1b8] sm:$0xff]
        %v1474 = vld [vmem:[%s1417 + $0x1c0] sm:$0xff]
        %v1475 = vld [vmem:[%s1417 + $0x1c8] sm:$0xff]
        %v1476 = vld [vmem:[%s1417 + $0x1d0] sm:$0xff]
        %v1477 = vld [vmem:[%s1417 + $0x1d8] sm:$0xff]
        %v1478 = vld [vmem:[%s1417 + $0x1e0] sm:$0xff]
        %v1479 = vld [vmem:[%s1417 + $0x1e8] sm:$0xff]
        %v1480 = vld [vmem:[%s1417 + $0x1f0] sm:$0xff]
        %v1481 = vld [vmem:[%s1417 + $0x1f8] sm:$0xff]
        %v1482 = vld [vmem:[%s1417 + $0x200] sm:$0xff]
        %v1483 = vld [vmem:[%s1417 + $0x208] sm:$0xff]
        %v1484 = vsel %vm707, %v1398, 0
        %v1486 = vsel %vm707, %v1402, 0
        %v1488 = vsel %vm707, %v1408, 0
        %v1490 = vsel %vm707, %v1412, 0
        %1492 = vmatprep.subr.mxu0 %v1419
        %1493 = vmatpush1.msra.mxu0 %v1418
        %1494 = vmatprep.subr.mxu0 %v1422
        %1495 = vmatpush1.msra.mxu0 %v1421
        %1496 = vmatprep.subr.mxu0 %v1425
        %1497 = vmatpush1.msra.mxu0 %v1424
        %1498 = vmatprep.subr.mxu0 %v1428
        %1499 = vmatpush1.msra.mxu0 %v1427
        %1500 = vmatprep.subr.mxu0 %v1431
        %1501 = vmatpush1.msra.mxu0 %v1430
        %1502 = vmatprep.subr.mxu0 %v1434
        %1503 = vmatpush1.msra.mxu0 %v1433
        %1504 = vmatprep.subr.mxu0 %v1437
        %1505 = vmatpush1.msra.mxu0 %v1436
        %1506 = vmatprep.subr.mxu0 %v1440
        %1507 = vmatpush1.msra.mxu0 %v1439
        %1508 = vmatprep.subr.mxu0 %v1443
        %1509 = vmatpush1.msra.mxu0 %v1442
        %1510 = vmatprep.subr.mxu0 %v1446
        %1511 = vmatpush1.msra.mxu0 %v1445
        %1512 = vmatprep.subr.mxu0 %v1449
        %1513 = vmatpush1.msra.mxu0 %v1448
        %1514 = vmatprep.subr.mxu0 %v1452
        %1515 = vmatpush1.msra.mxu0 %v1451
        %1516 = vmatprep.subr.mxu0 %v1455
        %1517 = vmatpush1.msra.mxu0 %v1454
        %1518 = vmatprep.subr.mxu0 %v1458
        %1519 = vmatpush1.msra.mxu0 %v1457
        %1520 = vmatprep.subr.mxu0 %v1461
        %1521 = vmatpush1.msra.mxu0 %v1460
        %1522 = vmatprep.subr.mxu0 %v1464
        %1523 = vmatpush1.msra.mxu0 %v1463
        %1524 = vmatprep.subr.mxu0 %v1467
        %1525 = vmatpush1.msra.mxu0 %v1466
        %1526 = vmatprep.subr.mxu0 %v1470
        %1527 = vmatpush1.msra.mxu0 %v1469
        %1528 = vmatprep.subr.mxu0 %v1473
        %1529 = vmatpush1.msra.mxu0 %v1472
        %1530 = vmatprep.subr.mxu0 %v1476
        %1531 = vmatpush1.msra.mxu0 %v1475
        %1532 = vmatprep.subr.mxu0 %v1479
        %1533 = vmatpush1.msra.mxu0 %v1478
        %1534 = vmatprep.subr.mxu0 %v1482
        %1535 = vmatpush1.msra.mxu0 %v1481
        %1536 = vmatprep.subr.mxu0 0.0
        %1537 = vmatpush1.msra.mxu0 0.0
        %1538 = vmatprep.subr.mxu0 0.0
        %1539 = vmatpush1.msra.mxu0 0.0
        %1540 = vmatprep.subr.mxu0 0.0
        %1541 = vmatpush1.msra.mxu0 0.0
        %1542 = vmatprep.subr.mxu0 0.0
        %1543 = vmatpush1.msra.mxu0 0.0
        %1544 = vmatprep.subr.mxu0 0.0
        %1545 = vmatpush1.msra.mxu0 0.0
        %1546 = vmatprep.subr.mxu0 0.0
        %1547 = vmatpush1.msra.mxu0 0.0
        %1548 = vmatprep.subr.mxu0 0.0
        %1549 = vmatpush1.msra.mxu0 0.0
        %1550 = vmatprep.subr.mxu0 0.0
        %1551 = vmatpush1.msra.mxu0 0.0
        %1552 = vmatprep.subr.mxu0 0.0
        %1553 = vmatpush1.msra.mxu0 0.0
        %1554 = vmatprep.subr.mxu0 0.0
        %1555 = vmatpush1.msra.mxu0 0.0
        %1556 = vmatprep.mubr.f32.mxu0 %v1484
        %1557 = vmatmul.mubr.f32.gmra.mrb[0].mxu0 %v1395
        %v1558 = vpop.f32.mrb[0].mxu0
        %v1559 = vadd.f32 0.0, %v1558
        %v1560 = vpop.f32.mrb[0].mxu0
        %v1561 = vadd.f32 0.0, %v1560
        %1562 = vmatprep.mubr.f32.mxu0 %v1486
        %1563 = vmatmul.mubr.f32.gmra.mrb[0].mxu0 %v1400
        %v1564 = vpop.f32.mrb[0].mxu0
        %v1565 = vadd.f32 0.0, %v1564
        %v1566 = vpop.f32.mrb[0].mxu0
        %v1567 = vadd.f32 0.0, %v1566
        %1568 = vmatprep.mubr.f32.mxu0 %v1488
        %1569 = vmatmul.mubr.f32.gmra.mrb[0].mxu0 %v1405
        %v1570 = vpop.f32.mrb[0].mxu0
        %v1571 = vadd.f32 0.0, %v1570
        %v1572 = vpop.f32.mrb[0].mxu0
        %v1573 = vadd.f32 0.0, %v1572
        %1574 = vmatprep.mubr.f32.mxu0 %v1490
        %1575 = vmatmul.mubr.f32.gmra.mrb[0].mxu0 %v1410
        %v1576 = vpop.f32.mrb[0].mxu0
        %v1577 = vadd.f32 0.0, %v1576
        %v1578 = vpop.f32.mrb[0].mxu0
        %v1579 = vadd.f32 0.0, %v1578
        %1580 = vdwg.mxu0
        %1581 = vmatprep.subr.mxu0 0.0
        %1582 = vmatpush1.msra.mxu0 %v1420
        %1583 = vmatprep.subr.mxu0 0.0
        %1584 = vmatpush1.msra.mxu0 %v1423
        %1585 = vmatprep.subr.mxu0 0.0
        %1586 = vmatpush1.msra.mxu0 %v1426
        %1587 = vmatprep.subr.mxu0 0.0
        %1588 = vmatpush1.msra.mxu0 %v1429
        %1589 = vmatprep.subr.mxu0 0.0
        %1590 = vmatpush1.msra.mxu0 %v1432
        %1591 = vmatprep.subr.mxu0 0.0
        %1592 = vmatpush1.msra.mxu0 %v1435
        %1593 = vmatprep.subr.mxu0 0.0
        %1594 = vmatpush1.msra.mxu0 %v1438
        %1595 = vmatprep.subr.mxu0 0.0
        %1596 = vmatpush1.msra.mxu0 %v1441
        %1597 = vmatprep.subr.mxu0 0.0
        %1598 = vmatpush1.msra.mxu0 %v1444
        %1599 = vmatprep.subr.mxu0 0.0
        %1600 = vmatpush1.msra.mxu0 %v1447
        %1601 = vmatprep.subr.mxu0 0.0
        %1602 = vmatpush1.msra.mxu0 %v1450
        %1603 = vmatprep.subr.mxu0 0.0
        %1604 = vmatpush1.msra.mxu0 %v1453
        %1605 = vmatprep.subr.mxu0 0.0
        %1606 = vmatpush1.msra.mxu0 %v1456
        %1607 = vmatprep.subr.mxu0 0.0
        %1608 = vmatpush1.msra.mxu0 %v1459
        %1609 = vmatprep.subr.mxu0 0.0
        %1610 = vmatpush1.msra.mxu0 %v1462
        %1611 = vmatprep.subr.mxu0 0.0
        %1612 = vmatpush1.msra.mxu0 %v1465
        %1613 = vmatprep.subr.mxu0 0.0
        %1614 = vmatpush1.msra.mxu0 %v1468
        %1615 = vmatprep.subr.mxu0 0.0
        %1616 = vmatpush1.msra.mxu0 %v1471
        %1617 = vmatprep.subr.mxu0 0.0
        %1618 = vmatpush1.msra.mxu0 %v1474
        %1619 = vmatprep.subr.mxu0 0.0
        %1620 = vmatpush1.msra.mxu0 %v1477
        %1621 = vmatprep.subr.mxu0 0.0
        %1622 = vmatpush1.msra.mxu0 %v1480
        %1623 = vmatprep.subr.mxu0 0.0
        %1624 = vmatpush1.msra.mxu0 %v1483
        %1625 = vmatprep.subr.mxu0 0.0
        %1626 = vmatpush1.msra.mxu0 0.0
        %1627 = vmatprep.subr.mxu0 0.0
        %1628 = vmatpush1.msra.mxu0 0.0
        %1629 = vmatprep.subr.mxu0 0.0
        %1630 = vmatpush1.msra.mxu0 0.0
        %1631 = vmatprep.subr.mxu0 0.0
        %1632 = vmatpush1.msra.mxu0 0.0
        %1633 = vmatprep.subr.mxu0 0.0
        %1634 = vmatpush1.msra.mxu0 0.0
        %1635 = vmatprep.subr.mxu0 0.0
        %1636 = vmatpush1.msra.mxu0 0.0
        %1637 = vmatprep.subr.mxu0 0.0
        %1638 = vmatpush1.msra.mxu0 0.0
        %1639 = vmatprep.subr.mxu0 0.0
        %1640 = vmatpush1.msra.mxu0 0.0
        %1641 = vmatprep.subr.mxu0 0.0
        %1642 = vmatpush1.msra.mxu0 0.0
        %1643 = vmatprep.subr.mxu0 0.0
        %1644 = vmatpush1.msra.mxu0 0.0
        %1645 = vmatprep.mubr.f32.mxu0 %v1484
        %1646 = vmatmul.mubr.f32.gmra.mrb[0].mxu0 %v1395
        %v1647 = vpop.f32.mrb[0].mxu0
        %v1648 = vadd.f32 0.0, %v1647
        %v1649 = vpop.f32.mrb[0].mxu0
        %1650 = vmatprep.mubr.f32.mxu0 %v1486
        %1651 = vmatmul.mubr.f32.gmra.mrb[0].mxu0 %v1400
        %v1652 = vpop.f32.mrb[0].mxu0
        %v1653 = vadd.f32 0.0, %v1652
        %v1654 = vpop.f32.mrb[0].mxu0
        %1655 = vmatprep.mubr.f32.mxu0 %v1488
        %1656 = vmatmul.mubr.f32.gmra.mrb[0].mxu0 %v1405
        %v1657 = vpop.f32.mrb[0].mxu0
        %v1658 = vadd.f32 0.0, %v1657
        %v1659 = vpop.f32.mrb[0].mxu0
        %1660 = vmatprep.mubr.f32.mxu0 %v1490
        %1661 = vmatmul.mubr.f32.gmra.mrb[0].mxu0 %v1410
        %v1662 = vpop.f32.mrb[0].mxu0
        %v1663 = vadd.f32 0.0, %v1662
        %v1664 = vpop.f32.mrb[0].mxu0
        %1665 = vdwg.mxu0
        %v1666 = vadd.f32 %v1364, %v1559
        %v1667 = vadd.f32 %v1365, %v1561
        %v1668 = vadd.f32 %v1366, %v1648
        %v1669 = vadd.f32 %v1367, %v1565
        %v1670 = vadd.f32 %v1368, %v1567
        %v1671 = vadd.f32 %v1369, %v1653
        %v1672 = vadd.f32 %v1370, %v1571
        %v1673 = vadd.f32 %v1371, %v1573
        %v1674 = vadd.f32 %v1372, %v1658
        %v1675 = vadd.f32 %v1373, %v1577
        %v1676 = vadd.f32 %v1374, %v1579
        %v1677 = vadd.f32 %v1375, %v1663
        %v1678 = vld [vmem:[#allocation2] sm:$0xf0]
        %v1679 = vld [vmem:[#allocation2 + $0x8] sm:$0xf0]
        %v1680 = vld [vmem:[#allocation2 + $0x20] sm:$0xf]
        %v1681 = vld [vmem:[#allocation2 + $0x28] sm:$0xf]
        %v1682 = vld [vmem:[#allocation2 + $0x30] sm:$0xf0]
        %v1683 = vld [vmem:[#allocation2 + $0x38] sm:$0xf0]
        %v1684 = vld [vmem:[#allocation2 + $0x50] sm:$0xf]
        %v1685 = vld [vmem:[#allocation2 + $0x58] sm:$0xf]
        %vm1694 = vcmask 1043456
        %v1695 = vrot.slane %v1678, 4
        %v1696 = vrot.slane %v523, 4
        %v1697 = vsel %vm1694, %v1695, %v1696
        %v1698 = vrot.slane %v1679, 4
        %v1699 = vrot.slane %v524, 4
        %v1700 = vsel %vm1694, %v1698, %v1699
        %v1701 = vrot.slane %v1680, 4
        %v1702 = vsel %vm1694, %v1696, %v1701
        %v1703 = vrot.slane %v1681, 4
        %v1704 = vsel %vm1694, %v1699, %v1703
        %v1705 = vrot.slane %v1682, 4
        %v1706 = vrot.slane %v527, 4
        %v1707 = vsel %vm1694, %v1705, %v1706
        %v1708 = vrot.slane %v1683, 4
        %v1709 = vrot.slane %v528, 4
        %v1710 = vsel %vm1694, %v1708, %v1709
        %v1711 = vrot.slane %v1684, 4
        %v1712 = vsel %vm1694, %v1706, %v1711
        %v1713 = vrot.slane %v1685, 4
        %v1714 = vsel %vm1694, %v1709, %v1713
        %s1719 = scalar_lea.vmem %s1, 2112
        %v1720 = vld [vmem:[%s1719] sm:$0xff]
        %v1721 = vld [vmem:[%s1719 + $0x8] sm:$0xff]
        %v1722 = vld [vmem:[%s1719 + $0x10] sm:$0xff]
        %v1723 = vld [vmem:[%s1719 + $0x18] sm:$0xff]
        %v1724 = vld [vmem:[%s1719 + $0x20] sm:$0xff]
        %v1725 = vld [vmem:[%s1719 + $0x28] sm:$0xff]
        %v1726 = vld [vmem:[%s1719 + $0x30] sm:$0xff]
        %v1727 = vld [vmem:[%s1719 + $0x38] sm:$0xff]
        %v1728 = vld [vmem:[%s1719 + $0x40] sm:$0xff]
        %v1729 = vld [vmem:[%s1719 + $0x48] sm:$0xff]
        %v1730 = vld [vmem:[%s1719 + $0x50] sm:$0xff]
        %v1731 = vld [vmem:[%s1719 + $0x58] sm:$0xff]
        %v1732 = vld [vmem:[%s1719 + $0x60] sm:$0xff]
        %v1733 = vld [vmem:[%s1719 + $0x68] sm:$0xff]
        %v1734 = vld [vmem:[%s1719 + $0x70] sm:$0xff]
        %v1735 = vld [vmem:[%s1719 + $0x78] sm:$0xff]
        %v1736 = vld [vmem:[%s1719 + $0x80] sm:$0xff]
        %v1737 = vld [vmem:[%s1719 + $0x88] sm:$0xff]
        %v1738 = vld [vmem:[%s1719 + $0x90] sm:$0xff]
        %v1739 = vld [vmem:[%s1719 + $0x98] sm:$0xff]
        %v1740 = vld [vmem:[%s1719 + $0xa0] sm:$0xff]
        %v1741 = vld [vmem:[%s1719 + $0xa8] sm:$0xff]
        %v1742 = vld [vmem:[%s1719 + $0xb0] sm:$0xff]
        %v1743 = vld [vmem:[%s1719 + $0xb8] sm:$0xff]
        %v1744 = vld [vmem:[%s1719 + $0xc0] sm:$0xff]
        %v1745 = vld [vmem:[%s1719 + $0xc8] sm:$0xff]
        %v1746 = vld [vmem:[%s1719 + $0xd0] sm:$0xff]
        %v1747 = vld [vmem:[%s1719 + $0xd8] sm:$0xff]
        %v1748 = vld [vmem:[%s1719 + $0xe0] sm:$0xff]
        %v1749 = vld [vmem:[%s1719 + $0xe8] sm:$0xff]
        %v1750 = vld [vmem:[%s1719 + $0xf0] sm:$0xff]
        %v1751 = vld [vmem:[%s1719 + $0xf8] sm:$0xff]
        %v1752 = vld [vmem:[%s1719 + $0x100] sm:$0xff]
        %v1753 = vld [vmem:[%s1719 + $0x108] sm:$0xff]
        %v1754 = vld [vmem:[%s1719 + $0x110] sm:$0xff]
        %v1755 = vld [vmem:[%s1719 + $0x118] sm:$0xff]
        %v1756 = vld [vmem:[%s1719 + $0x120] sm:$0xff]
        %v1757 = vld [vmem:[%s1719 + $0x128] sm:$0xff]
        %v1758 = vld [vmem:[%s1719 + $0x130] sm:$0xff]
        %v1759 = vld [vmem:[%s1719 + $0x138] sm:$0xff]
        %v1760 = vld [vmem:[%s1719 + $0x140] sm:$0xff]
        %v1761 = vld [vmem:[%s1719 + $0x148] sm:$0xff]
        %v1762 = vld [vmem:[%s1719 + $0x150] sm:$0xff]
        %v1763 = vld [vmem:[%s1719 + $0x158] sm:$0xff]
        %v1764 = vld [vmem:[%s1719 + $0x160] sm:$0xff]
        %v1765 = vld [vmem:[%s1719 + $0x168] sm:$0xff]
        %v1766 = vld [vmem:[%s1719 + $0x170] sm:$0xff]
        %v1767 = vld [vmem:[%s1719 + $0x178] sm:$0xff]
        %v1768 = vld [vmem:[%s1719 + $0x180] sm:$0xff]
        %v1769 = vld [vmem:[%s1719 + $0x188] sm:$0xff]
        %v1770 = vld [vmem:[%s1719 + $0x190] sm:$0xff]
        %v1771 = vld [vmem:[%s1719 + $0x198] sm:$0xff]
        %v1772 = vld [vmem:[%s1719 + $0x1a0] sm:$0xff]
        %v1773 = vld [vmem:[%s1719 + $0x1a8] sm:$0xff]
        %v1774 = vld [vmem:[%s1719 + $0x1b0] sm:$0xff]
        %v1775 = vld [vmem:[%s1719 + $0x1b8] sm:$0xff]
        %v1776 = vld [vmem:[%s1719 + $0x1c0] sm:$0xff]
        %v1777 = vld [vmem:[%s1719 + $0x1c8] sm:$0xff]
        %v1778 = vld [vmem:[%s1719 + $0x1d0] sm:$0xff]
        %v1779 = vld [vmem:[%s1719 + $0x1d8] sm:$0xff]
        %v1780 = vld [vmem:[%s1719 + $0x1e0] sm:$0xff]
        %v1781 = vld [vmem:[%s1719 + $0x1e8] sm:$0xff]
        %v1782 = vld [vmem:[%s1719 + $0x1f0] sm:$0xff]
        %v1783 = vld [vmem:[%s1719 + $0x1f8] sm:$0xff]
        %v1784 = vld [vmem:[%s1719 + $0x200] sm:$0xff]
        %v1785 = vld [vmem:[%s1719 + $0x208] sm:$0xff]
        %v1786 = vsel %vm707, %v1700, 0
        %v1788 = vsel %vm707, %v1704, 0
        %v1790 = vsel %vm707, %v1710, 0
        %v1792 = vsel %vm707, %v1714, 0
        %1794 = vmatprep.subr.mxu0 %v1721
        %1795 = vmatpush1.msra.mxu0 %v1720
        %1796 = vmatprep.subr.mxu0 %v1724
        %1797 = vmatpush1.msra.mxu0 %v1723
        %1798 = vmatprep.subr.mxu0 %v1727
        %1799 = vmatpush1.msra.mxu0 %v1726
        %1800 = vmatprep.subr.mxu0 %v1730
        %1801 = vmatpush1.msra.mxu0 %v1729
        %1802 = vmatprep.subr.mxu0 %v1733
        %1803 = vmatpush1.msra.mxu0 %v1732
        %1804 = vmatprep.subr.mxu0 %v1736
        %1805 = vmatpush1.msra.mxu0 %v1735
        %1806 = vmatprep.subr.mxu0 %v1739
        %1807 = vmatpush1.msra.mxu0 %v1738
        %1808 = vmatprep.subr.mxu0 %v1742
        %1809 = vmatpush1.msra.mxu0 %v1741
        %1810 = vmatprep.subr.mxu0 %v1745
        %1811 = vmatpush1.msra.mxu0 %v1744
        %1812 = vmatprep.subr.mxu0 %v1748
        %1813 = vmatpush1.msra.mxu0 %v1747
        %1814 = vmatprep.subr.mxu0 %v1751
        %1815 = vmatpush1.msra.mxu0 %v1750
        %1816 = vmatprep.subr.mxu0 %v1754
        %1817 = vmatpush1.msra.mxu0 %v1753
        %1818 = vmatprep.subr.mxu0 %v1757
        %1819 = vmatpush1.msra.mxu0 %v1756
        %1820 = vmatprep.subr.mxu0 %v1760
        %1821 = vmatpush1.msra.mxu0 %v1759
        %1822 = vmatprep.subr.mxu0 %v1763
        %1823 = vmatpush1.msra.mxu0 %v1762
        %1824 = vmatprep.subr.mxu0 %v1766
        %1825 = vmatpush1.msra.mxu0 %v1765
        %1826 = vmatprep.subr.mxu0 %v1769
        %1827 = vmatpush1.msra.mxu0 %v1768
        %1828 = vmatprep.subr.mxu0 %v1772
        %1829 = vmatpush1.msra.mxu0 %v1771
        %1830 = vmatprep.subr.mxu0 %v1775
        %1831 = vmatpush1.msra.mxu0 %v1774
        %1832 = vmatprep.subr.mxu0 %v1778
        %1833 = vmatpush1.msra.mxu0 %v1777
        %1834 = vmatprep.subr.mxu0 %v1781
        %1835 = vmatpush1.msra.mxu0 %v1780
        %1836 = vmatprep.subr.mxu0 %v1784
        %1837 = vmatpush1.msra.mxu0 %v1783
        %1838 = vmatprep.subr.mxu0 0.0
        %1839 = vmatpush1.msra.mxu0 0.0
        %1840 = vmatprep.subr.mxu0 0.0
        %1841 = vmatpush1.msra.mxu0 0.0
        %1842 = vmatprep.subr.mxu0 0.0
        %1843 = vmatpush1.msra.mxu0 0.0
        %1844 = vmatprep.subr.mxu0 0.0
        %1845 = vmatpush1.msra.mxu0 0.0
        %1846 = vmatprep.subr.mxu0 0.0
        %1847 = vmatpush1.msra.mxu0 0.0
        %1848 = vmatprep.subr.mxu0 0.0
        %1849 = vmatpush1.msra.mxu0 0.0
        %1850 = vmatprep.subr.mxu0 0.0
        %1851 = vmatpush1.msra.mxu0 0.0
        %1852 = vmatprep.subr.mxu0 0.0
        %1853 = vmatpush1.msra.mxu0 0.0
        %1854 = vmatprep.subr.mxu0 0.0
        %1855 = vmatpush1.msra.mxu0 0.0
        %1856 = vmatprep.subr.mxu0 0.0
        %1857 = vmatpush1.msra.mxu0 0.0
        %1858 = vmatprep.mubr.f32.mxu0 %v1786
        %1859 = vmatmul.mubr.f32.gmra.mrb[0].mxu0 %v1697
        %v1860 = vpop.f32.mrb[0].mxu0
        %v1861 = vadd.f32 0.0, %v1860
        %v1862 = vpop.f32.mrb[0].mxu0
        %v1863 = vadd.f32 0.0, %v1862
        %1864 = vmatprep.mubr.f32.mxu0 %v1788
        %1865 = vmatmul.mubr.f32.gmra.mrb[0].mxu0 %v1702
        %v1866 = vpop.f32.mrb[0].mxu0
        %v1867 = vadd.f32 0.0, %v1866
        %v1868 = vpop.f32.mrb[0].mxu0
        %v1869 = vadd.f32 0.0, %v1868
        %1870 = vmatprep.mubr.f32.mxu0 %v1790
        %1871 = vmatmul.mubr.f32.gmra.mrb[0].mxu0 %v1707
        %v1872 = vpop.f32.mrb[0].mxu0
        %v1873 = vadd.f32 0.0, %v1872
        %v1874 = vpop.f32.mrb[0].mxu0
        %v1875 = vadd.f32 0.0, %v1874
        %1876 = vmatprep.mubr.f32.mxu0 %v1792
        %1877 = vmatmul.mubr.f32.gmra.mrb[0].mxu0 %v1712
        %v1878 = vpop.f32.mrb[0].mxu0
        %v1879 = vadd.f32 0.0, %v1878
        %v1880 = vpop.f32.mrb[0].mxu0
        %v1881 = vadd.f32 0.0, %v1880
        %1882 = vdwg.mxu0
        %1883 = vmatprep.subr.mxu0 0.0
        %1884 = vmatpush1.msra.mxu0 %v1722
        %1885 = vmatprep.subr.mxu0 0.0
        %1886 = vmatpush1.msra.mxu0 %v1725
        %1887 = vmatprep.subr.mxu0 0.0
        %1888 = vmatpush1.msra.mxu0 %v1728
        %1889 = vmatprep.subr.mxu0 0.0
        %1890 = vmatpush1.msra.mxu0 %v1731
        %1891 = vmatprep.subr.mxu0 0.0
        %1892 = vmatpush1.msra.mxu0 %v1734
        %1893 = vmatprep.subr.mxu0 0.0
        %1894 = vmatpush1.msra.mxu0 %v1737
        %1895 = vmatprep.subr.mxu0 0.0
        %1896 = vmatpush1.msra.mxu0 %v1740
        %1897 = vmatprep.subr.mxu0 0.0
        %1898 = vmatpush1.msra.mxu0 %v1743
        %1899 = vmatprep.subr.mxu0 0.0
        %1900 = vmatpush1.msra.mxu0 %v1746
        %1901 = vmatprep.subr.mxu0 0.0
        %1902 = vmatpush1.msra.mxu0 %v1749
        %1903 = vmatprep.subr.mxu0 0.0
        %1904 = vmatpush1.msra.mxu0 %v1752
        %1905 = vmatprep.subr.mxu0 0.0
        %1906 = vmatpush1.msra.mxu0 %v1755
        %1907 = vmatprep.subr.mxu0 0.0
        %1908 = vmatpush1.msra.mxu0 %v1758
        %1909 = vmatprep.subr.mxu0 0.0
        %1910 = vmatpush1.msra.mxu0 %v1761
        %1911 = vmatprep.subr.mxu0 0.0
        %1912 = vmatpush1.msra.mxu0 %v1764
        %1913 = vmatprep.subr.mxu0 0.0
        %1914 = vmatpush1.msra.mxu0 %v1767
        %1915 = vmatprep.subr.mxu0 0.0
        %1916 = vmatpush1.msra.mxu0 %v1770
        %1917 = vmatprep.subr.mxu0 0.0
        %1918 = vmatpush1.msra.mxu0 %v1773
        %1919 = vmatprep.subr.mxu0 0.0
        %1920 = vmatpush1.msra.mxu0 %v1776
        %1921 = vmatprep.subr.mxu0 0.0
        %1922 = vmatpush1.msra.mxu0 %v1779
        %1923 = vmatprep.subr.mxu0 0.0
        %1924 = vmatpush1.msra.mxu0 %v1782
        %1925 = vmatprep.subr.mxu0 0.0
        %1926 = vmatpush1.msra.mxu0 %v1785
        %1927 = vmatprep.subr.mxu0 0.0
        %1928 = vmatpush1.msra.mxu0 0.0
        %1929 = vmatprep.subr.mxu0 0.0
        %1930 = vmatpush1.msra.mxu0 0.0
        %1931 = vmatprep.subr.mxu0 0.0
        %1932 = vmatpush1.msra.mxu0 0.0
        %1933 = vmatprep.subr.mxu0 0.0
        %1934 = vmatpush1.msra.mxu0 0.0
        %1935 = vmatprep.subr.mxu0 0.0
        %1936 = vmatpush1.msra.mxu0 0.0
        %1937 = vmatprep.subr.mxu0 0.0
        %1938 = vmatpush1.msra.mxu0 0.0
        %1939 = vmatprep.subr.mxu0 0.0
        %1940 = vmatpush1.msra.mxu0 0.0
        %1941 = vmatprep.subr.mxu0 0.0
        %1942 = vmatpush1.msra.mxu0 0.0
        %1943 = vmatprep.subr.mxu0 0.0
        %1944 = vmatpush1.msra.mxu0 0.0
        %1945 = vmatprep.subr.mxu0 0.0
        %1946 = vmatpush1.msra.mxu0 0.0
        %1947 = vmatprep.mubr.f32.mxu0 %v1786
        %1948 = vmatmul.mubr.f32.gmra.mrb[0].mxu0 %v1697
        %v1949 = vpop.f32.mrb[0].mxu0
        %v1950 = vadd.f32 0.0, %v1949
        %v1951 = vpop.f32.mrb[0].mxu0
        %1952 = vmatprep.mubr.f32.mxu0 %v1788
        %1953 = vmatmul.mubr.f32.gmra.mrb[0].mxu0 %v1702
        %v1954 = vpop.f32.mrb[0].mxu0
        %v1955 = vadd.f32 0.0, %v1954
        %v1956 = vpop.f32.mrb[0].mxu0
        %1957 = vmatprep.mubr.f32.mxu0 %v1790
        %1958 = vmatmul.mubr.f32.gmra.mrb[0].mxu0 %v1707
        %v1959 = vpop.f32.mrb[0].mxu0
        %v1960 = vadd.f32 0.0, %v1959
        %v1961 = vpop.f32.mrb[0].mxu0
        %1962 = vmatprep.mubr.f32.mxu0 %v1792
        %1963 = vmatmul.mubr.f32.gmra.mrb[0].mxu0 %v1712
        %v1964 = vpop.f32.mrb[0].mxu0
        %v1965 = vadd.f32 0.0, %v1964
        %v1966 = vpop.f32.mrb[0].mxu0
        %1967 = vdwg.mxu0
        %v1968 = vadd.f32 %v1666, %v1861
        %v1969 = vadd.f32 %v1667, %v1863
        %v1970 = vadd.f32 %v1668, %v1950
        %v1971 = vadd.f32 %v1669, %v1867
        %v1972 = vadd.f32 %v1670, %v1869
        %v1973 = vadd.f32 %v1671, %v1955
        %v1974 = vadd.f32 %v1672, %v1873
        %v1975 = vadd.f32 %v1673, %v1875
        %v1976 = vadd.f32 %v1674, %v1960
        %v1977 = vadd.f32 %v1675, %v1879
        %v1978 = vadd.f32 %v1676, %v1881
        %v1979 = vadd.f32 %v1677, %v1965
        %v1980 = vld [vmem:[#allocation2] sm:$0xe0]
        %v1981 = vld [vmem:[#allocation2 + $0x8] sm:$0xe0]
        %v1982 = vld [vmem:[#allocation2 + $0x20] sm:$0x1f]
        %v1983 = vld [vmem:[#allocation2 + $0x28] sm:$0x1f]
        %v1984 = vld [vmem:[#allocation2 + $0x30] sm:$0xe0]
        %v1985 = vld [vmem:[#allocation2 + $0x38] sm:$0xe0]
        %v1986 = vld [vmem:[#allocation2 + $0x50] sm:$0x1f]
        %v1987 = vld [vmem:[#allocation2 + $0x58] sm:$0x1f]
        %v1996 = vrot.slane %v1980, 5
        %v1997 = vrot.slane %v523, 5
        %v1998 = vsel %vm481, %v1996, %v1997
        %v1999 = vrot.slane %v1981, 5
        %v2000 = vrot.slane %v524, 5
        %v2001 = vsel %vm481, %v1999, %v2000
        %v2002 = vrot.slane %v1982, 5
        %v2003 = vsel %vm481, %v1997, %v2002
        %v2004 = vrot.slane %v1983, 5
        %v2005 = vsel %vm481, %v2000, %v2004
        %v2006 = vrot.slane %v1984, 5
        %v2007 = vrot.slane %v527, 5
        %v2008 = vsel %vm481, %v2006, %v2007
        %v2009 = vrot.slane %v1985, 5
        %v2010 = vrot.slane %v528, 5
        %v2011 = vsel %vm481, %v2009, %v2010
        %v2012 = vrot.slane %v1986, 5
        %v2013 = vsel %vm481, %v2007, %v2012
        %v2014 = vrot.slane %v1987, 5
        %v2015 = vsel %vm481, %v2010, %v2014
        %s2020 = scalar_lea.vmem %s1, 2640
        %v2021 = vld [vmem:[%s2020] sm:$0xff]
        %v2022 = vld [vmem:[%s2020 + $0x8] sm:$0xff]
        %v2023 = vld [vmem:[%s2020 + $0x10] sm:$0xff]
        %v2024 = vld [vmem:[%s2020 + $0x18] sm:$0xff]
        %v2025 = vld [vmem:[%s2020 + $0x20] sm:$0xff]
        %v2026 = vld [vmem:[%s2020 + $0x28] sm:$0xff]
        %v2027 = vld [vmem:[%s2020 + $0x30] sm:$0xff]
        %v2028 = vld [vmem:[%s2020 + $0x38] sm:$0xff]
        %v2029 = vld [vmem:[%s2020 + $0x40] sm:$0xff]
        %v2030 = vld [vmem:[%s2020 + $0x48] sm:$0xff]
        %v2031 = vld [vmem:[%s2020 + $0x50] sm:$0xff]
        %v2032 = vld [vmem:[%s2020 + $0x58] sm:$0xff]
        %v2033 = vld [vmem:[%s2020 + $0x60] sm:$0xff]
        %v2034 = vld [vmem:[%s2020 + $0x68] sm:$0xff]
        %v2035 = vld [vmem:[%s2020 + $0x70] sm:$0xff]
        %v2036 = vld [vmem:[%s2020 + $0x78] sm:$0xff]
        %v2037 = vld [vmem:[%s2020 + $0x80] sm:$0xff]
        %v2038 = vld [vmem:[%s2020 + $0x88] sm:$0xff]
        %v2039 = vld [vmem:[%s2020 + $0x90] sm:$0xff]
        %v2040 = vld [vmem:[%s2020 + $0x98] sm:$0xff]
        %v2041 = vld [vmem:[%s2020 + $0xa0] sm:$0xff]
        %v2042 = vld [vmem:[%s2020 + $0xa8] sm:$0xff]
        %v2043 = vld [vmem:[%s2020 + $0xb0] sm:$0xff]
        %v2044 = vld [vmem:[%s2020 + $0xb8] sm:$0xff]
        %v2045 = vld [vmem:[%s2020 + $0xc0] sm:$0xff]
        %v2046 = vld [vmem:[%s2020 + $0xc8] sm:$0xff]
        %v2047 = vld [vmem:[%s2020 + $0xd0] sm:$0xff]
        %v2048 = vld [vmem:[%s2020 + $0xd8] sm:$0xff]
        %v2049 = vld [vmem:[%s2020 + $0xe0] sm:$0xff]
        %v2050 = vld [vmem:[%s2020 + $0xe8] sm:$0xff]
        %v2051 = vld [vmem:[%s2020 + $0xf0] sm:$0xff]
        %v2052 = vld [vmem:[%s2020 + $0xf8] sm:$0xff]
        %v2053 = vld [vmem:[%s2020 + $0x100] sm:$0xff]
        %v2054 = vld [vmem:[%s2020 + $0x108] sm:$0xff]
        %v2055 = vld [vmem:[%s2020 + $0x110] sm:$0xff]
        %v2056 = vld [vmem:[%s2020 + $0x118] sm:$0xff]
        %v2057 = vld [vmem:[%s2020 + $0x120] sm:$0xff]
        %v2058 = vld [vmem:[%s2020 + $0x128] sm:$0xff]
        %v2059 = vld [vmem:[%s2020 + $0x130] sm:$0xff]
        %v2060 = vld [vmem:[%s2020 + $0x138] sm:$0xff]
        %v2061 = vld [vmem:[%s2020 + $0x140] sm:$0xff]
        %v2062 = vld [vmem:[%s2020 + $0x148] sm:$0xff]
        %v2063 = vld [vmem:[%s2020 + $0x150] sm:$0xff]
        %v2064 = vld [vmem:[%s2020 + $0x158] sm:$0xff]
        %v2065 = vld [vmem:[%s2020 + $0x160] sm:$0xff]
        %v2066 = vld [vmem:[%s2020 + $0x168] sm:$0xff]
        %v2067 = vld [vmem:[%s2020 + $0x170] sm:$0xff]
        %v2068 = vld [vmem:[%s2020 + $0x178] sm:$0xff]
        %v2069 = vld [vmem:[%s2020 + $0x180] sm:$0xff]
        %v2070 = vld [vmem:[%s2020 + $0x188] sm:$0xff]
        %v2071 = vld [vmem:[%s2020 + $0x190] sm:$0xff]
        %v2072 = vld [vmem:[%s2020 + $0x198] sm:$0xff]
        %v2073 = vld [vmem:[%s2020 + $0x1a0] sm:$0xff]
        %v2074 = vld [vmem:[%s2020 + $0x1a8] sm:$0xff]
        %v2075 = vld [vmem:[%s2020 + $0x1b0] sm:$0xff]
        %v2076 = vld [vmem:[%s2020 + $0x1b8] sm:$0xff]
        %v2077 = vld [vmem:[%s2020 + $0x1c0] sm:$0xff]
        %v2078 = vld [vmem:[%s2020 + $0x1c8] sm:$0xff]
        %v2079 = vld [vmem:[%s2020 + $0x1d0] sm:$0xff]
        %v2080 = vld [vmem:[%s2020 + $0x1d8] sm:$0xff]
        %v2081 = vld [vmem:[%s2020 + $0x1e0] sm:$0xff]
        %v2082 = vld [vmem:[%s2020 + $0x1e8] sm:$0xff]
        %v2083 = vld [vmem:[%s2020 + $0x1f0] sm:$0xff]
        %v2084 = vld [vmem:[%s2020 + $0x1f8] sm:$0xff]
        %v2085 = vld [vmem:[%s2020 + $0x200] sm:$0xff]
        %v2086 = vld [vmem:[%s2020 + $0x208] sm:$0xff]
        %v2087 = vsel %vm707, %v2001, 0
        %v2089 = vsel %vm707, %v2005, 0
        %v2091 = vsel %vm707, %v2011, 0
        %v2093 = vsel %vm707, %v2015, 0
        %2095 = vmatprep.subr.mxu0 %v2022
        %2096 = vmatpush1.msra.mxu0 %v2021
        %2097 = vmatprep.subr.mxu0 %v2025
        %2098 = vmatpush1.msra.mxu0 %v2024
        %2099 = vmatprep.subr.mxu0 %v2028
        %2100 = vmatpush1.msra.mxu0 %v2027
        %2101 = vmatprep.subr.mxu0 %v2031
        %2102 = vmatpush1.msra.mxu0 %v2030
        %2103 = vmatprep.subr.mxu0 %v2034
        %2104 = vmatpush1.msra.mxu0 %v2033
        %2105 = vmatprep.subr.mxu0 %v2037
        %2106 = vmatpush1.msra.mxu0 %v2036
        %2107 = vmatprep.subr.mxu0 %v2040
        %2108 = vmatpush1.msra.mxu0 %v2039
        %2109 = vmatprep.subr.mxu0 %v2043
        %2110 = vmatpush1.msra.mxu0 %v2042
        %2111 = vmatprep.subr.mxu0 %v2046
        %2112 = vmatpush1.msra.mxu0 %v2045
        %2113 = vmatprep.subr.mxu0 %v2049
        %2114 = vmatpush1.msra.mxu0 %v2048
        %2115 = vmatprep.subr.mxu0 %v2052
        %2116 = vmatpush1.msra.mxu0 %v2051
        %2117 = vmatprep.subr.mxu0 %v2055
        %2118 = vmatpush1.msra.mxu0 %v2054
        %2119 = vmatprep.subr.mxu0 %v2058
        %2120 = vmatpush1.msra.mxu0 %v2057
        %2121 = vmatprep.subr.mxu0 %v2061
        %2122 = vmatpush1.msra.mxu0 %v2060
        %2123 = vmatprep.subr.mxu0 %v2064
        %2124 = vmatpush1.msra.mxu0 %v2063
        %2125 = vmatprep.subr.mxu0 %v2067
        %2126 = vmatpush1.msra.mxu0 %v2066
        %2127 = vmatprep.subr.mxu0 %v2070
        %2128 = vmatpush1.msra.mxu0 %v2069
        %2129 = vmatprep.subr.mxu0 %v2073
        %2130 = vmatpush1.msra.mxu0 %v2072
        %2131 = vmatprep.subr.mxu0 %v2076
        %2132 = vmatpush1.msra.mxu0 %v2075
        %2133 = vmatprep.subr.mxu0 %v2079
        %2134 = vmatpush1.msra.mxu0 %v2078
        %2135 = vmatprep.subr.mxu0 %v2082
        %2136 = vmatpush1.msra.mxu0 %v2081
        %2137 = vmatprep.subr.mxu0 %v2085
        %2138 = vmatpush1.msra.mxu0 %v2084
        %2139 = vmatprep.subr.mxu0 0.0
        %2140 = vmatpush1.msra.mxu0 0.0
        %2141 = vmatprep.subr.mxu0 0.0
        %2142 = vmatpush1.msra.mxu0 0.0
        %2143 = vmatprep.subr.mxu0 0.0
        %2144 = vmatpush1.msra.mxu0 0.0
        %2145 = vmatprep.subr.mxu0 0.0
        %2146 = vmatpush1.msra.mxu0 0.0
        %2147 = vmatprep.subr.mxu0 0.0
        %2148 = vmatpush1.msra.mxu0 0.0
        %2149 = vmatprep.subr.mxu0 0.0
        %2150 = vmatpush1.msra.mxu0 0.0
        %2151 = vmatprep.subr.mxu0 0.0
        %2152 = vmatpush1.msra.mxu0 0.0
        %2153 = vmatprep.subr.mxu0 0.0
        %2154 = vmatpush1.msra.mxu0 0.0
        %2155 = vmatprep.subr.mxu0 0.0
        %2156 = vmatpush1.msra.mxu0 0.0
        %2157 = vmatprep.subr.mxu0 0.0
        %2158 = vmatpush1.msra.mxu0 0.0
        %2159 = vmatprep.mubr.f32.mxu0 %v2087
        %2160 = vmatmul.mubr.f32.gmra.mrb[0].mxu0 %v1998
        %v2161 = vpop.f32.mrb[0].mxu0
        %v2162 = vadd.f32 0.0, %v2161
        %v2163 = vpop.f32.mrb[0].mxu0
        %v2164 = vadd.f32 0.0, %v2163
        %2165 = vmatprep.mubr.f32.mxu0 %v2089
        %2166 = vmatmul.mubr.f32.gmra.mrb[0].mxu0 %v2003
        %v2167 = vpop.f32.mrb[0].mxu0
        %v2168 = vadd.f32 0.0, %v2167
        %v2169 = vpop.f32.mrb[0].mxu0
        %v2170 = vadd.f32 0.0, %v2169
        %2171 = vmatprep.mubr.f32.mxu0 %v2091
        %2172 = vmatmul.mubr.f32.gmra.mrb[0].mxu0 %v2008
        %v2173 = vpop.f32.mrb[0].mxu0
        %v2174 = vadd.f32 0.0, %v2173
        %v2175 = vpop.f32.mrb[0].mxu0
        %v2176 = vadd.f32 0.0, %v2175
        %2177 = vmatprep.mubr.f32.mxu0 %v2093
        %2178 = vmatmul.mubr.f32.gmra.mrb[0].mxu0 %v2013
        %v2179 = vpop.f32.mrb[0].mxu0
        %v2180 = vadd.f32 0.0, %v2179
        %v2181 = vpop.f32.mrb[0].mxu0
        %v2182 = vadd.f32 0.0, %v2181
        %2183 = vdwg.mxu0
        %2184 = vmatprep.subr.mxu0 0.0
        %2185 = vmatpush1.msra.mxu0 %v2023
        %2186 = vmatprep.subr.mxu0 0.0
        %2187 = vmatpush1.msra.mxu0 %v2026
        %2188 = vmatprep.subr.mxu0 0.0
        %2189 = vmatpush1.msra.mxu0 %v2029
        %2190 = vmatprep.subr.mxu0 0.0
        %2191 = vmatpush1.msra.mxu0 %v2032
        %2192 = vmatprep.subr.mxu0 0.0
        %2193 = vmatpush1.msra.mxu0 %v2035
        %2194 = vmatprep.subr.mxu0 0.0
        %2195 = vmatpush1.msra.mxu0 %v2038
        %2196 = vmatprep.subr.mxu0 0.0
        %2197 = vmatpush1.msra.mxu0 %v2041
        %2198 = vmatprep.subr.mxu0 0.0
        %2199 = vmatpush1.msra.mxu0 %v2044
        %2200 = vmatprep.subr.mxu0 0.0
        %2201 = vmatpush1.msra.mxu0 %v2047
        %2202 = vmatprep.subr.mxu0 0.0
        %2203 = vmatpush1.msra.mxu0 %v2050
        %2204 = vmatprep.subr.mxu0 0.0
        %2205 = vmatpush1.msra.mxu0 %v2053
        %2206 = vmatprep.subr.mxu0 0.0
        %2207 = vmatpush1.msra.mxu0 %v2056
        %2208 = vmatprep.subr.mxu0 0.0
        %2209 = vmatpush1.msra.mxu0 %v2059
        %2210 = vmatprep.subr.mxu0 0.0
        %2211 = vmatpush1.msra.mxu0 %v2062
        %2212 = vmatprep.subr.mxu0 0.0
        %2213 = vmatpush1.msra.mxu0 %v2065
        %2214 = vmatprep.subr.mxu0 0.0
        %2215 = vmatpush1.msra.mxu0 %v2068
        %2216 = vmatprep.subr.mxu0 0.0
        %2217 = vmatpush1.msra.mxu0 %v2071
        %2218 = vmatprep.subr.mxu0 0.0
        %2219 = vmatpush1.msra.mxu0 %v2074
        %2220 = vmatprep.subr.mxu0 0.0
        %2221 = vmatpush1.msra.mxu0 %v2077
        %2222 = vmatprep.subr.mxu0 0.0
        %2223 = vmatpush1.msra.mxu0 %v2080
        %2224 = vmatprep.subr.mxu0 0.0
        %2225 = vmatpush1.msra.mxu0 %v2083
        %2226 = vmatprep.subr.mxu0 0.0
        %2227 = vmatpush1.msra.mxu0 %v2086
        %2228 = vmatprep.subr.mxu0 0.0
        %2229 = vmatpush1.msra.mxu0 0.0
        %2230 = vmatprep.subr.mxu0 0.0
        %2231 = vmatpush1.msra.mxu0 0.0
        %2232 = vmatprep.subr.mxu0 0.0
        %2233 = vmatpush1.msra.mxu0 0.0
        %2234 = vmatprep.subr.mxu0 0.0
        %2235 = vmatpush1.msra.mxu0 0.0
        %2236 = vmatprep.subr.mxu0 0.0
        %2237 = vmatpush1.msra.mxu0 0.0
        %2238 = vmatprep.subr.mxu0 0.0
        %2239 = vmatpush1.msra.mxu0 0.0
        %2240 = vmatprep.subr.mxu0 0.0
        %2241 = vmatpush1.msra.mxu0 0.0
        %2242 = vmatprep.subr.mxu0 0.0
        %2243 = vmatpush1.msra.mxu0 0.0
        %2244 = vmatprep.subr.mxu0 0.0
        %2245 = vmatpush1.msra.mxu0 0.0
        %2246 = vmatprep.subr.mxu0 0.0
        %2247 = vmatpush1.msra.mxu0 0.0
        %2248 = vmatprep.mubr.f32.mxu0 %v2087
        %2249 = vmatmul.mubr.f32.gmra.mrb[0].mxu0 %v1998
        %v2250 = vpop.f32.mrb[0].mxu0
        %v2251 = vadd.f32 0.0, %v2250
        %v2252 = vpop.f32.mrb[0].mxu0
        %2253 = vmatprep.mubr.f32.mxu0 %v2089
        %2254 = vmatmul.mubr.f32.gmra.mrb[0].mxu0 %v2003
        %v2255 = vpop.f32.mrb[0].mxu0
        %v2256 = vadd.f32 0.0, %v2255
        %v2257 = vpop.f32.mrb[0].mxu0
        %2258 = vmatprep.mubr.f32.mxu0 %v2091
        %2259 = vmatmul.mubr.f32.gmra.mrb[0].mxu0 %v2008
        %v2260 = vpop.f32.mrb[0].mxu0
        %v2261 = vadd.f32 0.0, %v2260
        %v2262 = vpop.f32.mrb[0].mxu0
        %2263 = vmatprep.mubr.f32.mxu0 %v2093
        %2264 = vmatmul.mubr.f32.gmra.mrb[0].mxu0 %v2013
        %v2265 = vpop.f32.mrb[0].mxu0
        %v2266 = vadd.f32 0.0, %v2265
        %v2267 = vpop.f32.mrb[0].mxu0
        %2268 = vdwg.mxu0
        %v2269 = vadd.f32 %v1968, %v2162
        %v2270 = vadd.f32 %v1969, %v2164
        %v2271 = vadd.f32 %v1970, %v2251
        %v2272 = vadd.f32 %v1971, %v2168
        %v2273 = vadd.f32 %v1972, %v2170
        %v2274 = vadd.f32 %v1973, %v2256
        %v2275 = vadd.f32 %v1974, %v2174
        %v2276 = vadd.f32 %v1975, %v2176
        %v2277 = vadd.f32 %v1976, %v2261
        %v2278 = vadd.f32 %v1977, %v2180
        %v2279 = vadd.f32 %v1978, %v2182
        %v2280 = vadd.f32 %v1979, %v2266
        %v2281 = vld [vmem:[#allocation2] sm:$0xc0]
        %v2282 = vld [vmem:[#allocation2 + $0x8] sm:$0xc0]
        %v2283 = vld [vmem:[#allocation2 + $0x20] sm:$0x3f]
        %v2284 = vld [vmem:[#allocation2 + $0x28] sm:$0x3f]
        %v2285 = vld [vmem:[#allocation2 + $0x30] sm:$0xc0]
        %v2286 = vld [vmem:[#allocation2 + $0x38] sm:$0xc0]
        %v2287 = vld [vmem:[#allocation2 + $0x50] sm:$0x3f]
        %v2288 = vld [vmem:[#allocation2 + $0x58] sm:$0x3f]
        %vm2297 = vcmask 1041408
        %v2298 = vrot.slane %v2281, 6
        %v2299 = vrot.slane %v523, 6
        %v2300 = vsel %vm2297, %v2298, %v2299
        %v2301 = vrot.slane %v2282, 6
        %v2302 = vrot.slane %v524, 6
        %v2303 = vsel %vm2297, %v2301, %v2302
        %v2304 = vrot.slane %v2283, 6
        %v2305 = vsel %vm2297, %v2299, %v2304
        %v2306 = vrot.slane %v2284, 6
        %v2307 = vsel %vm2297, %v2302, %v2306
        %v2308 = vrot.slane %v2285, 6
        %v2309 = vrot.slane %v527, 6
        %v2310 = vsel %vm2297, %v2308, %v2309
        %v2311 = vrot.slane %v2286, 6
        %v2312 = vrot.slane %v528, 6
        %v2313 = vsel %vm2297, %v2311, %v2312
        %v2314 = vrot.slane %v2287, 6
        %v2315 = vsel %vm2297, %v2309, %v2314
        %v2316 = vrot.slane %v2288, 6
        %v2317 = vsel %vm2297, %v2312, %v2316
        %s2322 = scalar_lea.vmem %s1, 3168
        %v2323 = vld [vmem:[%s2322] sm:$0xff]
        %v2324 = vld [vmem:[%s2322 + $0x8] sm:$0xff]
        %v2325 = vld [vmem:[%s2322 + $0x10] sm:$0xff]
        %v2326 = vld [vmem:[%s2322 + $0x18] sm:$0xff]
        %v2327 = vld [vmem:[%s2322 + $0x20] sm:$0xff]
        %v2328 = vld [vmem:[%s2322 + $0x28] sm:$0xff]
        %v2329 = vld [vmem:[%s2322 + $0x30] sm:$0xff]
        %v2330 = vld [vmem:[%s2322 + $0x38] sm:$0xff]
        %v2331 = vld [vmem:[%s2322 + $0x40] sm:$0xff]
        %v2332 = vld [vmem:[%s2322 + $0x48] sm:$0xff]
        %v2333 = vld [vmem:[%s2322 + $0x50] sm:$0xff]
        %v2334 = vld [vmem:[%s2322 + $0x58] sm:$0xff]
        %v2335 = vld [vmem:[%s2322 + $0x60] sm:$0xff]
        %v2336 = vld [vmem:[%s2322 + $0x68] sm:$0xff]
        %v2337 = vld [vmem:[%s2322 + $0x70] sm:$0xff]
        %v2338 = vld [vmem:[%s2322 + $0x78] sm:$0xff]
        %v2339 = vld [vmem:[%s2322 + $0x80] sm:$0xff]
        %v2340 = vld [vmem:[%s2322 + $0x88] sm:$0xff]
        %v2341 = vld [vmem:[%s2322 + $0x90] sm:$0xff]
        %v2342 = vld [vmem:[%s2322 + $0x98] sm:$0xff]
        %v2343 = vld [vmem:[%s2322 + $0xa0] sm:$0xff]
        %v2344 = vld [vmem:[%s2322 + $0xa8] sm:$0xff]
        %v2345 = vld [vmem:[%s2322 + $0xb0] sm:$0xff]
        %v2346 = vld [vmem:[%s2322 + $0xb8] sm:$0xff]
        %v2347 = vld [vmem:[%s2322 + $0xc0] sm:$0xff]
        %v2348 = vld [vmem:[%s2322 + $0xc8] sm:$0xff]
        %v2349 = vld [vmem:[%s2322 + $0xd0] sm:$0xff]
        %v2350 = vld [vmem:[%s2322 + $0xd8] sm:$0xff]
        %v2351 = vld [vmem:[%s2322 + $0xe0] sm:$0xff]
        %v2352 = vld [vmem:[%s2322 + $0xe8] sm:$0xff]
        %v2353 = vld [vmem:[%s2322 + $0xf0] sm:$0xff]
        %v2354 = vld [vmem:[%s2322 + $0xf8] sm:$0xff]
        %v2355 = vld [vmem:[%s2322 + $0x100] sm:$0xff]
        %v2356 = vld [vmem:[%s2322 + $0x108] sm:$0xff]
        %v2357 = vld [vmem:[%s2322 + $0x110] sm:$0xff]
        %v2358 = vld [vmem:[%s2322 + $0x118] sm:$0xff]
        %v2359 = vld [vmem:[%s2322 + $0x120] sm:$0xff]
        %v2360 = vld [vmem:[%s2322 + $0x128] sm:$0xff]
        %v2361 = vld [vmem:[%s2322 + $0x130] sm:$0xff]
        %v2362 = vld [vmem:[%s2322 + $0x138] sm:$0xff]
        %v2363 = vld [vmem:[%s2322 + $0x140] sm:$0xff]
        %v2364 = vld [vmem:[%s2322 + $0x148] sm:$0xff]
        %v2365 = vld [vmem:[%s2322 + $0x150] sm:$0xff]
        %v2366 = vld [vmem:[%s2322 + $0x158] sm:$0xff]
        %v2367 = vld [vmem:[%s2322 + $0x160] sm:$0xff]
        %v2368 = vld [vmem:[%s2322 + $0x168] sm:$0xff]
        %v2369 = vld [vmem:[%s2322 + $0x170] sm:$0xff]
        %v2370 = vld [vmem:[%s2322 + $0x178] sm:$0xff]
        %v2371 = vld [vmem:[%s2322 + $0x180] sm:$0xff]
        %v2372 = vld [vmem:[%s2322 + $0x188] sm:$0xff]
        %v2373 = vld [vmem:[%s2322 + $0x190] sm:$0xff]
        %v2374 = vld [vmem:[%s2322 + $0x198] sm:$0xff]
        %v2375 = vld [vmem:[%s2322 + $0x1a0] sm:$0xff]
        %v2376 = vld [vmem:[%s2322 + $0x1a8] sm:$0xff]
        %v2377 = vld [vmem:[%s2322 + $0x1b0] sm:$0xff]
        %v2378 = vld [vmem:[%s2322 + $0x1b8] sm:$0xff]
        %v2379 = vld [vmem:[%s2322 + $0x1c0] sm:$0xff]
        %v2380 = vld [vmem:[%s2322 + $0x1c8] sm:$0xff]
        %v2381 = vld [vmem:[%s2322 + $0x1d0] sm:$0xff]
        %v2382 = vld [vmem:[%s2322 + $0x1d8] sm:$0xff]
        %v2383 = vld [vmem:[%s2322 + $0x1e0] sm:$0xff]
        %v2384 = vld [vmem:[%s2322 + $0x1e8] sm:$0xff]
        %v2385 = vld [vmem:[%s2322 + $0x1f0] sm:$0xff]
        %v2386 = vld [vmem:[%s2322 + $0x1f8] sm:$0xff]
        %v2387 = vld [vmem:[%s2322 + $0x200] sm:$0xff]
        %v2388 = vld [vmem:[%s2322 + $0x208] sm:$0xff]
        %v2389 = vsel %vm707, %v2303, 0
        %v2391 = vsel %vm707, %v2307, 0
        %v2393 = vsel %vm707, %v2313, 0
        %v2395 = vsel %vm707, %v2317, 0
        %2397 = vmatprep.subr.mxu0 %v2324
        %2398 = vmatpush1.msra.mxu0 %v2323
        %2399 = vmatprep.subr.mxu0 %v2327
        %2400 = vmatpush1.msra.mxu0 %v2326
        %2401 = vmatprep.subr.mxu0 %v2330
        %2402 = vmatpush1.msra.mxu0 %v2329
        %2403 = vmatprep.subr.mxu0 %v2333
        %2404 = vmatpush1.msra.mxu0 %v2332
        %2405 = vmatprep.subr.mxu0 %v2336
        %2406 = vmatpush1.msra.mxu0 %v2335
        %2407 = vmatprep.subr.mxu0 %v2339
        %2408 = vmatpush1.msra.mxu0 %v2338
        %2409 = vmatprep.subr.mxu0 %v2342
        %2410 = vmatpush1.msra.mxu0 %v2341
        %2411 = vmatprep.subr.mxu0 %v2345
        %2412 = vmatpush1.msra.mxu0 %v2344
        %2413 = vmatprep.subr.mxu0 %v2348
        %2414 = vmatpush1.msra.mxu0 %v2347
        %2415 = vmatprep.subr.mxu0 %v2351
        %2416 = vmatpush1.msra.mxu0 %v2350
        %2417 = vmatprep.subr.mxu0 %v2354
        %2418 = vmatpush1.msra.mxu0 %v2353
        %2419 = vmatprep.subr.mxu0 %v2357
        %2420 = vmatpush1.msra.mxu0 %v2356
        %2421 = vmatprep.subr.mxu0 %v2360
        %2422 = vmatpush1.msra.mxu0 %v2359
        %2423 = vmatprep.subr.mxu0 %v2363
        %2424 = vmatpush1.msra.mxu0 %v2362
        %2425 = vmatprep.subr.mxu0 %v2366
        %2426 = vmatpush1.msra.mxu0 %v2365
        %2427 = vmatprep.subr.mxu0 %v2369
        %2428 = vmatpush1.msra.mxu0 %v2368
        %2429 = vmatprep.subr.mxu0 %v2372
        %2430 = vmatpush1.msra.mxu0 %v2371
        %2431 = vmatprep.subr.mxu0 %v2375
        %2432 = vmatpush1.msra.mxu0 %v2374
        %2433 = vmatprep.subr.mxu0 %v2378
        %2434 = vmatpush1.msra.mxu0 %v2377
        %2435 = vmatprep.subr.mxu0 %v2381
        %2436 = vmatpush1.msra.mxu0 %v2380
        %2437 = vmatprep.subr.mxu0 %v2384
        %2438 = vmatpush1.msra.mxu0 %v2383
        %2439 = vmatprep.subr.mxu0 %v2387
        %2440 = vmatpush1.msra.mxu0 %v2386
        %2441 = vmatprep.subr.mxu0 0.0
        %2442 = vmatpush1.msra.mxu0 0.0
        %2443 = vmatprep.subr.mxu0 0.0
        %2444 = vmatpush1.msra.mxu0 0.0
        %2445 = vmatprep.subr.mxu0 0.0
        %2446 = vmatpush1.msra.mxu0 0.0
        %2447 = vmatprep.subr.mxu0 0.0
        %2448 = vmatpush1.msra.mxu0 0.0
        %2449 = vmatprep.subr.mxu0 0.0
        %2450 = vmatpush1.msra.mxu0 0.0
        %2451 = vmatprep.subr.mxu0 0.0
        %2452 = vmatpush1.msra.mxu0 0.0
        %2453 = vmatprep.subr.mxu0 0.0
        %2454 = vmatpush1.msra.mxu0 0.0
        %2455 = vmatprep.subr.mxu0 0.0
        %2456 = vmatpush1.msra.mxu0 0.0
        %2457 = vmatprep.subr.mxu0 0.0
        %2458 = vmatpush1.msra.mxu0 0.0
        %2459 = vmatprep.subr.mxu0 0.0
        %2460 = vmatpush1.msra.mxu0 0.0
        %2461 = vmatprep.mubr.f32.mxu0 %v2389
        %2462 = vmatmul.mubr.f32.gmra.mrb[0].mxu0 %v2300
        %v2463 = vpop.f32.mrb[0].mxu0
        %v2464 = vadd.f32 0.0, %v2463
        %v2465 = vpop.f32.mrb[0].mxu0
        %v2466 = vadd.f32 0.0, %v2465
        %2467 = vmatprep.mubr.f32.mxu0 %v2391
        %2468 = vmatmul.mubr.f32.gmra.mrb[0].mxu0 %v2305
        %v2469 = vpop.f32.mrb[0].mxu0
        %v2470 = vadd.f32 0.0, %v2469
        %v2471 = vpop.f32.mrb[0].mxu0
        %v2472 = vadd.f32 0.0, %v2471
        %2473 = vmatprep.mubr.f32.mxu0 %v2393
        %2474 = vmatmul.mubr.f32.gmra.mrb[0].mxu0 %v2310
        %v2475 = vpop.f32.mrb[0].mxu0
        %v2476 = vadd.f32 0.0, %v2475
        %v2477 = vpop.f32.mrb[0].mxu0
        %v2478 = vadd.f32 0.0, %v2477
        %2479 = vmatprep.mubr.f32.mxu0 %v2395
        %2480 = vmatmul.mubr.f32.gmra.mrb[0].mxu0 %v2315
        %v2481 = vpop.f32.mrb[0].mxu0
        %v2482 = vadd.f32 0.0, %v2481
        %v2483 = vpop.f32.mrb[0].mxu0
        %v2484 = vadd.f32 0.0, %v2483
        %2485 = vdwg.mxu0
        %2486 = vmatprep.subr.mxu0 0.0
        %2487 = vmatpush1.msra.mxu0 %v2325
        %2488 = vmatprep.subr.mxu0 0.0
        %2489 = vmatpush1.msra.mxu0 %v2328
        %2490 = vmatprep.subr.mxu0 0.0
        %2491 = vmatpush1.msra.mxu0 %v2331
        %2492 = vmatprep.subr.mxu0 0.0
        %2493 = vmatpush1.msra.mxu0 %v2334
        %2494 = vmatprep.subr.mxu0 0.0
        %2495 = vmatpush1.msra.mxu0 %v2337
        %2496 = vmatprep.subr.mxu0 0.0
        %2497 = vmatpush1.msra.mxu0 %v2340
        %2498 = vmatprep.subr.mxu0 0.0
        %2499 = vmatpush1.msra.mxu0 %v2343
        %2500 = vmatprep.subr.mxu0 0.0
        %2501 = vmatpush1.msra.mxu0 %v2346
        %2502 = vmatprep.subr.mxu0 0.0
        %2503 = vmatpush1.msra.mxu0 %v2349
        %2504 = vmatprep.subr.mxu0 0.0
        %2505 = vmatpush1.msra.mxu0 %v2352
        %2506 = vmatprep.subr.mxu0 0.0
        %2507 = vmatpush1.msra.mxu0 %v2355
        %2508 = vmatprep.subr.mxu0 0.0
        %2509 = vmatpush1.msra.mxu0 %v2358
        %2510 = vmatprep.subr.mxu0 0.0
        %2511 = vmatpush1.msra.mxu0 %v2361
        %2512 = vmatprep.subr.mxu0 0.0
        %2513 = vmatpush1.msra.mxu0 %v2364
        %2514 = vmatprep.subr.mxu0 0.0
        %2515 = vmatpush1.msra.mxu0 %v2367
        %2516 = vmatprep.subr.mxu0 0.0
        %2517 = vmatpush1.msra.mxu0 %v2370
        %2518 = vmatprep.subr.mxu0 0.0
        %2519 = vmatpush1.msra.mxu0 %v2373
        %2520 = vmatprep.subr.mxu0 0.0
        %2521 = vmatpush1.msra.mxu0 %v2376
        %2522 = vmatprep.subr.mxu0 0.0
        %2523 = vmatpush1.msra.mxu0 %v2379
        %2524 = vmatprep.subr.mxu0 0.0
        %2525 = vmatpush1.msra.mxu0 %v2382
        %2526 = vmatprep.subr.mxu0 0.0
        %2527 = vmatpush1.msra.mxu0 %v2385
        %2528 = vmatprep.subr.mxu0 0.0
        %2529 = vmatpush1.msra.mxu0 %v2388
        %2530 = vmatprep.subr.mxu0 0.0
        %2531 = vmatpush1.msra.mxu0 0.0
        %2532 = vmatprep.subr.mxu0 0.0
        %2533 = vmatpush1.msra.mxu0 0.0
        %2534 = vmatprep.subr.mxu0 0.0
        %2535 = vmatpush1.msra.mxu0 0.0
        %2536 = vmatprep.subr.mxu0 0.0
        %2537 = vmatpush1.msra.mxu0 0.0
        %2538 = vmatprep.subr.mxu0 0.0
        %2539 = vmatpush1.msra.mxu0 0.0
        %2540 = vmatprep.subr.mxu0 0.0
        %2541 = vmatpush1.msra.mxu0 0.0
        %2542 = vmatprep.subr.mxu0 0.0
        %2543 = vmatpush1.msra.mxu0 0.0
        %2544 = vmatprep.subr.mxu0 0.0
        %2545 = vmatpush1.msra.mxu0 0.0
        %2546 = vmatprep.subr.mxu0 0.0
        %2547 = vmatpush1.msra.mxu0 0.0
        %2548 = vmatprep.subr.mxu0 0.0
        %2549 = vmatpush1.msra.mxu0 0.0
        %2550 = vmatprep.mubr.f32.mxu0 %v2389
        %2551 = vmatmul.mubr.f32.gmra.mrb[0].mxu0 %v2300
        %v2552 = vpop.f32.mrb[0].mxu0
        %v2553 = vadd.f32 0.0, %v2552
        %v2554 = vpop.f32.mrb[0].mxu0
        %2555 = vmatprep.mubr.f32.mxu0 %v2391
        %2556 = vmatmul.mubr.f32.gmra.mrb[0].mxu0 %v2305
        %v2557 = vpop.f32.mrb[0].mxu0
        %v2558 = vadd.f32 0.0, %v2557
        %v2559 = vpop.f32.mrb[0].mxu0
        %2560 = vmatprep.mubr.f32.mxu0 %v2393
        %2561 = vmatmul.mubr.f32.gmra.mrb[0].mxu0 %v2310
        %v2562 = vpop.f32.mrb[0].mxu0
        %v2563 = vadd.f32 0.0, %v2562
        %v2564 = vpop.f32.mrb[0].mxu0
        %2565 = vmatprep.mubr.f32.mxu0 %v2395
        %2566 = vmatmul.mubr.f32.gmra.mrb[0].mxu0 %v2315
        %v2567 = vpop.f32.mrb[0].mxu0
        %v2568 = vadd.f32 0.0, %v2567
        %v2569 = vpop.f32.mrb[0].mxu0
        %2570 = vdwg.mxu0
        %v2571 = vadd.f32 %v2269, %v2464
        %v2572 = vadd.f32 %v2270, %v2466
        %v2573 = vadd.f32 %v2271, %v2553
        %v2574 = vadd.f32 %v2272, %v2470
        %v2575 = vadd.f32 %v2273, %v2472
        %v2576 = vadd.f32 %v2274, %v2558
        %v2577 = vadd.f32 %v2275, %v2476
        %v2578 = vadd.f32 %v2276, %v2478
        %v2579 = vadd.f32 %v2277, %v2563
        %v2580 = vadd.f32 %v2278, %v2482
        %v2581 = vadd.f32 %v2279, %v2484
        %v2582 = vadd.f32 %v2280, %v2568
        %v2583 = vld [vmem:[%s2] sm:$0x7]
        %v2585 = vlaneseq
        %v2586 = vshrl.u32 %v2585, 7
        %v2587 = vsub.s32 0, %v2586
        %v2588 = vrot.slane %v2583, %v2587
        %v2589 = vlaneseq
        %v2590 = vshrl.u32 %v2589, 7
        %v2591 = vsub.s32 1, %v2590
        %v2592 = vrot.slane %v2583, %v2591
        %v2593 = vlaneseq
        %v2594 = vshrl.u32 %v2593, 7
        %v2595 = vsub.s32 2, %v2594
        %v2596 = vrot.slane %v2583, %v2595
        %v2600 = vadd.f32 %v2571, %v2588
        %v2601 = vadd.f32 %v2572, %v2592
        %v2602 = vadd.f32 %v2573, %v2596
        %v2603 = vadd.f32 %v2574, %v2588
        %v2604 = vadd.f32 %v2575, %v2592
        %v2605 = vadd.f32 %v2576, %v2596
        %v2606 = vadd.f32 %v2577, %v2588
        %v2607 = vadd.f32 %v2578, %v2592
        %v2608 = vadd.f32 %v2579, %v2596
        %v2609 = vadd.f32 %v2580, %v2588
        %v2610 = vadd.f32 %v2581, %v2592
        %v2611 = vadd.f32 %v2582, %v2596
        %v2612 = vmax.f32 %v2600, 0.0
        %v2613 = vmax.f32 %v2603, 0.0
        %v2614 = vmax.f32 %v2606, 0.0
        %v2615 = vmax.f32 %v2609, 0.0
        %v2616 = vmax.f32 %v2601, 0.0
        %v2617 = vmax.f32 %v2604, 0.0
        %v2618 = vmax.f32 %v2607, 0.0
        %v2619 = vmax.f32 %v2610, 0.0
        %v2620 = vadd.f32 %v2612, %v2616
        %v2621 = vadd.f32 %v2613, %v2617
        %v2622 = vadd.f32 %v2614, %v2618
        %v2623 = vadd.f32 %v2615, %v2619
        %v2624 = vmax.f32 %v2602, 0.0
        %v2625 = vmax.f32 %v2605, 0.0
        %v2626 = vmax.f32 %v2608, 0.0
        %v2627 = vmax.f32 %v2611, 0.0
        %v2628 = vadd.f32 %v2620, %v2624
        %v2629 = vadd.f32 %v2621, %v2625
        %v2630 = vadd.f32 %v2622, %v2626
        %v2631 = vadd.f32 %v2623, %v2627
        %v2632 = vadd.f32 %v2628, %v2629
        %v2633 = vrot.slane %v2632, 4
        %v2634 = vadd.f32 %v2632, %v2633
        %v2635 = vrot.slane %v2634, 2
        %v2636 = vadd.f32 %v2634, %v2635
        %v2637 = vrot.slane %v2636, 1
        %v2638 = vadd.f32 %v2636, %v2637
        %v2639 = vmax.f32 %v2628, %v2629
        %v2640 = vrot.slane %v2639, 4
        %v2641 = vmax.f32 %v2639, %v2640
        %v2642 = vrot.slane %v2641, 2
        %v2643 = vmax.f32 %v2641, %v2642
        %v2644 = vrot.slane %v2643, 1
        %v2645 = vmax.f32 %v2643, %v2644
        %2647 = vrot.lane.b32.xlu0 %v2638, 120
        %v2648 = vpop.permute.xlu0 %2647
        %v2650 = vadd.f32 %v2638, %v2648
        %2652 = vrot.lane.b32.xlu0 %v2645, 120
        %v2653 = vpop.permute.xlu0 %2652
        %v2655 = vmax.f32 %v2645, %v2653
        %2656 = vrot.lane.b32.xlu0 %v2638, 112
        %v2657 = vpop.permute.xlu0 %2656
        %v2659 = vadd.f32 %v2650, %v2657
        %2660 = vrot.lane.b32.xlu0 %v2645, 112
        %v2661 = vpop.permute.xlu0 %2660
        %v2663 = vmax.f32 %v2655, %v2661
        %2664 = vrot.lane.b32.xlu0 %v2638, 104
        %v2665 = vpop.permute.xlu0 %2664
        %v2667 = vadd.f32 %v2659, %v2665
        %2668 = vrot.lane.b32.xlu0 %v2645, 104
        %v2669 = vpop.permute.xlu0 %2668
        %v2671 = vmax.f32 %v2663, %v2669
        %2672 = vrot.lane.b32.xlu0 %v2638, 96
        %v2673 = vpop.permute.xlu0 %2672
        %v2675 = vadd.f32 %v2667, %v2673
        %2676 = vrot.lane.b32.xlu0 %v2645, 96
        %v2677 = vpop.permute.xlu0 %2676
        %v2679 = vmax.f32 %v2671, %v2677
        %2680 = vrot.lane.b32.xlu0 %v2638, 88
        %v2681 = vpop.permute.xlu0 %2680
        %v2683 = vadd.f32 %v2675, %v2681
        %2684 = vrot.lane.b32.xlu0 %v2645, 88
        %v2685 = vpop.permute.xlu0 %2684
        %v2687 = vmax.f32 %v2679, %v2685
        %2688 = vrot.lane.b32.xlu0 %v2638, 80
        %v2689 = vpop.permute.xlu0 %2688
        %v2691 = vadd.f32 %v2683, %v2689
        %2692 = vrot.lane.b32.xlu0 %v2645, 80
        %v2693 = vpop.permute.xlu0 %2692
        %v2695 = vmax.f32 %v2687, %v2693
        %2696 = vrot.lane.b32.xlu0 %v2638, 72
        %v2697 = vpop.permute.xlu0 %2696
        %v2699 = vadd.f32 %v2691, %v2697
        %2700 = vrot.lane.b32.xlu0 %v2645, 72
        %v2701 = vpop.permute.xlu0 %2700
        %v2703 = vmax.f32 %v2695, %v2701
        %2704 = vrot.lane.b32.xlu0 %v2638, 64
        %v2705 = vpop.permute.xlu0 %2704
        %v2707 = vadd.f32 %v2699, %v2705
        %2708 = vrot.lane.b32.xlu0 %v2645, 64
        %v2709 = vpop.permute.xlu0 %2708
        %v2711 = vmax.f32 %v2703, %v2709
        %2712 = vrot.lane.b32.xlu0 %v2638, 56
        %v2713 = vpop.permute.xlu0 %2712
        %v2715 = vadd.f32 %v2707, %v2713
        %2716 = vrot.lane.b32.xlu0 %v2645, 56
        %v2717 = vpop.permute.xlu0 %2716
        %v2719 = vmax.f32 %v2711, %v2717
        %2720 = vrot.lane.b32.xlu0 %v2638, 48
        %v2721 = vpop.permute.xlu0 %2720
        %v2723 = vadd.f32 %v2715, %v2721
        %2724 = vrot.lane.b32.xlu0 %v2645, 48
        %v2725 = vpop.permute.xlu0 %2724
        %v2727 = vmax.f32 %v2719, %v2725
        %2728 = vrot.lane.b32.xlu0 %v2638, 40
        %v2729 = vpop.permute.xlu0 %2728
        %v2731 = vadd.f32 %v2723, %v2729
        %2732 = vrot.lane.b32.xlu0 %v2645, 40
        %v2733 = vpop.permute.xlu0 %2732
        %v2735 = vmax.f32 %v2727, %v2733
        %2736 = vrot.lane.b32.xlu0 %v2638, 32
        %v2737 = vpop.permute.xlu0 %2736
        %v2739 = vadd.f32 %v2731, %v2737
        %2740 = vrot.lane.b32.xlu0 %v2645, 32
        %v2741 = vpop.permute.xlu0 %2740
        %v2743 = vmax.f32 %v2735, %v2741
        %2744 = vrot.lane.b32.xlu0 %v2638, 24
        %v2745 = vpop.permute.xlu0 %2744
        %v2747 = vadd.f32 %v2739, %v2745
        %2748 = vrot.lane.b32.xlu0 %v2645, 24
        %v2749 = vpop.permute.xlu0 %2748
        %v2751 = vmax.f32 %v2743, %v2749
        %2752 = vrot.lane.b32.xlu0 %v2638, 16
        %v2753 = vpop.permute.xlu0 %2752
        %v2755 = vadd.f32 %v2747, %v2753
        %2756 = vrot.lane.b32.xlu0 %v2645, 16
        %v2757 = vpop.permute.xlu0 %2756
        %v2759 = vmax.f32 %v2751, %v2757
        %2760 = vrot.lane.b32.xlu0 %v2638, 8
        %v2761 = vpop.permute.xlu0 %2760
        %v2763 = vadd.f32 %v2755, %v2761
        %2764 = vrot.lane.b32.xlu0 %v2645, 8
        %v2765 = vpop.permute.xlu0 %2764
        %v2767 = vmax.f32 %v2759, %v2765
        %v2768 = vrcp.pop 256.0
        %v2769 = vmul.f32 %v2763, %v2768
        %v2770 = vadd.f32 %v2630, %v2631
        %v2771 = vrot.slane %v2770, 4
        %v2772 = vadd.f32 %v2770, %v2771
        %v2773 = vrot.slane %v2772, 2
        %v2774 = vadd.f32 %v2772, %v2773
        %v2775 = vrot.slane %v2774, 1
        %v2776 = vadd.f32 %v2774, %v2775
        %v2777 = vmax.f32 %v2630, %v2631
        %v2778 = vrot.slane %v2777, 4
        %v2779 = vmax.f32 %v2777, %v2778
        %v2780 = vrot.slane %v2779, 2
        %v2781 = vmax.f32 %v2779, %v2780
        %v2782 = vrot.slane %v2781, 1
        %v2783 = vmax.f32 %v2781, %v2782
        %2785 = vrot.lane.b32.xlu0 %v2776, 120
        %v2786 = vpop.permute.xlu0 %2785
        %v2788 = vadd.f32 %v2776, %v2786
        %2790 = vrot.lane.b32.xlu0 %v2783, 120
        %v2791 = vpop.permute.xlu0 %2790
        %v2793 = vmax.f32 %v2783, %v2791
        %2794 = vrot.lane.b32.xlu0 %v2776, 112
        %v2795 = vpop.permute.xlu0 %2794
        %v2797 = vadd.f32 %v2788, %v2795
        %2798 = vrot.lane.b32.xlu0 %v2783, 112
        %v2799 = vpop.permute.xlu0 %2798
        %v2801 = vmax.f32 %v2793, %v2799
        %2802 = vrot.lane.b32.xlu0 %v2776, 104
        %v2803 = vpop.permute.xlu0 %2802
        %v2805 = vadd.f32 %v2797, %v2803
        %2806 = vrot.lane.b32.xlu0 %v2783, 104
        %v2807 = vpop.permute.xlu0 %2806
        %v2809 = vmax.f32 %v2801, %v2807
        %2810 = vrot.lane.b32.xlu0 %v2776, 96
        %v2811 = vpop.permute.xlu0 %2810
        %v2813 = vadd.f32 %v2805, %v2811
        %2814 = vrot.lane.b32.xlu0 %v2783, 96
        %v2815 = vpop.permute.xlu0 %2814
        %v2817 = vmax.f32 %v2809, %v2815
        %2818 = vrot.lane.b32.xlu0 %v2776, 88
        %v2819 = vpop.permute.xlu0 %2818
        %v2821 = vadd.f32 %v2813, %v2819
        %2822 = vrot.lane.b32.xlu0 %v2783, 88
        %v2823 = vpop.permute.xlu0 %2822
        %v2825 = vmax.f32 %v2817, %v2823
        %2826 = vrot.lane.b32.xlu0 %v2776, 80
        %v2827 = vpop.permute.xlu0 %2826
        %v2829 = vadd.f32 %v2821, %v2827
        %2830 = vrot.lane.b32.xlu0 %v2783, 80
        %v2831 = vpop.permute.xlu0 %2830
        %v2833 = vmax.f32 %v2825, %v2831
        %2834 = vrot.lane.b32.xlu0 %v2776, 72
        %v2835 = vpop.permute.xlu0 %2834
        %v2837 = vadd.f32 %v2829, %v2835
        %2838 = vrot.lane.b32.xlu0 %v2783, 72
        %v2839 = vpop.permute.xlu0 %2838
        %v2841 = vmax.f32 %v2833, %v2839
        %2842 = vrot.lane.b32.xlu0 %v2776, 64
        %v2843 = vpop.permute.xlu0 %2842
        %v2845 = vadd.f32 %v2837, %v2843
        %2846 = vrot.lane.b32.xlu0 %v2783, 64
        %v2847 = vpop.permute.xlu0 %2846
        %v2849 = vmax.f32 %v2841, %v2847
        %2850 = vrot.lane.b32.xlu0 %v2776, 56
        %v2851 = vpop.permute.xlu0 %2850
        %v2853 = vadd.f32 %v2845, %v2851
        %2854 = vrot.lane.b32.xlu0 %v2783, 56
        %v2855 = vpop.permute.xlu0 %2854
        %v2857 = vmax.f32 %v2849, %v2855
        %2858 = vrot.lane.b32.xlu0 %v2776, 48
        %v2859 = vpop.permute.xlu0 %2858
        %v2861 = vadd.f32 %v2853, %v2859
        %2862 = vrot.lane.b32.xlu0 %v2783, 48
        %v2863 = vpop.permute.xlu0 %2862
        %v2865 = vmax.f32 %v2857, %v2863
        %2866 = vrot.lane.b32.xlu0 %v2776, 40
        %v2867 = vpop.permute.xlu0 %2866
        %v2869 = vadd.f32 %v2861, %v2867
        %2870 = vrot.lane.b32.xlu0 %v2783, 40
        %v2871 = vpop.permute.xlu0 %2870
        %v2873 = vmax.f32 %v2865, %v2871
        %2874 = vrot.lane.b32.xlu0 %v2776, 32
        %v2875 = vpop.permute.xlu0 %2874
        %v2877 = vadd.f32 %v2869, %v2875
        %2878 = vrot.lane.b32.xlu0 %v2783, 32
        %v2879 = vpop.permute.xlu0 %2878
        %v2881 = vmax.f32 %v2873, %v2879
        %2882 = vrot.lane.b32.xlu0 %v2776, 24
        %v2883 = vpop.permute.xlu0 %2882
        %v2885 = vadd.f32 %v2877, %v2883
        %2886 = vrot.lane.b32.xlu0 %v2783, 24
        %v2887 = vpop.permute.xlu0 %2886
        %v2889 = vmax.f32 %v2881, %v2887
        %2890 = vrot.lane.b32.xlu0 %v2776, 16
        %v2891 = vpop.permute.xlu0 %2890
        %v2893 = vadd.f32 %v2885, %v2891
        %2894 = vrot.lane.b32.xlu0 %v2783, 16
        %v2895 = vpop.permute.xlu0 %2894
        %v2897 = vmax.f32 %v2889, %v2895
        %2898 = vrot.lane.b32.xlu0 %v2776, 8
        %v2899 = vpop.permute.xlu0 %2898
        %v2901 = vadd.f32 %v2893, %v2899
        %2902 = vrot.lane.b32.xlu0 %v2783, 8
        %v2903 = vpop.permute.xlu0 %2902
        %v2905 = vmax.f32 %v2897, %v2903
        %v2906 = vmul.f32 %v2901, %v2768
        %vm2907 = vcmask 64512
        %v2908 = vsel %vm2907, %v2628, 0.0
        %2909 = vadd.xlane.f32.xlu0 %v2908
        %v2910 = vpop.xlane.xlu0 %2909
        %v2911 = vsel %vm2907, %v2629, 0.0
        %2912 = vadd.xlane.f32.xlu0 %v2911
        %v2913 = vpop.xlane.xlu0 %2912
        %v2914 = vrcp.pop 8.0
        %v2915 = vmul.f32 %v2910, %v2914
        %v2916 = vmul.f32 %v2913, %v2914
        %v2917 = vsel %vm2907, %v2628, -inf
        %2918 = vmax.xlane.f32.xlu0 %v2917
        %v2919 = vpop.xlane.xlu0 %2918
        %v2920 = vsel %vm2907, %v2629, -inf
        %2921 = vmax.xlane.f32.xlu0 %v2920
        %v2922 = vpop.xlane.xlu0 %2921
        %2925 = vrot.lane.b32.xlu0 %v2628, 120
        %v2926 = vpop.permute.xlu0 %2925
        %2927 = vrot.lane.b32.xlu0 %v2629, 120
        %v2928 = vpop.permute.xlu0 %2927
        %v2931 = vsel %vm2907, %v2926, 0.0
        %2932 = vadd.xlane.f32.xlu0 %v2931
        %v2933 = vpop.xlane.xlu0 %2932
        %v2934 = vsel %vm2907, %v2928, 0.0
        %2935 = vadd.xlane.f32.xlu0 %v2934
        %v2936 = vpop.xlane.xlu0 %2935
        %v2937 = vmul.f32 %v2933, %v2914
        %v2938 = vmul.f32 %v2936, %v2914
        %vm2939 = vcmask 130112
        %v2940 = vsel %vm2939, %v2628, -inf
        %2941 = vmax.xlane.f32.xlu0 %v2940
        %v2942 = vpop.xlane.xlu0 %2941
        %v2943 = vsel %vm2939, %v2629, -inf
        %2944 = vmax.xlane.f32.xlu0 %v2943
        %v2945 = vpop.xlane.xlu0 %2944
        %2946 = vrot.lane.b32.xlu0 %v2628, 112
        %v2947 = vpop.permute.xlu0 %2946
        %2948 = vrot.lane.b32.xlu0 %v2629, 112
        %v2949 = vpop.permute.xlu0 %2948
        %v2952 = vsel %vm2907, %v2947, 0.0
        %2953 = vadd.xlane.f32.xlu0 %v2952
        %v2954 = vpop.xlane.xlu0 %2953
        %v2955 = vsel %vm2907, %v2949, 0.0
        %2956 = vadd.xlane.f32.xlu0 %v2955
        %v2957 = vpop.xlane.xlu0 %2956
        %v2958 = vmul.f32 %v2954, %v2914
        %v2959 = vmul.f32 %v2957, %v2914
        %vm2960 = vcmask 195712
        %v2961 = vsel %vm2960, %v2628, -inf
        %2962 = vmax.xlane.f32.xlu0 %v2961
        %v2963 = vpop.xlane.xlu0 %2962
        %v2964 = vsel %vm2960, %v2629, -inf
        %2965 = vmax.xlane.f32.xlu0 %v2964
        %v2966 = vpop.xlane.xlu0 %2965
        %2967 = vrot.lane.b32.xlu0 %v2628, 104
        %v2968 = vpop.permute.xlu0 %2967
        %2969 = vrot.lane.b32.xlu0 %v2629, 104
        %v2970 = vpop.permute.xlu0 %2969
        %v2973 = vsel %vm2907, %v2968, 0.0
        %2974 = vadd.xlane.f32.xlu0 %v2973
        %v2975 = vpop.xlane.xlu0 %2974
        %v2976 = vsel %vm2907, %v2970, 0.0
        %2977 = vadd.xlane.f32.xlu0 %v2976
        %v2978 = vpop.xlane.xlu0 %2977
        %v2979 = vmul.f32 %v2975, %v2914
        %v2980 = vmul.f32 %v2978, %v2914
        %vm2981 = vcmask 261312
        %v2982 = vsel %vm2981, %v2628, -inf
        %2983 = vmax.xlane.f32.xlu0 %v2982
        %v2984 = vpop.xlane.xlu0 %2983
        %v2985 = vsel %vm2981, %v2629, -inf
        %2986 = vmax.xlane.f32.xlu0 %v2985
        %v2987 = vpop.xlane.xlu0 %2986
        %2988 = vrot.lane.b32.xlu0 %v2628, 96
        %v2989 = vpop.permute.xlu0 %2988
        %2990 = vrot.lane.b32.xlu0 %v2629, 96
        %v2991 = vpop.permute.xlu0 %2990
        %v2994 = vsel %vm2907, %v2989, 0.0
        %2995 = vadd.xlane.f32.xlu0 %v2994
        %v2996 = vpop.xlane.xlu0 %2995
        %v2997 = vsel %vm2907, %v2991, 0.0
        %2998 = vadd.xlane.f32.xlu0 %v2997
        %v2999 = vpop.xlane.xlu0 %2998
        %v3000 = vmul.f32 %v2996, %v2914
        %v3001 = vmul.f32 %v2999, %v2914
        %vm3002 = vcmask 326912
        %v3003 = vsel %vm3002, %v2628, -inf
        %3004 = vmax.xlane.f32.xlu0 %v3003
        %v3005 = vpop.xlane.xlu0 %3004
        %v3006 = vsel %vm3002, %v2629, -inf
        %3007 = vmax.xlane.f32.xlu0 %v3006
        %v3008 = vpop.xlane.xlu0 %3007
        %3009 = vrot.lane.b32.xlu0 %v2628, 88
        %v3010 = vpop.permute.xlu0 %3009
        %3011 = vrot.lane.b32.xlu0 %v2629, 88
        %v3012 = vpop.permute.xlu0 %3011
        %v3015 = vsel %vm2907, %v3010, 0.0
        %3016 = vadd.xlane.f32.xlu0 %v3015
        %v3017 = vpop.xlane.xlu0 %3016
        %v3018 = vsel %vm2907, %v3012, 0.0
        %3019 = vadd.xlane.f32.xlu0 %v3018
        %v3020 = vpop.xlane.xlu0 %3019
        %v3021 = vmul.f32 %v3017, %v2914
        %v3022 = vmul.f32 %v3020, %v2914
        %vm3023 = vcmask 392512
        %v3024 = vsel %vm3023, %v2628, -inf
        %3025 = vmax.xlane.f32.xlu0 %v3024
        %v3026 = vpop.xlane.xlu0 %3025
        %v3027 = vsel %vm3023, %v2629, -inf
        %3028 = vmax.xlane.f32.xlu0 %v3027
        %v3029 = vpop.xlane.xlu0 %3028
        %3030 = vrot.lane.b32.xlu0 %v2628, 80
        %v3031 = vpop.permute.xlu0 %3030
        %3032 = vrot.lane.b32.xlu0 %v2629, 80
        %v3033 = vpop.permute.xlu0 %3032
        %v3036 = vsel %vm2907, %v3031, 0.0
        %3037 = vadd.xlane.f32.xlu0 %v3036
        %v3038 = vpop.xlane.xlu0 %3037
        %v3039 = vsel %vm2907, %v3033, 0.0
        %3040 = vadd.xlane.f32.xlu0 %v3039
        %v3041 = vpop.xlane.xlu0 %3040
        %v3042 = vmul.f32 %v3038, %v2914
        %v3043 = vmul.f32 %v3041, %v2914
        %vm3044 = vcmask 458112
        %v3045 = vsel %vm3044, %v2628, -inf
        %3046 = vmax.xlane.f32.xlu0 %v3045
        %v3047 = vpop.xlane.xlu0 %3046
        %v3048 = vsel %vm3044, %v2629, -inf
        %3049 = vmax.xlane.f32.xlu0 %v3048
        %v3050 = vpop.xlane.xlu0 %3049
        %3051 = vrot.lane.b32.xlu0 %v2628, 72
        %v3052 = vpop.permute.xlu0 %3051
        %3053 = vrot.lane.b32.xlu0 %v2629, 72
        %v3054 = vpop.permute.xlu0 %3053
        %v3057 = vsel %vm2907, %v3052, 0.0
        %3058 = vadd.xlane.f32.xlu0 %v3057
        %v3059 = vpop.xlane.xlu0 %3058
        %v3060 = vsel %vm2907, %v3054, 0.0
        %3061 = vadd.xlane.f32.xlu0 %v3060
        %v3062 = vpop.xlane.xlu0 %3061
        %v3063 = vmul.f32 %v3059, %v2914
        %v3064 = vmul.f32 %v3062, %v2914
        %vm3065 = vcmask 523712
        %v3066 = vsel %vm3065, %v2628, -inf
        %3067 = vmax.xlane.f32.xlu0 %v3066
        %v3068 = vpop.xlane.xlu0 %3067
        %v3069 = vsel %vm3065, %v2629, -inf
        %3070 = vmax.xlane.f32.xlu0 %v3069
        %v3071 = vpop.xlane.xlu0 %3070
        %3072 = vrot.lane.b32.xlu0 %v2628, 64
        %v3073 = vpop.permute.xlu0 %3072
        %3074 = vrot.lane.b32.xlu0 %v2629, 64
        %v3075 = vpop.permute.xlu0 %3074
        %v3078 = vsel %vm2907, %v3073, 0.0
        %3079 = vadd.xlane.f32.xlu0 %v3078
        %v3080 = vpop.xlane.xlu0 %3079
        %v3081 = vsel %vm2907, %v3075, 0.0
        %3082 = vadd.xlane.f32.xlu0 %v3081
        %v3083 = vpop.xlane.xlu0 %3082
        %v3084 = vmul.f32 %v3080, %v2914
        %v3085 = vmul.f32 %v3083, %v2914
        %vm3086 = vcmask 589312
        %v3087 = vsel %vm3086, %v2628, -inf
        %3088 = vmax.xlane.f32.xlu0 %v3087
        %v3089 = vpop.xlane.xlu0 %3088
        %v3090 = vsel %vm3086, %v2629, -inf
        %3091 = vmax.xlane.f32.xlu0 %v3090
        %v3092 = vpop.xlane.xlu0 %3091
        %3093 = vrot.lane.b32.xlu0 %v2628, 56
        %v3094 = vpop.permute.xlu0 %3093
        %3095 = vrot.lane.b32.xlu0 %v2629, 56
        %v3096 = vpop.permute.xlu0 %3095
        %v3099 = vsel %vm2907, %v3094, 0.0
        %3100 = vadd.xlane.f32.xlu0 %v3099
        %v3101 = vpop.xlane.xlu0 %3100
        %v3102 = vsel %vm2907, %v3096, 0.0
        %3103 = vadd.xlane.f32.xlu0 %v3102
        %v3104 = vpop.xlane.xlu0 %3103
        %v3105 = vmul.f32 %v3101, %v2914
        %v3106 = vmul.f32 %v3104, %v2914
        %vm3107 = vcmask 654912
        %v3108 = vsel %vm3107, %v2628, -inf
        %3109 = vmax.xlane.f32.xlu0 %v3108
        %v3110 = vpop.xlane.xlu0 %3109
        %v3111 = vsel %vm3107, %v2629, -inf
        %3112 = vmax.xlane.f32.xlu0 %v3111
        %v3113 = vpop.xlane.xlu0 %3112
        %3114 = vrot.lane.b32.xlu0 %v2628, 48
        %v3115 = vpop.permute.xlu0 %3114
        %3116 = vrot.lane.b32.xlu0 %v2629, 48
        %v3117 = vpop.permute.xlu0 %3116
        %v3120 = vsel %vm2907, %v3115, 0.0
        %3121 = vadd.xlane.f32.xlu0 %v3120
        %v3122 = vpop.xlane.xlu0 %3121
        %v3123 = vsel %vm2907, %v3117, 0.0
        %3124 = vadd.xlane.f32.xlu0 %v3123
        %v3125 = vpop.xlane.xlu0 %3124
        %v3126 = vmul.f32 %v3122, %v2914
        %v3127 = vmul.f32 %v3125, %v2914
        %vm3128 = vcmask 720512
        %v3129 = vsel %vm3128, %v2628, -inf
        %3130 = vmax.xlane.f32.xlu0 %v3129
        %v3131 = vpop.xlane.xlu0 %3130
        %v3132 = vsel %vm3128, %v2629, -inf
        %3133 = vmax.xlane.f32.xlu0 %v3132
        %v3134 = vpop.xlane.xlu0 %3133
        %3135 = vrot.lane.b32.xlu0 %v2628, 40
        %v3136 = vpop.permute.xlu0 %3135
        %3137 = vrot.lane.b32.xlu0 %v2629, 40
        %v3138 = vpop.permute.xlu0 %3137
        %v3141 = vsel %vm2907, %v3136, 0.0
        %3142 = vadd.xlane.f32.xlu0 %v3141
        %v3143 = vpop.xlane.xlu0 %3142
        %v3144 = vsel %vm2907, %v3138, 0.0
        %3145 = vadd.xlane.f32.xlu0 %v3144
        %v3146 = vpop.xlane.xlu0 %3145
        %v3147 = vmul.f32 %v3143, %v2914
        %v3148 = vmul.f32 %v3146, %v2914
        %vm3149 = vcmask 786112
        %v3150 = vsel %vm3149, %v2628, -inf
        %3151 = vmax.xlane.f32.xlu0 %v3150
        %v3152 = vpop.xlane.xlu0 %3151
        %v3153 = vsel %vm3149, %v2629, -inf
        %3154 = vmax.xlane.f32.xlu0 %v3153
        %v3155 = vpop.xlane.xlu0 %3154
        %3156 = vrot.lane.b32.xlu0 %v2628, 32
        %v3157 = vpop.permute.xlu0 %3156
        %3158 = vrot.lane.b32.xlu0 %v2629, 32
        %v3159 = vpop.permute.xlu0 %3158
        %v3162 = vsel %vm2907, %v3157, 0.0
        %3163 = vadd.xlane.f32.xlu0 %v3162
        %v3164 = vpop.xlane.xlu0 %3163
        %v3165 = vsel %vm2907, %v3159, 0.0
        %3166 = vadd.xlane.f32.xlu0 %v3165
        %v3167 = vpop.xlane.xlu0 %3166
        %v3168 = vmul.f32 %v3164, %v2914
        %v3169 = vmul.f32 %v3167, %v2914
        %vm3170 = vcmask 851712
        %v3171 = vsel %vm3170, %v2628, -inf
        %3172 = vmax.xlane.f32.xlu0 %v3171
        %v3173 = vpop.xlane.xlu0 %3172
        %v3174 = vsel %vm3170, %v2629, -inf
        %3175 = vmax.xlane.f32.xlu0 %v3174
        %v3176 = vpop.xlane.xlu0 %3175
        %3177 = vrot.lane.b32.xlu0 %v2628, 24
        %v3178 = vpop.permute.xlu0 %3177
        %3179 = vrot.lane.b32.xlu0 %v2629, 24
        %v3180 = vpop.permute.xlu0 %3179
        %v3183 = vsel %vm2907, %v3178, 0.0
        %3184 = vadd.xlane.f32.xlu0 %v3183
        %v3185 = vpop.xlane.xlu0 %3184
        %v3186 = vsel %vm2907, %v3180, 0.0
        %3187 = vadd.xlane.f32.xlu0 %v3186
        %v3188 = vpop.xlane.xlu0 %3187
        %v3189 = vmul.f32 %v3185, %v2914
        %v3190 = vmul.f32 %v3188, %v2914
        %vm3191 = vcmask 917312
        %v3192 = vsel %vm3191, %v2628, -inf
        %3193 = vmax.xlane.f32.xlu0 %v3192
        %v3194 = vpop.xlane.xlu0 %3193
        %v3195 = vsel %vm3191, %v2629, -inf
        %3196 = vmax.xlane.f32.xlu0 %v3195
        %v3197 = vpop.xlane.xlu0 %3196
        %3198 = vrot.lane.b32.xlu0 %v2628, 16
        %v3199 = vpop.permute.xlu0 %3198
        %3200 = vrot.lane.b32.xlu0 %v2629, 16
        %v3201 = vpop.permute.xlu0 %3200
        %v3204 = vsel %vm2907, %v3199, 0.0
        %3205 = vadd.xlane.f32.xlu0 %v3204
        %v3206 = vpop.xlane.xlu0 %3205
        %v3207 = vsel %vm2907, %v3201, 0.0
        %3208 = vadd.xlane.f32.xlu0 %v3207
        %v3209 = vpop.xlane.xlu0 %3208
        %v3210 = vmul.f32 %v3206, %v2914
        %v3211 = vmul.f32 %v3209, %v2914
        %vm3212 = vcmask 982912
        %v3213 = vsel %vm3212, %v2628, -inf
        %3214 = vmax.xlane.f32.xlu0 %v3213
        %v3215 = vpop.xlane.xlu0 %3214
        %v3216 = vsel %vm3212, %v2629, -inf
        %3217 = vmax.xlane.f32.xlu0 %v3216
        %v3218 = vpop.xlane.xlu0 %3217
        %3219 = vrot.lane.b32.xlu0 %v2628, 8
        %v3220 = vpop.permute.xlu0 %3219
        %3221 = vrot.lane.b32.xlu0 %v2629, 8
        %v3222 = vpop.permute.xlu0 %3221
        %v3225 = vsel %vm2907, %v3220, 0.0
        %3226 = vadd.xlane.f32.xlu0 %v3225
        %v3227 = vpop.xlane.xlu0 %3226
        %v3228 = vsel %vm2907, %v3222, 0.0
        %3229 = vadd.xlane.f32.xlu0 %v3228
        %v3230 = vpop.xlane.xlu0 %3229
        %v3231 = vmul.f32 %v3227, %v2914
        %v3232 = vmul.f32 %v3230, %v2914
        %vm3233 = vcmask 1048512
        %v3234 = vsel %vm3233, %v2628, -inf
        %3235 = vmax.xlane.f32.xlu0 %v3234
        %v3236 = vpop.xlane.xlu0 %3235
        %v3237 = vsel %vm3233, %v2629, -inf
        %3238 = vmax.xlane.f32.xlu0 %v3237
        %v3239 = vpop.xlane.xlu0 %3238
        %vm3240 = vcmask 7168
        %v3241 = vsel %vm3240, %v2915, %v2937
        %v3242 = vsel %vm3240, %v2916, %v2938
        %vm3243 = vcmask 15360
        %v3244 = vsel %vm3243, %v3241, %v2958
        %v3245 = vsel %vm3243, %v3242, %v2959
        %vm3246 = vcmask 23552
        %v3247 = vsel %vm3246, %v3244, %v2979
        %v3248 = vsel %vm3246, %v3245, %v2980
        %vm3249 = vcmask 31744
        %v3250 = vsel %vm3249, %v3247, %v3000
        %v3251 = vsel %vm3249, %v3248, %v3001
        %vm3252 = vcmask 39936
        %v3253 = vsel %vm3252, %v3250, %v3021
        %v3254 = vsel %vm3252, %v3251, %v3022
        %vm3255 = vcmask 48128
        %v3256 = vsel %vm3255, %v3253, %v3042
        %v3257 = vsel %vm3255, %v3254, %v3043
        %vm3258 = vcmask 56320
        %v3259 = vsel %vm3258, %v3256, %v3063
        %v3260 = vsel %vm3258, %v3257, %v3064
        %v3261 = vsel %vm2907, %v3259, %v3084
        %v3262 = vsel %vm2907, %v3260, %v3085
        %vm3263 = vcmask 72704
        %v3264 = vsel %vm3263, %v3261, %v3105
        %v3265 = vsel %vm3263, %v3262, %v3106
        %vm3266 = vcmask 80896
        %v3267 = vsel %vm3266, %v3264, %v3126
        %v3268 = vsel %vm3266, %v3265, %v3127
        %vm3269 = vcmask 89088
        %v3270 = vsel %vm3269, %v3267, %v3147
        %v3271 = vsel %vm3269, %v3268, %v3148
        %vm3272 = vcmask 97280
        %v3273 = vsel %vm3272, %v3270, %v3168
        %v3274 = vsel %vm3272, %v3271, %v3169
        %vm3275 = vcmask 105472
        %v3276 = vsel %vm3275, %v3273, %v3189
        %v3277 = vsel %vm3275, %v3274, %v3190
        %vm3278 = vcmask 113664
        %v3279 = vsel %vm3278, %v3276, %v3210
        %v3280 = vsel %vm3278, %v3277, %v3211
        %vm3281 = vcmask 121856
        %v3282 = vsel %vm3281, %v3279, %v3231
        %v3283 = vsel %vm3281, %v3280, %v3232
        %v3284 = vsel %vm3240, %v2919, %v2942
        %v3285 = vsel %vm3240, %v2922, %v2945
        %v3286 = vsel %vm3243, %v3284, %v2963
        %v3287 = vsel %vm3243, %v3285, %v2966
        %v3288 = vsel %vm3246, %v3286, %v2984
        %v3289 = vsel %vm3246, %v3287, %v2987
        %v3290 = vsel %vm3249, %v3288, %v3005
        %v3291 = vsel %vm3249, %v3289, %v3008
        %v3292 = vsel %vm3252, %v3290, %v3026
        %v3293 = vsel %vm3252, %v3291, %v3029
        %v3294 = vsel %vm3255, %v3292, %v3047
        %v3295 = vsel %vm3255, %v3293, %v3050
        %v3296 = vsel %vm3258, %v3294, %v3068
        %v3297 = vsel %vm3258, %v3295, %v3071
        %v3298 = vsel %vm2907, %v3296, %v3089
        %v3299 = vsel %vm2907, %v3297, %v3092
        %v3300 = vsel %vm3263, %v3298, %v3110
        %v3301 = vsel %vm3263, %v3299, %v3113
        %v3302 = vsel %vm3266, %v3300, %v3131
        %v3303 = vsel %vm3266, %v3301, %v3134
        %v3304 = vsel %vm3269, %v3302, %v3152
        %v3305 = vsel %vm3269, %v3303, %v3155
        %v3306 = vsel %vm3272, %v3304, %v3173
        %v3307 = vsel %vm3272, %v3305, %v3176
        %v3308 = vsel %vm3275, %v3306, %v3194
        %v3309 = vsel %vm3275, %v3307, %v3197
        %v3310 = vsel %vm3278, %v3308, %v3215
        %v3311 = vsel %vm3278, %v3309, %v3218
        %v3312 = vsel %vm3281, %v3310, %v3236
        %v3313 = vsel %vm3281, %v3311, %v3239
        %v3314 = vsel %vm2907, %v2630, 0.0
        %3315 = vadd.xlane.f32.xlu0 %v3314
        %v3316 = vpop.xlane.xlu0 %3315
        %v3317 = vsel %vm2907, %v2631, 0.0
        %3318 = vadd.xlane.f32.xlu0 %v3317
        %v3319 = vpop.xlane.xlu0 %3318
        %v3320 = vmul.f32 %v3316, %v2914
        %v3321 = vmul.f32 %v3319, %v2914
        %v3322 = vsel %vm2907, %v2630, -inf
        %3323 = vmax.xlane.f32.xlu0 %v3322
        %v3324 = vpop.xlane.xlu0 %3323
        %v3325 = vsel %vm2907, %v2631, -inf
        %3326 = vmax.xlane.f32.xlu0 %v3325
        %v3327 = vpop.xlane.xlu0 %3326
        %3330 = vrot.lane.b32.xlu0 %v2630, 120
        %v3331 = vpop.permute.xlu0 %3330
        %3332 = vrot.lane.b32.xlu0 %v2631, 120
        %v3333 = vpop.permute.xlu0 %3332
        %v3336 = vsel %vm2907, %v3331, 0.0
        %3337 = vadd.xlane.f32.xlu0 %v3336
        %v3338 = vpop.xlane.xlu0 %3337
        %v3339 = vsel %vm2907, %v3333, 0.0
        %3340 = vadd.xlane.f32.xlu0 %v3339
        %v3341 = vpop.xlane.xlu0 %3340
        %v3342 = vmul.f32 %v3338, %v2914
        %v3343 = vmul.f32 %v3341, %v2914
        %v3344 = vsel %vm2939, %v2630, -inf
        %3345 = vmax.xlane.f32.xlu0 %v3344
        %v3346 = vpop.xlane.xlu0 %3345
        %v3347 = vsel %vm2939, %v2631, -inf
        %3348 = vmax.xlane.f32.xlu0 %v3347
        %v3349 = vpop.xlane.xlu0 %3348
        %3350 = vrot.lane.b32.xlu0 %v2630, 112
        %v3351 = vpop.permute.xlu0 %3350
        %3352 = vrot.lane.b32.xlu0 %v2631, 112
        %v3353 = vpop.permute.xlu0 %3352
        %v3356 = vsel %vm2907, %v3351, 0.0
        %3357 = vadd.xlane.f32.xlu0 %v3356
        %v3358 = vpop.xlane.xlu0 %3357
        %v3359 = vsel %vm2907, %v3353, 0.0
        %3360 = vadd.xlane.f32.xlu0 %v3359
        %v3361 = vpop.xlane.xlu0 %3360
        %v3362 = vmul.f32 %v3358, %v2914
        %v3363 = vmul.f32 %v3361, %v2914
        %v3364 = vsel %vm2960, %v2630, -inf
        %3365 = vmax.xlane.f32.xlu0 %v3364
        %v3366 = vpop.xlane.xlu0 %3365
        %v3367 = vsel %vm2960, %v2631, -inf
        %3368 = vmax.xlane.f32.xlu0 %v3367
        %v3369 = vpop.xlane.xlu0 %3368
        %3370 = vrot.lane.b32.xlu0 %v2630, 104
        %v3371 = vpop.permute.xlu0 %3370
        %3372 = vrot.lane.b32.xlu0 %v2631, 104
        %v3373 = vpop.permute.xlu0 %3372
        %v3376 = vsel %vm2907, %v3371, 0.0
        %3377 = vadd.xlane.f32.xlu0 %v3376
        %v3378 = vpop.xlane.xlu0 %3377
        %v3379 = vsel %vm2907, %v3373, 0.0
        %3380 = vadd.xlane.f32.xlu0 %v3379
        %v3381 = vpop.xlane.xlu0 %3380
        %v3382 = vmul.f32 %v3378, %v2914
        %v3383 = vmul.f32 %v3381, %v2914
        %v3384 = vsel %vm2981, %v2630, -inf
        %3385 = vmax.xlane.f32.xlu0 %v3384
        %v3386 = vpop.xlane.xlu0 %3385
        %v3387 = vsel %vm2981, %v2631, -inf
        %3388 = vmax.xlane.f32.xlu0 %v3387
        %v3389 = vpop.xlane.xlu0 %3388
        %3390 = vrot.lane.b32.xlu0 %v2630, 96
        %v3391 = vpop.permute.xlu0 %3390
        %3392 = vrot.lane.b32.xlu0 %v2631, 96
        %v3393 = vpop.permute.xlu0 %3392
        %v3396 = vsel %vm2907, %v3391, 0.0
        %3397 = vadd.xlane.f32.xlu0 %v3396
        %v3398 = vpop.xlane.xlu0 %3397
        %v3399 = vsel %vm2907, %v3393, 0.0
        %3400 = vadd.xlane.f32.xlu0 %v3399
        %v3401 = vpop.xlane.xlu0 %3400
        %v3402 = vmul.f32 %v3398, %v2914
        %v3403 = vmul.f32 %v3401, %v2914
        %v3404 = vsel %vm3002, %v2630, -inf
        %3405 = vmax.xlane.f32.xlu0 %v3404
        %v3406 = vpop.xlane.xlu0 %3405
        %v3407 = vsel %vm3002, %v2631, -inf
        %3408 = vmax.xlane.f32.xlu0 %v3407
        %v3409 = vpop.xlane.xlu0 %3408
        %3410 = vrot.lane.b32.xlu0 %v2630, 88
        %v3411 = vpop.permute.xlu0 %3410
        %3412 = vrot.lane.b32.xlu0 %v2631, 88
        %v3413 = vpop.permute.xlu0 %3412
        %v3416 = vsel %vm2907, %v3411, 0.0
        %3417 = vadd.xlane.f32.xlu0 %v3416
        %v3418 = vpop.xlane.xlu0 %3417
        %v3419 = vsel %vm2907, %v3413, 0.0
        %3420 = vadd.xlane.f32.xlu0 %v3419
        %v3421 = vpop.xlane.xlu0 %3420
        %v3422 = vmul.f32 %v3418, %v2914
        %v3423 = vmul.f32 %v3421, %v2914
        %v3424 = vsel %vm3023, %v2630, -inf
        %3425 = vmax.xlane.f32.xlu0 %v3424
        %v3426 = vpop.xlane.xlu0 %3425
        %v3427 = vsel %vm3023, %v2631, -inf
        %3428 = vmax.xlane.f32.xlu0 %v3427
        %v3429 = vpop.xlane.xlu0 %3428
        %3430 = vrot.lane.b32.xlu0 %v2630, 80
        %v3431 = vpop.permute.xlu0 %3430
        %3432 = vrot.lane.b32.xlu0 %v2631, 80
        %v3433 = vpop.permute.xlu0 %3432
        %v3436 = vsel %vm2907, %v3431, 0.0
        %3437 = vadd.xlane.f32.xlu0 %v3436
        %v3438 = vpop.xlane.xlu0 %3437
        %v3439 = vsel %vm2907, %v3433, 0.0
        %3440 = vadd.xlane.f32.xlu0 %v3439
        %v3441 = vpop.xlane.xlu0 %3440
        %v3442 = vmul.f32 %v3438, %v2914
        %v3443 = vmul.f32 %v3441, %v2914
        %v3444 = vsel %vm3044, %v2630, -inf
        %3445 = vmax.xlane.f32.xlu0 %v3444
        %v3446 = vpop.xlane.xlu0 %3445
        %v3447 = vsel %vm3044, %v2631, -inf
        %3448 = vmax.xlane.f32.xlu0 %v3447
        %v3449 = vpop.xlane.xlu0 %3448
        %3450 = vrot.lane.b32.xlu0 %v2630, 72
        %v3451 = vpop.permute.xlu0 %3450
        %3452 = vrot.lane.b32.xlu0 %v2631, 72
        %v3453 = vpop.permute.xlu0 %3452
        %v3456 = vsel %vm2907, %v3451, 0.0
        %3457 = vadd.xlane.f32.xlu0 %v3456
        %v3458 = vpop.xlane.xlu0 %3457
        %v3459 = vsel %vm2907, %v3453, 0.0
        %3460 = vadd.xlane.f32.xlu0 %v3459
        %v3461 = vpop.xlane.xlu0 %3460
        %v3462 = vmul.f32 %v3458, %v2914
        %v3463 = vmul.f32 %v3461, %v2914
        %v3464 = vsel %vm3065, %v2630, -inf
        %3465 = vmax.xlane.f32.xlu0 %v3464
        %v3466 = vpop.xlane.xlu0 %3465
        %v3467 = vsel %vm3065, %v2631, -inf
        %3468 = vmax.xlane.f32.xlu0 %v3467
        %v3469 = vpop.xlane.xlu0 %3468
        %3470 = vrot.lane.b32.xlu0 %v2630, 64
        %v3471 = vpop.permute.xlu0 %3470
        %3472 = vrot.lane.b32.xlu0 %v2631, 64
        %v3473 = vpop.permute.xlu0 %3472
        %v3476 = vsel %vm2907, %v3471, 0.0
        %3477 = vadd.xlane.f32.xlu0 %v3476
        %v3478 = vpop.xlane.xlu0 %3477
        %v3479 = vsel %vm2907, %v3473, 0.0
        %3480 = vadd.xlane.f32.xlu0 %v3479
        %v3481 = vpop.xlane.xlu0 %3480
        %v3482 = vmul.f32 %v3478, %v2914
        %v3483 = vmul.f32 %v3481, %v2914
        %v3484 = vsel %vm3086, %v2630, -inf
        %3485 = vmax.xlane.f32.xlu0 %v3484
        %v3486 = vpop.xlane.xlu0 %3485
        %v3487 = vsel %vm3086, %v2631, -inf
        %3488 = vmax.xlane.f32.xlu0 %v3487
        %v3489 = vpop.xlane.xlu0 %3488
        %3490 = vrot.lane.b32.xlu0 %v2630, 56
        %v3491 = vpop.permute.xlu0 %3490
        %3492 = vrot.lane.b32.xlu0 %v2631, 56
        %v3493 = vpop.permute.xlu0 %3492
        %v3496 = vsel %vm2907, %v3491, 0.0
        %3497 = vadd.xlane.f32.xlu0 %v3496
        %v3498 = vpop.xlane.xlu0 %3497
        %v3499 = vsel %vm2907, %v3493, 0.0
        %3500 = vadd.xlane.f32.xlu0 %v3499
        %v3501 = vpop.xlane.xlu0 %3500
        %v3502 = vmul.f32 %v3498, %v2914
        %v3503 = vmul.f32 %v3501, %v2914
        %v3504 = vsel %vm3107, %v2630, -inf
        %3505 = vmax.xlane.f32.xlu0 %v3504
        %v3506 = vpop.xlane.xlu0 %3505
        %v3507 = vsel %vm3107, %v2631, -inf
        %3508 = vmax.xlane.f32.xlu0 %v3507
        %v3509 = vpop.xlane.xlu0 %3508
        %3510 = vrot.lane.b32.xlu0 %v2630, 48
        %v3511 = vpop.permute.xlu0 %3510
        %3512 = vrot.lane.b32.xlu0 %v2631, 48
        %v3513 = vpop.permute.xlu0 %3512
        %v3516 = vsel %vm2907, %v3511, 0.0
        %3517 = vadd.xlane.f32.xlu0 %v3516
        %v3518 = vpop.xlane.xlu0 %3517
        %v3519 = vsel %vm2907, %v3513, 0.0
        %3520 = vadd.xlane.f32.xlu0 %v3519
        %v3521 = vpop.xlane.xlu0 %3520
        %v3522 = vmul.f32 %v3518, %v2914
        %v3523 = vmul.f32 %v3521, %v2914
        %v3524 = vsel %vm3128, %v2630, -inf
        %3525 = vmax.xlane.f32.xlu0 %v3524
        %v3526 = vpop.xlane.xlu0 %3525
        %v3527 = vsel %vm3128, %v2631, -inf
        %3528 = vmax.xlane.f32.xlu0 %v3527
        %v3529 = vpop.xlane.xlu0 %3528
        %3530 = vrot.lane.b32.xlu0 %v2630, 40
        %v3531 = vpop.permute.xlu0 %3530
        %3532 = vrot.lane.b32.xlu0 %v2631, 40
        %v3533 = vpop.permute.xlu0 %3532
        %v3536 = vsel %vm2907, %v3531, 0.0
        %3537 = vadd.xlane.f32.xlu0 %v3536
        %v3538 = vpop.xlane.xlu0 %3537
        %v3539 = vsel %vm2907, %v3533, 0.0
        %3540 = vadd.xlane.f32.xlu0 %v3539
        %v3541 = vpop.xlane.xlu0 %3540
        %v3542 = vmul.f32 %v3538, %v2914
        %v3543 = vmul.f32 %v3541, %v2914
        %v3544 = vsel %vm3149, %v2630, -inf
        %3545 = vmax.xlane.f32.xlu0 %v3544
        %v3546 = vpop.xlane.xlu0 %3545
        %v3547 = vsel %vm3149, %v2631, -inf
        %3548 = vmax.xlane.f32.xlu0 %v3547
        %v3549 = vpop.xlane.xlu0 %3548
        %3550 = vrot.lane.b32.xlu0 %v2630, 32
        %v3551 = vpop.permute.xlu0 %3550
        %3552 = vrot.lane.b32.xlu0 %v2631, 32
        %v3553 = vpop.permute.xlu0 %3552
        %v3556 = vsel %vm2907, %v3551, 0.0
        %3557 = vadd.xlane.f32.xlu0 %v3556
        %v3558 = vpop.xlane.xlu0 %3557
        %v3559 = vsel %vm2907, %v3553, 0.0
        %3560 = vadd.xlane.f32.xlu0 %v3559
        %v3561 = vpop.xlane.xlu0 %3560
        %v3562 = vmul.f32 %v3558, %v2914
        %v3563 = vmul.f32 %v3561, %v2914
        %v3564 = vsel %vm3170, %v2630, -inf
        %3565 = vmax.xlane.f32.xlu0 %v3564
        %v3566 = vpop.xlane.xlu0 %3565
        %v3567 = vsel %vm3170, %v2631, -inf
        %3568 = vmax.xlane.f32.xlu0 %v3567
        %v3569 = vpop.xlane.xlu0 %3568
        %3570 = vrot.lane.b32.xlu0 %v2630, 24
        %v3571 = vpop.permute.xlu0 %3570
        %3572 = vrot.lane.b32.xlu0 %v2631, 24
        %v3573 = vpop.permute.xlu0 %3572
        %v3576 = vsel %vm2907, %v3571, 0.0
        %3577 = vadd.xlane.f32.xlu0 %v3576
        %v3578 = vpop.xlane.xlu0 %3577
        %v3579 = vsel %vm2907, %v3573, 0.0
        %3580 = vadd.xlane.f32.xlu0 %v3579
        %v3581 = vpop.xlane.xlu0 %3580
        %v3582 = vmul.f32 %v3578, %v2914
        %v3583 = vmul.f32 %v3581, %v2914
        %v3584 = vsel %vm3191, %v2630, -inf
        %3585 = vmax.xlane.f32.xlu0 %v3584
        %v3586 = vpop.xlane.xlu0 %3585
        %v3587 = vsel %vm3191, %v2631, -inf
        %3588 = vmax.xlane.f32.xlu0 %v3587
        %v3589 = vpop.xlane.xlu0 %3588
        %3590 = vrot.lane.b32.xlu0 %v2630, 16
        %v3591 = vpop.permute.xlu0 %3590
        %3592 = vrot.lane.b32.xlu0 %v2631, 16
        %v3593 = vpop.permute.xlu0 %3592
        %v3596 = vsel %vm2907, %v3591, 0.0
        %3597 = vadd.xlane.f32.xlu0 %v3596
        %v3598 = vpop.xlane.xlu0 %3597
        %v3599 = vsel %vm2907, %v3593, 0.0
        %3600 = vadd.xlane.f32.xlu0 %v3599
        %v3601 = vpop.xlane.xlu0 %3600
        %v3602 = vmul.f32 %v3598, %v2914
        %v3603 = vmul.f32 %v3601, %v2914
        %v3604 = vsel %vm3212, %v2630, -inf
        %3605 = vmax.xlane.f32.xlu0 %v3604
        %v3606 = vpop.xlane.xlu0 %3605
        %v3607 = vsel %vm3212, %v2631, -inf
        %3608 = vmax.xlane.f32.xlu0 %v3607
        %v3609 = vpop.xlane.xlu0 %3608
        %3610 = vrot.lane.b32.xlu0 %v2630, 8
        %v3611 = vpop.permute.xlu0 %3610
        %3612 = vrot.lane.b32.xlu0 %v2631, 8
        %v3613 = vpop.permute.xlu0 %3612
        %v3616 = vsel %vm2907, %v3611, 0.0
        %3617 = vadd.xlane.f32.xlu0 %v3616
        %v3618 = vpop.xlane.xlu0 %3617
        %v3619 = vsel %vm2907, %v3613, 0.0
        %3620 = vadd.xlane.f32.xlu0 %v3619
        %v3621 = vpop.xlane.xlu0 %3620
        %v3622 = vmul.f32 %v3618, %v2914
        %v3623 = vmul.f32 %v3621, %v2914
        %v3624 = vsel %vm3233, %v2630, -inf
        %3625 = vmax.xlane.f32.xlu0 %v3624
        %v3626 = vpop.xlane.xlu0 %3625
        %v3627 = vsel %vm3233, %v2631, -inf
        %3628 = vmax.xlane.f32.xlu0 %v3627
        %v3629 = vpop.xlane.xlu0 %3628
        %v3630 = vsel %vm3240, %v3320, %v3342
        %v3631 = vsel %vm3240, %v3321, %v3343
        %v3632 = vsel %vm3243, %v3630, %v3362
        %v3633 = vsel %vm3243, %v3631, %v3363
        %v3634 = vsel %vm3246, %v3632, %v3382
        %v3635 = vsel %vm3246, %v3633, %v3383
        %v3636 = vsel %vm3249, %v3634, %v3402
        %v3637 = vsel %vm3249, %v3635, %v3403
        %v3638 = vsel %vm3252, %v3636, %v3422
        %v3639 = vsel %vm3252, %v3637, %v3423
        %v3640 = vsel %vm3255, %v3638, %v3442
        %v3641 = vsel %vm3255, %v3639, %v3443
        %v3642 = vsel %vm3258, %v3640, %v3462
        %v3643 = vsel %vm3258, %v3641, %v3463
        %v3644 = vsel %vm2907, %v3642, %v3482
        %v3645 = vsel %vm2907, %v3643, %v3483
        %v3646 = vsel %vm3263, %v3644, %v3502
        %v3647 = vsel %vm3263, %v3645, %v3503
        %v3648 = vsel %vm3266, %v3646, %v3522
        %v3649 = vsel %vm3266, %v3647, %v3523
        %v3650 = vsel %vm3269, %v3648, %v3542
        %v3651 = vsel %vm3269, %v3649, %v3543
        %v3652 = vsel %vm3272, %v3650, %v3562
        %v3653 = vsel %vm3272, %v3651, %v3563
        %v3654 = vsel %vm3275, %v3652, %v3582
        %v3655 = vsel %vm3275, %v3653, %v3583
        %v3656 = vsel %vm3278, %v3654, %v3602
        %v3657 = vsel %vm3278, %v3655, %v3603
        %v3658 = vsel %vm3281, %v3656, %v3622
        %v3659 = vsel %vm3281, %v3657, %v3623
        %v3660 = vsel %vm3240, %v3324, %v3346
        %v3661 = vsel %vm3240, %v3327, %v3349
        %v3662 = vsel %vm3243, %v3660, %v3366
        %v3663 = vsel %vm3243, %v3661, %v3369
        %v3664 = vsel %vm3246, %v3662, %v3386
        %v3665 = vsel %vm3246, %v3663, %v3389
        %v3666 = vsel %vm3249, %v3664, %v3406
        %v3667 = vsel %vm3249, %v3665, %v3409
        %v3668 = vsel %vm3252, %v3666, %v3426
        %v3669 = vsel %vm3252, %v3667, %v3429
        %v3670 = vsel %vm3255, %v3668, %v3446
        %v3671 = vsel %vm3255, %v3669, %v3449
        %v3672 = vsel %vm3258, %v3670, %v3466
        %v3673 = vsel %vm3258, %v3671, %v3469
        %v3674 = vsel %vm2907, %v3672, %v3486
        %v3675 = vsel %vm2907, %v3673, %v3489
        %v3676 = vsel %vm3263, %v3674, %v3506
        %v3677 = vsel %vm3263, %v3675, %v3509
        %v3678 = vsel %vm3266, %v3676, %v3526
        %v3679 = vsel %vm3266, %v3677, %v3529
        %v3680 = vsel %vm3269, %v3678, %v3546
        %v3681 = vsel %vm3269, %v3679, %v3549
        %v3682 = vsel %vm3272, %v3680, %v3566
        %v3683 = vsel %vm3272, %v3681, %v3569
        %v3684 = vsel %vm3275, %v3682, %v3586
        %v3685 = vsel %vm3275, %v3683, %v3589
        %v3686 = vsel %vm3278, %v3684, %v3606
        %v3687 = vsel %vm3278, %v3685, %v3609
        %v3688 = vsel %vm3281, %v3686, %v3626
        %v3689 = vsel %vm3281, %v3687, %v3629
        %v3691 = vrot.slane %v2767, 7
        %v3694 = vrot.slane %v2906, 6
        %v3697 = vrot.slane %v2905, 5
        %vm3699 = vcmask 1040384
        %v3700 = vsel %vm3699, %v2769, %v3691
        %v3701 = vsel %vm2297, %v3700, %v3694
        %v3702 = vsel %vm481, %v3701, %v3697
        %3704 = vrot.lane.b32.xlu0 %v3702, 1
        %v3705 = vpop.permute.xlu0 %3704
        %v3707 = vsel %vm3240, 0.0, %v3705
        %v3708 = vsel %vm3263, %v3707, 0.0
        %s3709 = sld [smem:[#allocation4]]
        %v3710 = vstv %s3709
        %s3711 = sld [smem:[#allocation5]]
        %v3712 = vstv %s3711
        %s3713 = sld [smem:[#allocation8]]
        %v3714 = vstv %s3713
        %v3715 = vmul.f32 %v3714, %v3708
        %v3716 = vadd.f32 %v3710, %v3715
        %s3717 = sld [smem:[#allocation10]]
        %v3718 = vstv %s3717
        %v3719 = vmul.f32 %v3718, %v3708
        %v3720 = vadd.f32 %v3712, %v3719
        %s3721 = sld [smem:[#allocation8 + $0x1]]
        %v3722 = vstv %s3721
        %v3723 = vmul.f32 %v3722, %v3708
        %3725 = vrot.lane.b32.xlu0 %v3723, 127
        %v3726 = vpop.permute.xlu0 %3725
        %v3728 = vadd.f32 %v3716, %v3726
        %s3729 = sld [smem:[#allocation10 + $0x1]]
        %v3730 = vstv %s3729
        %v3731 = vmul.f32 %v3730, %v3708
        %3733 = vrot.lane.b32.xlu0 %v3731, 127
        %v3734 = vpop.permute.xlu0 %3733
        %v3736 = vadd.f32 %v3720, %v3734
        %s3737 = sld [smem:[#allocation8 + $0x2]]
        %v3738 = vstv %s3737
        %v3739 = vmul.f32 %v3738, %v3708
        %3741 = vrot.lane.b32.xlu0 %v3739, 126
        %v3742 = vpop.permute.xlu0 %3741
        %v3744 = vadd.f32 %v3728, %v3742
        %s3745 = sld [smem:[#allocation10 + $0x2]]
        %v3746 = vstv %s3745
        %v3747 = vmul.f32 %v3746, %v3708
        %3749 = vrot.lane.b32.xlu0 %v3747, 126
        %v3750 = vpop.permute.xlu0 %3749
        %v3752 = vadd.f32 %v3736, %v3750
        %s3753 = sld [smem:[#allocation8 + $0x80]]
        %v3754 = vstv %s3753
        %v3755 = vmul.f32 %v3754, %v3708
        %v3757 = vrot.slane %v3755, 1
        %v3759 = vadd.f32 %v3744, %v3757
        %s3760 = sld [smem:[#allocation10 + $0x80]]
        %v3761 = vstv %s3760
        %v3762 = vmul.f32 %v3761, %v3708
        %v3764 = vrot.slane %v3762, 1
        %v3766 = vadd.f32 %v3752, %v3764
        %s3767 = sld [smem:[#allocation8 + $0x81]]
        %v3768 = vstv %s3767
        %v3769 = vmul.f32 %v3768, %v3708
        %v3771 = vrot.slane %v3769, 1
        %3772 = vrot.lane.b32.xlu0 %v3771, 127
        %v3773 = vpop.permute.xlu0 %3772
        %v3775 = vadd.f32 %v3759, %v3773
        %s3776 = sld [smem:[#allocation10 + $0x81]]
        %v3777 = vstv %s3776
        %v3778 = vmul.f32 %v3777, %v3708
        %v3780 = vrot.slane %v3778, 1
        %3781 = vrot.lane.b32.xlu0 %v3780, 127
        %v3782 = vpop.permute.xlu0 %3781
        %v3784 = vadd.f32 %v3766, %v3782
        %s3785 = sld [smem:[#allocation8 + $0x82]]
        %v3786 = vstv %s3785
        %v3787 = vmul.f32 %v3786, %v3708
        %v3789 = vrot.slane %v3787, 1
        %3790 = vrot.lane.b32.xlu0 %v3789, 126
        %v3791 = vpop.permute.xlu0 %3790
        %v3793 = vadd.f32 %v3775, %v3791
        %s3794 = sld [smem:[#allocation10 + $0x82]]
        %v3795 = vstv %s3794
        %v3796 = vmul.f32 %v3795, %v3708
        %v3798 = vrot.slane %v3796, 1
        %3799 = vrot.lane.b32.xlu0 %v3798, 126
        %v3800 = vpop.permute.xlu0 %3799
        %v3802 = vadd.f32 %v3784, %v3800
        %s3803 = sld [smem:[#allocation8 + $0x100]]
        %v3804 = vstv %s3803
        %v3805 = vmul.f32 %v3804, %v3708
        %v3807 = vrot.slane %v3805, 2
        %v3809 = vadd.f32 %v3793, %v3807
        %s3810 = sld [smem:[#allocation10 + $0x100]]
        %v3811 = vstv %s3810
        %v3812 = vmul.f32 %v3811, %v3708
        %v3814 = vrot.slane %v3812, 2
        %v3816 = vadd.f32 %v3802, %v3814
        %s3817 = sld [smem:[#allocation8 + $0x101]]
        %v3818 = vstv %s3817
        %v3819 = vmul.f32 %v3818, %v3708
        %v3821 = vrot.slane %v3819, 2
        %3822 = vrot.lane.b32.xlu0 %v3821, 127
        %v3823 = vpop.permute.xlu0 %3822
        %v3825 = vadd.f32 %v3809, %v3823
        %s3826 = sld [smem:[#allocation10 + $0x101]]
        %v3827 = vstv %s3826
        %v3828 = vmul.f32 %v3827, %v3708
        %v3830 = vrot.slane %v3828, 2
        %3831 = vrot.lane.b32.xlu0 %v3830, 127
        %v3832 = vpop.permute.xlu0 %3831
        %v3834 = vadd.f32 %v3816, %v3832
        %s3835 = sld [smem:[#allocation8 + $0x102]]
        %v3836 = vstv %s3835
        %v3837 = vmul.f32 %v3836, %v3708
        %v3839 = vrot.slane %v3837, 2
        %3840 = vrot.lane.b32.xlu0 %v3839, 126
        %v3841 = vpop.permute.xlu0 %3840
        %v3843 = vadd.f32 %v3825, %v3841
        %s3844 = sld [smem:[#allocation10 + $0x102]]
        %v3845 = vstv %s3844
        %v3846 = vmul.f32 %v3845, %v3708
        %v3848 = vrot.slane %v3846, 2
        %3849 = vrot.lane.b32.xlu0 %v3848, 126
        %v3850 = vpop.permute.xlu0 %3849
        %v3852 = vadd.f32 %v3834, %v3850
        %s3853 = sld [smem:[#allocation8 + $0x180]]
        %v3854 = vstv %s3853
        %v3855 = vmul.f32 %v3854, %v3708
        %v3857 = vrot.slane %v3855, 3
        %v3859 = vadd.f32 %v3843, %v3857
        %s3860 = sld [smem:[#allocation10 + $0x180]]
        %v3861 = vstv %s3860
        %v3862 = vmul.f32 %v3861, %v3708
        %v3864 = vrot.slane %v3862, 3
        %v3866 = vadd.f32 %v3852, %v3864
        %s3867 = sld [smem:[#allocation8 + $0x181]]
        %v3868 = vstv %s3867
        %v3869 = vmul.f32 %v3868, %v3708
        %v3871 = vrot.slane %v3869, 3
        %3872 = vrot.lane.b32.xlu0 %v3871, 127
        %v3873 = vpop.permute.xlu0 %3872
        %v3875 = vadd.f32 %v3859, %v3873
        %s3876 = sld [smem:[#allocation10 + $0x181]]
        %v3877 = vstv %s3876
        %v3878 = vmul.f32 %v3877, %v3708
        %v3880 = vrot.slane %v3878, 3
        %3881 = vrot.lane.b32.xlu0 %v3880, 127
        %v3882 = vpop.permute.xlu0 %3881
        %v3884 = vadd.f32 %v3866, %v3882
        %s3885 = sld [smem:[#allocation8 + $0x182]]
        %v3886 = vstv %s3885
        %v3887 = vmul.f32 %v3886, %v3708
        %v3889 = vrot.slane %v3887, 3
        %3890 = vrot.lane.b32.xlu0 %v3889, 126
        %v3891 = vpop.permute.xlu0 %3890
        %v3893 = vadd.f32 %v3875, %v3891
        %s3894 = sld [smem:[#allocation10 + $0x182]]
        %v3895 = vstv %s3894
        %v3896 = vmul.f32 %v3895, %v3708
        %v3898 = vrot.slane %v3896, 3
        %3899 = vrot.lane.b32.xlu0 %v3898, 126
        %v3900 = vpop.permute.xlu0 %3899
        %v3902 = vadd.f32 %v3884, %v3900
        %v3903 = vmax.f32 %v3893, %v3902
        %v3904 = vsub.f32 %v3893, %v3903
        %v3905 = vmul.f32 %v3904, 1.442695
        %v3906 = vpow.pop %v3905
        %v3907 = vsub.f32 %v3902, %v3903
        %v3908 = vmul.f32 %v3907, 1.442695
        %v3909 = vpow.pop %v3908
        %v3910 = vadd.f32 %v3906, %v3909
        %v3911 = vrcp.pop %v3910
        %v3912 = vmul.f32 %v3906, %v3911
        %v3913 = vmul.f32 %v3909, %v3911
        %vm3914 = vcmask 769024
        %3915 = vst.msk [vmem:[#allocation3] sm:$0xff] %vm3914, 0.0
        %3916 = vst.msk [vmem:[#allocation3 + $0x8] sm:$0xff] %vm3914, 0.0
        %vm3917 = vcmask 766976
        %3918 = vst.msk [vmem:[#allocation3 + $0x10] sm:$0x3f] %vm3917, 0.0
        %3921 = vrot.lane.b32.xlu0 %v3282, 3
        %v3922 = vpop.permute.xlu0 %3921
        %3923 = vrot.lane.b32.xlu0 %v3283, 3
        %v3924 = vpop.permute.xlu0 %3923
        %vm3927 = vcmask 154648
        %3928 = vst.msk [vmem:[#allocation3 + $0x3] sm:$0xff] %vm3927, %v3922
        %3929 = vst.msk [vmem:[#allocation3 + $0xb] sm:$0xff] %vm3927, %v3924
        %3932 = vrot.lane.b32.xlu0 %v3312, 25
        %v3933 = vpop.permute.xlu0 %3932
        %3934 = vrot.lane.b32.xlu0 %v3313, 25
        %v3935 = vpop.permute.xlu0 %3934
        %vm3938 = vcmask 335048
        %3939 = vst.msk [vmem:[#allocation3 + $0x3] sm:$0xff] %vm3938, %v3933
        %3940 = vst.msk [vmem:[#allocation3 + $0xb] sm:$0xff] %vm3938, %v3935
        %3943 = vrot.lane.b32.xlu0 %v3658, 47
        %v3944 = vpop.permute.xlu0 %3943
        %3945 = vrot.lane.b32.xlu0 %v3659, 47
        %v3946 = vpop.permute.xlu0 %3945
        %vm3949 = vcmask 515448
        %3950 = vst.msk [vmem:[#allocation3 + $0x3] sm:$0xff] %vm3949, %v3944
        %3951 = vst.msk [vmem:[#allocation3 + $0xb] sm:$0xff] %vm3949, %v3946
        %3954 = vrot.lane.b32.xlu0 %v3688, 69
        %v3955 = vpop.permute.xlu0 %3954
        %3956 = vrot.lane.b32.xlu0 %v3689, 69
        %v3957 = vpop.permute.xlu0 %3956
        %vm3960 = vcmask 695848
        %3961 = vst.msk [vmem:[#allocation3 + $0x3] sm:$0xff] %vm3960, %v3955
        %3962 = vst.msk [vmem:[#allocation3 + $0xb] sm:$0xff] %vm3960, %v3957
        %v3963 = vld [vmem:[#allocation3] sm:$0xff]
        %v3964 = vld [vmem:[#allocation3 + $0x8] sm:$0xff]
        %v3965 = vld [vmem:[%s3] sm:$0x1]
        %v3966 = vlaneseq
        %v3967 = vshrl.u32 %v3966, 7
        %v3968 = vsub.s32 0, %v3967
        %v3969 = vrot.slane %v3965, %v3968
        %v3970 = vmul.f32 %v3969, %v3963
        %v3971 = vmul.f32 %v3969, %v3964
        %v3972 = vadd.f32 %v3970, 0.0
        %v3973 = vadd.f32 %v3971, 0.0
        %v3974 = vld [vmem:[%s4] sm:$0x1]
        %v3975 = vlaneseq
        %v3976 = vshrl.u32 %v3975, 7
        %v3977 = vsub.s32 0, %v3976
        %v3978 = vrot.slane %v3974, %v3977
        %v3979 = vmul.f32 %v3978, %v3963
        %v3980 = vmul.f32 %v3978, %v3964
        %v3981 = vadd.f32 %v3979, 0.0
        %v3982 = vadd.f32 %v3980, 0.0
        %v3983 = vld [vmem:[%s3 + $0x1] sm:$0x1]
        %v3984 = vlaneseq
        %v3985 = vshrl.u32 %v3984, 7
        %v3986 = vsub.s32 0, %v3985
        %v3987 = vrot.slane %v3983, %v3986
        %3990 = vrot.lane.b32.xlu0 %v3963, 127
        %v3991 = vpop.permute.xlu0 %3990
        %3992 = vrot.lane.b32.xlu0 %v3964, 127
        %v3993 = vpop.permute.xlu0 %3992
        %v3996 = vmul.f32 %v3987, %v3991
        %v3997 = vmul.f32 %v3987, %v3993
        %v3998 = vadd.f32 %v3972, %v3996
        %v3999 = vadd.f32 %v3973, %v3997
        %v4000 = vld [vmem:[%s4 + $0x1] sm:$0x1]
        %v4001 = vlaneseq
        %v4002 = vshrl.u32 %v4001, 7
        %v4003 = vsub.s32 0, %v4002
        %v4004 = vrot.slane %v4000, %v4003
        %v4005 = vmul.f32 %v4004, %v3991
        %v4006 = vmul.f32 %v4004, %v3993
        %v4007 = vadd.f32 %v3981, %v4005
        %v4008 = vadd.f32 %v3982, %v4006
        %v4009 = vld [vmem:[%s3 + $0x2] sm:$0x1]
        %v4010 = vlaneseq
        %v4011 = vshrl.u32 %v4010, 7
        %v4012 = vsub.s32 0, %v4011
        %v4013 = vrot.slane %v4009, %v4012
        %4014 = vrot.lane.b32.xlu0 %v3963, 126
        %v4015 = vpop.permute.xlu0 %4014
        %4016 = vrot.lane.b32.xlu0 %v3964, 126
        %v4017 = vpop.permute.xlu0 %4016
        %v4020 = vmul.f32 %v4013, %v4015
        %v4021 = vmul.f32 %v4013, %v4017
        %v4022 = vadd.f32 %v3998, %v4020
        %v4023 = vadd.f32 %v3999, %v4021
        %v4024 = vld [vmem:[%s4 + $0x2] sm:$0x1]
        %v4025 = vlaneseq
        %v4026 = vshrl.u32 %v4025, 7
        %v4027 = vsub.s32 0, %v4026
        %v4028 = vrot.slane %v4024, %v4027
        %v4029 = vmul.f32 %v4028, %v4015
        %v4030 = vmul.f32 %v4028, %v4017
        %v4031 = vadd.f32 %v4007, %v4029
        %v4032 = vadd.f32 %v4008, %v4030
        %v4033 = vld [vmem:[%s3 + $0x3] sm:$0x1]
        %v4034 = vlaneseq
        %v4035 = vshrl.u32 %v4034, 7
        %v4036 = vsub.s32 0, %v4035
        %v4037 = vrot.slane %v4033, %v4036
        %4038 = vrot.lane.b32.xlu0 %v3963, 125
        %v4039 = vpop.permute.xlu0 %4038
        %4040 = vrot.lane.b32.xlu0 %v3964, 125
        %v4041 = vpop.permute.xlu0 %4040
        %v4044 = vmul.f32 %v4037, %v4039
        %v4045 = vmul.f32 %v4037, %v4041
        %v4046 = vadd.f32 %v4022, %v4044
        %v4047 = vadd.f32 %v4023, %v4045
        %v4048 = vld [vmem:[%s4 + $0x3] sm:$0x1]
        %v4049 = vlaneseq
        %v4050 = vshrl.u32 %v4049, 7
        %v4051 = vsub.s32 0, %v4050
        %v4052 = vrot.slane %v4048, %v4051
        %v4053 = vmul.f32 %v4052, %v4039
        %v4054 = vmul.f32 %v4052, %v4041
        %v4055 = vadd.f32 %v4031, %v4053
        %v4056 = vadd.f32 %v4032, %v4054
        %v4057 = vld [vmem:[%s3 + $0x4] sm:$0x1]
        %v4058 = vlaneseq
        %v4059 = vshrl.u32 %v4058, 7
        %v4060 = vsub.s32 0, %v4059
        %v4061 = vrot.slane %v4057, %v4060
        %4062 = vrot.lane.b32.xlu0 %v3963, 124
        %v4063 = vpop.permute.xlu0 %4062
        %4064 = vrot.lane.b32.xlu0 %v3964, 124
        %v4065 = vpop.permute.xlu0 %4064
        %v4068 = vmul.f32 %v4061, %v4063
        %v4069 = vmul.f32 %v4061, %v4065
        %v4070 = vadd.f32 %v4046, %v4068
        %v4071 = vadd.f32 %v4047, %v4069
        %v4072 = vld [vmem:[%s4 + $0x4] sm:$0x1]
        %v4073 = vlaneseq
        %v4074 = vshrl.u32 %v4073, 7
        %v4075 = vsub.s32 0, %v4074
        %v4076 = vrot.slane %v4072, %v4075
        %v4077 = vmul.f32 %v4076, %v4063
        %v4078 = vmul.f32 %v4076, %v4065
        %v4079 = vadd.f32 %v4055, %v4077
        %v4080 = vadd.f32 %v4056, %v4078
        %v4081 = vld [vmem:[%s3 + $0x5] sm:$0x1]
        %v4082 = vlaneseq
        %v4083 = vshrl.u32 %v4082, 7
        %v4084 = vsub.s32 0, %v4083
        %v4085 = vrot.slane %v4081, %v4084
        %4086 = vrot.lane.b32.xlu0 %v3963, 123
        %v4087 = vpop.permute.xlu0 %4086
        %4088 = vrot.lane.b32.xlu0 %v3964, 123
        %v4089 = vpop.permute.xlu0 %4088
        %v4092 = vmul.f32 %v4085, %v4087
        %v4093 = vmul.f32 %v4085, %v4089
        %v4094 = vadd.f32 %v4070, %v4092
        %v4095 = vadd.f32 %v4071, %v4093
        %v4096 = vld [vmem:[%s4 + $0x5] sm:$0x1]
        %v4097 = vlaneseq
        %v4098 = vshrl.u32 %v4097, 7
        %v4099 = vsub.s32 0, %v4098
        %v4100 = vrot.slane %v4096, %v4099
        %v4101 = vmul.f32 %v4100, %v4087
        %v4102 = vmul.f32 %v4100, %v4089
        %v4103 = vadd.f32 %v4079, %v4101
        %v4104 = vadd.f32 %v4080, %v4102
        %v4105 = vld [vmem:[%s3 + $0x6] sm:$0x1]
        %v4106 = vlaneseq
        %v4107 = vshrl.u32 %v4106, 7
        %v4108 = vsub.s32 0, %v4107
        %v4109 = vrot.slane %v4105, %v4108
        %4110 = vrot.lane.b32.xlu0 %v3963, 122
        %v4111 = vpop.permute.xlu0 %4110
        %4112 = vrot.lane.b32.xlu0 %v3964, 122
        %v4113 = vpop.permute.xlu0 %4112
        %v4116 = vmul.f32 %v4109, %v4111
        %v4117 = vmul.f32 %v4109, %v4113
        %v4118 = vadd.f32 %v4094, %v4116
        %v4119 = vadd.f32 %v4095, %v4117
        %v4120 = vld [vmem:[%s4 + $0x6] sm:$0x1]
        %v4121 = vlaneseq
        %v4122 = vshrl.u32 %v4121, 7
        %v4123 = vsub.s32 0, %v4122
        %v4124 = vrot.slane %v4120, %v4123
        %v4125 = vmul.f32 %v4124, %v4111
        %v4126 = vmul.f32 %v4124, %v4113
        %v4127 = vadd.f32 %v4103, %v4125
        %v4128 = vadd.f32 %v4104, %v4126
        %v4129 = vld [vmem:[#allocation3 + $0x1] sm:$0xff]
        %v4130 = vld [vmem:[#allocation3 + $0x9] sm:$0xff]
        %v4131 = vld [vmem:[%s3 + $0x7] sm:$0x1]
        %v4132 = vlaneseq
        %v4133 = vshrl.u32 %v4132, 7
        %v4134 = vsub.s32 0, %v4133
        %v4135 = vrot.slane %v4131, %v4134
        %v4136 = vmul.f32 %v4135, %v4129
        %v4137 = vmul.f32 %v4135, %v4130
        %v4138 = vadd.f32 %v4118, %v4136
        %v4139 = vadd.f32 %v4119, %v4137
        %v4140 = vld [vmem:[%s4 + $0x7] sm:$0x1]
        %v4141 = vlaneseq
        %v4142 = vshrl.u32 %v4141, 7
        %v4143 = vsub.s32 0, %v4142
        %v4144 = vrot.slane %v4140, %v4143
        %v4145 = vmul.f32 %v4144, %v4129
        %v4146 = vmul.f32 %v4144, %v4130
        %v4147 = vadd.f32 %v4127, %v4145
        %v4148 = vadd.f32 %v4128, %v4146
        %v4149 = vld [vmem:[%s3 + $0x8] sm:$0x1]
        %v4150 = vlaneseq
        %v4151 = vshrl.u32 %v4150, 7
        %v4152 = vsub.s32 0, %v4151
        %v4153 = vrot.slane %v4149, %v4152
        %4156 = vrot.lane.b32.xlu0 %v4129, 127
        %v4157 = vpop.permute.xlu0 %4156
        %4158 = vrot.lane.b32.xlu0 %v4130, 127
        %v4159 = vpop.permute.xlu0 %4158
        %v4162 = vmul.f32 %v4153, %v4157
        %v4163 = vmul.f32 %v4153, %v4159
        %v4164 = vadd.f32 %v4138, %v4162
        %v4165 = vadd.f32 %v4139, %v4163
        %v4166 = vld [vmem:[%s4 + $0x8] sm:$0x1]
        %v4167 = vlaneseq
        %v4168 = vshrl.u32 %v4167, 7
        %v4169 = vsub.s32 0, %v4168
        %v4170 = vrot.slane %v4166, %v4169
        %v4171 = vmul.f32 %v4170, %v4157
        %v4172 = vmul.f32 %v4170, %v4159
        %v4173 = vadd.f32 %v4147, %v4171
        %v4174 = vadd.f32 %v4148, %v4172
        %v4175 = vld [vmem:[%s3 + $0x9] sm:$0x1]
        %v4176 = vlaneseq
        %v4177 = vshrl.u32 %v4176, 7
        %v4178 = vsub.s32 0, %v4177
        %v4179 = vrot.slane %v4175, %v4178
        %4180 = vrot.lane.b32.xlu0 %v4129, 126
        %v4181 = vpop.permute.xlu0 %4180
        %4182 = vrot.lane.b32.xlu0 %v4130, 126
        %v4183 = vpop.permute.xlu0 %4182
        %v4186 = vmul.f32 %v4179, %v4181
        %v4187 = vmul.f32 %v4179, %v4183
        %v4188 = vadd.f32 %v4164, %v4186
        %v4189 = vadd.f32 %v4165, %v4187
        %v4190 = vld [vmem:[%s4 + $0x9] sm:$0x1]
        %v4191 = vlaneseq
        %v4192 = vshrl.u32 %v4191, 7
        %v4193 = vsub.s32 0, %v4192
        %v4194 = vrot.slane %v4190, %v4193
        %v4195 = vmul.f32 %v4194, %v4181
        %v4196 = vmul.f32 %v4194, %v4183
        %v4197 = vadd.f32 %v4173, %v4195
        %v4198 = vadd.f32 %v4174, %v4196
        %v4199 = vld [vmem:[%s3 + $0xa] sm:$0x1]
        %v4200 = vlaneseq
        %v4201 = vshrl.u32 %v4200, 7
        %v4202 = vsub.s32 0, %v4201
        %v4203 = vrot.slane %v4199, %v4202
        %4204 = vrot.lane.b32.xlu0 %v4129, 125
        %v4205 = vpop.permute.xlu0 %4204
        %4206 = vrot.lane.b32.xlu0 %v4130, 125
        %v4207 = vpop.permute.xlu0 %4206
        %v4210 = vmul.f32 %v4203, %v4205
        %v4211 = vmul.f32 %v4203, %v4207
        %v4212 = vadd.f32 %v4188, %v4210
        %v4213 = vadd.f32 %v4189, %v4211
        %v4214 = vld [vmem:[%s4 + $0xa] sm:$0x1]
        %v4215 = vlaneseq
        %v4216 = vshrl.u32 %v4215, 7
        %v4217 = vsub.s32 0, %v4216
        %v4218 = vrot.slane %v4214, %v4217
        %v4219 = vmul.f32 %v4218, %v4205
        %v4220 = vmul.f32 %v4218, %v4207
        %v4221 = vadd.f32 %v4197, %v4219
        %v4222 = vadd.f32 %v4198, %v4220
        %v4223 = vld [vmem:[%s3 + $0xb] sm:$0x1]
        %v4224 = vlaneseq
        %v4225 = vshrl.u32 %v4224, 7
        %v4226 = vsub.s32 0, %v4225
        %v4227 = vrot.slane %v4223, %v4226
        %4228 = vrot.lane.b32.xlu0 %v4129, 124
        %v4229 = vpop.permute.xlu0 %4228
        %4230 = vrot.lane.b32.xlu0 %v4130, 124
        %v4231 = vpop.permute.xlu0 %4230
        %v4234 = vmul.f32 %v4227, %v4229
        %v4235 = vmul.f32 %v4227, %v4231
        %v4236 = vadd.f32 %v4212, %v4234
        %v4237 = vadd.f32 %v4213, %v4235
        %v4238 = vld [vmem:[%s4 + $0xb] sm:$0x1]
        %v4239 = vlaneseq
        %v4240 = vshrl.u32 %v4239, 7
        %v4241 = vsub.s32 0, %v4240
        %v4242 = vrot.slane %v4238, %v4241
        %v4243 = vmul.f32 %v4242, %v4229
        %v4244 = vmul.f32 %v4242, %v4231
        %v4245 = vadd.f32 %v4221, %v4243
        %v4246 = vadd.f32 %v4222, %v4244
        %v4247 = vld [vmem:[%s3 + $0xc] sm:$0x1]
        %v4248 = vlaneseq
        %v4249 = vshrl.u32 %v4248, 7
        %v4250 = vsub.s32 0, %v4249
        %v4251 = vrot.slane %v4247, %v4250
        %4252 = vrot.lane.b32.xlu0 %v4129, 123
        %v4253 = vpop.permute.xlu0 %4252
        %4254 = vrot.lane.b32.xlu0 %v4130, 123
        %v4255 = vpop.permute.xlu0 %4254
        %v4258 = vmul.f32 %v4251, %v4253
        %v4259 = vmul.f32 %v4251, %v4255
        %v4260 = vadd.f32 %v4236, %v4258
        %v4261 = vadd.f32 %v4237, %v4259
        %v4262 = vld [vmem:[%s4 + $0xc] sm:$0x1]
        %v4263 = vlaneseq
        %v4264 = vshrl.u32 %v4263, 7
        %v4265 = vsub.s32 0, %v4264
        %v4266 = vrot.slane %v4262, %v4265
        %v4267 = vmul.f32 %v4266, %v4253
        %v4268 = vmul.f32 %v4266, %v4255
        %v4269 = vadd.f32 %v4245, %v4267
        %v4270 = vadd.f32 %v4246, %v4268
        %v4271 = vld [vmem:[%s3 + $0xd] sm:$0x1]
        %v4272 = vlaneseq
        %v4273 = vshrl.u32 %v4272, 7
        %v4274 = vsub.s32 0, %v4273
        %v4275 = vrot.slane %v4271, %v4274
        %4276 = vrot.lane.b32.xlu0 %v4129, 122
        %v4277 = vpop.permute.xlu0 %4276
        %4278 = vrot.lane.b32.xlu0 %v4130, 122
        %v4279 = vpop.permute.xlu0 %4278
        %v4282 = vmul.f32 %v4275, %v4277
        %v4283 = vmul.f32 %v4275, %v4279
        %v4284 = vadd.f32 %v4260, %v4282
        %v4285 = vadd.f32 %v4261, %v4283
        %v4286 = vld [vmem:[%s4 + $0xd] sm:$0x1]
        %v4287 = vlaneseq
        %v4288 = vshrl.u32 %v4287, 7
        %v4289 = vsub.s32 0, %v4288
        %v4290 = vrot.slane %v4286, %v4289
        %v4291 = vmul.f32 %v4290, %v4277
        %v4292 = vmul.f32 %v4290, %v4279
        %v4293 = vadd.f32 %v4269, %v4291
        %v4294 = vadd.f32 %v4270, %v4292
        %v4295 = vld [vmem:[#allocation3 + $0x2] sm:$0xff]
        %v4296 = vld [vmem:[#allocation3 + $0xa] sm:$0xff]
        %v4297 = vld [vmem:[%s3 + $0xe] sm:$0x1]
        %v4298 = vlaneseq
        %v4299 = vshrl.u32 %v4298, 7
        %v4300 = vsub.s32 0, %v4299
        %v4301 = vrot.slane %v4297, %v4300
        %v4302 = vmul.f32 %v4301, %v4295
        %v4303 = vmul.f32 %v4301, %v4296
        %v4304 = vadd.f32 %v4284, %v4302
        %v4305 = vadd.f32 %v4285, %v4303
        %v4306 = vld [vmem:[%s4 + $0xe] sm:$0x1]
        %v4307 = vlaneseq
        %v4308 = vshrl.u32 %v4307, 7
        %v4309 = vsub.s32 0, %v4308
        %v4310 = vrot.slane %v4306, %v4309
        %v4311 = vmul.f32 %v4310, %v4295
        %v4312 = vmul.f32 %v4310, %v4296
        %v4313 = vadd.f32 %v4293, %v4311
        %v4314 = vadd.f32 %v4294, %v4312
        %v4315 = vld [vmem:[%s3 + $0xf] sm:$0x1]
        %v4316 = vlaneseq
        %v4317 = vshrl.u32 %v4316, 7
        %v4318 = vsub.s32 0, %v4317
        %v4319 = vrot.slane %v4315, %v4318
        %4322 = vrot.lane.b32.xlu0 %v4295, 127
        %v4323 = vpop.permute.xlu0 %4322
        %4324 = vrot.lane.b32.xlu0 %v4296, 127
        %v4325 = vpop.permute.xlu0 %4324
        %v4328 = vmul.f32 %v4319, %v4323
        %v4329 = vmul.f32 %v4319, %v4325
        %v4330 = vadd.f32 %v4304, %v4328
        %v4331 = vadd.f32 %v4305, %v4329
        %v4332 = vld [vmem:[%s4 + $0xf] sm:$0x1]
        %v4333 = vlaneseq
        %v4334 = vshrl.u32 %v4333, 7
        %v4335 = vsub.s32 0, %v4334
        %v4336 = vrot.slane %v4332, %v4335
        %v4337 = vmul.f32 %v4336, %v4323
        %v4338 = vmul.f32 %v4336, %v4325
        %v4339 = vadd.f32 %v4313, %v4337
        %v4340 = vadd.f32 %v4314, %v4338
        %v4341 = vld [vmem:[%s3 + $0x10] sm:$0x1]
        %v4342 = vlaneseq
        %v4343 = vshrl.u32 %v4342, 7
        %v4344 = vsub.s32 0, %v4343
        %v4345 = vrot.slane %v4341, %v4344
        %4346 = vrot.lane.b32.xlu0 %v4295, 126
        %v4347 = vpop.permute.xlu0 %4346
        %4348 = vrot.lane.b32.xlu0 %v4296, 126
        %v4349 = vpop.permute.xlu0 %4348
        %v4352 = vmul.f32 %v4345, %v4347
        %v4353 = vmul.f32 %v4345, %v4349
        %v4354 = vadd.f32 %v4330, %v4352
        %v4355 = vadd.f32 %v4331, %v4353
        %v4356 = vld [vmem:[%s4 + $0x10] sm:$0x1]
        %v4357 = vlaneseq
        %v4358 = vshrl.u32 %v4357, 7
        %v4359 = vsub.s32 0, %v4358
        %v4360 = vrot.slane %v4356, %v4359
        %v4361 = vmul.f32 %v4360, %v4347
        %v4362 = vmul.f32 %v4360, %v4349
        %v4363 = vadd.f32 %v4339, %v4361
        %v4364 = vadd.f32 %v4340, %v4362
        %v4365 = vld [vmem:[%s3 + $0x11] sm:$0x1]
        %v4366 = vlaneseq
        %v4367 = vshrl.u32 %v4366, 7
        %v4368 = vsub.s32 0, %v4367
        %v4369 = vrot.slane %v4365, %v4368
        %4370 = vrot.lane.b32.xlu0 %v4295, 125
        %v4371 = vpop.permute.xlu0 %4370
        %4372 = vrot.lane.b32.xlu0 %v4296, 125
        %v4373 = vpop.permute.xlu0 %4372
        %v4376 = vmul.f32 %v4369, %v4371
        %v4377 = vmul.f32 %v4369, %v4373
        %v4378 = vadd.f32 %v4354, %v4376
        %v4379 = vadd.f32 %v4355, %v4377
        %v4380 = vld [vmem:[%s4 + $0x11] sm:$0x1]
        %v4381 = vlaneseq
        %v4382 = vshrl.u32 %v4381, 7
        %v4383 = vsub.s32 0, %v4382
        %v4384 = vrot.slane %v4380, %v4383
        %v4385 = vmul.f32 %v4384, %v4371
        %v4386 = vmul.f32 %v4384, %v4373
        %v4387 = vadd.f32 %v4363, %v4385
        %v4388 = vadd.f32 %v4364, %v4386
        %v4389 = vld [vmem:[%s3 + $0x12] sm:$0x1]
        %v4390 = vlaneseq
        %v4391 = vshrl.u32 %v4390, 7
        %v4392 = vsub.s32 0, %v4391
        %v4393 = vrot.slane %v4389, %v4392
        %4394 = vrot.lane.b32.xlu0 %v4295, 124
        %v4395 = vpop.permute.xlu0 %4394
        %4396 = vrot.lane.b32.xlu0 %v4296, 124
        %v4397 = vpop.permute.xlu0 %4396
        %v4400 = vmul.f32 %v4393, %v4395
        %v4401 = vmul.f32 %v4393, %v4397
        %v4402 = vadd.f32 %v4378, %v4400
        %v4403 = vadd.f32 %v4379, %v4401
        %v4404 = vld [vmem:[%s4 + $0x12] sm:$0x1]
        %v4405 = vlaneseq
        %v4406 = vshrl.u32 %v4405, 7
        %v4407 = vsub.s32 0, %v4406
        %v4408 = vrot.slane %v4404, %v4407
        %v4409 = vmul.f32 %v4408, %v4395
        %v4410 = vmul.f32 %v4408, %v4397
        %v4411 = vadd.f32 %v4387, %v4409
        %v4412 = vadd.f32 %v4388, %v4410
        %v4413 = vld [vmem:[%s3 + $0x13] sm:$0x1]
        %v4414 = vlaneseq
        %v4415 = vshrl.u32 %v4414, 7
        %v4416 = vsub.s32 0, %v4415
        %v4417 = vrot.slane %v4413, %v4416
        %4418 = vrot.lane.b32.xlu0 %v4295, 123
        %v4419 = vpop.permute.xlu0 %4418
        %4420 = vrot.lane.b32.xlu0 %v4296, 123
        %v4421 = vpop.permute.xlu0 %4420
        %v4424 = vmul.f32 %v4417, %v4419
        %v4425 = vmul.f32 %v4417, %v4421
        %v4426 = vadd.f32 %v4402, %v4424
        %v4427 = vadd.f32 %v4403, %v4425
        %v4428 = vld [vmem:[%s4 + $0x13] sm:$0x1]
        %v4429 = vlaneseq
        %v4430 = vshrl.u32 %v4429, 7
        %v4431 = vsub.s32 0, %v4430
        %v4432 = vrot.slane %v4428, %v4431
        %v4433 = vmul.f32 %v4432, %v4419
        %v4434 = vmul.f32 %v4432, %v4421
        %v4435 = vadd.f32 %v4411, %v4433
        %v4436 = vadd.f32 %v4412, %v4434
        %v4437 = vld [vmem:[%s3 + $0x14] sm:$0x1]
        %v4438 = vlaneseq
        %v4439 = vshrl.u32 %v4438, 7
        %v4440 = vsub.s32 0, %v4439
        %v4441 = vrot.slane %v4437, %v4440
        %4442 = vrot.lane.b32.xlu0 %v4295, 122
        %v4443 = vpop.permute.xlu0 %4442
        %4444 = vrot.lane.b32.xlu0 %v4296, 122
        %v4445 = vpop.permute.xlu0 %4444
        %v4448 = vmul.f32 %v4441, %v4443
        %v4449 = vmul.f32 %v4441, %v4445
        %v4450 = vadd.f32 %v4426, %v4448
        %v4451 = vadd.f32 %v4427, %v4449
        %v4452 = vld [vmem:[%s4 + $0x14] sm:$0x1]
        %v4453 = vlaneseq
        %v4454 = vshrl.u32 %v4453, 7
        %v4455 = vsub.s32 0, %v4454
        %v4456 = vrot.slane %v4452, %v4455
        %v4457 = vmul.f32 %v4456, %v4443
        %v4458 = vmul.f32 %v4456, %v4445
        %v4459 = vadd.f32 %v4435, %v4457
        %v4460 = vadd.f32 %v4436, %v4458
        %v4461 = vld [vmem:[#allocation3 + $0x3] sm:$0xff]
        %v4462 = vld [vmem:[#allocation3 + $0xb] sm:$0xff]
        %v4463 = vld [vmem:[%s3 + $0x15] sm:$0x1]
        %v4464 = vlaneseq
        %v4465 = vshrl.u32 %v4464, 7
        %v4466 = vsub.s32 0, %v4465
        %v4467 = vrot.slane %v4463, %v4466
        %v4468 = vmul.f32 %v4467, %v4461
        %v4469 = vmul.f32 %v4467, %v4462
        %v4470 = vadd.f32 %v4450, %v4468
        %v4471 = vadd.f32 %v4451, %v4469
        %v4472 = vld [vmem:[%s4 + $0x15] sm:$0x1]
        %v4473 = vlaneseq
        %v4474 = vshrl.u32 %v4473, 7
        %v4475 = vsub.s32 0, %v4474
        %v4476 = vrot.slane %v4472, %v4475
        %v4477 = vmul.f32 %v4476, %v4461
        %v4478 = vmul.f32 %v4476, %v4462
        %v4479 = vadd.f32 %v4459, %v4477
        %v4480 = vadd.f32 %v4460, %v4478
        %v4481 = vld [vmem:[%s3 + $0x16] sm:$0x1]
        %v4482 = vlaneseq
        %v4483 = vshrl.u32 %v4482, 7
        %v4484 = vsub.s32 0, %v4483
        %v4485 = vrot.slane %v4481, %v4484
        %4488 = vrot.lane.b32.xlu0 %v4461, 127
        %v4489 = vpop.permute.xlu0 %4488
        %4490 = vrot.lane.b32.xlu0 %v4462, 127
        %v4491 = vpop.permute.xlu0 %4490
        %v4494 = vmul.f32 %v4485, %v4489
        %v4495 = vmul.f32 %v4485, %v4491
        %v4496 = vadd.f32 %v4470, %v4494
        %v4497 = vadd.f32 %v4471, %v4495
        %v4498 = vld [vmem:[%s4 + $0x16] sm:$0x1]
        %v4499 = vlaneseq
        %v4500 = vshrl.u32 %v4499, 7
        %v4501 = vsub.s32 0, %v4500
        %v4502 = vrot.slane %v4498, %v4501
        %v4503 = vmul.f32 %v4502, %v4489
        %v4504 = vmul.f32 %v4502, %v4491
        %v4505 = vadd.f32 %v4479, %v4503
        %v4506 = vadd.f32 %v4480, %v4504
        %v4507 = vld [vmem:[%s3 + $0x17] sm:$0x1]
        %v4508 = vlaneseq
        %v4509 = vshrl.u32 %v4508, 7
        %v4510 = vsub.s32 0, %v4509
        %v4511 = vrot.slane %v4507, %v4510
        %4512 = vrot.lane.b32.xlu0 %v4461, 126
        %v4513 = vpop.permute.xlu0 %4512
        %4514 = vrot.lane.b32.xlu0 %v4462, 126
        %v4515 = vpop.permute.xlu0 %4514
        %v4518 = vmul.f32 %v4511, %v4513
        %v4519 = vmul.f32 %v4511, %v4515
        %v4520 = vadd.f32 %v4496, %v4518
        %v4521 = vadd.f32 %v4497, %v4519
        %v4522 = vld [vmem:[%s4 + $0x17] sm:$0x1]
        %v4523 = vlaneseq
        %v4524 = vshrl.u32 %v4523, 7
        %v4525 = vsub.s32 0, %v4524
        %v4526 = vrot.slane %v4522, %v4525
        %v4527 = vmul.f32 %v4526, %v4513
        %v4528 = vmul.f32 %v4526, %v4515
        %v4529 = vadd.f32 %v4505, %v4527
        %v4530 = vadd.f32 %v4506, %v4528
        %v4531 = vld [vmem:[%s3 + $0x18] sm:$0x1]
        %v4532 = vlaneseq
        %v4533 = vshrl.u32 %v4532, 7
        %v4534 = vsub.s32 0, %v4533
        %v4535 = vrot.slane %v4531, %v4534
        %4536 = vrot.lane.b32.xlu0 %v4461, 125
        %v4537 = vpop.permute.xlu0 %4536
        %4538 = vrot.lane.b32.xlu0 %v4462, 125
        %v4539 = vpop.permute.xlu0 %4538
        %v4542 = vmul.f32 %v4535, %v4537
        %v4543 = vmul.f32 %v4535, %v4539
        %v4544 = vadd.f32 %v4520, %v4542
        %v4545 = vadd.f32 %v4521, %v4543
        %v4546 = vld [vmem:[%s4 + $0x18] sm:$0x1]
        %v4547 = vlaneseq
        %v4548 = vshrl.u32 %v4547, 7
        %v4549 = vsub.s32 0, %v4548
        %v4550 = vrot.slane %v4546, %v4549
        %v4551 = vmul.f32 %v4550, %v4537
        %v4552 = vmul.f32 %v4550, %v4539
        %v4553 = vadd.f32 %v4529, %v4551
        %v4554 = vadd.f32 %v4530, %v4552
        %v4555 = vld [vmem:[%s3 + $0x19] sm:$0x1]
        %v4556 = vlaneseq
        %v4557 = vshrl.u32 %v4556, 7
        %v4558 = vsub.s32 0, %v4557
        %v4559 = vrot.slane %v4555, %v4558
        %4560 = vrot.lane.b32.xlu0 %v4461, 124
        %v4561 = vpop.permute.xlu0 %4560
        %4562 = vrot.lane.b32.xlu0 %v4462, 124
        %v4563 = vpop.permute.xlu0 %4562
        %v4566 = vmul.f32 %v4559, %v4561
        %v4567 = vmul.f32 %v4559, %v4563
        %v4568 = vadd.f32 %v4544, %v4566
        %v4569 = vadd.f32 %v4545, %v4567
        %v4570 = vld [vmem:[%s4 + $0x19] sm:$0x1]
        %v4571 = vlaneseq
        %v4572 = vshrl.u32 %v4571, 7
        %v4573 = vsub.s32 0, %v4572
        %v4574 = vrot.slane %v4570, %v4573
        %v4575 = vmul.f32 %v4574, %v4561
        %v4576 = vmul.f32 %v4574, %v4563
        %v4577 = vadd.f32 %v4553, %v4575
        %v4578 = vadd.f32 %v4554, %v4576
        %v4579 = vld [vmem:[%s3 + $0x1a] sm:$0x1]
        %v4580 = vlaneseq
        %v4581 = vshrl.u32 %v4580, 7
        %v4582 = vsub.s32 0, %v4581
        %v4583 = vrot.slane %v4579, %v4582
        %4584 = vrot.lane.b32.xlu0 %v4461, 123
        %v4585 = vpop.permute.xlu0 %4584
        %4586 = vrot.lane.b32.xlu0 %v4462, 123
        %v4587 = vpop.permute.xlu0 %4586
        %v4590 = vmul.f32 %v4583, %v4585
        %v4591 = vmul.f32 %v4583, %v4587
        %v4592 = vadd.f32 %v4568, %v4590
        %v4593 = vadd.f32 %v4569, %v4591
        %v4594 = vld [vmem:[%s4 + $0x1a] sm:$0x1]
        %v4595 = vlaneseq
        %v4596 = vshrl.u32 %v4595, 7
        %v4597 = vsub.s32 0, %v4596
        %v4598 = vrot.slane %v4594, %v4597
        %v4599 = vmul.f32 %v4598, %v4585
        %v4600 = vmul.f32 %v4598, %v4587
        %v4601 = vadd.f32 %v4577, %v4599
        %v4602 = vadd.f32 %v4578, %v4600
        %v4603 = vld [vmem:[%s3 + $0x1b] sm:$0x1]
        %v4604 = vlaneseq
        %v4605 = vshrl.u32 %v4604, 7
        %v4606 = vsub.s32 0, %v4605
        %v4607 = vrot.slane %v4603, %v4606
        %4608 = vrot.lane.b32.xlu0 %v4461, 122
        %v4609 = vpop.permute.xlu0 %4608
        %4610 = vrot.lane.b32.xlu0 %v4462, 122
        %v4611 = vpop.permute.xlu0 %4610
        %v4614 = vmul.f32 %v4607, %v4609
        %v4615 = vmul.f32 %v4607, %v4611
        %v4616 = vadd.f32 %v4592, %v4614
        %v4617 = vadd.f32 %v4593, %v4615
        %v4618 = vld [vmem:[%s4 + $0x1b] sm:$0x1]
        %v4619 = vlaneseq
        %v4620 = vshrl.u32 %v4619, 7
        %v4621 = vsub.s32 0, %v4620
        %v4622 = vrot.slane %v4618, %v4621
        %v4623 = vmul.f32 %v4622, %v4609
        %v4624 = vmul.f32 %v4622, %v4611
        %v4625 = vadd.f32 %v4601, %v4623
        %v4626 = vadd.f32 %v4602, %v4624
        %v4627 = vld [vmem:[#allocation3 + $0x4] sm:$0xff]
        %v4628 = vld [vmem:[#allocation3 + $0xc] sm:$0xff]
        %v4629 = vld [vmem:[%s3 + $0x1c] sm:$0x1]
        %v4630 = vlaneseq
        %v4631 = vshrl.u32 %v4630, 7
        %v4632 = vsub.s32 0, %v4631
        %v4633 = vrot.slane %v4629, %v4632
        %v4634 = vmul.f32 %v4633, %v4627
        %v4635 = vmul.f32 %v4633, %v4628
        %v4636 = vadd.f32 %v4616, %v4634
        %v4637 = vadd.f32 %v4617, %v4635
        %v4638 = vld [vmem:[%s4 + $0x1c] sm:$0x1]
        %v4639 = vlaneseq
        %v4640 = vshrl.u32 %v4639, 7
        %v4641 = vsub.s32 0, %v4640
        %v4642 = vrot.slane %v4638, %v4641
        %v4643 = vmul.f32 %v4642, %v4627
        %v4644 = vmul.f32 %v4642, %v4628
        %v4645 = vadd.f32 %v4625, %v4643
        %v4646 = vadd.f32 %v4626, %v4644
        %v4647 = vld [vmem:[%s3 + $0x1d] sm:$0x1]
        %v4648 = vlaneseq
        %v4649 = vshrl.u32 %v4648, 7
        %v4650 = vsub.s32 0, %v4649
        %v4651 = vrot.slane %v4647, %v4650
        %4654 = vrot.lane.b32.xlu0 %v4627, 127
        %v4655 = vpop.permute.xlu0 %4654
        %4656 = vrot.lane.b32.xlu0 %v4628, 127
        %v4657 = vpop.permute.xlu0 %4656
        %v4660 = vmul.f32 %v4651, %v4655
        %v4661 = vmul.f32 %v4651, %v4657
        %v4662 = vadd.f32 %v4636, %v4660
        %v4663 = vadd.f32 %v4637, %v4661
        %v4664 = vld [vmem:[%s4 + $0x1d] sm:$0x1]
        %v4665 = vlaneseq
        %v4666 = vshrl.u32 %v4665, 7
        %v4667 = vsub.s32 0, %v4666
        %v4668 = vrot.slane %v4664, %v4667
        %v4669 = vmul.f32 %v4668, %v4655
        %v4670 = vmul.f32 %v4668, %v4657
        %v4671 = vadd.f32 %v4645, %v4669
        %v4672 = vadd.f32 %v4646, %v4670
        %v4673 = vld [vmem:[%s3 + $0x1e] sm:$0x1]
        %v4674 = vlaneseq
        %v4675 = vshrl.u32 %v4674, 7
        %v4676 = vsub.s32 0, %v4675
        %v4677 = vrot.slane %v4673, %v4676
        %4678 = vrot.lane.b32.xlu0 %v4627, 126
        %v4679 = vpop.permute.xlu0 %4678
        %4680 = vrot.lane.b32.xlu0 %v4628, 126
        %v4681 = vpop.permute.xlu0 %4680
        %v4684 = vmul.f32 %v4677, %v4679
        %v4685 = vmul.f32 %v4677, %v4681
        %v4686 = vadd.f32 %v4662, %v4684
        %v4687 = vadd.f32 %v4663, %v4685
        %v4688 = vld [vmem:[%s4 + $0x1e] sm:$0x1]
        %v4689 = vlaneseq
        %v4690 = vshrl.u32 %v4689, 7
        %v4691 = vsub.s32 0, %v4690
        %v4692 = vrot.slane %v4688, %v4691
        %v4693 = vmul.f32 %v4692, %v4679
        %v4694 = vmul.f32 %v4692, %v4681
        %v4695 = vadd.f32 %v4671, %v4693
        %v4696 = vadd.f32 %v4672, %v4694
        %v4697 = vld [vmem:[%s3 + $0x1f] sm:$0x1]
        %v4698 = vlaneseq
        %v4699 = vshrl.u32 %v4698, 7
        %v4700 = vsub.s32 0, %v4699
        %v4701 = vrot.slane %v4697, %v4700
        %4702 = vrot.lane.b32.xlu0 %v4627, 125
        %v4703 = vpop.permute.xlu0 %4702
        %4704 = vrot.lane.b32.xlu0 %v4628, 125
        %v4705 = vpop.permute.xlu0 %4704
        %v4708 = vmul.f32 %v4701, %v4703
        %v4709 = vmul.f32 %v4701, %v4705
        %v4710 = vadd.f32 %v4686, %v4708
        %v4711 = vadd.f32 %v4687, %v4709
        %v4712 = vld [vmem:[%s4 + $0x1f] sm:$0x1]
        %v4713 = vlaneseq
        %v4714 = vshrl.u32 %v4713, 7
        %v4715 = vsub.s32 0, %v4714
        %v4716 = vrot.slane %v4712, %v4715
        %v4717 = vmul.f32 %v4716, %v4703
        %v4718 = vmul.f32 %v4716, %v4705
        %v4719 = vadd.f32 %v4695, %v4717
        %v4720 = vadd.f32 %v4696, %v4718
        %v4721 = vld [vmem:[%s3 + $0x20] sm:$0x1]
        %v4722 = vlaneseq
        %v4723 = vshrl.u32 %v4722, 7
        %v4724 = vsub.s32 0, %v4723
        %v4725 = vrot.slane %v4721, %v4724
        %4726 = vrot.lane.b32.xlu0 %v4627, 124
        %v4727 = vpop.permute.xlu0 %4726
        %4728 = vrot.lane.b32.xlu0 %v4628, 124
        %v4729 = vpop.permute.xlu0 %4728
        %v4732 = vmul.f32 %v4725, %v4727
        %v4733 = vmul.f32 %v4725, %v4729
        %v4734 = vadd.f32 %v4710, %v4732
        %v4735 = vadd.f32 %v4711, %v4733
        %v4736 = vld [vmem:[%s4 + $0x20] sm:$0x1]
        %v4737 = vlaneseq
        %v4738 = vshrl.u32 %v4737, 7
        %v4739 = vsub.s32 0, %v4738
        %v4740 = vrot.slane %v4736, %v4739
        %v4741 = vmul.f32 %v4740, %v4727
        %v4742 = vmul.f32 %v4740, %v4729
        %v4743 = vadd.f32 %v4719, %v4741
        %v4744 = vadd.f32 %v4720, %v4742
        %v4745 = vld [vmem:[%s3 + $0x21] sm:$0x1]
        %v4746 = vlaneseq
        %v4747 = vshrl.u32 %v4746, 7
        %v4748 = vsub.s32 0, %v4747
        %v4749 = vrot.slane %v4745, %v4748
        %4750 = vrot.lane.b32.xlu0 %v4627, 123
        %v4751 = vpop.permute.xlu0 %4750
        %4752 = vrot.lane.b32.xlu0 %v4628, 123
        %v4753 = vpop.permute.xlu0 %4752
        %v4756 = vmul.f32 %v4749, %v4751
        %v4757 = vmul.f32 %v4749, %v4753
        %v4758 = vadd.f32 %v4734, %v4756
        %v4759 = vadd.f32 %v4735, %v4757
        %v4760 = vld [vmem:[%s4 + $0x21] sm:$0x1]
        %v4761 = vlaneseq
        %v4762 = vshrl.u32 %v4761, 7
        %v4763 = vsub.s32 0, %v4762
        %v4764 = vrot.slane %v4760, %v4763
        %v4765 = vmul.f32 %v4764, %v4751
        %v4766 = vmul.f32 %v4764, %v4753
        %v4767 = vadd.f32 %v4743, %v4765
        %v4768 = vadd.f32 %v4744, %v4766
        %v4769 = vld [vmem:[%s3 + $0x22] sm:$0x1]
        %v4770 = vlaneseq
        %v4771 = vshrl.u32 %v4770, 7
        %v4772 = vsub.s32 0, %v4771
        %v4773 = vrot.slane %v4769, %v4772
        %4774 = vrot.lane.b32.xlu0 %v4627, 122
        %v4775 = vpop.permute.xlu0 %4774
        %4776 = vrot.lane.b32.xlu0 %v4628, 122
        %v4777 = vpop.permute.xlu0 %4776
        %v4780 = vmul.f32 %v4773, %v4775
        %v4781 = vmul.f32 %v4773, %v4777
        %v4782 = vadd.f32 %v4758, %v4780
        %v4783 = vadd.f32 %v4759, %v4781
        %v4784 = vld [vmem:[%s4 + $0x22] sm:$0x1]
        %v4785 = vlaneseq
        %v4786 = vshrl.u32 %v4785, 7
        %v4787 = vsub.s32 0, %v4786
        %v4788 = vrot.slane %v4784, %v4787
        %v4789 = vmul.f32 %v4788, %v4775
        %v4790 = vmul.f32 %v4788, %v4777
        %v4791 = vadd.f32 %v4767, %v4789
        %v4792 = vadd.f32 %v4768, %v4790
        %v4793 = vld [vmem:[#allocation3 + $0x5] sm:$0xff]
        %v4794 = vld [vmem:[#allocation3 + $0xd] sm:$0xff]
        %v4795 = vld [vmem:[%s3 + $0x23] sm:$0x1]
        %v4796 = vlaneseq
        %v4797 = vshrl.u32 %v4796, 7
        %v4798 = vsub.s32 0, %v4797
        %v4799 = vrot.slane %v4795, %v4798
        %v4800 = vmul.f32 %v4799, %v4793
        %v4801 = vmul.f32 %v4799, %v4794
        %v4802 = vadd.f32 %v4782, %v4800
        %v4803 = vadd.f32 %v4783, %v4801
        %v4804 = vld [vmem:[%s4 + $0x23] sm:$0x1]
        %v4805 = vlaneseq
        %v4806 = vshrl.u32 %v4805, 7
        %v4807 = vsub.s32 0, %v4806
        %v4808 = vrot.slane %v4804, %v4807
        %v4809 = vmul.f32 %v4808, %v4793
        %v4810 = vmul.f32 %v4808, %v4794
        %v4811 = vadd.f32 %v4791, %v4809
        %v4812 = vadd.f32 %v4792, %v4810
        %v4813 = vld [vmem:[%s3 + $0x24] sm:$0x1]
        %v4814 = vlaneseq
        %v4815 = vshrl.u32 %v4814, 7
        %v4816 = vsub.s32 0, %v4815
        %v4817 = vrot.slane %v4813, %v4816
        %4820 = vrot.lane.b32.xlu0 %v4793, 127
        %v4821 = vpop.permute.xlu0 %4820
        %4822 = vrot.lane.b32.xlu0 %v4794, 127
        %v4823 = vpop.permute.xlu0 %4822
        %v4826 = vmul.f32 %v4817, %v4821
        %v4827 = vmul.f32 %v4817, %v4823
        %v4828 = vadd.f32 %v4802, %v4826
        %v4829 = vadd.f32 %v4803, %v4827
        %v4830 = vld [vmem:[%s4 + $0x24] sm:$0x1]
        %v4831 = vlaneseq
        %v4832 = vshrl.u32 %v4831, 7
        %v4833 = vsub.s32 0, %v4832
        %v4834 = vrot.slane %v4830, %v4833
        %v4835 = vmul.f32 %v4834, %v4821
        %v4836 = vmul.f32 %v4834, %v4823
        %v4837 = vadd.f32 %v4811, %v4835
        %v4838 = vadd.f32 %v4812, %v4836
        %v4839 = vld [vmem:[%s3 + $0x25] sm:$0x1]
        %v4840 = vlaneseq
        %v4841 = vshrl.u32 %v4840, 7
        %v4842 = vsub.s32 0, %v4841
        %v4843 = vrot.slane %v4839, %v4842
        %4844 = vrot.lane.b32.xlu0 %v4793, 126
        %v4845 = vpop.permute.xlu0 %4844
        %4846 = vrot.lane.b32.xlu0 %v4794, 126
        %v4847 = vpop.permute.xlu0 %4846
        %v4850 = vmul.f32 %v4843, %v4845
        %v4851 = vmul.f32 %v4843, %v4847
        %v4852 = vadd.f32 %v4828, %v4850
        %v4853 = vadd.f32 %v4829, %v4851
        %v4854 = vld [vmem:[%s4 + $0x25] sm:$0x1]
        %v4855 = vlaneseq
        %v4856 = vshrl.u32 %v4855, 7
        %v4857 = vsub.s32 0, %v4856
        %v4858 = vrot.slane %v4854, %v4857
        %v4859 = vmul.f32 %v4858, %v4845
        %v4860 = vmul.f32 %v4858, %v4847
        %v4861 = vadd.f32 %v4837, %v4859
        %v4862 = vadd.f32 %v4838, %v4860
        %v4863 = vld [vmem:[%s3 + $0x26] sm:$0x1]
        %v4864 = vlaneseq
        %v4865 = vshrl.u32 %v4864, 7
        %v4866 = vsub.s32 0, %v4865
        %v4867 = vrot.slane %v4863, %v4866
        %4868 = vrot.lane.b32.xlu0 %v4793, 125
        %v4869 = vpop.permute.xlu0 %4868
        %4870 = vrot.lane.b32.xlu0 %v4794, 125
        %v4871 = vpop.permute.xlu0 %4870
        %v4874 = vmul.f32 %v4867, %v4869
        %v4875 = vmul.f32 %v4867, %v4871
        %v4876 = vadd.f32 %v4852, %v4874
        %v4877 = vadd.f32 %v4853, %v4875
        %v4878 = vld [vmem:[%s4 + $0x26] sm:$0x1]
        %v4879 = vlaneseq
        %v4880 = vshrl.u32 %v4879, 7
        %v4881 = vsub.s32 0, %v4880
        %v4882 = vrot.slane %v4878, %v4881
        %v4883 = vmul.f32 %v4882, %v4869
        %v4884 = vmul.f32 %v4882, %v4871
        %v4885 = vadd.f32 %v4861, %v4883
        %v4886 = vadd.f32 %v4862, %v4884
        %v4887 = vld [vmem:[%s3 + $0x27] sm:$0x1]
        %v4888 = vlaneseq
        %v4889 = vshrl.u32 %v4888, 7
        %v4890 = vsub.s32 0, %v4889
        %v4891 = vrot.slane %v4887, %v4890
        %4892 = vrot.lane.b32.xlu0 %v4793, 124
        %v4893 = vpop.permute.xlu0 %4892
        %4894 = vrot.lane.b32.xlu0 %v4794, 124
        %v4895 = vpop.permute.xlu0 %4894
        %v4898 = vmul.f32 %v4891, %v4893
        %v4899 = vmul.f32 %v4891, %v4895
        %v4900 = vadd.f32 %v4876, %v4898
        %v4901 = vadd.f32 %v4877, %v4899
        %v4902 = vld [vmem:[%s4 + $0x27] sm:$0x1]
        %v4903 = vlaneseq
        %v4904 = vshrl.u32 %v4903, 7
        %v4905 = vsub.s32 0, %v4904
        %v4906 = vrot.slane %v4902, %v4905
        %v4907 = vmul.f32 %v4906, %v4893
        %v4908 = vmul.f32 %v4906, %v4895
        %v4909 = vadd.f32 %v4885, %v4907
        %v4910 = vadd.f32 %v4886, %v4908
        %v4911 = vld [vmem:[%s3 + $0x28] sm:$0x1]
        %v4912 = vlaneseq
        %v4913 = vshrl.u32 %v4912, 7
        %v4914 = vsub.s32 0, %v4913
        %v4915 = vrot.slane %v4911, %v4914
        %4916 = vrot.lane.b32.xlu0 %v4793, 123
        %v4917 = vpop.permute.xlu0 %4916
        %4918 = vrot.lane.b32.xlu0 %v4794, 123
        %v4919 = vpop.permute.xlu0 %4918
        %v4922 = vmul.f32 %v4915, %v4917
        %v4923 = vmul.f32 %v4915, %v4919
        %v4924 = vadd.f32 %v4900, %v4922
        %v4925 = vadd.f32 %v4901, %v4923
        %v4926 = vld [vmem:[%s4 + $0x28] sm:$0x1]
        %v4927 = vlaneseq
        %v4928 = vshrl.u32 %v4927, 7
        %v4929 = vsub.s32 0, %v4928
        %v4930 = vrot.slane %v4926, %v4929
        %v4931 = vmul.f32 %v4930, %v4917
        %v4932 = vmul.f32 %v4930, %v4919
        %v4933 = vadd.f32 %v4909, %v4931
        %v4934 = vadd.f32 %v4910, %v4932
        %v4935 = vld [vmem:[%s3 + $0x29] sm:$0x1]
        %v4936 = vlaneseq
        %v4937 = vshrl.u32 %v4936, 7
        %v4938 = vsub.s32 0, %v4937
        %v4939 = vrot.slane %v4935, %v4938
        %4940 = vrot.lane.b32.xlu0 %v4793, 122
        %v4941 = vpop.permute.xlu0 %4940
        %4942 = vrot.lane.b32.xlu0 %v4794, 122
        %v4943 = vpop.permute.xlu0 %4942
        %v4946 = vmul.f32 %v4939, %v4941
        %v4947 = vmul.f32 %v4939, %v4943
        %v4948 = vadd.f32 %v4924, %v4946
        %v4949 = vadd.f32 %v4925, %v4947
        %v4950 = vld [vmem:[%s4 + $0x29] sm:$0x1]
        %v4951 = vlaneseq
        %v4952 = vshrl.u32 %v4951, 7
        %v4953 = vsub.s32 0, %v4952
        %v4954 = vrot.slane %v4950, %v4953
        %v4955 = vmul.f32 %v4954, %v4941
        %v4956 = vmul.f32 %v4954, %v4943
        %v4957 = vadd.f32 %v4933, %v4955
        %v4958 = vadd.f32 %v4934, %v4956
        %v4959 = vld [vmem:[#allocation3 + $0x6] sm:$0xff]
        %v4960 = vld [vmem:[#allocation3 + $0xe] sm:$0xff]
        %v4961 = vld [vmem:[%s3 + $0x2a] sm:$0x1]
        %v4962 = vlaneseq
        %v4963 = vshrl.u32 %v4962, 7
        %v4964 = vsub.s32 0, %v4963
        %v4965 = vrot.slane %v4961, %v4964
        %v4966 = vmul.f32 %v4965, %v4959
        %v4967 = vmul.f32 %v4965, %v4960
        %v4968 = vadd.f32 %v4948, %v4966
        %v4969 = vadd.f32 %v4949, %v4967
        %v4970 = vld [vmem:[%s4 + $0x2a] sm:$0x1]
        %v4971 = vlaneseq
        %v4972 = vshrl.u32 %v4971, 7
        %v4973 = vsub.s32 0, %v4972
        %v4974 = vrot.slane %v4970, %v4973
        %v4975 = vmul.f32 %v4974, %v4959
        %v4976 = vmul.f32 %v4974, %v4960
        %v4977 = vadd.f32 %v4957, %v4975
        %v4978 = vadd.f32 %v4958, %v4976
        %v4979 = vld [vmem:[%s3 + $0x2b] sm:$0x1]
        %v4980 = vlaneseq
        %v4981 = vshrl.u32 %v4980, 7
        %v4982 = vsub.s32 0, %v4981
        %v4983 = vrot.slane %v4979, %v4982
        %4986 = vrot.lane.b32.xlu0 %v4959, 127
        %v4987 = vpop.permute.xlu0 %4986
        %4988 = vrot.lane.b32.xlu0 %v4960, 127
        %v4989 = vpop.permute.xlu0 %4988
        %v4992 = vmul.f32 %v4983, %v4987
        %v4993 = vmul.f32 %v4983, %v4989
        %v4994 = vadd.f32 %v4968, %v4992
        %v4995 = vadd.f32 %v4969, %v4993
        %v4996 = vld [vmem:[%s4 + $0x2b] sm:$0x1]
        %v4997 = vlaneseq
        %v4998 = vshrl.u32 %v4997, 7
        %v4999 = vsub.s32 0, %v4998
        %v5000 = vrot.slane %v4996, %v4999
        %v5001 = vmul.f32 %v5000, %v4987
        %v5002 = vmul.f32 %v5000, %v4989
        %v5003 = vadd.f32 %v4977, %v5001
        %v5004 = vadd.f32 %v4978, %v5002
        %v5005 = vld [vmem:[%s3 + $0x2c] sm:$0x1]
        %v5006 = vlaneseq
        %v5007 = vshrl.u32 %v5006, 7
        %v5008 = vsub.s32 0, %v5007
        %v5009 = vrot.slane %v5005, %v5008
        %5010 = vrot.lane.b32.xlu0 %v4959, 126
        %v5011 = vpop.permute.xlu0 %5010
        %5012 = vrot.lane.b32.xlu0 %v4960, 126
        %v5013 = vpop.permute.xlu0 %5012
        %v5016 = vmul.f32 %v5009, %v5011
        %v5017 = vmul.f32 %v5009, %v5013
        %v5018 = vadd.f32 %v4994, %v5016
        %v5019 = vadd.f32 %v4995, %v5017
        %v5020 = vld [vmem:[%s4 + $0x2c] sm:$0x1]
        %v5021 = vlaneseq
        %v5022 = vshrl.u32 %v5021, 7
        %v5023 = vsub.s32 0, %v5022
        %v5024 = vrot.slane %v5020, %v5023
        %v5025 = vmul.f32 %v5024, %v5011
        %v5026 = vmul.f32 %v5024, %v5013
        %v5027 = vadd.f32 %v5003, %v5025
        %v5028 = vadd.f32 %v5004, %v5026
        %v5029 = vld [vmem:[%s3 + $0x2d] sm:$0x1]
        %v5030 = vlaneseq
        %v5031 = vshrl.u32 %v5030, 7
        %v5032 = vsub.s32 0, %v5031
        %v5033 = vrot.slane %v5029, %v5032
        %5034 = vrot.lane.b32.xlu0 %v4959, 125
        %v5035 = vpop.permute.xlu0 %5034
        %5036 = vrot.lane.b32.xlu0 %v4960, 125
        %v5037 = vpop.permute.xlu0 %5036
        %v5040 = vmul.f32 %v5033, %v5035
        %v5041 = vmul.f32 %v5033, %v5037
        %v5042 = vadd.f32 %v5018, %v5040
        %v5043 = vadd.f32 %v5019, %v5041
        %v5044 = vld [vmem:[%s4 + $0x2d] sm:$0x1]
        %v5045 = vlaneseq
        %v5046 = vshrl.u32 %v5045, 7
        %v5047 = vsub.s32 0, %v5046
        %v5048 = vrot.slane %v5044, %v5047
        %v5049 = vmul.f32 %v5048, %v5035
        %v5050 = vmul.f32 %v5048, %v5037
        %v5051 = vadd.f32 %v5027, %v5049
        %v5052 = vadd.f32 %v5028, %v5050
        %v5053 = vld [vmem:[%s3 + $0x2e] sm:$0x1]
        %v5054 = vlaneseq
        %v5055 = vshrl.u32 %v5054, 7
        %v5056 = vsub.s32 0, %v5055
        %v5057 = vrot.slane %v5053, %v5056
        %5058 = vrot.lane.b32.xlu0 %v4959, 124
        %v5059 = vpop.permute.xlu0 %5058
        %5060 = vrot.lane.b32.xlu0 %v4960, 124
        %v5061 = vpop.permute.xlu0 %5060
        %v5064 = vmul.f32 %v5057, %v5059
        %v5065 = vmul.f32 %v5057, %v5061
        %v5066 = vadd.f32 %v5042, %v5064
        %v5067 = vadd.f32 %v5043, %v5065
        %v5068 = vld [vmem:[%s4 + $0x2e] sm:$0x1]
        %v5069 = vlaneseq
        %v5070 = vshrl.u32 %v5069, 7
        %v5071 = vsub.s32 0, %v5070
        %v5072 = vrot.slane %v5068, %v5071
        %v5073 = vmul.f32 %v5072, %v5059
        %v5074 = vmul.f32 %v5072, %v5061
        %v5075 = vadd.f32 %v5051, %v5073
        %v5076 = vadd.f32 %v5052, %v5074
        %v5077 = vld [vmem:[%s3 + $0x2f] sm:$0x1]
        %v5078 = vlaneseq
        %v5079 = vshrl.u32 %v5078, 7
        %v5080 = vsub.s32 0, %v5079
        %v5081 = vrot.slane %v5077, %v5080
        %5082 = vrot.lane.b32.xlu0 %v4959, 123
        %v5083 = vpop.permute.xlu0 %5082
        %5084 = vrot.lane.b32.xlu0 %v4960, 123
        %v5085 = vpop.permute.xlu0 %5084
        %v5088 = vmul.f32 %v5081, %v5083
        %v5089 = vmul.f32 %v5081, %v5085
        %v5090 = vadd.f32 %v5066, %v5088
        %v5091 = vadd.f32 %v5067, %v5089
        %v5092 = vld [vmem:[%s4 + $0x2f] sm:$0x1]
        %v5093 = vlaneseq
        %v5094 = vshrl.u32 %v5093, 7
        %v5095 = vsub.s32 0, %v5094
        %v5096 = vrot.slane %v5092, %v5095
        %v5097 = vmul.f32 %v5096, %v5083
        %v5098 = vmul.f32 %v5096, %v5085
        %v5099 = vadd.f32 %v5075, %v5097
        %v5100 = vadd.f32 %v5076, %v5098
        %v5101 = vld [vmem:[%s3 + $0x30] sm:$0x1]
        %v5102 = vlaneseq
        %v5103 = vshrl.u32 %v5102, 7
        %v5104 = vsub.s32 0, %v5103
        %v5105 = vrot.slane %v5101, %v5104
        %5106 = vrot.lane.b32.xlu0 %v4959, 122
        %v5107 = vpop.permute.xlu0 %5106
        %5108 = vrot.lane.b32.xlu0 %v4960, 122
        %v5109 = vpop.permute.xlu0 %5108
        %v5112 = vmul.f32 %v5105, %v5107
        %v5113 = vmul.f32 %v5105, %v5109
        %v5114 = vadd.f32 %v5090, %v5112
        %v5115 = vadd.f32 %v5091, %v5113
        %v5116 = vld [vmem:[%s4 + $0x30] sm:$0x1]
        %v5117 = vlaneseq
        %v5118 = vshrl.u32 %v5117, 7
        %v5119 = vsub.s32 0, %v5118
        %v5120 = vrot.slane %v5116, %v5119
        %v5121 = vmul.f32 %v5120, %v5107
        %v5122 = vmul.f32 %v5120, %v5109
        %v5123 = vadd.f32 %v5099, %v5121
        %v5124 = vadd.f32 %v5100, %v5122
        %s5125 = sld [smem:[#allocation6]]
        %v5126 = vstv %s5125
        %s5127 = sld [smem:[#allocation7]]
        %v5128 = vstv %s5127
        %v5129 = vadd.f32 %v5126, %v5114
        %v5130 = vadd.f32 %v5126, %v5115
        %v5131 = vadd.f32 %v5128, %v5123
        %v5132 = vadd.f32 %v5128, %v5124
        %5135 = vrot.lane.b32.xlu0 %v5114, 106
        %v5136 = vpop.permute.xlu0 %5135
        %5137 = vrot.lane.b32.xlu0 %v5115, 106
        %v5138 = vpop.permute.xlu0 %5137
        %v5141 = vadd.f32 %v5129, %v5136
        %v5142 = vadd.f32 %v5130, %v5138
        %5145 = vrot.lane.b32.xlu0 %v5123, 106
        %v5146 = vpop.permute.xlu0 %5145
        %5147 = vrot.lane.b32.xlu0 %v5124, 106
        %v5148 = vpop.permute.xlu0 %5147
        %v5151 = vadd.f32 %v5131, %v5146
        %v5152 = vadd.f32 %v5132, %v5148
        %5153 = vrot.lane.b32.xlu0 %v5114, 84
        %v5154 = vpop.permute.xlu0 %5153
        %5155 = vrot.lane.b32.xlu0 %v5115, 84
        %v5156 = vpop.permute.xlu0 %5155
        %v5159 = vadd.f32 %v5141, %v5154
        %v5160 = vadd.f32 %v5142, %v5156
        %5161 = vrot.lane.b32.xlu0 %v5123, 84
        %v5162 = vpop.permute.xlu0 %5161
        %5163 = vrot.lane.b32.xlu0 %v5124, 84
        %v5164 = vpop.permute.xlu0 %5163
        %v5167 = vadd.f32 %v5151, %v5162
        %v5168 = vadd.f32 %v5152, %v5164
        %5169 = vrot.lane.b32.xlu0 %v5114, 62
        %v5170 = vpop.permute.xlu0 %5169
        %5171 = vrot.lane.b32.xlu0 %v5115, 62
        %v5172 = vpop.permute.xlu0 %5171
        %v5175 = vadd.f32 %v5159, %v5170
        %v5176 = vadd.f32 %v5160, %v5172
        %5177 = vrot.lane.b32.xlu0 %v5123, 62
        %v5178 = vpop.permute.xlu0 %5177
        %5179 = vrot.lane.b32.xlu0 %v5124, 62
        %v5180 = vpop.permute.xlu0 %5179
        %v5183 = vadd.f32 %v5167, %v5178
        %v5184 = vadd.f32 %v5168, %v5180
        %v5185 = vmax.f32 %v5175, %v5183
        %v5186 = vmax.f32 %v5176, %v5184
        %v5187 = vsub.f32 %v5175, %v5185
        %v5188 = vsub.f32 %v5176, %v5186
        %v5189 = vmul.f32 %v5187, 1.442695
        %v5190 = vpow.pop %v5189
        %v5191 = vmul.f32 %v5188, 1.442695
        %v5192 = vpow.pop %v5191
        %v5193 = vsub.f32 %v5183, %v5185
        %v5194 = vsub.f32 %v5184, %v5186
        %v5195 = vmul.f32 %v5193, 1.442695
        %v5196 = vpow.pop %v5195
        %v5197 = vmul.f32 %v5194, 1.442695
        %v5198 = vpow.pop %v5197
        %v5199 = vadd.f32 %v5190, %v5196
        %v5200 = vadd.f32 %v5192, %v5198
        %v5201 = vrcp.pop %v5199
        %v5202 = vrcp.pop %v5200
        %v5203 = vmul.f32 %v5190, %v5201
        %v5204 = vmul.f32 %v5192, %v5202
        %v5205 = vmul.f32 %v5196, %v5201
        %v5206 = vmul.f32 %v5198, %v5202
        %5208 = vrot.lane.b32.xlu0 %v3912, 8
        %v5209 = vpop.permute.xlu0 %5208
        %5211 = vrot.lane.b32.xlu0 %v3912, 16
        %v5212 = vpop.permute.xlu0 %5211
        %5214 = vrot.lane.b32.xlu0 %v3912, 24
        %v5215 = vpop.permute.xlu0 %5214
        %5217 = vrot.lane.b32.xlu0 %v3912, 32
        %v5218 = vpop.permute.xlu0 %5217
        %5220 = vrot.lane.b32.xlu0 %v3912, 40
        %v5221 = vpop.permute.xlu0 %5220
        %5223 = vrot.lane.b32.xlu0 %v3912, 48
        %v5224 = vpop.permute.xlu0 %5223
        %5226 = vrot.lane.b32.xlu0 %v3912, 56
        %v5227 = vpop.permute.xlu0 %5226
        %5229 = vrot.lane.b32.xlu0 %v3912, 64
        %v5230 = vpop.permute.xlu0 %5229
        %5232 = vrot.lane.b32.xlu0 %v3912, 72
        %v5233 = vpop.permute.xlu0 %5232
        %5235 = vrot.lane.b32.xlu0 %v3912, 80
        %v5236 = vpop.permute.xlu0 %5235
        %5238 = vrot.lane.b32.xlu0 %v3912, 88
        %v5239 = vpop.permute.xlu0 %5238
        %5241 = vrot.lane.b32.xlu0 %v3912, 96
        %v5242 = vpop.permute.xlu0 %5241
        %5244 = vrot.lane.b32.xlu0 %v3912, 104
        %v5245 = vpop.permute.xlu0 %5244
        %5247 = vrot.lane.b32.xlu0 %v3912, 112
        %v5248 = vpop.permute.xlu0 %5247
        %5250 = vrot.lane.b32.xlu0 %v3912, 120
        %v5251 = vpop.permute.xlu0 %5250
        %v5253 = vsel %vm2907, %v3912, %v5209
        %vm5254 = vcmask 130048
        %v5255 = vsel %vm5254, %v5253, %v5212
        %v5256 = vsel %vm457, %v5255, %v5215
        %vm5257 = vcmask 261120
        %v5258 = vsel %vm5257, %v5256, %v5218
        %vm5259 = vcmask 326656
        %v5260 = vsel %vm5259, %v5258, %v5221
        %v5261 = vsel %vm707, %v5260, %v5224
        %vm5262 = vcmask 457728
        %v5263 = vsel %vm5262, %v5261, %v5227
        %vm5264 = vcmask 523264
        %v5265 = vsel %vm5264, %v5263, %v5230
        %vm5266 = vcmask 588800
        %v5267 = vsel %vm5266, %v5265, %v5233
        %vm5268 = vcmask 654336
        %v5269 = vsel %vm5268, %v5267, %v5236
        %vm5270 = vcmask 719872
        %v5271 = vsel %vm5270, %v5269, %v5239
        %vm5272 = vcmask 785408
        %v5273 = vsel %vm5272, %v5271, %v5242
        %vm5274 = vcmask 850944
        %v5275 = vsel %vm5274, %v5273, %v5245
        %vm5276 = vcmask 916480
        %v5277 = vsel %vm5276, %v5275, %v5248
        %vm5278 = vcmask 982016
        %v5279 = vsel %vm5278, %v5277, %v5251
        %5281 = vrot.lane.b32.xlu0 %v3913, 8
        %v5282 = vpop.permute.xlu0 %5281
        %5284 = vrot.lane.b32.xlu0 %v3913, 16
        %v5285 = vpop.permute.xlu0 %5284
        %5287 = vrot.lane.b32.xlu0 %v3913, 24
        %v5288 = vpop.permute.xlu0 %5287
        %5290 = vrot.lane.b32.xlu0 %v3913, 32
        %v5291 = vpop.permute.xlu0 %5290
        %5293 = vrot.lane.b32.xlu0 %v3913, 40
        %v5294 = vpop.permute.xlu0 %5293
        %5296 = vrot.lane.b32.xlu0 %v3913, 48
        %v5297 = vpop.permute.xlu0 %5296
        %5299 = vrot.lane.b32.xlu0 %v3913, 56
        %v5300 = vpop.permute.xlu0 %5299
        %5302 = vrot.lane.b32.xlu0 %v3913, 64
        %v5303 = vpop.permute.xlu0 %5302
        %5305 = vrot.lane.b32.xlu0 %v3913, 72
        %v5306 = vpop.permute.xlu0 %5305
        %5308 = vrot.lane.b32.xlu0 %v3913, 80
        %v5309 = vpop.permute.xlu0 %5308
        %5311 = vrot.lane.b32.xlu0 %v3913, 88
        %v5312 = vpop.permute.xlu0 %5311
        %5314 = vrot.lane.b32.xlu0 %v3913, 96
        %v5315 = vpop.permute.xlu0 %5314
        %5317 = vrot.lane.b32.xlu0 %v3913, 104
        %v5318 = vpop.permute.xlu0 %5317
        %5320 = vrot.lane.b32.xlu0 %v3913, 112
        %v5321 = vpop.permute.xlu0 %5320
        %5323 = vrot.lane.b32.xlu0 %v3913, 120
        %v5324 = vpop.permute.xlu0 %5323
        %v5326 = vsel %vm2907, %v3913, %v5282
        %v5327 = vsel %vm5254, %v5326, %v5285
        %v5328 = vsel %vm457, %v5327, %v5288
        %v5329 = vsel %vm5257, %v5328, %v5291
        %v5330 = vsel %vm5259, %v5329, %v5294
        %v5331 = vsel %vm707, %v5330, %v5297
        %v5332 = vsel %vm5262, %v5331, %v5300
        %v5333 = vsel %vm5264, %v5332, %v5303
        %v5334 = vsel %vm5266, %v5333, %v5306
        %v5335 = vsel %vm5268, %v5334, %v5309
        %v5336 = vsel %vm5270, %v5335, %v5312
        %v5337 = vsel %vm5272, %v5336, %v5315
        %v5338 = vsel %vm5274, %v5337, %v5318
        %v5339 = vsel %vm5276, %v5338, %v5321
        %v5340 = vsel %vm5278, %v5339, %v5324
        %v5341 = vld [vmem:[%s5] sm:$0xff]
        %v5342 = vld [vmem:[%s5 + $0x8] sm:$0xff]
        %v5344 = vsel %vm5254, %v5203, 0
        %v5347 = vsel %vm5254, %v5204, 0
        %5349 = vmatprep.subr.mxu0 0.0
        %5350 = vmatpush1.msra.mxu0 %v5341
        %5351 = vmatprep.subr.mxu0 0.0
        %5352 = vmatpush1.msra.mxu0 %v5342
        %5353 = vmatprep.subr.mxu0 0.0
        %5354 = vmatpush1.msra.mxu0 0.0
        %5355 = vmatprep.subr.mxu0 0.0
        %5356 = vmatpush1.msra.mxu0 0.0
        %5357 = vmatprep.subr.mxu0 0.0
        %5358 = vmatpush1.msra.mxu0 0.0
        %5359 = vmatprep.subr.mxu0 0.0
        %5360 = vmatpush1.msra.mxu0 0.0
        %5361 = vmatprep.subr.mxu0 0.0
        %5362 = vmatpush1.msra.mxu0 0.0
        %5363 = vmatprep.subr.mxu0 0.0
        %5364 = vmatpush1.msra.mxu0 0.0
        %5365 = vmatprep.subr.mxu0 0.0
        %5366 = vmatpush1.msra.mxu0 0.0
        %5367 = vmatprep.subr.mxu0 0.0
        %5368 = vmatpush1.msra.mxu0 0.0
        %5369 = vmatprep.subr.mxu0 0.0
        %5370 = vmatpush1.msra.mxu0 0.0
        %5371 = vmatprep.subr.mxu0 0.0
        %5372 = vmatpush1.msra.mxu0 0.0
        %5373 = vmatprep.subr.mxu0 0.0
        %5374 = vmatpush1.msra.mxu0 0.0
        %5375 = vmatprep.subr.mxu0 0.0
        %5376 = vmatpush1.msra.mxu0 0.0
        %5377 = vmatprep.subr.mxu0 0.0
        %5378 = vmatpush1.msra.mxu0 0.0
        %5379 = vmatprep.subr.mxu0 0.0
        %5380 = vmatpush1.msra.mxu0 0.0
        %5381 = vmatprep.subr.mxu0 0.0
        %5382 = vmatpush1.msra.mxu0 0.0
        %5383 = vmatprep.subr.mxu0 0.0
        %5384 = vmatpush1.msra.mxu0 0.0
        %5385 = vmatprep.subr.mxu0 0.0
        %5386 = vmatpush1.msra.mxu0 0.0
        %5387 = vmatprep.subr.mxu0 0.0
        %5388 = vmatpush1.msra.mxu0 0.0
        %5389 = vmatprep.subr.mxu0 0.0
        %5390 = vmatpush1.msra.mxu0 0.0
        %5391 = vmatprep.subr.mxu0 0.0
        %5392 = vmatpush1.msra.mxu0 0.0
        %5393 = vmatprep.subr.mxu0 0.0
        %5394 = vmatpush1.msra.mxu0 0.0
        %5395 = vmatprep.subr.mxu0 0.0
        %5396 = vmatpush1.msra.mxu0 0.0
        %5397 = vmatprep.subr.mxu0 0.0
        %5398 = vmatpush1.msra.mxu0 0.0
        %5399 = vmatprep.subr.mxu0 0.0
        %5400 = vmatpush1.msra.mxu0 0.0
        %5401 = vmatprep.subr.mxu0 0.0
        %5402 = vmatpush1.msra.mxu0 0.0
        %5403 = vmatprep.subr.mxu0 0.0
        %5404 = vmatpush1.msra.mxu0 0.0
        %5405 = vmatprep.subr.mxu0 0.0
        %5406 = vmatpush1.msra.mxu0 0.0
        %5407 = vmatprep.subr.mxu0 0.0
        %5408 = vmatpush1.msra.mxu0 0.0
        %5409 = vmatprep.subr.mxu0 0.0
        %5410 = vmatpush1.msra.mxu0 0.0
        %5411 = vmatprep.subr.mxu0 0.0
        %5412 = vmatpush1.msra.mxu0 0.0
        %5413 = vmatprep.mubr.f32.mxu0 0.0
        %5414 = vmatmul.mubr.f32.gmra.mrb[0].mxu0 %v5344
        %v5415 = vpop.f32.mrb[0].mxu0
        %v5416 = vadd.f32 0.0, %v5415
        %v5417 = vpop.f32.mrb[0].mxu0
        %5418 = vmatprep.mubr.f32.mxu0 0.0
        %5419 = vmatmul.mubr.f32.gmra.mrb[0].mxu0 %v5347
        %v5420 = vpop.f32.mrb[0].mxu0
        %v5421 = vadd.f32 0.0, %v5420
        %v5422 = vpop.f32.mrb[0].mxu0
        %5423 = vdwg.mxu0
        %v5425 = vsel %vm5254, %v5205, 0
        %v5428 = vsel %vm5254, %v5206, 0
        %5430 = vmatprep.subr.mxu0 0.0
        %5431 = vmatpush1.msra.mxu0 %v5341
        %5432 = vmatprep.subr.mxu0 0.0
        %5433 = vmatpush1.msra.mxu0 %v5342
        %5434 = vmatprep.subr.mxu0 0.0
        %5435 = vmatpush1.msra.mxu0 0.0
        %5436 = vmatprep.subr.mxu0 0.0
        %5437 = vmatpush1.msra.mxu0 0.0
        %5438 = vmatprep.subr.mxu0 0.0
        %5439 = vmatpush1.msra.mxu0 0.0
        %5440 = vmatprep.subr.mxu0 0.0
        %5441 = vmatpush1.msra.mxu0 0.0
        %5442 = vmatprep.subr.mxu0 0.0
        %5443 = vmatpush1.msra.mxu0 0.0
        %5444 = vmatprep.subr.mxu0 0.0
        %5445 = vmatpush1.msra.mxu0 0.0
        %5446 = vmatprep.subr.mxu0 0.0
        %5447 = vmatpush1.msra.mxu0 0.0
        %5448 = vmatprep.subr.mxu0 0.0
        %5449 = vmatpush1.msra.mxu0 0.0
        %5450 = vmatprep.subr.mxu0 0.0
        %5451 = vmatpush1.msra.mxu0 0.0
        %5452 = vmatprep.subr.mxu0 0.0
        %5453 = vmatpush1.msra.mxu0 0.0
        %5454 = vmatprep.subr.mxu0 0.0
        %5455 = vmatpush1.msra.mxu0 0.0
        %5456 = vmatprep.subr.mxu0 0.0
        %5457 = vmatpush1.msra.mxu0 0.0
        %5458 = vmatprep.subr.mxu0 0.0
        %5459 = vmatpush1.msra.mxu0 0.0
        %5460 = vmatprep.subr.mxu0 0.0
        %5461 = vmatpush1.msra.mxu0 0.0
        %5462 = vmatprep.subr.mxu0 0.0
        %5463 = vmatpush1.msra.mxu0 0.0
        %5464 = vmatprep.subr.mxu0 0.0
        %5465 = vmatpush1.msra.mxu0 0.0
        %5466 = vmatprep.subr.mxu0 0.0
        %5467 = vmatpush1.msra.mxu0 0.0
        %5468 = vmatprep.subr.mxu0 0.0
        %5469 = vmatpush1.msra.mxu0 0.0
        %5470 = vmatprep.subr.mxu0 0.0
        %5471 = vmatpush1.msra.mxu0 0.0
        %5472 = vmatprep.subr.mxu0 0.0
        %5473 = vmatpush1.msra.mxu0 0.0
        %5474 = vmatprep.subr.mxu0 0.0
        %5475 = vmatpush1.msra.mxu0 0.0
        %5476 = vmatprep.subr.mxu0 0.0
        %5477 = vmatpush1.msra.mxu0 0.0
        %5478 = vmatprep.subr.mxu0 0.0
        %5479 = vmatpush1.msra.mxu0 0.0
        %5480 = vmatprep.subr.mxu0 0.0
        %5481 = vmatpush1.msra.mxu0 0.0
        %5482 = vmatprep.subr.mxu0 0.0
        %5483 = vmatpush1.msra.mxu0 0.0
        %5484 = vmatprep.subr.mxu0 0.0
        %5485 = vmatpush1.msra.mxu0 0.0
        %5486 = vmatprep.subr.mxu0 0.0
        %5487 = vmatpush1.msra.mxu0 0.0
        %5488 = vmatprep.subr.mxu0 0.0
        %5489 = vmatpush1.msra.mxu0 0.0
        %5490 = vmatprep.subr.mxu0 0.0
        %5491 = vmatpush1.msra.mxu0 0.0
        %5492 = vmatprep.subr.mxu0 0.0
        %5493 = vmatpush1.msra.mxu0 0.0
        %5494 = vmatprep.mubr.f32.mxu0 0.0
        %5495 = vmatmul.mubr.f32.gmra.mrb[0].mxu0 %v5425
        %v5496 = vpop.f32.mrb[0].mxu0
        %v5497 = vadd.f32 0.0, %v5496
        %v5498 = vpop.f32.mrb[0].mxu0
        %5499 = vmatprep.mubr.f32.mxu0 0.0
        %5500 = vmatmul.mubr.f32.gmra.mrb[0].mxu0 %v5428
        %v5501 = vpop.f32.mrb[0].mxu0
        %v5502 = vadd.f32 0.0, %v5501
        %v5503 = vpop.f32.mrb[0].mxu0
        %5504 = vdwg.mxu0
        %v5505 = vlaneseq
        %v5506 = vshrl.u32 %v5505, 7
        %v5507 = vsub.s32 0, %v5506
        %v5508 = vrot.slane %v5279, %v5507
        %v5509 = vadd.f32 %v5508, %v5416
        %v5510 = vadd.f32 %v5508, %v5421
        %v5511 = vadd.f32 %v5509, 1.0
        %v5512 = vadd.f32 %v5510, 1.0
        %v5513 = vlaneseq
        %v5514 = vshrl.u32 %v5513, 7
        %v5515 = vsub.s32 0, %v5514
        %v5516 = vrot.slane %v5340, %v5515
        %v5517 = vadd.f32 %v5516, %v5497
        %v5518 = vadd.f32 %v5516, %v5502
        %v5519 = vadd.f32 %v5517, 1.0
        %v5520 = vadd.f32 %v5518, 1.0
        %v5521 = vmul.f32 %v5511, %v2628
        %v5522 = vmul.f32 %v5512, %v2629
        %v5523 = vmul.f32 %v5519, %v2630
        %v5524 = vmul.f32 %v5520, %v2631
        %v5525 = vadd.f32 %v5521, %v5523
        %v5526 = vadd.f32 %v5522, %v5524
        %5527 = vst [vmem:[%s444] sm:$0xff] %v5525
        %5528 = vst [vmem:[%s444 + $0x8] sm:$0xff] %v5526
        %p5529 = scmp.lt.s32.totalorder %s29, 1
        %s5530 = scalar_select %p5529, %s29, 1
        %s5531 = smul.addr %s5530, 2
        %s5532 = smul.addr %s5531, 8
        %s5533 = scalar_lea.vmem %s12, %s5532
        // Predicated region
        $region77: #{bfm_forward.1} parent=67 // pred_check
          %p5534 = pneg %p304
        $region78: #{bfm_forward.1} parent=67 // pred_check_branch
          %5536 = sbr.rel (%p5534) target = $region80
        $region79: #{bfm_forward.1} parent=67 // pred_region
          _
        $region80: #{bfm_forward.1} parent=67 // pred_fallthru
          _
      $region68: #{bfm_forward.1} parent=5 // pred_fallthru
        _
      %p5537 = scmp.le.s32.totalorder 2, %s24
      // Predicated region
      $region81: #{bfm_forward.1} parent=5 // pred_check
        %p5538 = pneg %p5537
      $region82: #{bfm_forward.1} parent=5 // pred_check_branch
        %5540 = sbr.rel (%p5538) target = $region84
      $region83: #{bfm_forward.1} parent=5 // pred_region
        %s5541 = ssub.s32 %s24, 2
        // Predicated region
        $region85: #{bfm_forward.1} parent=83 // pred_check
          %p5542 = pneg %p310
        $region86: #{bfm_forward.1} parent=83 // pred_check_branch
          %5544 = sbr.rel (%p5542) target = $region88
        $region87: #{bfm_forward.1} parent=83 // pred_region
          %p5545 = scmp.lt.s32.totalorder %s30, 1
          %s5546 = scalar_select %p5545, %s30, 1
          %s5547 = smul.addr %s5546, 2
          %s5548 = smul.addr %s5547, 8
          %s5549 = scalar_lea.vmem %s12, %s5548
        $region88: #{bfm_forward.1} parent=83 // pred_fallthru
          _
      $region84: #{bfm_forward.1} parent=5 // pred_fallthru
        _
    $region6: #{bfm_forward.1} parent=1 // loop_footer
      %s28 = sadd.s32 1, %s24
    $region7: #{bfm_forward.1} parent=1 // loop_footer_branch
      %23 = sbr.rel target = $region3
    $region8: #{bfm_forward.1} parent=1 // loop_exit
      _
    %5550 = vsyncpa [#allocation9], 1
    %s5551 = scalar_lea.sflag [#allocation9], 1
    %5552 = vsyncpa %s5551, 1
    %5553 = vsyncpa [#allocation11], 1

</llo_original>
